<compile_context>
chip_gen: v7x
topology: tpu7x:2x2x1
jax: 0.10.0
libtpu: 0.0.40
codegen_flags: <defaults>
</compile_context>

<pallas_src>
import functools

import jax
import jax.numpy as jnp
from jax.experimental import pallas as pl
from jax.experimental.pallas import tpu as pltpu


# ----------------------------------------------------------------------------
# In-kernel helpers (traced Python; all activations are flattened (rows, C)).
# ----------------------------------------------------------------------------
def _stage_padded(xpad_ref, v, rows, pad, c, zero_margins):
    """Write v (rows, c) into the padded buffer payload [pad, pad+rows).

    Only the margin rows actually read by the shifted taps are zeroed, and only
    when the layer's spatial shape changes; the margins stay zero across the
    two convs of a layer because staging rewrites payload rows only.
    """
    if zero_margins:
        zeros = jnp.zeros((pad, c), jnp.float32)
        xpad_ref[pl.ds(0, pad), :] = zeros
        xpad_ref[pl.ds(pad + rows, pad), :] = zeros
    xpad_ref[pl.ds(pad, rows), :] = v


def _conv3x3_im2col(xpad_ref, col_ref, w_ref, b_ref, rows, w_dim, c,
                    mask_l, mask_r, relu):
    """3x3 SAME conv as ONE im2col matmul: (rows, 9c) @ (9c, c).

    The 9 shifted views are static sublane-offset reads from the zero-margined
    padded buffer; left/right image borders use the hoisted masks.
    w_ref is (9*c, c) with row index tap*c + cin; b_ref is (1, c).
    """
    pad = w_dim + 1
    for dy in range(3):
        for dx in range(3):
            off = pad + (dy - 1) * w_dim + (dx - 1)       # static offset
            sh = xpad_ref[pl.ds(off, rows), :]            # (rows, c)
            if dx == 0:
                sh = jnp.where(mask_l, sh, 0.0)
            elif dx == 2:
                sh = jnp.where(mask_r, sh, 0.0)
            tap = 3 * dy + dx
            col_ref[pl.ds(0, rows), pl.ds(tap * c, c)] = sh
    acc = jnp.dot(col_ref[pl.ds(0, rows), :], w_ref[...],
                  preferred_element_type=jnp.float32)
    acc = acc + b_ref[...]
    if relu:
        acc = jnp.maximum(acc, 0.0)
    return acc


def _maxpool2x2(v, h_dim, w_dim, c, pool_ref):
    """2x2 / stride-2 max pool of a flattened (h*w, c) value -> (h*w/4, c)."""
    # Pool over h: pair image rows h and h+1 (leading-dim split, minor dim kept).
    x4 = v.reshape(h_dim // 2, 2, w_dim, c)
    m = jnp.maximum(x4[:, 0], x4[:, 1]).reshape((h_dim // 2) * w_dim, c)
    # Pool over w: adjacent flattened rows via stride-2 sublane reads from VMEM.
    rows = (h_dim // 2) * w_dim
    pool_ref[pl.ds(0, rows), :] = m
    even = pool_ref[pl.ds(0, rows // 2, 2), :]
    odd = pool_ref[pl.ds(1, rows // 2, 2), :]
    return jnp.maximum(even, odd)                          # (rows // 2, c)


# ----------------------------------------------------------------------------
# Fused forward kernel: one batch element per grid step.
# ----------------------------------------------------------------------------
def _fused_forward_kernel(x_ref, w1a_ref, b1a_ref, w1b_ref, b1b_ref,
                          w2a_ref, b2a_ref, w2b_ref, b2b_ref,
                          wq_ref, blin_ref, o_ref,
                          xpad_ref, col_ref, pool_ref, flat_ref,
                          *, H, W, C):
    HW = H * W
    H2, W2 = H // 2, W // 2
    HW2 = H2 * W2
    S3 = (H // 4) * (W // 4)

    # Hoisted border masks (one iota/compare per layer shape, reused by both
    # convs of that layer).
    def border_masks(rows, w_dim):
        wpos = jax.lax.broadcasted_iota(jnp.int32, (rows, C), 0) % w_dim
        return wpos != 0, wpos != (w_dim - 1)

    mask_l1, mask_r1 = border_masks(HW, W)
    mask_l2, mask_r2 = border_masks(HW2, W2)

    x0 = x_ref[0]                                          # (HW, C) channel-padded

    # ---- convlayer1: Conv3x3 + ReLU, Conv3x3, MaxPool2x2 ----
    _stage_padded(xpad_ref, x0, HW, W + 1, C, zero_margins=True)
    h = _conv3x3_im2col(xpad_ref, col_ref, w1a_ref, b1a_ref, HW, W, C,
                        mask_l1, mask_r1, relu=True)
    _stage_padded(xpad_ref, h, HW, W + 1, C, zero_margins=False)
    h = _conv3x3_im2col(xpad_ref, col_ref, w1b_ref, b1b_ref, HW, W, C,
                        mask_l1, mask_r1, relu=False)
    h = _maxpool2x2(h, H, W, C, pool_ref)                  # (HW2, C)

    # ---- convlayer2: Conv3x3 + ReLU, Conv3x3, MaxPool2x2 ----
    _stage_padded(xpad_ref, h, HW2, W2 + 1, C, zero_margins=True)
    h = _conv3x3_im2col(xpad_ref, col_ref, w2a_ref, b2a_ref, HW2, W2, C,
                        mask_l2, mask_r2, relu=True)
    _stage_padded(xpad_ref, h, HW2, W2 + 1, C, zero_margins=False)
    h = _conv3x3_im2col(xpad_ref, col_ref, w2b_ref, b2b_ref, HW2, W2, C,
                        mask_l2, mask_r2, relu=False)
    h = _maxpool2x2(h, H2, W2, C, pool_ref)                # (S3, C)

    # ---- flatten (torch NCHW order pre-folded into wq) + Linear ----
    # Lay the pooled tile out as one lane-dense row, then a single MXU
    # contraction (replaces the former S3 serialized M=1 dots).
    for s in range(S3):
        flat_ref[pl.ds(0, 1), pl.ds(s * C, C)] = h[s:s + 1, :]
    logits = jnp.dot(flat_ref[pl.ds(0, 1), :], wq_ref[...],
                     preferred_element_type=jnp.float32) + blin_ref[...]
    o_ref[0] = logits.astype(o_ref.dtype)


# ----------------------------------------------------------------------------
# Wrapper: one pallas_call for the whole forward pass.
# ----------------------------------------------------------------------------
def forward(params, x_nchw):
    N, Cin, H, W = x_nchw.shape
    C = int(params["b1a"].shape[-1])
    K = int(params["blin"].shape[-1])
    assert H % 8 == 0 and W % 8 == 0, "spatial dims must be multiples of 8"
    assert Cin <= C, "input channels must not exceed hidden units"
    HW = H * W
    S3 = (H // 4) * (W // 4)
    assert params["wlin"].shape[0] == C * S3
    Kp = ((K + 127) // 128) * 128                          # lane-dense logits slab

    # NCHW -> flattened (N, H*W, C); zero-pad channels to C so the first conv
    # uses the same lane-dense (rows, C) / single-matmul path as the others.
    x = jnp.transpose(x_nchw, (0, 2, 3, 1)).astype(jnp.float32)
    if Cin < C:
        x = jnp.pad(x, ((0, 0), (0, 0), (0, 0), (0, C - Cin)))
    x2d = x.reshape(N, HW, C)

    def conv_w(w, cin):                                    # (3,3,cin,C) -> (9C, C)
        w = w.astype(jnp.float32)
        if cin < C:
            w = jnp.pad(w, ((0, 0), (0, 0), (0, C - cin), (0, 0)))
        return w.reshape(9 * C, C)

    w1a, w1b = conv_w(params["w1a"], Cin), conv_w(params["w1b"], C)
    w2a, w2b = conv_w(params["w2a"], C), conv_w(params["w2b"], C)
    b1a = params["b1a"].reshape(1, C).astype(jnp.float32)
    b1b = params["b1b"].reshape(1, C).astype(jnp.float32)
    b2a = params["b2a"].reshape(1, C).astype(jnp.float32)
    b2b = params["b2b"].reshape(1, C).astype(jnp.float32)

    # Fold the torch flatten order (channel-major) into the linear weight so the
    # kernel's (s, c) row contracts directly:  wq[s*C + c, k] = wlin[c*S3 + s, k].
    wq = params["wlin"].astype(jnp.float32).reshape(C, S3, K)
    wq = wq.transpose(1, 0, 2).reshape(S3 * C, K)
    wq = jnp.pad(wq, ((0, 0), (0, Kp - K)))
    blin = jnp.pad(params["blin"].reshape(1, K).astype(jnp.float32),
                   ((0, 0), (0, Kp - K)))

    kern = functools.partial(_fused_forward_kernel, H=H, W=W, C=C)
    pad_rows = HW + 2 * (W + 1)

    out = pl.pallas_call(
        kern,
        out_shape=jax.ShapeDtypeStruct((N, 1, Kp), jnp.float32),
        grid=(N,),
        in_specs=[
            pl.BlockSpec((1, HW, C), lambda n: (n, 0, 0)),     # x (per image)
            pl.BlockSpec((9 * C, C), lambda n: (0, 0)),        # conv1a weight
            pl.BlockSpec((1, C), lambda n: (0, 0)),            # conv1a bias
            pl.BlockSpec((9 * C, C), lambda n: (0, 0)),        # conv1b weight
            pl.BlockSpec((1, C), lambda n: (0, 0)),            # conv1b bias
            pl.BlockSpec((9 * C, C), lambda n: (0, 0)),        # conv2a weight
            pl.BlockSpec((1, C), lambda n: (0, 0)),            # conv2a bias
            pl.BlockSpec((9 * C, C), lambda n: (0, 0)),        # conv2b weight
            pl.BlockSpec((1, C), lambda n: (0, 0)),            # conv2b bias
            pl.BlockSpec((S3 * C, Kp), lambda n: (0, 0)),      # linear weight
            pl.BlockSpec((1, Kp), lambda n: (0, 0)),           # linear bias
        ],
        out_specs=pl.BlockSpec((1, 1, Kp), lambda n: (n, 0, 0)),
        scratch_shapes=[
            pltpu.VMEM((pad_rows, C), jnp.float32),        # zero-margined conv input
            pltpu.VMEM((HW, 9 * C), jnp.float32),          # im2col staging
            pltpu.VMEM((HW // 2, C), jnp.float32),         # max-pool staging
            pltpu.VMEM((8, S3 * C), jnp.float32),          # flattened row for linear
        ],
        compiler_params=pltpu.CompilerParams(
            dimension_semantics=("parallel",)),
    )(x2d, w1a, b1a, w1b, b1b, w2a, b2a, w2b, b2b, wq, blin)
    return out[:, 0, :K]


# ----------------------------------------------------------------------------
# Parameter init (deterministic, synthetic) and a pure-JAX reference.
# ----------------------------------------------------------------------------
def init_params(key, *, in_ch, hidden, num_classes, image_size):
    ks = jax.random.split(key, 10)

    def conv_w(k, cin, cout):
        return jax.random.normal(k, (3, 3, cin, cout), jnp.float32) * (
            1.0 / jnp.sqrt(jnp.float32(9 * cin)))

    def bias(k, c):
        return jax.random.normal(k, (c,), jnp.float32) * 0.01

    H, W = image_size
    lin_features = hidden * (H // 4) * (W // 4)   # same as the torch dummy pass
    return {
        "w1a": conv_w(ks[0], in_ch, hidden), "b1a": bias(ks[1], hidden),
        "w1b": conv_w(ks[2], hidden, hidden), "b1b": bias(ks[3], hidden),
        "w2a": conv_w(ks[4], hidden, hidden), "b2a": bias(ks[5], hidden),
        "w2b": conv_w(ks[6], hidden, hidden), "b2b": bias(ks[7], hidden),
        "wlin": jax.random.normal(ks[8], (lin_features, num_classes),
                                  jnp.float32) * (
            1.0 / jnp.sqrt(jnp.float32(lin_features))),
        "blin": bias(ks[9], num_classes),
    }


def reference(params, x_nchw):
    """Pure-JAX (XLA) reference for correctness checking."""
    x = jnp.transpose(x_nchw, (0, 2, 3, 1)).astype(jnp.float32)

    def conv(x, w, b):
        y = jax.lax.conv_general_dilated(
            x, w, (1, 1), "SAME",
            dimension_numbers=("NHWC", "HWIO", "NHWC"))
        return y + b.reshape(1, 1, 1, -1)

    def pool(x):
        return jax.lax.reduce_window(x, jnp.float32(-jnp.inf), jax.lax.max,
                                     (1, 2, 2, 1), (1, 2, 2, 1), "VALID")

    h = jax.nn.relu(conv(x, params["w1a"], params["b1a"]))
    h = conv(h, params["w1b"], params["b1b"])
    h = pool(h)
    h = jax.nn.relu(conv(h, params["w2a"], params["b2a"]))
    h = conv(h, params["w2b"], params["b2b"])
    h = pool(h)
    hf = jnp.transpose(h, (0, 3, 1, 2)).reshape(h.shape[0], -1)   # torch flatten order
    return hf @ params["wlin"] + params["blin"]


if __name__ == "__main__":
    key = jax.random.PRNGKey(0)
    k_in, k_par = jax.random.split(key)

    # small shapes consistent with the module: batch=2, in_ch=1, 16x16 image,
    # hidden_units=16, num_classes=10
    batch, in_ch, hidden, num_classes = 2, 1, 16, 10
    image_size = (16, 16)

    params = init_params(k_par, in_ch=in_ch, hidden=hidden,
                         num_classes=num_classes, image_size=image_size)
    x = jax.random.normal(k_in, (batch, in_ch, *image_size), jnp.float32)

    out = jax.jit(forward)(params, x)
    out = jax.block_until_ready(out)
    assert out.shape == (batch, num_classes), out.shape

    ref = reference(params, x)
    max_err = float(jnp.max(jnp.abs(out - ref)))
    if not bool(jnp.allclose(out, ref, atol=1e-3, rtol=1e-3)):
        raise AssertionError(f"Pallas output mismatch vs reference "
                             f"(max abs err = {max_err})")
    print("KERNEL_OK")
</pallas_src>

<mosaic_0001>
module attributes {stable_mosaic.version = 11 : i64} {
  func.func @_fused_forward_kernel(%arg0: i32, %arg1: memref<1x256x16xf32, #tpu.memory_space<vmem>>, %arg2: memref<144x16xf32, #tpu.memory_space<vmem>>, %arg3: memref<1x16xf32, #tpu.memory_space<vmem>>, %arg4: memref<144x16xf32, #tpu.memory_space<vmem>>, %arg5: memref<1x16xf32, #tpu.memory_space<vmem>>, %arg6: memref<144x16xf32, #tpu.memory_space<vmem>>, %arg7: memref<1x16xf32, #tpu.memory_space<vmem>>, %arg8: memref<144x16xf32, #tpu.memory_space<vmem>>, %arg9: memref<1x16xf32, #tpu.memory_space<vmem>>, %arg10: memref<256x128xf32, #tpu.memory_space<vmem>>, %arg11: memref<1x128xf32, #tpu.memory_space<vmem>>, %arg12: memref<1x1x128xf32, #tpu.memory_space<vmem>>, %arg13: memref<290x16xf32, #tpu.memory_space<vmem>>, %arg14: memref<256x144xf32, #tpu.memory_space<vmem>>, %arg15: memref<128x16xf32, #tpu.memory_space<vmem>>, %arg16: memref<8x256xf32, #tpu.memory_space<vmem>>) attributes {dimension_semantics = [#tpu.dimension_semantics<parallel>], iteration_bounds = array<i64: 2>, scalar_prefetch = 0 : i64, scratch_operands = 4 : i64, tpu.core_type = #tpu.core_type<tc>, window_params = [{transform_indices = @transform_0, window_bounds = array<i64: 1, 256, 16>}, {pipeline_mode = #tpu.pipeline_mode<synchronous>, transform_indices = @transform_1, window_bounds = array<i64: 144, 16>}, {pipeline_mode = #tpu.pipeline_mode<synchronous>, transform_indices = @transform_2, window_bounds = array<i64: 1, 16>}, {pipeline_mode = #tpu.pipeline_mode<synchronous>, transform_indices = @transform_3, window_bounds = array<i64: 144, 16>}, {pipeline_mode = #tpu.pipeline_mode<synchronous>, transform_indices = @transform_4, window_bounds = array<i64: 1, 16>}, {pipeline_mode = #tpu.pipeline_mode<synchronous>, transform_indices = @transform_5, window_bounds = array<i64: 144, 16>}, {pipeline_mode = #tpu.pipeline_mode<synchronous>, transform_indices = @transform_6, window_bounds = array<i64: 1, 16>}, {pipeline_mode = #tpu.pipeline_mode<synchronous>, transform_indices = @transform_7, window_bounds = array<i64: 144, 16>}, {pipeline_mode = #tpu.pipeline_mode<synchronous>, transform_indices = @transform_8, window_bounds = array<i64: 1, 16>}, {pipeline_mode = #tpu.pipeline_mode<synchronous>, transform_indices = @transform_9, window_bounds = array<i64: 256, 128>}, {pipeline_mode = #tpu.pipeline_mode<synchronous>, transform_indices = @transform_10, window_bounds = array<i64: 1, 128>}, {transform_indices = @transform_11, window_bounds = array<i64: 1, 1, 128>}]} {
    %0 = tpu.iota {dimensions = array<i32: 0>} : vector<256x16xi32>
    %c16_i32 = arith.constant 16 : i32
    %c0_i32 = arith.constant 0 : i32
    %1 = arith.cmpi eq, %c16_i32, %c0_i32 : i32
    %c1_i32 = arith.constant 1 : i32
    %2 = arith.select %1, %c1_i32, %c16_i32 : i32
    %3 = vector.broadcast %2 : i32 to vector<256x16xi32>
    %4 = arith.remsi %0, %3 : vector<256x16xi32>
    %c0_i32_0 = arith.constant 0 : i32
    %5 = vector.broadcast %c0_i32_0 : i32 to vector<256x16xi32>
    %6 = arith.cmpi ne, %4, %5 : vector<256x16xi32>
    %c0_i32_1 = arith.constant 0 : i32
    %7 = vector.broadcast %c0_i32_1 : i32 to vector<256x16xi32>
    %8 = arith.cmpi slt, %4, %7 : vector<256x16xi32>
    %c0_i32_2 = arith.constant 0 : i32
    %9 = arith.cmpi slt, %2, %c0_i32_2 : i32
    %10 = vector.broadcast %9 : i1 to vector<256x16xi1>
    %11 = vector.broadcast %10 : vector<256x16xi1> to vector<256x16xi1>
    %12 = arith.xori %8, %11 : vector<256x16xi1>
    %13 = arith.andi %12, %6 : vector<256x16xi1>
    %14 = vector.broadcast %2 : i32 to vector<256x16xi32>
    %15 = arith.addi %4, %14 : vector<256x16xi32>
    %16 = arith.select %13, %15, %4 : vector<256x16xi1>, vector<256x16xi32>
    %c0_i32_3 = arith.constant 0 : i32
    %17 = vector.broadcast %c0_i32_3 : i32 to vector<256x16xi32>
    %18 = arith.cmpi ne, %16, %17 : vector<256x16xi32>
    %c15_i32 = arith.constant 15 : i32
    %19 = vector.broadcast %c15_i32 : i32 to vector<256x16xi32>
    %20 = arith.cmpi ne, %16, %19 : vector<256x16xi32>
    %21 = tpu.iota {dimensions = array<i32: 0>} : vector<64x16xi32>
    %c8_i32 = arith.constant 8 : i32
    %c0_i32_4 = arith.constant 0 : i32
    %22 = arith.cmpi eq, %c8_i32, %c0_i32_4 : i32
    %c1_i32_5 = arith.constant 1 : i32
    %23 = arith.select %22, %c1_i32_5, %c8_i32 : i32
    %24 = vector.broadcast %23 : i32 to vector<64x16xi32>
    %25 = arith.remsi %21, %24 : vector<64x16xi32>
    %c0_i32_6 = arith.constant 0 : i32
    %26 = vector.broadcast %c0_i32_6 : i32 to vector<64x16xi32>
    %27 = arith.cmpi ne, %25, %26 : vector<64x16xi32>
    %c0_i32_7 = arith.constant 0 : i32
    %28 = vector.broadcast %c0_i32_7 : i32 to vector<64x16xi32>
    %29 = arith.cmpi slt, %25, %28 : vector<64x16xi32>
    %c0_i32_8 = arith.constant 0 : i32
    %30 = arith.cmpi slt, %23, %c0_i32_8 : i32
    %31 = vector.broadcast %30 : i1 to vector<64x16xi1>
    %32 = vector.broadcast %31 : vector<64x16xi1> to vector<64x16xi1>
    %33 = arith.xori %29, %32 : vector<64x16xi1>
    %34 = arith.andi %33, %27 : vector<64x16xi1>
    %35 = vector.broadcast %23 : i32 to vector<64x16xi32>
    %36 = arith.addi %25, %35 : vector<64x16xi32>
    %37 = arith.select %34, %36, %25 : vector<64x16xi1>, vector<64x16xi32>
    %c0_i32_9 = arith.constant 0 : i32
    %38 = vector.broadcast %c0_i32_9 : i32 to vector<64x16xi32>
    %39 = arith.cmpi ne, %37, %38 : vector<64x16xi32>
    %c7_i32 = arith.constant 7 : i32
    %40 = vector.broadcast %c7_i32 : i32 to vector<64x16xi32>
    %41 = arith.cmpi ne, %37, %40 : vector<64x16xi32>
    %c0 = arith.constant 0 : index
    %c0_10 = arith.constant 0 : index
    %c0_11 = arith.constant 0 : index
    %42 = vector.load %arg1[%c0, %c0_10, %c0_11] : memref<1x256x16xf32, #tpu.memory_space<vmem>>, vector<1x256x16xf32>
    %43 = vector.shape_cast %42 : vector<1x256x16xf32> to vector<256x16xf32>
    %cst = arith.constant 0.000000e+00 : f32
    %44 = vector.broadcast %cst : f32 to vector<17x16xf32>
    %c0_12 = arith.constant 0 : index
    %c0_13 = arith.constant 0 : index
    %45 = vector.load %arg13[%c0_12, %c0_13] : memref<290x16xf32, #tpu.memory_space<vmem>>, vector<17x16xf32>
    tpu.vector_store %arg13[%c0_12, %c0_13], %44 {strides = array<i32>} : memref<290x16xf32, #tpu.memory_space<vmem>>, vector<17x16xf32>,
    %c273 = arith.constant 273 : index
    %c0_14 = arith.constant 0 : index
    %46 = vector.load %arg13[%c273, %c0_14] : memref<290x16xf32, #tpu.memory_space<vmem>>, vector<17x16xf32>
    tpu.vector_store %arg13[%c273, %c0_14], %44 {strides = array<i32>} : memref<290x16xf32, #tpu.memory_space<vmem>>, vector<17x16xf32>,
    %c17 = arith.constant 17 : index
    %c0_15 = arith.constant 0 : index
    %47 = vector.load %arg13[%c17, %c0_15] : memref<290x16xf32, #tpu.memory_space<vmem>>, vector<256x16xf32>
    tpu.vector_store %arg13[%c17, %c0_15], %43 {strides = array<i32>} : memref<290x16xf32, #tpu.memory_space<vmem>>, vector<256x16xf32>,
    %c0_16 = arith.constant 0 : index
    %c0_17 = arith.constant 0 : index
    %48 = vector.load %arg13[%c0_16, %c0_17] : memref<290x16xf32, #tpu.memory_space<vmem>>, vector<256x16xf32>
    %cst_18 = arith.constant 0.000000e+00 : f32
    %49 = vector.broadcast %cst_18 : f32 to vector<256x16xf32>
    %50 = arith.select %18, %48, %49 : vector<256x16xi1>, vector<256x16xf32>
    %c0_19 = arith.constant 0 : index
    %c0_20 = arith.constant 0 : index
    %51 = vector.load %arg14[%c0_19, %c0_20] : memref<256x144xf32, #tpu.memory_space<vmem>>, vector<256x16xf32>
    tpu.vector_store %arg14[%c0_19, %c0_20], %50 {strides = array<i32>} : memref<256x144xf32, #tpu.memory_space<vmem>>, vector<256x16xf32>,
    %c1 = arith.constant 1 : index
    %c0_21 = arith.constant 0 : index
    %52 = vector.load %arg13[%c1, %c0_21] : memref<290x16xf32, #tpu.memory_space<vmem>>, vector<256x16xf32>
    %c0_22 = arith.constant 0 : index
    %c16 = arith.constant 16 : index
    %53 = vector.load %arg14[%c0_22, %c16] : memref<256x144xf32, #tpu.memory_space<vmem>>, vector<256x16xf32>
    tpu.vector_store %arg14[%c0_22, %c16], %52 {strides = array<i32>} : memref<256x144xf32, #tpu.memory_space<vmem>>, vector<256x16xf32>,
    %c2 = arith.constant 2 : index
    %c0_23 = arith.constant 0 : index
    %54 = vector.load %arg13[%c2, %c0_23] : memref<290x16xf32, #tpu.memory_space<vmem>>, vector<256x16xf32>
    %cst_24 = arith.constant 0.000000e+00 : f32
    %55 = vector.broadcast %cst_24 : f32 to vector<256x16xf32>
    %56 = arith.select %20, %54, %55 : vector<256x16xi1>, vector<256x16xf32>
    %c0_25 = arith.constant 0 : index
    %c32 = arith.constant 32 : index
    %57 = vector.load %arg14[%c0_25, %c32] : memref<256x144xf32, #tpu.memory_space<vmem>>, vector<256x16xf32>
    tpu.vector_store %arg14[%c0_25, %c32], %56 {strides = array<i32>} : memref<256x144xf32, #tpu.memory_space<vmem>>, vector<256x16xf32>,
    %c16_26 = arith.constant 16 : index
    %c0_27 = arith.constant 0 : index
    %58 = vector.load %arg13[%c16_26, %c0_27] : memref<290x16xf32, #tpu.memory_space<vmem>>, vector<256x16xf32>
    %cst_28 = arith.constant 0.000000e+00 : f32
    %59 = vector.broadcast %cst_28 : f32 to vector<256x16xf32>
    %60 = arith.select %18, %58, %59 : vector<256x16xi1>, vector<256x16xf32>
    %c0_29 = arith.constant 0 : index
    %c48 = arith.constant 48 : index
    %61 = vector.load %arg14[%c0_29, %c48] : memref<256x144xf32, #tpu.memory_space<vmem>>, vector<256x16xf32>
    tpu.vector_store %arg14[%c0_29, %c48], %60 {strides = array<i32>} : memref<256x144xf32, #tpu.memory_space<vmem>>, vector<256x16xf32>,
    %c17_30 = arith.constant 17 : index
    %c0_31 = arith.constant 0 : index
    %62 = vector.load %arg13[%c17_30, %c0_31] : memref<290x16xf32, #tpu.memory_space<vmem>>, vector<256x16xf32>
    %c0_32 = arith.constant 0 : index
    %c64 = arith.constant 64 : index
    %63 = vector.load %arg14[%c0_32, %c64] : memref<256x144xf32, #tpu.memory_space<vmem>>, vector<256x16xf32>
    tpu.vector_store %arg14[%c0_32, %c64], %62 {strides = array<i32>} : memref<256x144xf32, #tpu.memory_space<vmem>>, vector<256x16xf32>,
    %c18 = arith.constant 18 : index
    %c0_33 = arith.constant 0 : index
    %64 = vector.load %arg13[%c18, %c0_33] : memref<290x16xf32, #tpu.memory_space<vmem>>, vector<256x16xf32>
    %cst_34 = arith.constant 0.000000e+00 : f32
    %65 = vector.broadcast %cst_34 : f32 to vector<256x16xf32>
    %66 = arith.select %20, %64, %65 : vector<256x16xi1>, vector<256x16xf32>
    %c0_35 = arith.constant 0 : index
    %c80 = arith.constant 80 : index
    %67 = vector.load %arg14[%c0_35, %c80] : memref<256x144xf32, #tpu.memory_space<vmem>>, vector<256x16xf32>
    tpu.vector_store %arg14[%c0_35, %c80], %66 {strides = array<i32>} : memref<256x144xf32, #tpu.memory_space<vmem>>, vector<256x16xf32>,
    %c32_36 = arith.constant 32 : index
    %c0_37 = arith.constant 0 : index
    %68 = vector.load %arg13[%c32_36, %c0_37] : memref<290x16xf32, #tpu.memory_space<vmem>>, vector<256x16xf32>
    %cst_38 = arith.constant 0.000000e+00 : f32
    %69 = vector.broadcast %cst_38 : f32 to vector<256x16xf32>
    %70 = arith.select %18, %68, %69 : vector<256x16xi1>, vector<256x16xf32>
    %c0_39 = arith.constant 0 : index
    %c96 = arith.constant 96 : index
    %71 = vector.load %arg14[%c0_39, %c96] : memref<256x144xf32, #tpu.memory_space<vmem>>, vector<256x16xf32>
    tpu.vector_store %arg14[%c0_39, %c96], %70 {strides = array<i32>} : memref<256x144xf32, #tpu.memory_space<vmem>>, vector<256x16xf32>,
    %c33 = arith.constant 33 : index
    %c0_40 = arith.constant 0 : index
    %72 = vector.load %arg13[%c33, %c0_40] : memref<290x16xf32, #tpu.memory_space<vmem>>, vector<256x16xf32>
    %c0_41 = arith.constant 0 : index
    %c112 = arith.constant 112 : index
    %73 = vector.load %arg14[%c0_41, %c112] : memref<256x144xf32, #tpu.memory_space<vmem>>, vector<256x16xf32>
    tpu.vector_store %arg14[%c0_41, %c112], %72 {strides = array<i32>} : memref<256x144xf32, #tpu.memory_space<vmem>>, vector<256x16xf32>,
    %c34 = arith.constant 34 : index
    %c0_42 = arith.constant 0 : index
    %74 = vector.load %arg13[%c34, %c0_42] : memref<290x16xf32, #tpu.memory_space<vmem>>, vector<256x16xf32>
    %cst_43 = arith.constant 0.000000e+00 : f32
    %75 = vector.broadcast %cst_43 : f32 to vector<256x16xf32>
    %76 = arith.select %20, %74, %75 : vector<256x16xi1>, vector<256x16xf32>
    %c0_44 = arith.constant 0 : index
    %c128 = arith.constant 128 : index
    %77 = vector.load %arg14[%c0_44, %c128] : memref<256x144xf32, #tpu.memory_space<vmem>>, vector<256x16xf32>
    tpu.vector_store %arg14[%c0_44, %c128], %76 {strides = array<i32>} : memref<256x144xf32, #tpu.memory_space<vmem>>, vector<256x16xf32>,
    %c0_45 = arith.constant 0 : index
    %c0_46 = arith.constant 0 : index
    %78 = vector.load %arg14[%c0_45, %c0_46] : memref<256x144xf32, #tpu.memory_space<vmem>>, vector<256x144xf32>
    %c0_47 = arith.constant 0 : index
    %c0_48 = arith.constant 0 : index
    %79 = vector.load %arg2[%c0_47, %c0_48] : memref<144x16xf32, #tpu.memory_space<vmem>>, vector<144x16xf32>
    %cst_49 = arith.constant dense<0.000000e+00> : vector<256x16xf32>
    %80 = tpu.matmul %78, %79, %cst_49 {dimension_numbers = #tpu.dot_dimension_numbers<[1], [0], [0], [1], [0, 0, 1, 1], [], []>} : vector<256x144xf32>, vector<144x16xf32>, vector<256x16xf32> -> vector<256x16xf32>
    %c0_50 = arith.constant 0 : index
    %c0_51 = arith.constant 0 : index
    %81 = vector.load %arg3[%c0_50, %c0_51] : memref<1x16xf32, #tpu.memory_space<vmem>>, vector<1x16xf32>
    %82 = vector.broadcast %81 : vector<1x16xf32> to vector<256x16xf32>
    %83 = arith.addf %80, %82 : vector<256x16xf32>
    %cst_52 = arith.constant 0.000000e+00 : f32
    %84 = vector.broadcast %cst_52 : f32 to vector<256x16xf32>
    %85 = arith.maximumf %83, %84 : vector<256x16xf32>
    %c17_53 = arith.constant 17 : index
    %c0_54 = arith.constant 0 : index
    %86 = vector.load %arg13[%c17_53, %c0_54] : memref<290x16xf32, #tpu.memory_space<vmem>>, vector<256x16xf32>
    tpu.vector_store %arg13[%c17_53, %c0_54], %85 {strides = array<i32>} : memref<290x16xf32, #tpu.memory_space<vmem>>, vector<256x16xf32>,
    %c0_55 = arith.constant 0 : index
    %c0_56 = arith.constant 0 : index
    %87 = vector.load %arg13[%c0_55, %c0_56] : memref<290x16xf32, #tpu.memory_space<vmem>>, vector<256x16xf32>
    %cst_57 = arith.constant 0.000000e+00 : f32
    %88 = vector.broadcast %cst_57 : f32 to vector<256x16xf32>
    %89 = arith.select %18, %87, %88 : vector<256x16xi1>, vector<256x16xf32>
    %c0_58 = arith.constant 0 : index
    %c0_59 = arith.constant 0 : index
    %90 = vector.load %arg14[%c0_58, %c0_59] : memref<256x144xf32, #tpu.memory_space<vmem>>, vector<256x16xf32>
    tpu.vector_store %arg14[%c0_58, %c0_59], %89 {strides = array<i32>} : memref<256x144xf32, #tpu.memory_space<vmem>>, vector<256x16xf32>,
    %c1_60 = arith.constant 1 : index
    %c0_61 = arith.constant 0 : index
    %91 = vector.load %arg13[%c1_60, %c0_61] : memref<290x16xf32, #tpu.memory_space<vmem>>, vector<256x16xf32>
    %c0_62 = arith.constant 0 : index
    %c16_63 = arith.constant 16 : index
    %92 = vector.load %arg14[%c0_62, %c16_63] : memref<256x144xf32, #tpu.memory_space<vmem>>, vector<256x16xf32>
    tpu.vector_store %arg14[%c0_62, %c16_63], %91 {strides = array<i32>} : memref<256x144xf32, #tpu.memory_space<vmem>>, vector<256x16xf32>,
    %c2_64 = arith.constant 2 : index
    %c0_65 = arith.constant 0 : index
    %93 = vector.load %arg13[%c2_64, %c0_65] : memref<290x16xf32, #tpu.memory_space<vmem>>, vector<256x16xf32>
    %cst_66 = arith.constant 0.000000e+00 : f32
    %94 = vector.broadcast %cst_66 : f32 to vector<256x16xf32>
    %95 = arith.select %20, %93, %94 : vector<256x16xi1>, vector<256x16xf32>
    %c0_67 = arith.constant 0 : index
    %c32_68 = arith.constant 32 : index
    %96 = vector.load %arg14[%c0_67, %c32_68] : memref<256x144xf32, #tpu.memory_space<vmem>>, vector<256x16xf32>
    tpu.vector_store %arg14[%c0_67, %c32_68], %95 {strides = array<i32>} : memref<256x144xf32, #tpu.memory_space<vmem>>, vector<256x16xf32>,
    %c16_69 = arith.constant 16 : index
    %c0_70 = arith.constant 0 : index
    %97 = vector.load %arg13[%c16_69, %c0_70] : memref<290x16xf32, #tpu.memory_space<vmem>>, vector<256x16xf32>
    %cst_71 = arith.constant 0.000000e+00 : f32
    %98 = vector.broadcast %cst_71 : f32 to vector<256x16xf32>
    %99 = arith.select %18, %97, %98 : vector<256x16xi1>, vector<256x16xf32>
    %c0_72 = arith.constant 0 : index
    %c48_73 = arith.constant 48 : index
    %100 = vector.load %arg14[%c0_72, %c48_73] : memref<256x144xf32, #tpu.memory_space<vmem>>, vector<256x16xf32>
    tpu.vector_store %arg14[%c0_72, %c48_73], %99 {strides = array<i32>} : memref<256x144xf32, #tpu.memory_space<vmem>>, vector<256x16xf32>,
    %c17_74 = arith.constant 17 : index
    %c0_75 = arith.constant 0 : index
    %101 = vector.load %arg13[%c17_74, %c0_75] : memref<290x16xf32, #tpu.memory_space<vmem>>, vector<256x16xf32>
    %c0_76 = arith.constant 0 : index
    %c64_77 = arith.constant 64 : index
    %102 = vector.load %arg14[%c0_76, %c64_77] : memref<256x144xf32, #tpu.memory_space<vmem>>, vector<256x16xf32>
    tpu.vector_store %arg14[%c0_76, %c64_77], %101 {strides = array<i32>} : memref<256x144xf32, #tpu.memory_space<vmem>>, vector<256x16xf32>,
    %c18_78 = arith.constant 18 : index
    %c0_79 = arith.constant 0 : index
    %103 = vector.load %arg13[%c18_78, %c0_79] : memref<290x16xf32, #tpu.memory_space<vmem>>, vector<256x16xf32>
    %cst_80 = arith.constant 0.000000e+00 : f32
    %104 = vector.broadcast %cst_80 : f32 to vector<256x16xf32>
    %105 = arith.select %20, %103, %104 : vector<256x16xi1>, vector<256x16xf32>
    %c0_81 = arith.constant 0 : index
    %c80_82 = arith.constant 80 : index
    %106 = vector.load %arg14[%c0_81, %c80_82] : memref<256x144xf32, #tpu.memory_space<vmem>>, vector<256x16xf32>
    tpu.vector_store %arg14[%c0_81, %c80_82], %105 {strides = array<i32>} : memref<256x144xf32, #tpu.memory_space<vmem>>, vector<256x16xf32>,
    %c32_83 = arith.constant 32 : index
    %c0_84 = arith.constant 0 : index
    %107 = vector.load %arg13[%c32_83, %c0_84] : memref<290x16xf32, #tpu.memory_space<vmem>>, vector<256x16xf32>
    %cst_85 = arith.constant 0.000000e+00 : f32
    %108 = vector.broadcast %cst_85 : f32 to vector<256x16xf32>
    %109 = arith.select %18, %107, %108 : vector<256x16xi1>, vector<256x16xf32>
    %c0_86 = arith.constant 0 : index
    %c96_87 = arith.constant 96 : index
    %110 = vector.load %arg14[%c0_86, %c96_87] : memref<256x144xf32, #tpu.memory_space<vmem>>, vector<256x16xf32>
    tpu.vector_store %arg14[%c0_86, %c96_87], %109 {strides = array<i32>} : memref<256x144xf32, #tpu.memory_space<vmem>>, vector<256x16xf32>,
    %c33_88 = arith.constant 33 : index
    %c0_89 = arith.constant 0 : index
    %111 = vector.load %arg13[%c33_88, %c0_89] : memref<290x16xf32, #tpu.memory_space<vmem>>, vector<256x16xf32>
    %c0_90 = arith.constant 0 : index
    %c112_91 = arith.constant 112 : index
    %112 = vector.load %arg14[%c0_90, %c112_91] : memref<256x144xf32, #tpu.memory_space<vmem>>, vector<256x16xf32>
    tpu.vector_store %arg14[%c0_90, %c112_91], %111 {strides = array<i32>} : memref<256x144xf32, #tpu.memory_space<vmem>>, vector<256x16xf32>,
    %c34_92 = arith.constant 34 : index
    %c0_93 = arith.constant 0 : index
    %113 = vector.load %arg13[%c34_92, %c0_93] : memref<290x16xf32, #tpu.memory_space<vmem>>, vector<256x16xf32>
    %cst_94 = arith.constant 0.000000e+00 : f32
    %114 = vector.broadcast %cst_94 : f32 to vector<256x16xf32>
    %115 = arith.select %20, %113, %114 : vector<256x16xi1>, vector<256x16xf32>
    %c0_95 = arith.constant 0 : index
    %c128_96 = arith.constant 128 : index
    %116 = vector.load %arg14[%c0_95, %c128_96] : memref<256x144xf32, #tpu.memory_space<vmem>>, vector<256x16xf32>
    tpu.vector_store %arg14[%c0_95, %c128_96], %115 {strides = array<i32>} : memref<256x144xf32, #tpu.memory_space<vmem>>, vector<256x16xf32>,
    %c0_97 = arith.constant 0 : index
    %c0_98 = arith.constant 0 : index
    %117 = vector.load %arg14[%c0_97, %c0_98] : memref<256x144xf32, #tpu.memory_space<vmem>>, vector<256x144xf32>
    %c0_99 = arith.constant 0 : index
    %c0_100 = arith.constant 0 : index
    %118 = vector.load %arg4[%c0_99, %c0_100] : memref<144x16xf32, #tpu.memory_space<vmem>>, vector<144x16xf32>
    %cst_101 = arith.constant dense<0.000000e+00> : vector<256x16xf32>
    %119 = tpu.matmul %117, %118, %cst_101 {dimension_numbers = #tpu.dot_dimension_numbers<[1], [0], [0], [1], [0, 0, 1, 1], [], []>} : vector<256x144xf32>, vector<144x16xf32>, vector<256x16xf32> -> vector<256x16xf32>
    %c0_102 = arith.constant 0 : index
    %c0_103 = arith.constant 0 : index
    %120 = vector.load %arg5[%c0_102, %c0_103] : memref<1x16xf32, #tpu.memory_space<vmem>>, vector<1x16xf32>
    %121 = vector.broadcast %120 : vector<1x16xf32> to vector<256x16xf32>
    %122 = arith.addf %119, %121 : vector<256x16xf32>
    %123 = vector.shape_cast %122 : vector<256x16xf32> to vector<8x2x16x16xf32>
    %124 = vector.extract_strided_slice %123 {offsets = [0, 0, 0, 0], sizes = [8, 1, 16, 16], strides = [1, 1, 1, 1]} : vector<8x2x16x16xf32> to vector<8x1x16x16xf32>
    %125 = vector.shape_cast %124 : vector<8x1x16x16xf32> to vector<8x16x16xf32>
    %126 = vector.extract_strided_slice %123 {offsets = [0, 1, 0, 0], sizes = [8, 1, 16, 16], strides = [1, 1, 1, 1]} : vector<8x2x16x16xf32> to vector<8x1x16x16xf32>
    %127 = vector.shape_cast %126 : vector<8x1x16x16xf32> to vector<8x16x16xf32>
    %128 = arith.maximumf %125, %127 : vector<8x16x16xf32>
    %129 = vector.shape_cast %128 : vector<8x16x16xf32> to vector<128x16xf32>
    %c0_104 = arith.constant 0 : index
    %c0_105 = arith.constant 0 : index
    %130 = vector.load %arg15[%c0_104, %c0_105] : memref<128x16xf32, #tpu.memory_space<vmem>>, vector<128x16xf32>
    tpu.vector_store %arg15[%c0_104, %c0_105], %129 {strides = array<i32>} : memref<128x16xf32, #tpu.memory_space<vmem>>, vector<128x16xf32>,
    %c0_106 = arith.constant 0 : index
    %c0_107 = arith.constant 0 : index
    %131 = tpu.strided_load %arg15[%c0_106, %c0_107] {strides = array<i32: 2, 1>} : memref<128x16xf32, #tpu.memory_space<vmem>>, vector<64x16xf32>
    %c1_108 = arith.constant 1 : index
    %c0_109 = arith.constant 0 : index
    %132 = tpu.strided_load %arg15[%c1_108, %c0_109] {strides = array<i32: 2, 1>} : memref<128x16xf32, #tpu.memory_space<vmem>>, vector<64x16xf32>
    %133 = arith.maximumf %131, %132 : vector<64x16xf32>
    %cst_110 = arith.constant 0.000000e+00 : f32
    %134 = vector.broadcast %cst_110 : f32 to vector<9x16xf32>
    %c0_111 = arith.constant 0 : index
    %c0_112 = arith.constant 0 : index
    %135 = vector.load %arg13[%c0_111, %c0_112] : memref<290x16xf32, #tpu.memory_space<vmem>>, vector<9x16xf32>
    tpu.vector_store %arg13[%c0_111, %c0_112], %134 {strides = array<i32>} : memref<290x16xf32, #tpu.memory_space<vmem>>, vector<9x16xf32>,
    %c73 = arith.constant 73 : index
    %c0_113 = arith.constant 0 : index
    %136 = vector.load %arg13[%c73, %c0_113] : memref<290x16xf32, #tpu.memory_space<vmem>>, vector<9x16xf32>
    tpu.vector_store %arg13[%c73, %c0_113], %134 {strides = array<i32>} : memref<290x16xf32, #tpu.memory_space<vmem>>, vector<9x16xf32>,
    %c9 = arith.constant 9 : index
    %c0_114 = arith.constant 0 : index
    %137 = vector.load %arg13[%c9, %c0_114] : memref<290x16xf32, #tpu.memory_space<vmem>>, vector<64x16xf32>
    tpu.vector_store %arg13[%c9, %c0_114], %133 {strides = array<i32>} : memref<290x16xf32, #tpu.memory_space<vmem>>, vector<64x16xf32>,
    %c0_115 = arith.constant 0 : index
    %c0_116 = arith.constant 0 : index
    %138 = vector.load %arg13[%c0_115, %c0_116] : memref<290x16xf32, #tpu.memory_space<vmem>>, vector<64x16xf32>
    %cst_117 = arith.constant 0.000000e+00 : f32
    %139 = vector.broadcast %cst_117 : f32 to vector<64x16xf32>
    %140 = arith.select %39, %138, %139 : vector<64x16xi1>, vector<64x16xf32>
    %c0_118 = arith.constant 0 : index
    %c0_119 = arith.constant 0 : index
    %141 = vector.load %arg14[%c0_118, %c0_119] : memref<256x144xf32, #tpu.memory_space<vmem>>, vector<64x16xf32>
    tpu.vector_store %arg14[%c0_118, %c0_119], %140 {strides = array<i32>} : memref<256x144xf32, #tpu.memory_space<vmem>>, vector<64x16xf32>,
    %c1_120 = arith.constant 1 : index
    %c0_121 = arith.constant 0 : index
    %142 = vector.load %arg13[%c1_120, %c0_121] : memref<290x16xf32, #tpu.memory_space<vmem>>, vector<64x16xf32>
    %c0_122 = arith.constant 0 : index
    %c16_123 = arith.constant 16 : index
    %143 = vector.load %arg14[%c0_122, %c16_123] : memref<256x144xf32, #tpu.memory_space<vmem>>, vector<64x16xf32>
    tpu.vector_store %arg14[%c0_122, %c16_123], %142 {strides = array<i32>} : memref<256x144xf32, #tpu.memory_space<vmem>>, vector<64x16xf32>,
    %c2_124 = arith.constant 2 : index
    %c0_125 = arith.constant 0 : index
    %144 = vector.load %arg13[%c2_124, %c0_125] : memref<290x16xf32, #tpu.memory_space<vmem>>, vector<64x16xf32>
    %cst_126 = arith.constant 0.000000e+00 : f32
    %145 = vector.broadcast %cst_126 : f32 to vector<64x16xf32>
    %146 = arith.select %41, %144, %145 : vector<64x16xi1>, vector<64x16xf32>
    %c0_127 = arith.constant 0 : index
    %c32_128 = arith.constant 32 : index
    %147 = vector.load %arg14[%c0_127, %c32_128] : memref<256x144xf32, #tpu.memory_space<vmem>>, vector<64x16xf32>
    tpu.vector_store %arg14[%c0_127, %c32_128], %146 {strides = array<i32>} : memref<256x144xf32, #tpu.memory_space<vmem>>, vector<64x16xf32>,
    %c8 = arith.constant 8 : index
    %c0_129 = arith.constant 0 : index
    %148 = vector.load %arg13[%c8, %c0_129] : memref<290x16xf32, #tpu.memory_space<vmem>>, vector<64x16xf32>
    %cst_130 = arith.constant 0.000000e+00 : f32
    %149 = vector.broadcast %cst_130 : f32 to vector<64x16xf32>
    %150 = arith.select %39, %148, %149 : vector<64x16xi1>, vector<64x16xf32>
    %c0_131 = arith.constant 0 : index
    %c48_132 = arith.constant 48 : index
    %151 = vector.load %arg14[%c0_131, %c48_132] : memref<256x144xf32, #tpu.memory_space<vmem>>, vector<64x16xf32>
    tpu.vector_store %arg14[%c0_131, %c48_132], %150 {strides = array<i32>} : memref<256x144xf32, #tpu.memory_space<vmem>>, vector<64x16xf32>,
    %c9_133 = arith.constant 9 : index
    %c0_134 = arith.constant 0 : index
    %152 = vector.load %arg13[%c9_133, %c0_134] : memref<290x16xf32, #tpu.memory_space<vmem>>, vector<64x16xf32>
    %c0_135 = arith.constant 0 : index
    %c64_136 = arith.constant 64 : index
    %153 = vector.load %arg14[%c0_135, %c64_136] : memref<256x144xf32, #tpu.memory_space<vmem>>, vector<64x16xf32>
    tpu.vector_store %arg14[%c0_135, %c64_136], %152 {strides = array<i32>} : memref<256x144xf32, #tpu.memory_space<vmem>>, vector<64x16xf32>,
    %c10 = arith.constant 10 : index
    %c0_137 = arith.constant 0 : index
    %154 = vector.load %arg13[%c10, %c0_137] : memref<290x16xf32, #tpu.memory_space<vmem>>, vector<64x16xf32>
    %cst_138 = arith.constant 0.000000e+00 : f32
    %155 = vector.broadcast %cst_138 : f32 to vector<64x16xf32>
    %156 = arith.select %41, %154, %155 : vector<64x16xi1>, vector<64x16xf32>
    %c0_139 = arith.constant 0 : index
    %c80_140 = arith.constant 80 : index
    %157 = vector.load %arg14[%c0_139, %c80_140] : memref<256x144xf32, #tpu.memory_space<vmem>>, vector<64x16xf32>
    tpu.vector_store %arg14[%c0_139, %c80_140], %156 {strides = array<i32>} : memref<256x144xf32, #tpu.memory_space<vmem>>, vector<64x16xf32>,
    %c16_141 = arith.constant 16 : index
    %c0_142 = arith.constant 0 : index
    %158 = vector.load %arg13[%c16_141, %c0_142] : memref<290x16xf32, #tpu.memory_space<vmem>>, vector<64x16xf32>
    %cst_143 = arith.constant 0.000000e+00 : f32
    %159 = vector.broadcast %cst_143 : f32 to vector<64x16xf32>
    %160 = arith.select %39, %158, %159 : vector<64x16xi1>, vector<64x16xf32>
    %c0_144 = arith.constant 0 : index
    %c96_145 = arith.constant 96 : index
    %161 = vector.load %arg14[%c0_144, %c96_145] : memref<256x144xf32, #tpu.memory_space<vmem>>, vector<64x16xf32>
    tpu.vector_store %arg14[%c0_144, %c96_145], %160 {strides = array<i32>} : memref<256x144xf32, #tpu.memory_space<vmem>>, vector<64x16xf32>,
    %c17_146 = arith.constant 17 : index
    %c0_147 = arith.constant 0 : index
    %162 = vector.load %arg13[%c17_146, %c0_147] : memref<290x16xf32, #tpu.memory_space<vmem>>, vector<64x16xf32>
    %c0_148 = arith.constant 0 : index
    %c112_149 = arith.constant 112 : index
    %163 = vector.load %arg14[%c0_148, %c112_149] : memref<256x144xf32, #tpu.memory_space<vmem>>, vector<64x16xf32>
    tpu.vector_store %arg14[%c0_148, %c112_149], %162 {strides = array<i32>} : memref<256x144xf32, #tpu.memory_space<vmem>>, vector<64x16xf32>,
    %c18_150 = arith.constant 18 : index
    %c0_151 = arith.constant 0 : index
    %164 = vector.load %arg13[%c18_150, %c0_151] : memref<290x16xf32, #tpu.memory_space<vmem>>, vector<64x16xf32>
    %cst_152 = arith.constant 0.000000e+00 : f32
    %165 = vector.broadcast %cst_152 : f32 to vector<64x16xf32>
    %166 = arith.select %41, %164, %165 : vector<64x16xi1>, vector<64x16xf32>
    %c0_153 = arith.constant 0 : index
    %c128_154 = arith.constant 128 : index
    %167 = vector.load %arg14[%c0_153, %c128_154] : memref<256x144xf32, #tpu.memory_space<vmem>>, vector<64x16xf32>
    tpu.vector_store %arg14[%c0_153, %c128_154], %166 {strides = array<i32>} : memref<256x144xf32, #tpu.memory_space<vmem>>, vector<64x16xf32>,
    %c0_155 = arith.constant 0 : index
    %c0_156 = arith.constant 0 : index
    %168 = vector.load %arg14[%c0_155, %c0_156] : memref<256x144xf32, #tpu.memory_space<vmem>>, vector<64x144xf32>
    %c0_157 = arith.constant 0 : index
    %c0_158 = arith.constant 0 : index
    %169 = vector.load %arg6[%c0_157, %c0_158] : memref<144x16xf32, #tpu.memory_space<vmem>>, vector<144x16xf32>
    %cst_159 = arith.constant dense<0.000000e+00> : vector<64x16xf32>
    %170 = tpu.matmul %168, %169, %cst_159 {dimension_numbers = #tpu.dot_dimension_numbers<[1], [0], [0], [1], [0, 0, 1, 1], [], []>} : vector<64x144xf32>, vector<144x16xf32>, vector<64x16xf32> -> vector<64x16xf32>
    %c0_160 = arith.constant 0 : index
    %c0_161 = arith.constant 0 : index
    %171 = vector.load %arg7[%c0_160, %c0_161] : memref<1x16xf32, #tpu.memory_space<vmem>>, vector<1x16xf32>
    %172 = vector.broadcast %171 : vector<1x16xf32> to vector<64x16xf32>
    %173 = arith.addf %170, %172 : vector<64x16xf32>
    %cst_162 = arith.constant 0.000000e+00 : f32
    %174 = vector.broadcast %cst_162 : f32 to vector<64x16xf32>
    %175 = arith.maximumf %173, %174 : vector<64x16xf32>
    %c9_163 = arith.constant 9 : index
    %c0_164 = arith.constant 0 : index
    %176 = vector.load %arg13[%c9_163, %c0_164] : memref<290x16xf32, #tpu.memory_space<vmem>>, vector<64x16xf32>
    tpu.vector_store %arg13[%c9_163, %c0_164], %175 {strides = array<i32>} : memref<290x16xf32, #tpu.memory_space<vmem>>, vector<64x16xf32>,
    %c0_165 = arith.constant 0 : index
    %c0_166 = arith.constant 0 : index
    %177 = vector.load %arg13[%c0_165, %c0_166] : memref<290x16xf32, #tpu.memory_space<vmem>>, vector<64x16xf32>
    %cst_167 = arith.constant 0.000000e+00 : f32
    %178 = vector.broadcast %cst_167 : f32 to vector<64x16xf32>
    %179 = arith.select %39, %177, %178 : vector<64x16xi1>, vector<64x16xf32>
    %c0_168 = arith.constant 0 : index
    %c0_169 = arith.constant 0 : index
    %180 = vector.load %arg14[%c0_168, %c0_169] : memref<256x144xf32, #tpu.memory_space<vmem>>, vector<64x16xf32>
    tpu.vector_store %arg14[%c0_168, %c0_169], %179 {strides = array<i32>} : memref<256x144xf32, #tpu.memory_space<vmem>>, vector<64x16xf32>,
    %c1_170 = arith.constant 1 : index
    %c0_171 = arith.constant 0 : index
    %181 = vector.load %arg13[%c1_170, %c0_171] : memref<290x16xf32, #tpu.memory_space<vmem>>, vector<64x16xf32>
    %c0_172 = arith.constant 0 : index
    %c16_173 = arith.constant 16 : index
    %182 = vector.load %arg14[%c0_172, %c16_173] : memref<256x144xf32, #tpu.memory_space<vmem>>, vector<64x16xf32>
    tpu.vector_store %arg14[%c0_172, %c16_173], %181 {strides = array<i32>} : memref<256x144xf32, #tpu.memory_space<vmem>>, vector<64x16xf32>,
    %c2_174 = arith.constant 2 : index
    %c0_175 = arith.constant 0 : index
    %183 = vector.load %arg13[%c2_174, %c0_175] : memref<290x16xf32, #tpu.memory_space<vmem>>, vector<64x16xf32>
    %cst_176 = arith.constant 0.000000e+00 : f32
    %184 = vector.broadcast %cst_176 : f32 to vector<64x16xf32>
    %185 = arith.select %41, %183, %184 : vector<64x16xi1>, vector<64x16xf32>
    %c0_177 = arith.constant 0 : index
    %c32_178 = arith.constant 32 : index
    %186 = vector.load %arg14[%c0_177, %c32_178] : memref<256x144xf32, #tpu.memory_space<vmem>>, vector<64x16xf32>
    tpu.vector_store %arg14[%c0_177, %c32_178], %185 {strides = array<i32>} : memref<256x144xf32, #tpu.memory_space<vmem>>, vector<64x16xf32>,
    %c8_179 = arith.constant 8 : index
    %c0_180 = arith.constant 0 : index
    %187 = vector.load %arg13[%c8_179, %c0_180] : memref<290x16xf32, #tpu.memory_space<vmem>>, vector<64x16xf32>
    %cst_181 = arith.constant 0.000000e+00 : f32
    %188 = vector.broadcast %cst_181 : f32 to vector<64x16xf32>
    %189 = arith.select %39, %187, %188 : vector<64x16xi1>, vector<64x16xf32>
    %c0_182 = arith.constant 0 : index
    %c48_183 = arith.constant 48 : index
    %190 = vector.load %arg14[%c0_182, %c48_183] : memref<256x144xf32, #tpu.memory_space<vmem>>, vector<64x16xf32>
    tpu.vector_store %arg14[%c0_182, %c48_183], %189 {strides = array<i32>} : memref<256x144xf32, #tpu.memory_space<vmem>>, vector<64x16xf32>,
    %c9_184 = arith.constant 9 : index
    %c0_185 = arith.constant 0 : index
    %191 = vector.load %arg13[%c9_184, %c0_185] : memref<290x16xf32, #tpu.memory_space<vmem>>, vector<64x16xf32>
    %c0_186 = arith.constant 0 : index
    %c64_187 = arith.constant 64 : index
    %192 = vector.load %arg14[%c0_186, %c64_187] : memref<256x144xf32, #tpu.memory_space<vmem>>, vector<64x16xf32>
    tpu.vector_store %arg14[%c0_186, %c64_187], %191 {strides = array<i32>} : memref<256x144xf32, #tpu.memory_space<vmem>>, vector<64x16xf32>,
    %c10_188 = arith.constant 10 : index
    %c0_189 = arith.constant 0 : index
    %193 = vector.load %arg13[%c10_188, %c0_189] : memref<290x16xf32, #tpu.memory_space<vmem>>, vector<64x16xf32>
    %cst_190 = arith.constant 0.000000e+00 : f32
    %194 = vector.broadcast %cst_190 : f32 to vector<64x16xf32>
    %195 = arith.select %41, %193, %194 : vector<64x16xi1>, vector<64x16xf32>
    %c0_191 = arith.constant 0 : index
    %c80_192 = arith.constant 80 : index
    %196 = vector.load %arg14[%c0_191, %c80_192] : memref<256x144xf32, #tpu.memory_space<vmem>>, vector<64x16xf32>
    tpu.vector_store %arg14[%c0_191, %c80_192], %195 {strides = array<i32>} : memref<256x144xf32, #tpu.memory_space<vmem>>, vector<64x16xf32>,
    %c16_193 = arith.constant 16 : index
    %c0_194 = arith.constant 0 : index
    %197 = vector.load %arg13[%c16_193, %c0_194] : memref<290x16xf32, #tpu.memory_space<vmem>>, vector<64x16xf32>
    %cst_195 = arith.constant 0.000000e+00 : f32
    %198 = vector.broadcast %cst_195 : f32 to vector<64x16xf32>
    %199 = arith.select %39, %197, %198 : vector<64x16xi1>, vector<64x16xf32>
    %c0_196 = arith.constant 0 : index
    %c96_197 = arith.constant 96 : index
    %200 = vector.load %arg14[%c0_196, %c96_197] : memref<256x144xf32, #tpu.memory_space<vmem>>, vector<64x16xf32>
    tpu.vector_store %arg14[%c0_196, %c96_197], %199 {strides = array<i32>} : memref<256x144xf32, #tpu.memory_space<vmem>>, vector<64x16xf32>,
    %c17_198 = arith.constant 17 : index
    %c0_199 = arith.constant 0 : index
    %201 = vector.load %arg13[%c17_198, %c0_199] : memref<290x16xf32, #tpu.memory_space<vmem>>, vector<64x16xf32>
    %c0_200 = arith.constant 0 : index
    %c112_201 = arith.constant 112 : index
    %202 = vector.load %arg14[%c0_200, %c112_201] : memref<256x144xf32, #tpu.memory_space<vmem>>, vector<64x16xf32>
    tpu.vector_store %arg14[%c0_200, %c112_201], %201 {strides = array<i32>} : memref<256x144xf32, #tpu.memory_space<vmem>>, vector<64x16xf32>,
    %c18_202 = arith.constant 18 : index
    %c0_203 = arith.constant 0 : index
    %203 = vector.load %arg13[%c18_202, %c0_203] : memref<290x16xf32, #tpu.memory_space<vmem>>, vector<64x16xf32>
    %cst_204 = arith.constant 0.000000e+00 : f32
    %204 = vector.broadcast %cst_204 : f32 to vector<64x16xf32>
    %205 = arith.select %41, %203, %204 : vector<64x16xi1>, vector<64x16xf32>
    %c0_205 = arith.constant 0 : index
    %c128_206 = arith.constant 128 : index
    %206 = vector.load %arg14[%c0_205, %c128_206] : memref<256x144xf32, #tpu.memory_space<vmem>>, vector<64x16xf32>
    tpu.vector_store %arg14[%c0_205, %c128_206], %205 {strides = array<i32>} : memref<256x144xf32, #tpu.memory_space<vmem>>, vector<64x16xf32>,
    %c0_207 = arith.constant 0 : index
    %c0_208 = arith.constant 0 : index
    %207 = vector.load %arg14[%c0_207, %c0_208] : memref<256x144xf32, #tpu.memory_space<vmem>>, vector<64x144xf32>
    %c0_209 = arith.constant 0 : index
    %c0_210 = arith.constant 0 : index
    %208 = vector.load %arg8[%c0_209, %c0_210] : memref<144x16xf32, #tpu.memory_space<vmem>>, vector<144x16xf32>
    %cst_211 = arith.constant dense<0.000000e+00> : vector<64x16xf32>
    %209 = tpu.matmul %207, %208, %cst_211 {dimension_numbers = #tpu.dot_dimension_numbers<[1], [0], [0], [1], [0, 0, 1, 1], [], []>} : vector<64x144xf32>, vector<144x16xf32>, vector<64x16xf32> -> vector<64x16xf32>
    %c0_212 = arith.constant 0 : index
    %c0_213 = arith.constant 0 : index
    %210 = vector.load %arg9[%c0_212, %c0_213] : memref<1x16xf32, #tpu.memory_space<vmem>>, vector<1x16xf32>
    %211 = vector.broadcast %210 : vector<1x16xf32> to vector<64x16xf32>
    %212 = arith.addf %209, %211 : vector<64x16xf32>
    %213 = vector.shape_cast %212 : vector<64x16xf32> to vector<4x2x8x16xf32>
    %214 = vector.extract_strided_slice %213 {offsets = [0, 0, 0, 0], sizes = [4, 1, 8, 16], strides = [1, 1, 1, 1]} : vector<4x2x8x16xf32> to vector<4x1x8x16xf32>
    %215 = vector.shape_cast %214 : vector<4x1x8x16xf32> to vector<4x8x16xf32>
    %216 = vector.extract_strided_slice %213 {offsets = [0, 1, 0, 0], sizes = [4, 1, 8, 16], strides = [1, 1, 1, 1]} : vector<4x2x8x16xf32> to vector<4x1x8x16xf32>
    %217 = vector.shape_cast %216 : vector<4x1x8x16xf32> to vector<4x8x16xf32>
    %218 = arith.maximumf %215, %217 : vector<4x8x16xf32>
    %219 = vector.shape_cast %218 : vector<4x8x16xf32> to vector<32x16xf32>
    %c0_214 = arith.constant 0 : index
    %c0_215 = arith.constant 0 : index
    %220 = vector.load %arg15[%c0_214, %c0_215] : memref<128x16xf32, #tpu.memory_space<vmem>>, vector<32x16xf32>
    tpu.vector_store %arg15[%c0_214, %c0_215], %219 {strides = array<i32>} : memref<128x16xf32, #tpu.memory_space<vmem>>, vector<32x16xf32>,
    %c0_216 = arith.constant 0 : index
    %c0_217 = arith.constant 0 : index
    %221 = tpu.strided_load %arg15[%c0_216, %c0_217] {strides = array<i32: 2, 1>} : memref<128x16xf32, #tpu.memory_space<vmem>>, vector<16x16xf32>
    %c1_218 = arith.constant 1 : index
    %c0_219 = arith.constant 0 : index
    %222 = tpu.strided_load %arg15[%c1_218, %c0_219] {strides = array<i32: 2, 1>} : memref<128x16xf32, #tpu.memory_space<vmem>>, vector<16x16xf32>
    %223 = arith.maximumf %221, %222 : vector<16x16xf32>
    %224 = vector.extract_strided_slice %223 {offsets = [0, 0], sizes = [1, 16], strides = [1, 1]} : vector<16x16xf32> to vector<1x16xf32>
    %c0_220 = arith.constant 0 : index
    %c0_221 = arith.constant 0 : index
    %225 = vector.load %arg16[%c0_220, %c0_221] : memref<8x256xf32, #tpu.memory_space<vmem>>, vector<1x16xf32>
    tpu.vector_store %arg16[%c0_220, %c0_221], %224 {strides = array<i32>} : memref<8x256xf32, #tpu.memory_space<vmem>>, vector<1x16xf32>,
    %226 = vector.extract_strided_slice %223 {offsets = [1, 0], sizes = [1, 16], strides = [1, 1]} : vector<16x16xf32> to vector<1x16xf32>
    %c0_222 = arith.constant 0 : index
    %c16_223 = arith.constant 16 : index
    %227 = vector.load %arg16[%c0_222, %c16_223] : memref<8x256xf32, #tpu.memory_space<vmem>>, vector<1x16xf32>
    tpu.vector_store %arg16[%c0_222, %c16_223], %226 {strides = array<i32>} : memref<8x256xf32, #tpu.memory_space<vmem>>, vector<1x16xf32>,
    %228 = vector.extract_strided_slice %223 {offsets = [2, 0], sizes = [1, 16], strides = [1, 1]} : vector<16x16xf32> to vector<1x16xf32>
    %c0_224 = arith.constant 0 : index
    %c32_225 = arith.constant 32 : index
    %229 = vector.load %arg16[%c0_224, %c32_225] : memref<8x256xf32, #tpu.memory_space<vmem>>, vector<1x16xf32>
    tpu.vector_store %arg16[%c0_224, %c32_225], %228 {strides = array<i32>} : memref<8x256xf32, #tpu.memory_space<vmem>>, vector<1x16xf32>,
    %230 = vector.extract_strided_slice %223 {offsets = [3, 0], sizes = [1, 16], strides = [1, 1]} : vector<16x16xf32> to vector<1x16xf32>
    %c0_226 = arith.constant 0 : index
    %c48_227 = arith.constant 48 : index
    %231 = vector.load %arg16[%c0_226, %c48_227] : memref<8x256xf32, #tpu.memory_space<vmem>>, vector<1x16xf32>
    tpu.vector_store %arg16[%c0_226, %c48_227], %230 {strides = array<i32>} : memref<8x256xf32, #tpu.memory_space<vmem>>, vector<1x16xf32>,
    %232 = vector.extract_strided_slice %223 {offsets = [4, 0], sizes = [1, 16], strides = [1, 1]} : vector<16x16xf32> to vector<1x16xf32>
    %c0_228 = arith.constant 0 : index
    %c64_229 = arith.constant 64 : index
    %233 = vector.load %arg16[%c0_228, %c64_229] : memref<8x256xf32, #tpu.memory_space<vmem>>, vector<1x16xf32>
    tpu.vector_store %arg16[%c0_228, %c64_229], %232 {strides = array<i32>} : memref<8x256xf32, #tpu.memory_space<vmem>>, vector<1x16xf32>,
    %234 = vector.extract_strided_slice %223 {offsets = [5, 0], sizes = [1, 16], strides = [1, 1]} : vector<16x16xf32> to vector<1x16xf32>
    %c0_230 = arith.constant 0 : index
    %c80_231 = arith.constant 80 : index
    %235 = vector.load %arg16[%c0_230, %c80_231] : memref<8x256xf32, #tpu.memory_space<vmem>>, vector<1x16xf32>
    tpu.vector_store %arg16[%c0_230, %c80_231], %234 {strides = array<i32>} : memref<8x256xf32, #tpu.memory_space<vmem>>, vector<1x16xf32>,
    %236 = vector.extract_strided_slice %223 {offsets = [6, 0], sizes = [1, 16], strides = [1, 1]} : vector<16x16xf32> to vector<1x16xf32>
    %c0_232 = arith.constant 0 : index
    %c96_233 = arith.constant 96 : index
    %237 = vector.load %arg16[%c0_232, %c96_233] : memref<8x256xf32, #tpu.memory_space<vmem>>, vector<1x16xf32>
    tpu.vector_store %arg16[%c0_232, %c96_233], %236 {strides = array<i32>} : memref<8x256xf32, #tpu.memory_space<vmem>>, vector<1x16xf32>,
    %238 = vector.extract_strided_slice %223 {offsets = [7, 0], sizes = [1, 16], strides = [1, 1]} : vector<16x16xf32> to vector<1x16xf32>
    %c0_234 = arith.constant 0 : index
    %c112_235 = arith.constant 112 : index
    %239 = vector.load %arg16[%c0_234, %c112_235] : memref<8x256xf32, #tpu.memory_space<vmem>>, vector<1x16xf32>
    tpu.vector_store %arg16[%c0_234, %c112_235], %238 {strides = array<i32>} : memref<8x256xf32, #tpu.memory_space<vmem>>, vector<1x16xf32>,
    %240 = vector.extract_strided_slice %223 {offsets = [8, 0], sizes = [1, 16], strides = [1, 1]} : vector<16x16xf32> to vector<1x16xf32>
    %c0_236 = arith.constant 0 : index
    %c128_237 = arith.constant 128 : index
    %241 = vector.load %arg16[%c0_236, %c128_237] : memref<8x256xf32, #tpu.memory_space<vmem>>, vector<1x16xf32>
    tpu.vector_store %arg16[%c0_236, %c128_237], %240 {strides = array<i32>} : memref<8x256xf32, #tpu.memory_space<vmem>>, vector<1x16xf32>,
    %242 = vector.extract_strided_slice %223 {offsets = [9, 0], sizes = [1, 16], strides = [1, 1]} : vector<16x16xf32> to vector<1x16xf32>
    %c0_238 = arith.constant 0 : index
    %c144 = arith.constant 144 : index
    %243 = vector.load %arg16[%c0_238, %c144] : memref<8x256xf32, #tpu.memory_space<vmem>>, vector<1x16xf32>
    tpu.vector_store %arg16[%c0_238, %c144], %242 {strides = array<i32>} : memref<8x256xf32, #tpu.memory_space<vmem>>, vector<1x16xf32>,
    %244 = vector.extract_strided_slice %223 {offsets = [10, 0], sizes = [1, 16], strides = [1, 1]} : vector<16x16xf32> to vector<1x16xf32>
    %c0_239 = arith.constant 0 : index
    %c160 = arith.constant 160 : index
    %245 = vector.load %arg16[%c0_239, %c160] : memref<8x256xf32, #tpu.memory_space<vmem>>, vector<1x16xf32>
    tpu.vector_store %arg16[%c0_239, %c160], %244 {strides = array<i32>} : memref<8x256xf32, #tpu.memory_space<vmem>>, vector<1x16xf32>,
    %246 = vector.extract_strided_slice %223 {offsets = [11, 0], sizes = [1, 16], strides = [1, 1]} : vector<16x16xf32> to vector<1x16xf32>
    %c0_240 = arith.constant 0 : index
    %c176 = arith.constant 176 : index
    %247 = vector.load %arg16[%c0_240, %c176] : memref<8x256xf32, #tpu.memory_space<vmem>>, vector<1x16xf32>
    tpu.vector_store %arg16[%c0_240, %c176], %246 {strides = array<i32>} : memref<8x256xf32, #tpu.memory_space<vmem>>, vector<1x16xf32>,
    %248 = vector.extract_strided_slice %223 {offsets = [12, 0], sizes = [1, 16], strides = [1, 1]} : vector<16x16xf32> to vector<1x16xf32>
    %c0_241 = arith.constant 0 : index
    %c192 = arith.constant 192 : index
    %249 = vector.load %arg16[%c0_241, %c192] : memref<8x256xf32, #tpu.memory_space<vmem>>, vector<1x16xf32>
    tpu.vector_store %arg16[%c0_241, %c192], %248 {strides = array<i32>} : memref<8x256xf32, #tpu.memory_space<vmem>>, vector<1x16xf32>,
    %250 = vector.extract_strided_slice %223 {offsets = [13, 0], sizes = [1, 16], strides = [1, 1]} : vector<16x16xf32> to vector<1x16xf32>
    %c0_242 = arith.constant 0 : index
    %c208 = arith.constant 208 : index
    %251 = vector.load %arg16[%c0_242, %c208] : memref<8x256xf32, #tpu.memory_space<vmem>>, vector<1x16xf32>
    tpu.vector_store %arg16[%c0_242, %c208], %250 {strides = array<i32>} : memref<8x256xf32, #tpu.memory_space<vmem>>, vector<1x16xf32>,
    %252 = vector.extract_strided_slice %223 {offsets = [14, 0], sizes = [1, 16], strides = [1, 1]} : vector<16x16xf32> to vector<1x16xf32>
    %c0_243 = arith.constant 0 : index
    %c224 = arith.constant 224 : index
    %253 = vector.load %arg16[%c0_243, %c224] : memref<8x256xf32, #tpu.memory_space<vmem>>, vector<1x16xf32>
    tpu.vector_store %arg16[%c0_243, %c224], %252 {strides = array<i32>} : memref<8x256xf32, #tpu.memory_space<vmem>>, vector<1x16xf32>,
    %254 = vector.extract_strided_slice %223 {offsets = [15, 0], sizes = [1, 16], strides = [1, 1]} : vector<16x16xf32> to vector<1x16xf32>
    %c0_244 = arith.constant 0 : index
    %c240 = arith.constant 240 : index
    %255 = vector.load %arg16[%c0_244, %c240] : memref<8x256xf32, #tpu.memory_space<vmem>>, vector<1x16xf32>
    tpu.vector_store %arg16[%c0_244, %c240], %254 {strides = array<i32>} : memref<8x256xf32, #tpu.memory_space<vmem>>, vector<1x16xf32>,
    %c0_245 = arith.constant 0 : index
    %c0_246 = arith.constant 0 : index
    %256 = vector.load %arg16[%c0_245, %c0_246] : memref<8x256xf32, #tpu.memory_space<vmem>>, vector<1x256xf32>
    %c0_247 = arith.constant 0 : index
    %c0_248 = arith.constant 0 : index
    %257 = vector.load %arg10[%c0_247, %c0_248] : memref<256x128xf32, #tpu.memory_space<vmem>>, vector<256x128xf32>
    %cst_249 = arith.constant dense<0.000000e+00> : vector<1x128xf32>
    %258 = tpu.matmul %256, %257, %cst_249 {dimension_numbers = #tpu.dot_dimension_numbers<[1], [0], [0], [1], [0, 0, 1, 1], [], []>} : vector<1x256xf32>, vector<256x128xf32>, vector<1x128xf32> -> vector<1x128xf32>
    %c0_250 = arith.constant 0 : index
    %c0_251 = arith.constant 0 : index
    %259 = vector.load %arg11[%c0_250, %c0_251] : memref<1x128xf32, #tpu.memory_space<vmem>>, vector<1x128xf32>
    %260 = arith.addf %258, %259 : vector<1x128xf32>
    %c0_252 = arith.constant 0 : index
    %c0_253 = arith.constant 0 : index
    %c0_254 = arith.constant 0 : index
    %261 = vector.load %arg12[%c0_252, %c0_253, %c0_254] : memref<1x1x128xf32, #tpu.memory_space<vmem>>, vector<1x1x128xf32>
    %262 = vector.shape_cast %261 : vector<1x1x128xf32> to vector<1x128xf32>
    %263 = vector.shape_cast %260 : vector<1x128xf32> to vector<1x1x128xf32>
    tpu.vector_store %arg12[%c0_252, %c0_253, %c0_254], %263 {strides = array<i32>} : memref<1x1x128xf32, #tpu.memory_space<vmem>>, vector<1x1x128xf32>,
    return
  }
  func.func @transform_0(%arg0: i32) -> (i32, i32, i32) {
    %c0_i32 = arith.constant 0 : i32
    %c0_i32_0 = arith.constant 0 : i32
    %c0_i32_1 = arith.constant 0 : i32
    return %arg0, %c0_i32, %c0_i32_0 : i32, i32, i32
  }
  func.func @transform_1(%arg0: i32) -> (i32, i32) {
    %c0_i32 = arith.constant 0 : i32
    %c0_i32_0 = arith.constant 0 : i32
    %c0_i32_1 = arith.constant 0 : i32
    return %c0_i32, %c0_i32_0 : i32, i32
  }
  func.func @transform_2(%arg0: i32) -> (i32, i32) {
    %c0_i32 = arith.constant 0 : i32
    %c0_i32_0 = arith.constant 0 : i32
    %c0_i32_1 = arith.constant 0 : i32
    return %c0_i32, %c0_i32_0 : i32, i32
  }
  func.func @transform_3(%arg0: i32) -> (i32, i32) {
    %c0_i32 = arith.constant 0 : i32
    %c0_i32_0 = arith.constant 0 : i32
    %c0_i32_1 = arith.constant 0 : i32
    return %c0_i32, %c0_i32_0 : i32, i32
  }
  func.func @transform_4(%arg0: i32) -> (i32, i32) {
    %c0_i32 = arith.constant 0 : i32
    %c0_i32_0 = arith.constant 0 : i32
    %c0_i32_1 = arith.constant 0 : i32
    return %c0_i32, %c0_i32_0 : i32, i32
  }
  func.func @transform_5(%arg0: i32) -> (i32, i32) {
    %c0_i32 = arith.constant 0 : i32
    %c0_i32_0 = arith.constant 0 : i32
    %c0_i32_1 = arith.constant 0 : i32
    return %c0_i32, %c0_i32_0 : i32, i32
  }
  func.func @transform_6(%arg0: i32) -> (i32, i32) {
    %c0_i32 = arith.constant 0 : i32
    %c0_i32_0 = arith.constant 0 : i32
    %c0_i32_1 = arith.constant 0 : i32
    return %c0_i32, %c0_i32_0 : i32, i32
  }
  func.func @transform_7(%arg0: i32) -> (i32, i32) {
    %c0_i32 = arith.constant 0 : i32
    %c0_i32_0 = arith.constant 0 : i32
    %c0_i32_1 = arith.constant 0 : i32
    return %c0_i32, %c0_i32_0 : i32, i32
  }
  func.func @transform_8(%arg0: i32) -> (i32, i32) {
    %c0_i32 = arith.constant 0 : i32
    %c0_i32_0 = arith.constant 0 : i32
    %c0_i32_1 = arith.constant 0 : i32
    return %c0_i32, %c0_i32_0 : i32, i32
  }
  func.func @transform_9(%arg0: i32) -> (i32, i32) {
    %c0_i32 = arith.constant 0 : i32
    %c0_i32_0 = arith.constant 0 : i32
    %c0_i32_1 = arith.constant 0 : i32
    return %c0_i32, %c0_i32_0 : i32, i32
  }
  func.func @transform_10(%arg0: i32) -> (i32, i32) {
    %c0_i32 = arith.constant 0 : i32
    %c0_i32_0 = arith.constant 0 : i32
    %c0_i32_1 = arith.constant 0 : i32
    return %c0_i32, %c0_i32_0 : i32, i32
  }
  func.func @transform_11(%arg0: i32) -> (i32, i32, i32) {
    %c0_i32 = arith.constant 0 : i32
    %c0_i32_0 = arith.constant 0 : i32
    %c0_i32_1 = arith.constant 0 : i32
    return %arg0, %c0_i32, %c0_i32_0 : i32, i32, i32
  }
}

</mosaic_0001>

<llo_original>
// kernel: forward.1
$region0: #{forward.1}
  #allocation0 [shape = 'u32[]', space=smem, size = 0x4, offset = 0x4, fixed_abs, tag = 'smem constant byte address 0x4 - core index']
  #allocation1 [shape = 'u32[144,128]{1,0:T(1,128)}', space=vmem, size = 0x12000, scoped, tag = 'internal scratch']
  #allocation2 [shape = 'f32[290,16]{1,0:T(8,128)}', space=vmem, size = 0x25000, scoped, tag = 'scratch operand']
  #allocation3 [shape = 'f32[256,144]{1,0:T(8,128)}', space=vmem, size = 0x40000, scoped, tag = 'scratch operand']
  #allocation4 [shape = 'f32[128,16]{1,0:T(8,128)}', space=vmem, size = 0x10000, scoped, tag = 'scratch operand']
  #allocation5 [shape = 'f32[8,256]{1,0:T(8,128)}', space=vmem, size = 0x2000, scoped, tag = 'scratch operand']
  %s0 = inlined_call_operand.vmem [shape: f32[2,256,16], index: 0, kind: input, shape index: {}]
  %s1 = inlined_call_operand.vmem [shape: f32[144,16], index: 1, kind: input, shape index: {}]
  %s2 = inlined_call_operand.vmem [shape: f32[1,16], index: 2, kind: input, shape index: {}]
  %s3 = inlined_call_operand.vmem [shape: f32[144,16], index: 3, kind: input, shape index: {}]
  %s4 = inlined_call_operand.vmem [shape: f32[1,16], index: 4, kind: input, shape index: {}]
  %s5 = inlined_call_operand.vmem [shape: f32[144,16], index: 5, kind: input, shape index: {}]
  %s6 = inlined_call_operand.vmem [shape: f32[1,16], index: 6, kind: input, shape index: {}]
  %s7 = inlined_call_operand.vmem [shape: f32[144,16], index: 7, kind: input, shape index: {}]
  %s8 = inlined_call_operand.vmem [shape: f32[1,16], index: 8, kind: input, shape index: {}]
  %s9 = inlined_call_operand.vmem [shape: f32[256,128], index: 9, kind: input, shape index: {}]
  %s10 = inlined_call_operand.vmem [shape: f32[1,128], index: 10, kind: input, shape index: {}]
  %s11 = inlined_call_operand.hbm [shape: f32[2,1,128], index: 11, kind: output, shape index: {}]
  %s12 = sld [smem:[#allocation0]]
  $region77: #{forward.1} parent=0
    _
  %s14 = ssub.s32 1, %s12
  %s15 = scalar_select 0, %s14, %s12
  $region1: #{forward.1} parent=0
    #allocation6 [shape = 'u8[1024]{0}', space=vmem, size = 0x400, scoped, tag = 'output window, operand 0']
    #allocation7 [shape = 's32[2]{0}', space=sflag, size = 0x8, scoped, tag = 'scoped memory for forward.1']
    %16 = vsyncpa [#allocation7], 0
    %s17 = scalar_lea.sflag [#allocation7], 1
    %18 = vsyncpa %s17, 0
    loop: start=0, step=1, limit=4
    $region2: #{forward.1} parent=1 // loop_pre_header
      _
    $region3: #{forward.1} parent=1 // loop_header
      %s20 = sphi 0, %s24
      %p21 = scmp.ge.s32.totalorder %s20, 4
      %s30 = sphi 0, %s32
      %s33 = sphi 0, %s30
      %s34 = sphi 0, %s33
      %s50 = sphi 0, %s34
      %s54 = sphi 0, %s54
      %s56 = sphi 0, %s54
      %s57 = sphi 0, %s56
      %s71 = sphi 0, %s57
      %s75 = sphi 0, %s75
      %s77 = sphi 0, %s75
      %s78 = sphi 0, %s77
      %s92 = sphi 0, %s78
      %s96 = sphi 0, %s96
      %s98 = sphi 0, %s96
      %s99 = sphi 0, %s98
      %s113 = sphi 0, %s99
      %s117 = sphi 0, %s117
      %s119 = sphi 0, %s117
      %s120 = sphi 0, %s119
      %s134 = sphi 0, %s120
      %s138 = sphi 0, %s138
      %s140 = sphi 0, %s138
      %s141 = sphi 0, %s140
      %s155 = sphi 0, %s141
      %s159 = sphi 0, %s159
      %s161 = sphi 0, %s159
      %s162 = sphi 0, %s161
      %s176 = sphi 0, %s162
      %s180 = sphi 0, %s180
      %s182 = sphi 0, %s180
      %s183 = sphi 0, %s182
      %s197 = sphi 0, %s183
      %s201 = sphi 0, %s201
      %s203 = sphi 0, %s201
      %s204 = sphi 0, %s203
      %s218 = sphi 0, %s204
      %s222 = sphi 0, %s222
      %s224 = sphi 0, %s222
      %s225 = sphi 0, %s224
      %s239 = sphi 0, %s225
      %s243 = sphi 0, %s243
      %s245 = sphi 0, %s243
      %s246 = sphi 0, %s245
      %s260 = sphi 0, %s246
      %s266 = sphi 0, %s268
      %s269 = sphi 0, %s266
      %s270 = sphi 0, %s269
      %s286 = sphi 0, %s270
    $region4: #{forward.1} parent=1 // loop_header_branch
      %23 = sbr.rel (%p21) target = $region8
    $region5: #{forward.1} parent=1 // loop_body
      %s25 = ssub.s32 %s20, 1
      %s26 = ssub.s32 %s20, 2
      %s27 = sadd.s32 %s20, 1
      %s28 = ssub.s32 %s20, %s27
      %p29 = scmp.eq.s32.totalorder %s28, 0
      %s31 = sadd.s32 %s30, 1
      %s32 = scalar_select %p29, %s30, %s31
      %p35 = pneg %p29
      %p36 = scmp.eq.s32.totalorder %s20, 1
      %p37 = por %p35, %p36
      %p38 = scmp.ne.s32.totalorder %s30, %s33
      %p39 = scmp.eq.s32.totalorder %s20, 0
      %p40 = por %p38, %p39
      %p41 = scmp.ne.s32.totalorder %s30, %s33
      %p42 = scmp.eq.s32.totalorder %s25, 1
      %p43 = por %p41, %p42
      %p44 = scmp.ne.s32.totalorder %s33, %s34
      %p45 = scmp.eq.s32.totalorder %s25, 0
      %p46 = por %p44, %p45
      %p47 = scmp.ne.s32.totalorder %s33, %s34
      %p48 = scmp.eq.s32.totalorder %s26, 1
      %p49 = por %p47, %p48
      %p51 = scmp.ne.s32.totalorder %s34, %s50
      %p52 = scmp.eq.s32.totalorder %s26, 0
      %p53 = por %p51, %p52
      %s55 = sadd.s32 %s54, 1
      %p58 = scmp.eq.s32.totalorder %s20, 1
      %p59 = scmp.ne.s32.totalorder %s54, %s56
      %p60 = scmp.eq.s32.totalorder %s20, 0
      %p61 = por %p59, %p60
      %p62 = scmp.ne.s32.totalorder %s54, %s56
      %p63 = scmp.eq.s32.totalorder %s25, 1
      %p64 = por %p62, %p63
      %p65 = scmp.ne.s32.totalorder %s56, %s57
      %p66 = scmp.eq.s32.totalorder %s25, 0
      %p67 = por %p65, %p66
      %p68 = scmp.ne.s32.totalorder %s56, %s57
      %p69 = scmp.eq.s32.totalorder %s26, 1
      %p70 = por %p68, %p69
      %p72 = scmp.ne.s32.totalorder %s57, %s71
      %p73 = scmp.eq.s32.totalorder %s26, 0
      %p74 = por %p72, %p73
      %s76 = sadd.s32 %s75, 1
      %p79 = scmp.eq.s32.totalorder %s20, 1
      %p80 = scmp.ne.s32.totalorder %s75, %s77
      %p81 = scmp.eq.s32.totalorder %s20, 0
      %p82 = por %p80, %p81
      %p83 = scmp.ne.s32.totalorder %s75, %s77
      %p84 = scmp.eq.s32.totalorder %s25, 1
      %p85 = por %p83, %p84
      %p86 = scmp.ne.s32.totalorder %s77, %s78
      %p87 = scmp.eq.s32.totalorder %s25, 0
      %p88 = por %p86, %p87
      %p89 = scmp.ne.s32.totalorder %s77, %s78
      %p90 = scmp.eq.s32.totalorder %s26, 1
      %p91 = por %p89, %p90
      %p93 = scmp.ne.s32.totalorder %s78, %s92
      %p94 = scmp.eq.s32.totalorder %s26, 0
      %p95 = por %p93, %p94
      %s97 = sadd.s32 %s96, 1
      %p100 = scmp.eq.s32.totalorder %s20, 1
      %p101 = scmp.ne.s32.totalorder %s96, %s98
      %p102 = scmp.eq.s32.totalorder %s20, 0
      %p103 = por %p101, %p102
      %p104 = scmp.ne.s32.totalorder %s96, %s98
      %p105 = scmp.eq.s32.totalorder %s25, 1
      %p106 = por %p104, %p105
      %p107 = scmp.ne.s32.totalorder %s98, %s99
      %p108 = scmp.eq.s32.totalorder %s25, 0
      %p109 = por %p107, %p108
      %p110 = scmp.ne.s32.totalorder %s98, %s99
      %p111 = scmp.eq.s32.totalorder %s26, 1
      %p112 = por %p110, %p111
      %p114 = scmp.ne.s32.totalorder %s99, %s113
      %p115 = scmp.eq.s32.totalorder %s26, 0
      %p116 = por %p114, %p115
      %s118 = sadd.s32 %s117, 1
      %p121 = scmp.eq.s32.totalorder %s20, 1
      %p122 = scmp.ne.s32.totalorder %s117, %s119
      %p123 = scmp.eq.s32.totalorder %s20, 0
      %p124 = por %p122, %p123
      %p125 = scmp.ne.s32.totalorder %s117, %s119
      %p126 = scmp.eq.s32.totalorder %s25, 1
      %p127 = por %p125, %p126
      %p128 = scmp.ne.s32.totalorder %s119, %s120
      %p129 = scmp.eq.s32.totalorder %s25, 0
      %p130 = por %p128, %p129
      %p131 = scmp.ne.s32.totalorder %s119, %s120
      %p132 = scmp.eq.s32.totalorder %s26, 1
      %p133 = por %p131, %p132
      %p135 = scmp.ne.s32.totalorder %s120, %s134
      %p136 = scmp.eq.s32.totalorder %s26, 0
      %p137 = por %p135, %p136
      %s139 = sadd.s32 %s138, 1
      %p142 = scmp.eq.s32.totalorder %s20, 1
      %p143 = scmp.ne.s32.totalorder %s138, %s140
      %p144 = scmp.eq.s32.totalorder %s20, 0
      %p145 = por %p143, %p144
      %p146 = scmp.ne.s32.totalorder %s138, %s140
      %p147 = scmp.eq.s32.totalorder %s25, 1
      %p148 = por %p146, %p147
      %p149 = scmp.ne.s32.totalorder %s140, %s141
      %p150 = scmp.eq.s32.totalorder %s25, 0
      %p151 = por %p149, %p150
      %p152 = scmp.ne.s32.totalorder %s140, %s141
      %p153 = scmp.eq.s32.totalorder %s26, 1
      %p154 = por %p152, %p153
      %p156 = scmp.ne.s32.totalorder %s141, %s155
      %p157 = scmp.eq.s32.totalorder %s26, 0
      %p158 = por %p156, %p157
      %s160 = sadd.s32 %s159, 1
      %p163 = scmp.eq.s32.totalorder %s20, 1
      %p164 = scmp.ne.s32.totalorder %s159, %s161
      %p165 = scmp.eq.s32.totalorder %s20, 0
      %p166 = por %p164, %p165
      %p167 = scmp.ne.s32.totalorder %s159, %s161
      %p168 = scmp.eq.s32.totalorder %s25, 1
      %p169 = por %p167, %p168
      %p170 = scmp.ne.s32.totalorder %s161, %s162
      %p171 = scmp.eq.s32.totalorder %s25, 0
      %p172 = por %p170, %p171
      %p173 = scmp.ne.s32.totalorder %s161, %s162
      %p174 = scmp.eq.s32.totalorder %s26, 1
      %p175 = por %p173, %p174
      %p177 = scmp.ne.s32.totalorder %s162, %s176
      %p178 = scmp.eq.s32.totalorder %s26, 0
      %p179 = por %p177, %p178
      %s181 = sadd.s32 %s180, 1
      %p184 = scmp.eq.s32.totalorder %s20, 1
      %p185 = scmp.ne.s32.totalorder %s180, %s182
      %p186 = scmp.eq.s32.totalorder %s20, 0
      %p187 = por %p185, %p186
      %p188 = scmp.ne.s32.totalorder %s180, %s182
      %p189 = scmp.eq.s32.totalorder %s25, 1
      %p190 = por %p188, %p189
      %p191 = scmp.ne.s32.totalorder %s182, %s183
      %p192 = scmp.eq.s32.totalorder %s25, 0
      %p193 = por %p191, %p192
      %p194 = scmp.ne.s32.totalorder %s182, %s183
      %p195 = scmp.eq.s32.totalorder %s26, 1
      %p196 = por %p194, %p195
      %p198 = scmp.ne.s32.totalorder %s183, %s197
      %p199 = scmp.eq.s32.totalorder %s26, 0
      %p200 = por %p198, %p199
      %s202 = sadd.s32 %s201, 1
      %p205 = scmp.eq.s32.totalorder %s20, 1
      %p206 = scmp.ne.s32.totalorder %s201, %s203
      %p207 = scmp.eq.s32.totalorder %s20, 0
      %p208 = por %p206, %p207
      %p209 = scmp.ne.s32.totalorder %s201, %s203
      %p210 = scmp.eq.s32.totalorder %s25, 1
      %p211 = por %p209, %p210
      %p212 = scmp.ne.s32.totalorder %s203, %s204
      %p213 = scmp.eq.s32.totalorder %s25, 0
      %p214 = por %p212, %p213
      %p215 = scmp.ne.s32.totalorder %s203, %s204
      %p216 = scmp.eq.s32.totalorder %s26, 1
      %p217 = por %p215, %p216
      %p219 = scmp.ne.s32.totalorder %s204, %s218
      %p220 = scmp.eq.s32.totalorder %s26, 0
      %p221 = por %p219, %p220
      %s223 = sadd.s32 %s222, 1
      %p226 = scmp.eq.s32.totalorder %s20, 1
      %p227 = scmp.ne.s32.totalorder %s222, %s224
      %p228 = scmp.eq.s32.totalorder %s20, 0
      %p229 = por %p227, %p228
      %p230 = scmp.ne.s32.totalorder %s222, %s224
      %p231 = scmp.eq.s32.totalorder %s25, 1
      %p232 = por %p230, %p231
      %p233 = scmp.ne.s32.totalorder %s224, %s225
      %p234 = scmp.eq.s32.totalorder %s25, 0
      %p235 = por %p233, %p234
      %p236 = scmp.ne.s32.totalorder %s224, %s225
      %p237 = scmp.eq.s32.totalorder %s26, 1
      %p238 = por %p236, %p237
      %p240 = scmp.ne.s32.totalorder %s225, %s239
      %p241 = scmp.eq.s32.totalorder %s26, 0
      %p242 = por %p240, %p241
      %s244 = sadd.s32 %s243, 1
      %p247 = scmp.eq.s32.totalorder %s20, 1
      %p248 = scmp.ne.s32.totalorder %s243, %s245
      %p249 = scmp.eq.s32.totalorder %s20, 0
      %p250 = por %p248, %p249
      %p251 = scmp.ne.s32.totalorder %s243, %s245
      %p252 = scmp.eq.s32.totalorder %s25, 1
      %p253 = por %p251, %p252
      %p254 = scmp.ne.s32.totalorder %s245, %s246
      %p255 = scmp.eq.s32.totalorder %s25, 0
      %p256 = por %p254, %p255
      %p257 = scmp.ne.s32.totalorder %s245, %s246
      %p258 = scmp.eq.s32.totalorder %s26, 1
      %p259 = por %p257, %p258
      %p261 = scmp.ne.s32.totalorder %s246, %s260
      %p262 = scmp.eq.s32.totalorder %s26, 0
      %p263 = por %p261, %p262
      %s264 = ssub.s32 %s20, %s27
      %p265 = scmp.eq.s32.totalorder %s264, 0
      %s267 = sadd.s32 %s266, 1
      %s268 = scalar_select %p265, %s266, %s267
      %p271 = pneg %p265
      %p272 = scmp.eq.s32.totalorder %s20, 1
      %p273 = por %p271, %p272
      %p274 = scmp.ne.s32.totalorder %s266, %s269
      %p275 = scmp.eq.s32.totalorder %s20, 0
      %p276 = por %p274, %p275
      %p277 = scmp.ne.s32.totalorder %s266, %s269
      %p278 = scmp.eq.s32.totalorder %s25, 1
      %p279 = por %p277, %p278
      %p280 = scmp.ne.s32.totalorder %s269, %s270
      %p281 = scmp.eq.s32.totalorder %s25, 0
      %p282 = por %p280, %p281
      %p283 = scmp.ne.s32.totalorder %s269, %s270
      %p284 = scmp.eq.s32.totalorder %s26, 1
      %p285 = por %p283, %p284
      %p287 = scmp.ne.s32.totalorder %s270, %s286
      %p288 = scmp.eq.s32.totalorder %s26, 0
      %p289 = por %p287, %p288
      %p290 = scmp.le.s32.totalorder 1, %s20
      %p291 = scmp.lt.s32.totalorder %s20, 3
      %p292 = pnand %p290, %p291
      %p293 = pneg %p292
      // Predicated region
      $region9: #{forward.1} parent=5 // pred_check
        _
      $region10: #{forward.1} parent=5 // pred_check_branch
        %295 = sbr.rel (%p292) target = $region12
      $region11: #{forward.1} parent=5 // pred_region
        %s296 = ssub.s32 %s20, 1
        // Predicated region
        $region13: #{forward.1} parent=11 // pred_check
          %p297 = pneg %p67
        $region14: #{forward.1} parent=11 // pred_check_branch
          %299 = sbr.rel (%p297) target = $region16
        $region15: #{forward.1} parent=11 // pred_region
          _
        $region16: #{forward.1} parent=11 // pred_fallthru
          _
        // Predicated region
        $region17: #{forward.1} parent=11 // pred_check
          %p300 = pneg %p88
        $region18: #{forward.1} parent=11 // pred_check_branch
          %302 = sbr.rel (%p300) target = $region20
        $region19: #{forward.1} parent=11 // pred_region
          _
        $region20: #{forward.1} parent=11 // pred_fallthru
          _
        // Predicated region
        $region21: #{forward.1} parent=11 // pred_check
          %p303 = pneg %p109
        $region22: #{forward.1} parent=11 // pred_check_branch
          %305 = sbr.rel (%p303) target = $region24
        $region23: #{forward.1} parent=11 // pred_region
          _
        $region24: #{forward.1} parent=11 // pred_fallthru
          _
        // Predicated region
        $region25: #{forward.1} parent=11 // pred_check
          %p306 = pneg %p130
        $region26: #{forward.1} parent=11 // pred_check_branch
          %308 = sbr.rel (%p306) target = $region28
        $region27: #{forward.1} parent=11 // pred_region
          _
        $region28: #{forward.1} parent=11 // pred_fallthru
          _
        // Predicated region
        $region29: #{forward.1} parent=11 // pred_check
          %p309 = pneg %p151
        $region30: #{forward.1} parent=11 // pred_check_branch
          %311 = sbr.rel (%p309) target = $region32
        $region31: #{forward.1} parent=11 // pred_region
          _
        $region32: #{forward.1} parent=11 // pred_fallthru
          _
        // Predicated region
        $region33: #{forward.1} parent=11 // pred_check
          %p312 = pneg %p172
        $region34: #{forward.1} parent=11 // pred_check_branch
          %314 = sbr.rel (%p312) target = $region36
        $region35: #{forward.1} parent=11 // pred_region
          _
        $region36: #{forward.1} parent=11 // pred_fallthru
          _
        // Predicated region
        $region37: #{forward.1} parent=11 // pred_check
          %p315 = pneg %p193
        $region38: #{forward.1} parent=11 // pred_check_branch
          %317 = sbr.rel (%p315) target = $region40
        $region39: #{forward.1} parent=11 // pred_region
          _
        $region40: #{forward.1} parent=11 // pred_fallthru
          _
        // Predicated region
        $region41: #{forward.1} parent=11 // pred_check
          %p318 = pneg %p214
        $region42: #{forward.1} parent=11 // pred_check_branch
          %320 = sbr.rel (%p318) target = $region44
        $region43: #{forward.1} parent=11 // pred_region
          _
        $region44: #{forward.1} parent=11 // pred_fallthru
          _
        // Predicated region
        $region45: #{forward.1} parent=11 // pred_check
          %p321 = pneg %p235
        $region46: #{forward.1} parent=11 // pred_check_branch
          %323 = sbr.rel (%p321) target = $region48
        $region47: #{forward.1} parent=11 // pred_region
          _
        $region48: #{forward.1} parent=11 // pred_fallthru
          _
        // Predicated region
        $region49: #{forward.1} parent=11 // pred_check
          %p324 = pneg %p256
        $region50: #{forward.1} parent=11 // pred_check_branch
          %326 = sbr.rel (%p324) target = $region52
        $region51: #{forward.1} parent=11 // pred_region
          _
        $region52: #{forward.1} parent=11 // pred_fallthru
          _
      $region12: #{forward.1} parent=5 // pred_fallthru
        _
      %p327 = scmp.lt.s32.totalorder %s20, 2
      // Predicated region
      $region53: #{forward.1} parent=5 // pred_check
        %p328 = pneg %p327
      $region54: #{forward.1} parent=5 // pred_check_branch
        %330 = sbr.rel (%p328) target = $region56
      $region55: #{forward.1} parent=5 // pred_region
        // Predicated region
        $region57: #{forward.1} parent=55 // pred_check
          %p331 = pneg %p40
        $region58: #{forward.1} parent=55 // pred_check_branch
          %333 = sbr.rel (%p331) target = $region60
        $region59: #{forward.1} parent=55 // pred_region
          %p334 = scmp.lt.s32.totalorder %s20, 1
          %s335 = scalar_select %p334, %s20, 1
          %s336 = smul.addr %s335, 32
          %s337 = smul.addr %s336, 8
          %s338 = scalar_lea.vmem %s0, %s337
        $region60: #{forward.1} parent=55 // pred_fallthru
          _
      $region56: #{forward.1} parent=5 // pred_fallthru
        _
      %p339 = scmp.le.s32.totalorder 1, %s20
      %p340 = scmp.lt.s32.totalorder %s20, 3
      %p341 = pnand %p339, %p340
      %p342 = pneg %p341
      // Predicated region
      $region61: #{forward.1} parent=5 // pred_check
        _
      $region62: #{forward.1} parent=5 // pred_check_branch
        %344 = sbr.rel (%p341) target = $region64
      $region63: #{forward.1} parent=5 // pred_region
        %s345 = ssub.s32 %s20, 1
        %p346 = scmp.lt.s32.totalorder %s25, 1
        %s347 = scalar_select %p346, %s25, 1
        %s348 = smul.addr %s347, 32
        %s349 = smul.addr %s348, 8
        %s350 = scalar_lea.vmem %s0, %s349
        %p351 = pneg %p46
        %p352 = pneg %p43
        %p353 = pneg %p67
        %p354 = pneg %p64
        %p355 = pneg %p88
        %p356 = pneg %p85
        %p357 = pneg %p109
        %p358 = pneg %p106
        %p359 = pneg %p130
        %p360 = pneg %p127
        %p361 = pneg %p151
        %p362 = pneg %p148
        %p363 = pneg %p172
        %p364 = pneg %p169
        %p365 = pneg %p193
        %p366 = pneg %p190
        %p367 = pneg %p214
        %p368 = pneg %p211
        %p369 = pneg %p235
        %p370 = pneg %p232
        %p371 = pneg %p256
        %p372 = pneg %p253
        %p373 = pneg %p282
        %p374 = pneg %p279
        %s375 = sand.u32 %s269, 1
        %s376 = scalar_lea.sflag [#allocation7], %s375
        %s377 = sand.u32 %s269, 1
        %s378 = scalar_lea.vmem [#allocation6], %s377
        %p379 = scmp.lt.s32.totalorder %s25, 1
        %s380 = scalar_select %p379, %s25, 1
        %s381 = smul.addr %s380, 32
        %s382 = smul.addr %s381, 8
        %s383 = scalar_lea.vmem %s0, %s382
        %v384 = vlaneseq
        %v385 = vshrl.u32 %v384, 7
        %v386 = vadd.s32 %v385, 8
        %v387 = vadd.s32 %v385, 16
        %v388 = vadd.s32 %v385, 24
        %v389 = vadd.s32 %v385, 32
        %v390 = vadd.s32 %v385, 40
        %v391 = vadd.s32 %v385, 48
        %v392 = vadd.s32 %v385, 56
        %v393 = vadd.s32 %v385, 64
        %v394 = vadd.s32 %v385, 72
        %v395 = vadd.s32 %v385, 80
        %v396 = vadd.s32 %v385, 88
        %v397 = vadd.s32 %v385, 96
        %v398 = vadd.s32 %v385, 104
        %v399 = vadd.s32 %v385, 112
        %v400 = vadd.s32 %v385, 120
        %v401 = vadd.s32 %v385, 128
        %v402 = vadd.s32 %v385, 136
        %v403 = vadd.s32 %v385, 144
        %v404 = vadd.s32 %v385, 152
        %v405 = vadd.s32 %v385, 160
        %v406 = vadd.s32 %v385, 168
        %v407 = vadd.s32 %v385, 176
        %v408 = vadd.s32 %v385, 184
        %v409 = vadd.s32 %v385, 192
        %v410 = vadd.s32 %v385, 200
        %v411 = vadd.s32 %v385, 208
        %v412 = vadd.s32 %v385, 216
        %v413 = vadd.s32 %v385, 224
        %v414 = vadd.s32 %v385, 232
        %v415 = vadd.s32 %v385, 240
        %v416 = vadd.s32 %v385, 248
        %vm417 = vcmp.lt.s32.totalorder %v385, 0
        %v418 = vsub.s32 0, %v385
        %v419 = vsel %vm417, %v418, %v385
        %v420 = vshrl.u32 %v419, 4
        %v421 = vand.u32 %v419, 15
        %v422 = vsub.s32 0, %v421
        %v423 = vsel %vm417, %v422, %v421
        %vm424 = vcmp.lt.s32.totalorder %v386, 0
        %v425 = vsub.s32 0, %v386
        %v426 = vsel %vm424, %v425, %v386
        %v427 = vshrl.u32 %v426, 4
        %v428 = vand.u32 %v426, 15
        %v429 = vsub.s32 0, %v428
        %v430 = vsel %vm424, %v429, %v428
        %vm431 = vcmp.lt.s32.totalorder %v387, 0
        %v432 = vsub.s32 0, %v387
        %v433 = vsel %vm431, %v432, %v387
        %v434 = vshrl.u32 %v433, 4
        %v435 = vand.u32 %v433, 15
        %v436 = vsub.s32 0, %v435
        %v437 = vsel %vm431, %v436, %v435
        %vm438 = vcmp.lt.s32.totalorder %v388, 0
        %v439 = vsub.s32 0, %v388
        %v440 = vsel %vm438, %v439, %v388
        %v441 = vshrl.u32 %v440, 4
        %v442 = vand.u32 %v440, 15
        %v443 = vsub.s32 0, %v442
        %v444 = vsel %vm438, %v443, %v442
        %vm445 = vcmp.lt.s32.totalorder %v389, 0
        %v446 = vsub.s32 0, %v389
        %v447 = vsel %vm445, %v446, %v389
        %v448 = vshrl.u32 %v447, 4
        %v449 = vand.u32 %v447, 15
        %v450 = vsub.s32 0, %v449
        %v451 = vsel %vm445, %v450, %v449
        %vm452 = vcmp.lt.s32.totalorder %v390, 0
        %v453 = vsub.s32 0, %v390
        %v454 = vsel %vm452, %v453, %v390
        %v455 = vshrl.u32 %v454, 4
        %v456 = vand.u32 %v454, 15
        %v457 = vsub.s32 0, %v456
        %v458 = vsel %vm452, %v457, %v456
        %vm459 = vcmp.lt.s32.totalorder %v391, 0
        %v460 = vsub.s32 0, %v391
        %v461 = vsel %vm459, %v460, %v391
        %v462 = vshrl.u32 %v461, 4
        %v463 = vand.u32 %v461, 15
        %v464 = vsub.s32 0, %v463
        %v465 = vsel %vm459, %v464, %v463
        %vm466 = vcmp.lt.s32.totalorder %v392, 0
        %v467 = vsub.s32 0, %v392
        %v468 = vsel %vm466, %v467, %v392
        %v469 = vshrl.u32 %v468, 4
        %v470 = vand.u32 %v468, 15
        %v471 = vsub.s32 0, %v470
        %v472 = vsel %vm466, %v471, %v470
        %vm473 = vcmp.lt.s32.totalorder %v393, 0
        %v474 = vsub.s32 0, %v393
        %v475 = vsel %vm473, %v474, %v393
        %v476 = vshrl.u32 %v475, 4
        %v477 = vand.u32 %v475, 15
        %v478 = vsub.s32 0, %v477
        %v479 = vsel %vm473, %v478, %v477
        %vm480 = vcmp.lt.s32.totalorder %v394, 0
        %v481 = vsub.s32 0, %v394
        %v482 = vsel %vm480, %v481, %v394
        %v483 = vshrl.u32 %v482, 4
        %v484 = vand.u32 %v482, 15
        %v485 = vsub.s32 0, %v484
        %v486 = vsel %vm480, %v485, %v484
        %vm487 = vcmp.lt.s32.totalorder %v395, 0
        %v488 = vsub.s32 0, %v395
        %v489 = vsel %vm487, %v488, %v395
        %v490 = vshrl.u32 %v489, 4
        %v491 = vand.u32 %v489, 15
        %v492 = vsub.s32 0, %v491
        %v493 = vsel %vm487, %v492, %v491
        %vm494 = vcmp.lt.s32.totalorder %v396, 0
        %v495 = vsub.s32 0, %v396
        %v496 = vsel %vm494, %v495, %v396
        %v497 = vshrl.u32 %v496, 4
        %v498 = vand.u32 %v496, 15
        %v499 = vsub.s32 0, %v498
        %v500 = vsel %vm494, %v499, %v498
        %vm501 = vcmp.lt.s32.totalorder %v397, 0
        %v502 = vsub.s32 0, %v397
        %v503 = vsel %vm501, %v502, %v397
        %v504 = vshrl.u32 %v503, 4
        %v505 = vand.u32 %v503, 15
        %v506 = vsub.s32 0, %v505
        %v507 = vsel %vm501, %v506, %v505
        %vm508 = vcmp.lt.s32.totalorder %v398, 0
        %v509 = vsub.s32 0, %v398
        %v510 = vsel %vm508, %v509, %v398
        %v511 = vshrl.u32 %v510, 4
        %v512 = vand.u32 %v510, 15
        %v513 = vsub.s32 0, %v512
        %v514 = vsel %vm508, %v513, %v512
        %vm515 = vcmp.lt.s32.totalorder %v399, 0
        %v516 = vsub.s32 0, %v399
        %v517 = vsel %vm515, %v516, %v399
        %v518 = vshrl.u32 %v517, 4
        %v519 = vand.u32 %v517, 15
        %v520 = vsub.s32 0, %v519
        %v521 = vsel %vm515, %v520, %v519
        %vm522 = vcmp.lt.s32.totalorder %v400, 0
        %v523 = vsub.s32 0, %v400
        %v524 = vsel %vm522, %v523, %v400
        %v525 = vshrl.u32 %v524, 4
        %v526 = vand.u32 %v524, 15
        %v527 = vsub.s32 0, %v526
        %v528 = vsel %vm522, %v527, %v526
        %vm529 = vcmp.lt.s32.totalorder %v401, 0
        %v530 = vsub.s32 0, %v401
        %v531 = vsel %vm529, %v530, %v401
        %v532 = vshrl.u32 %v531, 4
        %v533 = vand.u32 %v531, 15
        %v534 = vsub.s32 0, %v533
        %v535 = vsel %vm529, %v534, %v533
        %vm536 = vcmp.lt.s32.totalorder %v402, 0
        %v537 = vsub.s32 0, %v402
        %v538 = vsel %vm536, %v537, %v402
        %v539 = vshrl.u32 %v538, 4
        %v540 = vand.u32 %v538, 15
        %v541 = vsub.s32 0, %v540
        %v542 = vsel %vm536, %v541, %v540
        %vm543 = vcmp.lt.s32.totalorder %v403, 0
        %v544 = vsub.s32 0, %v403
        %v545 = vsel %vm543, %v544, %v403
        %v546 = vshrl.u32 %v545, 4
        %v547 = vand.u32 %v545, 15
        %v548 = vsub.s32 0, %v547
        %v549 = vsel %vm543, %v548, %v547
        %vm550 = vcmp.lt.s32.totalorder %v404, 0
        %v551 = vsub.s32 0, %v404
        %v552 = vsel %vm550, %v551, %v404
        %v553 = vshrl.u32 %v552, 4
        %v554 = vand.u32 %v552, 15
        %v555 = vsub.s32 0, %v554
        %v556 = vsel %vm550, %v555, %v554
        %vm557 = vcmp.lt.s32.totalorder %v405, 0
        %v558 = vsub.s32 0, %v405
        %v559 = vsel %vm557, %v558, %v405
        %v560 = vshrl.u32 %v559, 4
        %v561 = vand.u32 %v559, 15
        %v562 = vsub.s32 0, %v561
        %v563 = vsel %vm557, %v562, %v561
        %vm564 = vcmp.lt.s32.totalorder %v406, 0
        %v565 = vsub.s32 0, %v406
        %v566 = vsel %vm564, %v565, %v406
        %v567 = vshrl.u32 %v566, 4
        %v568 = vand.u32 %v566, 15
        %v569 = vsub.s32 0, %v568
        %v570 = vsel %vm564, %v569, %v568
        %vm571 = vcmp.lt.s32.totalorder %v407, 0
        %v572 = vsub.s32 0, %v407
        %v573 = vsel %vm571, %v572, %v407
        %v574 = vshrl.u32 %v573, 4
        %v575 = vand.u32 %v573, 15
        %v576 = vsub.s32 0, %v575
        %v577 = vsel %vm571, %v576, %v575
        %vm578 = vcmp.lt.s32.totalorder %v408, 0
        %v579 = vsub.s32 0, %v408
        %v580 = vsel %vm578, %v579, %v408
        %v581 = vshrl.u32 %v580, 4
        %v582 = vand.u32 %v580, 15
        %v583 = vsub.s32 0, %v582
        %v584 = vsel %vm578, %v583, %v582
        %vm585 = vcmp.lt.s32.totalorder %v409, 0
        %v586 = vsub.s32 0, %v409
        %v587 = vsel %vm585, %v586, %v409
        %v588 = vshrl.u32 %v587, 4
        %v589 = vand.u32 %v587, 15
        %v590 = vsub.s32 0, %v589
        %v591 = vsel %vm585, %v590, %v589
        %vm592 = vcmp.lt.s32.totalorder %v410, 0
        %v593 = vsub.s32 0, %v410
        %v594 = vsel %vm592, %v593, %v410
        %v595 = vshrl.u32 %v594, 4
        %v596 = vand.u32 %v594, 15
        %v597 = vsub.s32 0, %v596
        %v598 = vsel %vm592, %v597, %v596
        %vm599 = vcmp.lt.s32.totalorder %v411, 0
        %v600 = vsub.s32 0, %v411
        %v601 = vsel %vm599, %v600, %v411
        %v602 = vshrl.u32 %v601, 4
        %v603 = vand.u32 %v601, 15
        %v604 = vsub.s32 0, %v603
        %v605 = vsel %vm599, %v604, %v603
        %vm606 = vcmp.lt.s32.totalorder %v412, 0
        %v607 = vsub.s32 0, %v412
        %v608 = vsel %vm606, %v607, %v412
        %v609 = vshrl.u32 %v608, 4
        %v610 = vand.u32 %v608, 15
        %v611 = vsub.s32 0, %v610
        %v612 = vsel %vm606, %v611, %v610
        %vm613 = vcmp.lt.s32.totalorder %v413, 0
        %v614 = vsub.s32 0, %v413
        %v615 = vsel %vm613, %v614, %v413
        %v616 = vshrl.u32 %v615, 4
        %v617 = vand.u32 %v615, 15
        %v618 = vsub.s32 0, %v617
        %v619 = vsel %vm613, %v618, %v617
        %vm620 = vcmp.lt.s32.totalorder %v414, 0
        %v621 = vsub.s32 0, %v414
        %v622 = vsel %vm620, %v621, %v414
        %v623 = vshrl.u32 %v622, 4
        %v624 = vand.u32 %v622, 15
        %v625 = vsub.s32 0, %v624
        %v626 = vsel %vm620, %v625, %v624
        %vm627 = vcmp.lt.s32.totalorder %v415, 0
        %v628 = vsub.s32 0, %v415
        %v629 = vsel %vm627, %v628, %v415
        %v630 = vshrl.u32 %v629, 4
        %v631 = vand.u32 %v629, 15
        %v632 = vsub.s32 0, %v631
        %v633 = vsel %vm627, %v632, %v631
        %vm634 = vcmp.lt.s32.totalorder %v416, 0
        %v635 = vsub.s32 0, %v416
        %v636 = vsel %vm634, %v635, %v416
        %v637 = vshrl.u32 %v636, 4
        %v638 = vand.u32 %v636, 15
        %v639 = vsub.s32 0, %v638
        %v640 = vsel %vm634, %v639, %v638
        %vm641 = vcmp.ne.s32.totalorder %v423, 0
        %vm642 = vcmp.ne.s32.totalorder %v430, 0
        %vm643 = vcmp.ne.s32.totalorder %v437, 0
        %vm644 = vcmp.ne.s32.totalorder %v444, 0
        %vm645 = vcmp.ne.s32.totalorder %v451, 0
        %vm646 = vcmp.ne.s32.totalorder %v458, 0
        %vm647 = vcmp.ne.s32.totalorder %v465, 0
        %vm648 = vcmp.ne.s32.totalorder %v472, 0
        %vm649 = vcmp.ne.s32.totalorder %v479, 0
        %vm650 = vcmp.ne.s32.totalorder %v486, 0
        %vm651 = vcmp.ne.s32.totalorder %v493, 0
        %vm652 = vcmp.ne.s32.totalorder %v500, 0
        %vm653 = vcmp.ne.s32.totalorder %v507, 0
        %vm654 = vcmp.ne.s32.totalorder %v514, 0
        %vm655 = vcmp.ne.s32.totalorder %v521, 0
        %vm656 = vcmp.ne.s32.totalorder %v528, 0
        %vm657 = vcmp.ne.s32.totalorder %v535, 0
        %vm658 = vcmp.ne.s32.totalorder %v542, 0
        %vm659 = vcmp.ne.s32.totalorder %v549, 0
        %vm660 = vcmp.ne.s32.totalorder %v556, 0
        %vm661 = vcmp.ne.s32.totalorder %v563, 0
        %vm662 = vcmp.ne.s32.totalorder %v570, 0
        %vm663 = vcmp.ne.s32.totalorder %v577, 0
        %vm664 = vcmp.ne.s32.totalorder %v584, 0
        %vm665 = vcmp.ne.s32.totalorder %v591, 0
        %vm666 = vcmp.ne.s32.totalorder %v598, 0
        %vm667 = vcmp.ne.s32.totalorder %v605, 0
        %vm668 = vcmp.ne.s32.totalorder %v612, 0
        %vm669 = vcmp.ne.s32.totalorder %v619, 0
        %vm670 = vcmp.ne.s32.totalorder %v626, 0
        %vm671 = vcmp.ne.s32.totalorder %v633, 0
        %vm672 = vcmp.ne.s32.totalorder %v640, 0
        %vm673 = vcmp.lt.s32.totalorder %v423, 0
        %vm674 = vcmp.lt.s32.totalorder %v430, 0
        %vm675 = vcmp.lt.s32.totalorder %v437, 0
        %vm676 = vcmp.lt.s32.totalorder %v444, 0
        %vm677 = vcmp.lt.s32.totalorder %v451, 0
        %vm678 = vcmp.lt.s32.totalorder %v458, 0
        %vm679 = vcmp.lt.s32.totalorder %v465, 0
        %vm680 = vcmp.lt.s32.totalorder %v472, 0
        %vm681 = vcmp.lt.s32.totalorder %v479, 0
        %vm682 = vcmp.lt.s32.totalorder %v486, 0
        %vm683 = vcmp.lt.s32.totalorder %v493, 0
        %vm684 = vcmp.lt.s32.totalorder %v500, 0
        %vm685 = vcmp.lt.s32.totalorder %v507, 0
        %vm686 = vcmp.lt.s32.totalorder %v514, 0
        %vm687 = vcmp.lt.s32.totalorder %v521, 0
        %vm688 = vcmp.lt.s32.totalorder %v528, 0
        %vm689 = vcmp.lt.s32.totalorder %v535, 0
        %vm690 = vcmp.lt.s32.totalorder %v542, 0
        %vm691 = vcmp.lt.s32.totalorder %v549, 0
        %vm692 = vcmp.lt.s32.totalorder %v556, 0
        %vm693 = vcmp.lt.s32.totalorder %v563, 0
        %vm694 = vcmp.lt.s32.totalorder %v570, 0
        %vm695 = vcmp.lt.s32.totalorder %v577, 0
        %vm696 = vcmp.lt.s32.totalorder %v584, 0
        %vm697 = vcmp.lt.s32.totalorder %v591, 0
        %vm698 = vcmp.lt.s32.totalorder %v598, 0
        %vm699 = vcmp.lt.s32.totalorder %v605, 0
        %vm700 = vcmp.lt.s32.totalorder %v612, 0
        %vm701 = vcmp.lt.s32.totalorder %v619, 0
        %vm702 = vcmp.lt.s32.totalorder %v626, 0
        %vm703 = vcmp.lt.s32.totalorder %v633, 0
        %vm704 = vcmp.lt.s32.totalorder %v640, 0
        %vm705 = vmand %vm673, %vm641
        %vm706 = vmand %vm674, %vm642
        %vm707 = vmand %vm675, %vm643
        %vm708 = vmand %vm676, %vm644
        %vm709 = vmand %vm677, %vm645
        %vm710 = vmand %vm678, %vm646
        %vm711 = vmand %vm679, %vm647
        %vm712 = vmand %vm680, %vm648
        %vm713 = vmand %vm681, %vm649
        %vm714 = vmand %vm682, %vm650
        %vm715 = vmand %vm683, %vm651
        %vm716 = vmand %vm684, %vm652
        %vm717 = vmand %vm685, %vm653
        %vm718 = vmand %vm686, %vm654
        %vm719 = vmand %vm687, %vm655
        %vm720 = vmand %vm688, %vm656
        %vm721 = vmand %vm689, %vm657
        %vm722 = vmand %vm690, %vm658
        %vm723 = vmand %vm691, %vm659
        %vm724 = vmand %vm692, %vm660
        %vm725 = vmand %vm693, %vm661
        %vm726 = vmand %vm694, %vm662
        %vm727 = vmand %vm695, %vm663
        %vm728 = vmand %vm696, %vm664
        %vm729 = vmand %vm697, %vm665
        %vm730 = vmand %vm698, %vm666
        %vm731 = vmand %vm699, %vm667
        %vm732 = vmand %vm700, %vm668
        %vm733 = vmand %vm701, %vm669
        %vm734 = vmand %vm702, %vm670
        %vm735 = vmand %vm703, %vm671
        %vm736 = vmand %vm704, %vm672
        %v737 = vadd.s32 %v423, 16
        %v738 = vadd.s32 %v430, 16
        %v739 = vadd.s32 %v437, 16
        %v740 = vadd.s32 %v444, 16
        %v741 = vadd.s32 %v451, 16
        %v742 = vadd.s32 %v458, 16
        %v743 = vadd.s32 %v465, 16
        %v744 = vadd.s32 %v472, 16
        %v745 = vadd.s32 %v479, 16
        %v746 = vadd.s32 %v486, 16
        %v747 = vadd.s32 %v493, 16
        %v748 = vadd.s32 %v500, 16
        %v749 = vadd.s32 %v507, 16
        %v750 = vadd.s32 %v514, 16
        %v751 = vadd.s32 %v521, 16
        %v752 = vadd.s32 %v528, 16
        %v753 = vadd.s32 %v535, 16
        %v754 = vadd.s32 %v542, 16
        %v755 = vadd.s32 %v549, 16
        %v756 = vadd.s32 %v556, 16
        %v757 = vadd.s32 %v563, 16
        %v758 = vadd.s32 %v570, 16
        %v759 = vadd.s32 %v577, 16
        %v760 = vadd.s32 %v584, 16
        %v761 = vadd.s32 %v591, 16
        %v762 = vadd.s32 %v598, 16
        %v763 = vadd.s32 %v605, 16
        %v764 = vadd.s32 %v612, 16
        %v765 = vadd.s32 %v619, 16
        %v766 = vadd.s32 %v626, 16
        %v767 = vadd.s32 %v633, 16
        %v768 = vadd.s32 %v640, 16
        %v769 = vsel %vm705, %v737, %v423
        %v770 = vsel %vm706, %v738, %v430
        %v771 = vsel %vm707, %v739, %v437
        %v772 = vsel %vm708, %v740, %v444
        %v773 = vsel %vm709, %v741, %v451
        %v774 = vsel %vm710, %v742, %v458
        %v775 = vsel %vm711, %v743, %v465
        %v776 = vsel %vm712, %v744, %v472
        %v777 = vsel %vm713, %v745, %v479
        %v778 = vsel %vm714, %v746, %v486
        %v779 = vsel %vm715, %v747, %v493
        %v780 = vsel %vm716, %v748, %v500
        %v781 = vsel %vm717, %v749, %v507
        %v782 = vsel %vm718, %v750, %v514
        %v783 = vsel %vm719, %v751, %v521
        %v784 = vsel %vm720, %v752, %v528
        %v785 = vsel %vm721, %v753, %v535
        %v786 = vsel %vm722, %v754, %v542
        %v787 = vsel %vm723, %v755, %v549
        %v788 = vsel %vm724, %v756, %v556
        %v789 = vsel %vm725, %v757, %v563
        %v790 = vsel %vm726, %v758, %v570
        %v791 = vsel %vm727, %v759, %v577
        %v792 = vsel %vm728, %v760, %v584
        %v793 = vsel %vm729, %v761, %v591
        %v794 = vsel %vm730, %v762, %v598
        %v795 = vsel %vm731, %v763, %v605
        %v796 = vsel %vm732, %v764, %v612
        %v797 = vsel %vm733, %v765, %v619
        %v798 = vsel %vm734, %v766, %v626
        %v799 = vsel %vm735, %v767, %v633
        %v800 = vsel %vm736, %v768, %v640
        %vm801 = vcmp.ne.s32.totalorder %v769, 0
        %vm802 = vcmp.ne.s32.totalorder %v770, 0
        %vm803 = vcmp.ne.s32.totalorder %v771, 0
        %vm804 = vcmp.ne.s32.totalorder %v772, 0
        %vm805 = vcmp.ne.s32.totalorder %v773, 0
        %vm806 = vcmp.ne.s32.totalorder %v774, 0
        %vm807 = vcmp.ne.s32.totalorder %v775, 0
        %vm808 = vcmp.ne.s32.totalorder %v776, 0
        %vm809 = vcmp.ne.s32.totalorder %v777, 0
        %vm810 = vcmp.ne.s32.totalorder %v778, 0
        %vm811 = vcmp.ne.s32.totalorder %v779, 0
        %vm812 = vcmp.ne.s32.totalorder %v780, 0
        %vm813 = vcmp.ne.s32.totalorder %v781, 0
        %vm814 = vcmp.ne.s32.totalorder %v782, 0
        %vm815 = vcmp.ne.s32.totalorder %v783, 0
        %vm816 = vcmp.ne.s32.totalorder %v784, 0
        %vm817 = vcmp.ne.s32.totalorder %v785, 0
        %vm818 = vcmp.ne.s32.totalorder %v786, 0
        %vm819 = vcmp.ne.s32.totalorder %v787, 0
        %vm820 = vcmp.ne.s32.totalorder %v788, 0
        %vm821 = vcmp.ne.s32.totalorder %v789, 0
        %vm822 = vcmp.ne.s32.totalorder %v790, 0
        %vm823 = vcmp.ne.s32.totalorder %v791, 0
        %vm824 = vcmp.ne.s32.totalorder %v792, 0
        %vm825 = vcmp.ne.s32.totalorder %v793, 0
        %vm826 = vcmp.ne.s32.totalorder %v794, 0
        %vm827 = vcmp.ne.s32.totalorder %v795, 0
        %vm828 = vcmp.ne.s32.totalorder %v796, 0
        %vm829 = vcmp.ne.s32.totalorder %v797, 0
        %vm830 = vcmp.ne.s32.totalorder %v798, 0
        %vm831 = vcmp.ne.s32.totalorder %v799, 0
        %vm832 = vcmp.ne.s32.totalorder %v800, 0
        %vm833 = vcmp.ne.s32.totalorder %v769, 15
        %vm834 = vcmp.ne.s32.totalorder %v770, 15
        %vm835 = vcmp.ne.s32.totalorder %v771, 15
        %vm836 = vcmp.ne.s32.totalorder %v772, 15
        %vm837 = vcmp.ne.s32.totalorder %v773, 15
        %vm838 = vcmp.ne.s32.totalorder %v774, 15
        %vm839 = vcmp.ne.s32.totalorder %v775, 15
        %vm840 = vcmp.ne.s32.totalorder %v776, 15
        %vm841 = vcmp.ne.s32.totalorder %v777, 15
        %vm842 = vcmp.ne.s32.totalorder %v778, 15
        %vm843 = vcmp.ne.s32.totalorder %v779, 15
        %vm844 = vcmp.ne.s32.totalorder %v780, 15
        %vm845 = vcmp.ne.s32.totalorder %v781, 15
        %vm846 = vcmp.ne.s32.totalorder %v782, 15
        %vm847 = vcmp.ne.s32.totalorder %v783, 15
        %vm848 = vcmp.ne.s32.totalorder %v784, 15
        %vm849 = vcmp.ne.s32.totalorder %v785, 15
        %vm850 = vcmp.ne.s32.totalorder %v786, 15
        %vm851 = vcmp.ne.s32.totalorder %v787, 15
        %vm852 = vcmp.ne.s32.totalorder %v788, 15
        %vm853 = vcmp.ne.s32.totalorder %v789, 15
        %vm854 = vcmp.ne.s32.totalorder %v790, 15
        %vm855 = vcmp.ne.s32.totalorder %v791, 15
        %vm856 = vcmp.ne.s32.totalorder %v792, 15
        %vm857 = vcmp.ne.s32.totalorder %v793, 15
        %vm858 = vcmp.ne.s32.totalorder %v794, 15
        %vm859 = vcmp.ne.s32.totalorder %v795, 15
        %vm860 = vcmp.ne.s32.totalorder %v796, 15
        %vm861 = vcmp.ne.s32.totalorder %v797, 15
        %vm862 = vcmp.ne.s32.totalorder %v798, 15
        %vm863 = vcmp.ne.s32.totalorder %v799, 15
        %vm864 = vcmp.ne.s32.totalorder %v800, 15
        %vm865 = vcmp.lt.s32.totalorder %v385, 0
        %v866 = vsub.s32 0, %v385
        %v867 = vsel %vm865, %v866, %v385
        %v868 = vshrl.u32 %v867, 3
        %v869 = vand.u32 %v867, 7
        %v870 = vsub.s32 0, %v869
        %v871 = vsel %vm865, %v870, %v869
        %vm872 = vcmp.lt.s32.totalorder %v386, 0
        %v873 = vsub.s32 0, %v386
        %v874 = vsel %vm872, %v873, %v386
        %v875 = vshrl.u32 %v874, 3
        %v876 = vand.u32 %v874, 7
        %v877 = vsub.s32 0, %v876
        %v878 = vsel %vm872, %v877, %v876
        %vm879 = vcmp.lt.s32.totalorder %v387, 0
        %v880 = vsub.s32 0, %v387
        %v881 = vsel %vm879, %v880, %v387
        %v882 = vshrl.u32 %v881, 3
        %v883 = vand.u32 %v881, 7
        %v884 = vsub.s32 0, %v883
        %v885 = vsel %vm879, %v884, %v883
        %vm886 = vcmp.lt.s32.totalorder %v388, 0
        %v887 = vsub.s32 0, %v388
        %v888 = vsel %vm886, %v887, %v388
        %v889 = vshrl.u32 %v888, 3
        %v890 = vand.u32 %v888, 7
        %v891 = vsub.s32 0, %v890
        %v892 = vsel %vm886, %v891, %v890
        %vm893 = vcmp.lt.s32.totalorder %v389, 0
        %v894 = vsub.s32 0, %v389
        %v895 = vsel %vm893, %v894, %v389
        %v896 = vshrl.u32 %v895, 3
        %v897 = vand.u32 %v895, 7
        %v898 = vsub.s32 0, %v897
        %v899 = vsel %vm893, %v898, %v897
        %vm900 = vcmp.lt.s32.totalorder %v390, 0
        %v901 = vsub.s32 0, %v390
        %v902 = vsel %vm900, %v901, %v390
        %v903 = vshrl.u32 %v902, 3
        %v904 = vand.u32 %v902, 7
        %v905 = vsub.s32 0, %v904
        %v906 = vsel %vm900, %v905, %v904
        %vm907 = vcmp.lt.s32.totalorder %v391, 0
        %v908 = vsub.s32 0, %v391
        %v909 = vsel %vm907, %v908, %v391
        %v910 = vshrl.u32 %v909, 3
        %v911 = vand.u32 %v909, 7
        %v912 = vsub.s32 0, %v911
        %v913 = vsel %vm907, %v912, %v911
        %vm914 = vcmp.lt.s32.totalorder %v392, 0
        %v915 = vsub.s32 0, %v392
        %v916 = vsel %vm914, %v915, %v392
        %v917 = vshrl.u32 %v916, 3
        %v918 = vand.u32 %v916, 7
        %v919 = vsub.s32 0, %v918
        %v920 = vsel %vm914, %v919, %v918
        %vm921 = vcmp.ne.s32.totalorder %v871, 0
        %vm922 = vcmp.ne.s32.totalorder %v878, 0
        %vm923 = vcmp.ne.s32.totalorder %v885, 0
        %vm924 = vcmp.ne.s32.totalorder %v892, 0
        %vm925 = vcmp.ne.s32.totalorder %v899, 0
        %vm926 = vcmp.ne.s32.totalorder %v906, 0
        %vm927 = vcmp.ne.s32.totalorder %v913, 0
        %vm928 = vcmp.ne.s32.totalorder %v920, 0
        %vm929 = vcmp.lt.s32.totalorder %v871, 0
        %vm930 = vcmp.lt.s32.totalorder %v878, 0
        %vm931 = vcmp.lt.s32.totalorder %v885, 0
        %vm932 = vcmp.lt.s32.totalorder %v892, 0
        %vm933 = vcmp.lt.s32.totalorder %v899, 0
        %vm934 = vcmp.lt.s32.totalorder %v906, 0
        %vm935 = vcmp.lt.s32.totalorder %v913, 0
        %vm936 = vcmp.lt.s32.totalorder %v920, 0
        %vm937 = vmand %vm929, %vm921
        %vm938 = vmand %vm930, %vm922
        %vm939 = vmand %vm931, %vm923
        %vm940 = vmand %vm932, %vm924
        %vm941 = vmand %vm933, %vm925
        %vm942 = vmand %vm934, %vm926
        %vm943 = vmand %vm935, %vm927
        %vm944 = vmand %vm936, %vm928
        %v945 = vadd.s32 %v871, 8
        %v946 = vadd.s32 %v878, 8
        %v947 = vadd.s32 %v885, 8
        %v948 = vadd.s32 %v892, 8
        %v949 = vadd.s32 %v899, 8
        %v950 = vadd.s32 %v906, 8
        %v951 = vadd.s32 %v913, 8
        %v952 = vadd.s32 %v920, 8
        %v953 = vsel %vm937, %v945, %v871
        %v954 = vsel %vm938, %v946, %v878
        %v955 = vsel %vm939, %v947, %v885
        %v956 = vsel %vm940, %v948, %v892
        %v957 = vsel %vm941, %v949, %v899
        %v958 = vsel %vm942, %v950, %v906
        %v959 = vsel %vm943, %v951, %v913
        %v960 = vsel %vm944, %v952, %v920
        %vm961 = vcmp.ne.s32.totalorder %v953, 0
        %vm962 = vcmp.ne.s32.totalorder %v954, 0
        %vm963 = vcmp.ne.s32.totalorder %v955, 0
        %vm964 = vcmp.ne.s32.totalorder %v956, 0
        %vm965 = vcmp.ne.s32.totalorder %v957, 0
        %vm966 = vcmp.ne.s32.totalorder %v958, 0
        %vm967 = vcmp.ne.s32.totalorder %v959, 0
        %vm968 = vcmp.ne.s32.totalorder %v960, 0
        %vm969 = vcmp.ne.s32.totalorder %v953, 7
        %vm970 = vcmp.ne.s32.totalorder %v954, 7
        %vm971 = vcmp.ne.s32.totalorder %v955, 7
        %vm972 = vcmp.ne.s32.totalorder %v956, 7
        %vm973 = vcmp.ne.s32.totalorder %v957, 7
        %vm974 = vcmp.ne.s32.totalorder %v958, 7
        %vm975 = vcmp.ne.s32.totalorder %v959, 7
        %vm976 = vcmp.ne.s32.totalorder %v960, 7
        %v977 = vld [vmem:[%s383] sm:$0xff]
        %v978 = vld [vmem:[%s383 + $0x8] sm:$0xff]
        %v979 = vld [vmem:[%s383 + $0x10] sm:$0xff]
        %v980 = vld [vmem:[%s383 + $0x18] sm:$0xff]
        %v981 = vld [vmem:[%s383 + $0x20] sm:$0xff]
        %v982 = vld [vmem:[%s383 + $0x28] sm:$0xff]
        %v983 = vld [vmem:[%s383 + $0x30] sm:$0xff]
        %v984 = vld [vmem:[%s383 + $0x38] sm:$0xff]
        %v985 = vld [vmem:[%s383 + $0x40] sm:$0xff]
        %v986 = vld [vmem:[%s383 + $0x48] sm:$0xff]
        %v987 = vld [vmem:[%s383 + $0x50] sm:$0xff]
        %v988 = vld [vmem:[%s383 + $0x58] sm:$0xff]
        %v989 = vld [vmem:[%s383 + $0x60] sm:$0xff]
        %v990 = vld [vmem:[%s383 + $0x68] sm:$0xff]
        %v991 = vld [vmem:[%s383 + $0x70] sm:$0xff]
        %v992 = vld [vmem:[%s383 + $0x78] sm:$0xff]
        %v993 = vld [vmem:[%s383 + $0x80] sm:$0xff]
        %v994 = vld [vmem:[%s383 + $0x88] sm:$0xff]
        %v995 = vld [vmem:[%s383 + $0x90] sm:$0xff]
        %v996 = vld [vmem:[%s383 + $0x98] sm:$0xff]
        %v997 = vld [vmem:[%s383 + $0xa0] sm:$0xff]
        %v998 = vld [vmem:[%s383 + $0xa8] sm:$0xff]
        %v999 = vld [vmem:[%s383 + $0xb0] sm:$0xff]
        %v1000 = vld [vmem:[%s383 + $0xb8] sm:$0xff]
        %v1001 = vld [vmem:[%s383 + $0xc0] sm:$0xff]
        %v1002 = vld [vmem:[%s383 + $0xc8] sm:$0xff]
        %v1003 = vld [vmem:[%s383 + $0xd0] sm:$0xff]
        %v1004 = vld [vmem:[%s383 + $0xd8] sm:$0xff]
        %v1005 = vld [vmem:[%s383 + $0xe0] sm:$0xff]
        %v1006 = vld [vmem:[%s383 + $0xe8] sm:$0xff]
        %v1007 = vld [vmem:[%s383 + $0xf0] sm:$0xff]
        %v1008 = vld [vmem:[%s383 + $0xf8] sm:$0xff]
        %vm1009 = vcmask 130048
        %1010 = vst.msk [vmem:[#allocation2] sm:$0xff] %vm1009, 0.0
        %1011 = vst.msk [vmem:[#allocation2 + $0x8] sm:$0xff] %vm1009, 0.0
        %vm1012 = vcmask 122880
        %1013 = vst.msk [vmem:[#allocation2 + $0x10] sm:$0x1] %vm1012, 0.0
        %1014 = vst.msk [vmem:[#allocation2 + $0x111] sm:$0xff] %vm1009, 0.0
        %1015 = vst.msk [vmem:[#allocation2 + $0x119] sm:$0xff] %vm1009, 0.0
        %1016 = vst.msk [vmem:[#allocation2 + $0x121] sm:$0x1] %vm1012, 0.0
        %1017 = vst.msk [vmem:[#allocation2 + $0x11] sm:$0xff] %vm1009, %v977
        %1018 = vst.msk [vmem:[#allocation2 + $0x19] sm:$0xff] %vm1009, %v978
        %1019 = vst.msk [vmem:[#allocation2 + $0x21] sm:$0xff] %vm1009, %v979
        %1020 = vst.msk [vmem:[#allocation2 + $0x29] sm:$0xff] %vm1009, %v980
        %1021 = vst.msk [vmem:[#allocation2 + $0x31] sm:$0xff] %vm1009, %v981
        %1022 = vst.msk [vmem:[#allocation2 + $0x39] sm:$0xff] %vm1009, %v982
        %1023 = vst.msk [vmem:[#allocation2 + $0x41] sm:$0xff] %vm1009, %v983
        %1024 = vst.msk [vmem:[#allocation2 + $0x49] sm:$0xff] %vm1009, %v984
        %1025 = vst.msk [vmem:[#allocation2 + $0x51] sm:$0xff] %vm1009, %v985
        %1026 = vst.msk [vmem:[#allocation2 + $0x59] sm:$0xff] %vm1009, %v986
        %1027 = vst.msk [vmem:[#allocation2 + $0x61] sm:$0xff] %vm1009, %v987
        %1028 = vst.msk [vmem:[#allocation2 + $0x69] sm:$0xff] %vm1009, %v988
        %1029 = vst.msk [vmem:[#allocation2 + $0x71] sm:$0xff] %vm1009, %v989
        %1030 = vst.msk [vmem:[#allocation2 + $0x79] sm:$0xff] %vm1009, %v990
        %1031 = vst.msk [vmem:[#allocation2 + $0x81] sm:$0xff] %vm1009, %v991
        %1032 = vst.msk [vmem:[#allocation2 + $0x89] sm:$0xff] %vm1009, %v992
        %1033 = vst.msk [vmem:[#allocation2 + $0x91] sm:$0xff] %vm1009, %v993
        %1034 = vst.msk [vmem:[#allocation2 + $0x99] sm:$0xff] %vm1009, %v994
        %1035 = vst.msk [vmem:[#allocation2 + $0xa1] sm:$0xff] %vm1009, %v995
        %1036 = vst.msk [vmem:[#allocation2 + $0xa9] sm:$0xff] %vm1009, %v996
        %1037 = vst.msk [vmem:[#allocation2 + $0xb1] sm:$0xff] %vm1009, %v997
        %1038 = vst.msk [vmem:[#allocation2 + $0xb9] sm:$0xff] %vm1009, %v998
        %1039 = vst.msk [vmem:[#allocation2 + $0xc1] sm:$0xff] %vm1009, %v999
        %1040 = vst.msk [vmem:[#allocation2 + $0xc9] sm:$0xff] %vm1009, %v1000
        %1041 = vst.msk [vmem:[#allocation2 + $0xd1] sm:$0xff] %vm1009, %v1001
        %1042 = vst.msk [vmem:[#allocation2 + $0xd9] sm:$0xff] %vm1009, %v1002
        %1043 = vst.msk [vmem:[#allocation2 + $0xe1] sm:$0xff] %vm1009, %v1003
        %1044 = vst.msk [vmem:[#allocation2 + $0xe9] sm:$0xff] %vm1009, %v1004
        %1045 = vst.msk [vmem:[#allocation2 + $0xf1] sm:$0xff] %vm1009, %v1005
        %1046 = vst.msk [vmem:[#allocation2 + $0xf9] sm:$0xff] %vm1009, %v1006
        %1047 = vst.msk [vmem:[#allocation2 + $0x101] sm:$0xff] %vm1009, %v1007
        %1048 = vst.msk [vmem:[#allocation2 + $0x109] sm:$0xff] %vm1009, %v1008
        %v1049 = vld [vmem:[#allocation2] sm:$0xff]
        %v1050 = vld [vmem:[#allocation2 + $0x8] sm:$0xff]
        %v1051 = vld [vmem:[#allocation2 + $0x10] sm:$0xff]
        %v1052 = vld [vmem:[#allocation2 + $0x18] sm:$0xff]
        %v1053 = vld [vmem:[#allocation2 + $0x20] sm:$0xff]
        %v1054 = vld [vmem:[#allocation2 + $0x28] sm:$0xff]
        %v1055 = vld [vmem:[#allocation2 + $0x30] sm:$0xff]
        %v1056 = vld [vmem:[#allocation2 + $0x38] sm:$0xff]
        %v1057 = vld [vmem:[#allocation2 + $0x40] sm:$0xff]
        %v1058 = vld [vmem:[#allocation2 + $0x48] sm:$0xff]
        %v1059 = vld [vmem:[#allocation2 + $0x50] sm:$0xff]
        %v1060 = vld [vmem:[#allocation2 + $0x58] sm:$0xff]
        %v1061 = vld [vmem:[#allocation2 + $0x60] sm:$0xff]
        %v1062 = vld [vmem:[#allocation2 + $0x68] sm:$0xff]
        %v1063 = vld [vmem:[#allocation2 + $0x70] sm:$0xff]
        %v1064 = vld [vmem:[#allocation2 + $0x78] sm:$0xff]
        %v1065 = vld [vmem:[#allocation2 + $0x80] sm:$0xff]
        %v1066 = vld [vmem:[#allocation2 + $0x88] sm:$0xff]
        %v1067 = vld [vmem:[#allocation2 + $0x90] sm:$0xff]
        %v1068 = vld [vmem:[#allocation2 + $0x98] sm:$0xff]
        %v1069 = vld [vmem:[#allocation2 + $0xa0] sm:$0xff]
        %v1070 = vld [vmem:[#allocation2 + $0xa8] sm:$0xff]
        %v1071 = vld [vmem:[#allocation2 + $0xb0] sm:$0xff]
        %v1072 = vld [vmem:[#allocation2 + $0xb8] sm:$0xff]
        %v1073 = vld [vmem:[#allocation2 + $0xc0] sm:$0xff]
        %v1074 = vld [vmem:[#allocation2 + $0xc8] sm:$0xff]
        %v1075 = vld [vmem:[#allocation2 + $0xd0] sm:$0xff]
        %v1076 = vld [vmem:[#allocation2 + $0xd8] sm:$0xff]
        %v1077 = vld [vmem:[#allocation2 + $0xe0] sm:$0xff]
        %v1078 = vld [vmem:[#allocation2 + $0xe8] sm:$0xff]
        %v1079 = vld [vmem:[#allocation2 + $0xf0] sm:$0xff]
        %v1080 = vld [vmem:[#allocation2 + $0xf8] sm:$0xff]
        %v1081 = vsel %vm801, %v1049, 0.0
        %v1082 = vsel %vm802, %v1050, 0.0
        %v1083 = vsel %vm803, %v1051, 0.0
        %v1084 = vsel %vm804, %v1052, 0.0
        %v1085 = vsel %vm805, %v1053, 0.0
        %v1086 = vsel %vm806, %v1054, 0.0
        %v1087 = vsel %vm807, %v1055, 0.0
        %v1088 = vsel %vm808, %v1056, 0.0
        %v1089 = vsel %vm809, %v1057, 0.0
        %v1090 = vsel %vm810, %v1058, 0.0
        %v1091 = vsel %vm811, %v1059, 0.0
        %v1092 = vsel %vm812, %v1060, 0.0
        %v1093 = vsel %vm813, %v1061, 0.0
        %v1094 = vsel %vm814, %v1062, 0.0
        %v1095 = vsel %vm815, %v1063, 0.0
        %v1096 = vsel %vm816, %v1064, 0.0
        %v1097 = vsel %vm817, %v1065, 0.0
        %v1098 = vsel %vm818, %v1066, 0.0
        %v1099 = vsel %vm819, %v1067, 0.0
        %v1100 = vsel %vm820, %v1068, 0.0
        %v1101 = vsel %vm821, %v1069, 0.0
        %v1102 = vsel %vm822, %v1070, 0.0
        %v1103 = vsel %vm823, %v1071, 0.0
        %v1104 = vsel %vm824, %v1072, 0.0
        %v1105 = vsel %vm825, %v1073, 0.0
        %v1106 = vsel %vm826, %v1074, 0.0
        %v1107 = vsel %vm827, %v1075, 0.0
        %v1108 = vsel %vm828, %v1076, 0.0
        %v1109 = vsel %vm829, %v1077, 0.0
        %v1110 = vsel %vm830, %v1078, 0.0
        %v1111 = vsel %vm831, %v1079, 0.0
        %v1112 = vsel %vm832, %v1080, 0.0
        %1113 = vst.msk [vmem:[#allocation3] sm:$0xff] %vm1009, %v1081
        %1114 = vst.msk [vmem:[#allocation3 + $0x10] sm:$0xff] %vm1009, %v1082
        %1115 = vst.msk [vmem:[#allocation3 + $0x20] sm:$0xff] %vm1009, %v1083
        %1116 = vst.msk [vmem:[#allocation3 + $0x30] sm:$0xff] %vm1009, %v1084
        %1117 = vst.msk [vmem:[#allocation3 + $0x40] sm:$0xff] %vm1009, %v1085
        %1118 = vst.msk [vmem:[#allocation3 + $0x50] sm:$0xff] %vm1009, %v1086
        %1119 = vst.msk [vmem:[#allocation3 + $0x60] sm:$0xff] %vm1009, %v1087
        %1120 = vst.msk [vmem:[#allocation3 + $0x70] sm:$0xff] %vm1009, %v1088
        %1121 = vst.msk [vmem:[#allocation3 + $0x80] sm:$0xff] %vm1009, %v1089
        %1122 = vst.msk [vmem:[#allocation3 + $0x90] sm:$0xff] %vm1009, %v1090
        %1123 = vst.msk [vmem:[#allocation3 + $0xa0] sm:$0xff] %vm1009, %v1091
        %1124 = vst.msk [vmem:[#allocation3 + $0xb0] sm:$0xff] %vm1009, %v1092
        %1125 = vst.msk [vmem:[#allocation3 + $0xc0] sm:$0xff] %vm1009, %v1093
        %1126 = vst.msk [vmem:[#allocation3 + $0xd0] sm:$0xff] %vm1009, %v1094
        %1127 = vst.msk [vmem:[#allocation3 + $0xe0] sm:$0xff] %vm1009, %v1095
        %1128 = vst.msk [vmem:[#allocation3 + $0xf0] sm:$0xff] %vm1009, %v1096
        %1129 = vst.msk [vmem:[#allocation3 + $0x100] sm:$0xff] %vm1009, %v1097
        %1130 = vst.msk [vmem:[#allocation3 + $0x110] sm:$0xff] %vm1009, %v1098
        %1131 = vst.msk [vmem:[#allocation3 + $0x120] sm:$0xff] %vm1009, %v1099
        %1132 = vst.msk [vmem:[#allocation3 + $0x130] sm:$0xff] %vm1009, %v1100
        %1133 = vst.msk [vmem:[#allocation3 + $0x140] sm:$0xff] %vm1009, %v1101
        %1134 = vst.msk [vmem:[#allocation3 + $0x150] sm:$0xff] %vm1009, %v1102
        %1135 = vst.msk [vmem:[#allocation3 + $0x160] sm:$0xff] %vm1009, %v1103
        %1136 = vst.msk [vmem:[#allocation3 + $0x170] sm:$0xff] %vm1009, %v1104
        %1137 = vst.msk [vmem:[#allocation3 + $0x180] sm:$0xff] %vm1009, %v1105
        %1138 = vst.msk [vmem:[#allocation3 + $0x190] sm:$0xff] %vm1009, %v1106
        %1139 = vst.msk [vmem:[#allocation3 + $0x1a0] sm:$0xff] %vm1009, %v1107
        %1140 = vst.msk [vmem:[#allocation3 + $0x1b0] sm:$0xff] %vm1009, %v1108
        %1141 = vst.msk [vmem:[#allocation3 + $0x1c0] sm:$0xff] %vm1009, %v1109
        %1142 = vst.msk [vmem:[#allocation3 + $0x1d0] sm:$0xff] %vm1009, %v1110
        %1143 = vst.msk [vmem:[#allocation3 + $0x1e0] sm:$0xff] %vm1009, %v1111
        %1144 = vst.msk [vmem:[#allocation3 + $0x1f0] sm:$0xff] %vm1009, %v1112
        %v1145 = vld [vmem:[#allocation2 + $0x1] sm:$0xff]
        %v1146 = vld [vmem:[#allocation2 + $0x9] sm:$0xff]
        %v1147 = vld [vmem:[#allocation2 + $0x11] sm:$0xff]
        %v1148 = vld [vmem:[#allocation2 + $0x19] sm:$0xff]
        %v1149 = vld [vmem:[#allocation2 + $0x21] sm:$0xff]
        %v1150 = vld [vmem:[#allocation2 + $0x29] sm:$0xff]
        %v1151 = vld [vmem:[#allocation2 + $0x31] sm:$0xff]
        %v1152 = vld [vmem:[#allocation2 + $0x39] sm:$0xff]
        %v1153 = vld [vmem:[#allocation2 + $0x41] sm:$0xff]
        %v1154 = vld [vmem:[#allocation2 + $0x49] sm:$0xff]
        %v1155 = vld [vmem:[#allocation2 + $0x51] sm:$0xff]
        %v1156 = vld [vmem:[#allocation2 + $0x59] sm:$0xff]
        %v1157 = vld [vmem:[#allocation2 + $0x61] sm:$0xff]
        %v1158 = vld [vmem:[#allocation2 + $0x69] sm:$0xff]
        %v1159 = vld [vmem:[#allocation2 + $0x71] sm:$0xff]
        %v1160 = vld [vmem:[#allocation2 + $0x79] sm:$0xff]
        %v1161 = vld [vmem:[#allocation2 + $0x81] sm:$0xff]
        %v1162 = vld [vmem:[#allocation2 + $0x89] sm:$0xff]
        %v1163 = vld [vmem:[#allocation2 + $0x91] sm:$0xff]
        %v1164 = vld [vmem:[#allocation2 + $0x99] sm:$0xff]
        %v1165 = vld [vmem:[#allocation2 + $0xa1] sm:$0xff]
        %v1166 = vld [vmem:[#allocation2 + $0xa9] sm:$0xff]
        %v1167 = vld [vmem:[#allocation2 + $0xb1] sm:$0xff]
        %v1168 = vld [vmem:[#allocation2 + $0xb9] sm:$0xff]
        %v1169 = vld [vmem:[#allocation2 + $0xc1] sm:$0xff]
        %v1170 = vld [vmem:[#allocation2 + $0xc9] sm:$0xff]
        %v1171 = vld [vmem:[#allocation2 + $0xd1] sm:$0xff]
        %v1172 = vld [vmem:[#allocation2 + $0xd9] sm:$0xff]
        %v1173 = vld [vmem:[#allocation2 + $0xe1] sm:$0xff]
        %v1174 = vld [vmem:[#allocation2 + $0xe9] sm:$0xff]
        %v1175 = vld [vmem:[#allocation2 + $0xf1] sm:$0xff]
        %v1176 = vld [vmem:[#allocation2 + $0xf9] sm:$0xff]
        %1209 = vrot.lane.b32.xlu0 %v1145, 16
        %v1210 = vpop.permute.xlu0 %1209
        %1211 = vrot.lane.b32.xlu0 %v1146, 16
        %v1212 = vpop.permute.xlu0 %1211
        %1213 = vrot.lane.b32.xlu0 %v1147, 16
        %v1214 = vpop.permute.xlu0 %1213
        %1215 = vrot.lane.b32.xlu0 %v1148, 16
        %v1216 = vpop.permute.xlu0 %1215
        %1217 = vrot.lane.b32.xlu0 %v1149, 16
        %v1218 = vpop.permute.xlu0 %1217
        %1219 = vrot.lane.b32.xlu0 %v1150, 16
        %v1220 = vpop.permute.xlu0 %1219
        %1221 = vrot.lane.b32.xlu0 %v1151, 16
        %v1222 = vpop.permute.xlu0 %1221
        %1223 = vrot.lane.b32.xlu0 %v1152, 16
        %v1224 = vpop.permute.xlu0 %1223
        %1225 = vrot.lane.b32.xlu0 %v1153, 16
        %v1226 = vpop.permute.xlu0 %1225
        %1227 = vrot.lane.b32.xlu0 %v1154, 16
        %v1228 = vpop.permute.xlu0 %1227
        %1229 = vrot.lane.b32.xlu0 %v1155, 16
        %v1230 = vpop.permute.xlu0 %1229
        %1231 = vrot.lane.b32.xlu0 %v1156, 16
        %v1232 = vpop.permute.xlu0 %1231
        %1233 = vrot.lane.b32.xlu0 %v1157, 16
        %v1234 = vpop.permute.xlu0 %1233
        %1235 = vrot.lane.b32.xlu0 %v1158, 16
        %v1236 = vpop.permute.xlu0 %1235
        %1237 = vrot.lane.b32.xlu0 %v1159, 16
        %v1238 = vpop.permute.xlu0 %1237
        %1239 = vrot.lane.b32.xlu0 %v1160, 16
        %v1240 = vpop.permute.xlu0 %1239
        %1241 = vrot.lane.b32.xlu0 %v1161, 16
        %v1242 = vpop.permute.xlu0 %1241
        %1243 = vrot.lane.b32.xlu0 %v1162, 16
        %v1244 = vpop.permute.xlu0 %1243
        %1245 = vrot.lane.b32.xlu0 %v1163, 16
        %v1246 = vpop.permute.xlu0 %1245
        %1247 = vrot.lane.b32.xlu0 %v1164, 16
        %v1248 = vpop.permute.xlu0 %1247
        %1249 = vrot.lane.b32.xlu0 %v1165, 16
        %v1250 = vpop.permute.xlu0 %1249
        %1251 = vrot.lane.b32.xlu0 %v1166, 16
        %v1252 = vpop.permute.xlu0 %1251
        %1253 = vrot.lane.b32.xlu0 %v1167, 16
        %v1254 = vpop.permute.xlu0 %1253
        %1255 = vrot.lane.b32.xlu0 %v1168, 16
        %v1256 = vpop.permute.xlu0 %1255
        %1257 = vrot.lane.b32.xlu0 %v1169, 16
        %v1258 = vpop.permute.xlu0 %1257
        %1259 = vrot.lane.b32.xlu0 %v1170, 16
        %v1260 = vpop.permute.xlu0 %1259
        %1261 = vrot.lane.b32.xlu0 %v1171, 16
        %v1262 = vpop.permute.xlu0 %1261
        %1263 = vrot.lane.b32.xlu0 %v1172, 16
        %v1264 = vpop.permute.xlu0 %1263
        %1265 = vrot.lane.b32.xlu0 %v1173, 16
        %v1266 = vpop.permute.xlu0 %1265
        %1267 = vrot.lane.b32.xlu0 %v1174, 16
        %v1268 = vpop.permute.xlu0 %1267
        %1269 = vrot.lane.b32.xlu0 %v1175, 16
        %v1270 = vpop.permute.xlu0 %1269
        %1271 = vrot.lane.b32.xlu0 %v1176, 16
        %v1272 = vpop.permute.xlu0 %1271
        %vm1305 = vcmask 261248
        %1306 = vst.msk [vmem:[#allocation3] sm:$0xff] %vm1305, %v1210
        %1307 = vst.msk [vmem:[#allocation3 + $0x10] sm:$0xff] %vm1305, %v1212
        %1308 = vst.msk [vmem:[#allocation3 + $0x20] sm:$0xff] %vm1305, %v1214
        %1309 = vst.msk [vmem:[#allocation3 + $0x30] sm:$0xff] %vm1305, %v1216
        %1310 = vst.msk [vmem:[#allocation3 + $0x40] sm:$0xff] %vm1305, %v1218
        %1311 = vst.msk [vmem:[#allocation3 + $0x50] sm:$0xff] %vm1305, %v1220
        %1312 = vst.msk [vmem:[#allocation3 + $0x60] sm:$0xff] %vm1305, %v1222
        %1313 = vst.msk [vmem:[#allocation3 + $0x70] sm:$0xff] %vm1305, %v1224
        %1314 = vst.msk [vmem:[#allocation3 + $0x80] sm:$0xff] %vm1305, %v1226
        %1315 = vst.msk [vmem:[#allocation3 + $0x90] sm:$0xff] %vm1305, %v1228
        %1316 = vst.msk [vmem:[#allocation3 + $0xa0] sm:$0xff] %vm1305, %v1230
        %1317 = vst.msk [vmem:[#allocation3 + $0xb0] sm:$0xff] %vm1305, %v1232
        %1318 = vst.msk [vmem:[#allocation3 + $0xc0] sm:$0xff] %vm1305, %v1234
        %1319 = vst.msk [vmem:[#allocation3 + $0xd0] sm:$0xff] %vm1305, %v1236
        %1320 = vst.msk [vmem:[#allocation3 + $0xe0] sm:$0xff] %vm1305, %v1238
        %1321 = vst.msk [vmem:[#allocation3 + $0xf0] sm:$0xff] %vm1305, %v1240
        %1322 = vst.msk [vmem:[#allocation3 + $0x100] sm:$0xff] %vm1305, %v1242
        %1323 = vst.msk [vmem:[#allocation3 + $0x110] sm:$0xff] %vm1305, %v1244
        %1324 = vst.msk [vmem:[#allocation3 + $0x120] sm:$0xff] %vm1305, %v1246
        %1325 = vst.msk [vmem:[#allocation3 + $0x130] sm:$0xff] %vm1305, %v1248
        %1326 = vst.msk [vmem:[#allocation3 + $0x140] sm:$0xff] %vm1305, %v1250
        %1327 = vst.msk [vmem:[#allocation3 + $0x150] sm:$0xff] %vm1305, %v1252
        %1328 = vst.msk [vmem:[#allocation3 + $0x160] sm:$0xff] %vm1305, %v1254
        %1329 = vst.msk [vmem:[#allocation3 + $0x170] sm:$0xff] %vm1305, %v1256
        %1330 = vst.msk [vmem:[#allocation3 + $0x180] sm:$0xff] %vm1305, %v1258
        %1331 = vst.msk [vmem:[#allocation3 + $0x190] sm:$0xff] %vm1305, %v1260
        %1332 = vst.msk [vmem:[#allocation3 + $0x1a0] sm:$0xff] %vm1305, %v1262
        %1333 = vst.msk [vmem:[#allocation3 + $0x1b0] sm:$0xff] %vm1305, %v1264
        %1334 = vst.msk [vmem:[#allocation3 + $0x1c0] sm:$0xff] %vm1305, %v1266
        %1335 = vst.msk [vmem:[#allocation3 + $0x1d0] sm:$0xff] %vm1305, %v1268
        %1336 = vst.msk [vmem:[#allocation3 + $0x1e0] sm:$0xff] %vm1305, %v1270
        %1337 = vst.msk [vmem:[#allocation3 + $0x1f0] sm:$0xff] %vm1305, %v1272
        %v1338 = vld [vmem:[#allocation2 + $0x2] sm:$0xff]
        %v1339 = vld [vmem:[#allocation2 + $0xa] sm:$0xff]
        %v1340 = vld [vmem:[#allocation2 + $0x12] sm:$0xff]
        %v1341 = vld [vmem:[#allocation2 + $0x1a] sm:$0xff]
        %v1342 = vld [vmem:[#allocation2 + $0x22] sm:$0xff]
        %v1343 = vld [vmem:[#allocation2 + $0x2a] sm:$0xff]
        %v1344 = vld [vmem:[#allocation2 + $0x32] sm:$0xff]
        %v1345 = vld [vmem:[#allocation2 + $0x3a] sm:$0xff]
        %v1346 = vld [vmem:[#allocation2 + $0x42] sm:$0xff]
        %v1347 = vld [vmem:[#allocation2 + $0x4a] sm:$0xff]
        %v1348 = vld [vmem:[#allocation2 + $0x52] sm:$0xff]
        %v1349 = vld [vmem:[#allocation2 + $0x5a] sm:$0xff]
        %v1350 = vld [vmem:[#allocation2 + $0x62] sm:$0xff]
        %v1351 = vld [vmem:[#allocation2 + $0x6a] sm:$0xff]
        %v1352 = vld [vmem:[#allocation2 + $0x72] sm:$0xff]
        %v1353 = vld [vmem:[#allocation2 + $0x7a] sm:$0xff]
        %v1354 = vld [vmem:[#allocation2 + $0x82] sm:$0xff]
        %v1355 = vld [vmem:[#allocation2 + $0x8a] sm:$0xff]
        %v1356 = vld [vmem:[#allocation2 + $0x92] sm:$0xff]
        %v1357 = vld [vmem:[#allocation2 + $0x9a] sm:$0xff]
        %v1358 = vld [vmem:[#allocation2 + $0xa2] sm:$0xff]
        %v1359 = vld [vmem:[#allocation2 + $0xaa] sm:$0xff]
        %v1360 = vld [vmem:[#allocation2 + $0xb2] sm:$0xff]
        %v1361 = vld [vmem:[#allocation2 + $0xba] sm:$0xff]
        %v1362 = vld [vmem:[#allocation2 + $0xc2] sm:$0xff]
        %v1363 = vld [vmem:[#allocation2 + $0xca] sm:$0xff]
        %v1364 = vld [vmem:[#allocation2 + $0xd2] sm:$0xff]
        %v1365 = vld [vmem:[#allocation2 + $0xda] sm:$0xff]
        %v1366 = vld [vmem:[#allocation2 + $0xe2] sm:$0xff]
        %v1367 = vld [vmem:[#allocation2 + $0xea] sm:$0xff]
        %v1368 = vld [vmem:[#allocation2 + $0xf2] sm:$0xff]
        %v1369 = vld [vmem:[#allocation2 + $0xfa] sm:$0xff]
        %v1370 = vsel %vm833, %v1338, 0.0
        %v1371 = vsel %vm834, %v1339, 0.0
        %v1372 = vsel %vm835, %v1340, 0.0
        %v1373 = vsel %vm836, %v1341, 0.0
        %v1374 = vsel %vm837, %v1342, 0.0
        %v1375 = vsel %vm838, %v1343, 0.0
        %v1376 = vsel %vm839, %v1344, 0.0
        %v1377 = vsel %vm840, %v1345, 0.0
        %v1378 = vsel %vm841, %v1346, 0.0
        %v1379 = vsel %vm842, %v1347, 0.0
        %v1380 = vsel %vm843, %v1348, 0.0
        %v1381 = vsel %vm844, %v1349, 0.0
        %v1382 = vsel %vm845, %v1350, 0.0
        %v1383 = vsel %vm846, %v1351, 0.0
        %v1384 = vsel %vm847, %v1352, 0.0
        %v1385 = vsel %vm848, %v1353, 0.0
        %v1386 = vsel %vm849, %v1354, 0.0
        %v1387 = vsel %vm850, %v1355, 0.0
        %v1388 = vsel %vm851, %v1356, 0.0
        %v1389 = vsel %vm852, %v1357, 0.0
        %v1390 = vsel %vm853, %v1358, 0.0
        %v1391 = vsel %vm854, %v1359, 0.0
        %v1392 = vsel %vm855, %v1360, 0.0
        %v1393 = vsel %vm856, %v1361, 0.0
        %v1394 = vsel %vm857, %v1362, 0.0
        %v1395 = vsel %vm858, %v1363, 0.0
        %v1396 = vsel %vm859, %v1364, 0.0
        %v1397 = vsel %vm860, %v1365, 0.0
        %v1398 = vsel %vm861, %v1366, 0.0
        %v1399 = vsel %vm862, %v1367, 0.0
        %v1400 = vsel %vm863, %v1368, 0.0
        %v1401 = vsel %vm864, %v1369, 0.0
        %1434 = vrot.lane.b32.xlu0 %v1370, 32
        %v1435 = vpop.permute.xlu0 %1434
        %1436 = vrot.lane.b32.xlu0 %v1371, 32
        %v1437 = vpop.permute.xlu0 %1436
        %1438 = vrot.lane.b32.xlu0 %v1372, 32
        %v1439 = vpop.permute.xlu0 %1438
        %1440 = vrot.lane.b32.xlu0 %v1373, 32
        %v1441 = vpop.permute.xlu0 %1440
        %1442 = vrot.lane.b32.xlu0 %v1374, 32
        %v1443 = vpop.permute.xlu0 %1442
        %1444 = vrot.lane.b32.xlu0 %v1375, 32
        %v1445 = vpop.permute.xlu0 %1444
        %1446 = vrot.lane.b32.xlu0 %v1376, 32
        %v1447 = vpop.permute.xlu0 %1446
        %1448 = vrot.lane.b32.xlu0 %v1377, 32
        %v1449 = vpop.permute.xlu0 %1448
        %1450 = vrot.lane.b32.xlu0 %v1378, 32
        %v1451 = vpop.permute.xlu0 %1450
        %1452 = vrot.lane.b32.xlu0 %v1379, 32
        %v1453 = vpop.permute.xlu0 %1452
        %1454 = vrot.lane.b32.xlu0 %v1380, 32
        %v1455 = vpop.permute.xlu0 %1454
        %1456 = vrot.lane.b32.xlu0 %v1381, 32
        %v1457 = vpop.permute.xlu0 %1456
        %1458 = vrot.lane.b32.xlu0 %v1382, 32
        %v1459 = vpop.permute.xlu0 %1458
        %1460 = vrot.lane.b32.xlu0 %v1383, 32
        %v1461 = vpop.permute.xlu0 %1460
        %1462 = vrot.lane.b32.xlu0 %v1384, 32
        %v1463 = vpop.permute.xlu0 %1462
        %1464 = vrot.lane.b32.xlu0 %v1385, 32
        %v1465 = vpop.permute.xlu0 %1464
        %1466 = vrot.lane.b32.xlu0 %v1386, 32
        %v1467 = vpop.permute.xlu0 %1466
        %1468 = vrot.lane.b32.xlu0 %v1387, 32
        %v1469 = vpop.permute.xlu0 %1468
        %1470 = vrot.lane.b32.xlu0 %v1388, 32
        %v1471 = vpop.permute.xlu0 %1470
        %1472 = vrot.lane.b32.xlu0 %v1389, 32
        %v1473 = vpop.permute.xlu0 %1472
        %1474 = vrot.lane.b32.xlu0 %v1390, 32
        %v1475 = vpop.permute.xlu0 %1474
        %1476 = vrot.lane.b32.xlu0 %v1391, 32
        %v1477 = vpop.permute.xlu0 %1476
        %1478 = vrot.lane.b32.xlu0 %v1392, 32
        %v1479 = vpop.permute.xlu0 %1478
        %1480 = vrot.lane.b32.xlu0 %v1393, 32
        %v1481 = vpop.permute.xlu0 %1480
        %1482 = vrot.lane.b32.xlu0 %v1394, 32
        %v1483 = vpop.permute.xlu0 %1482
        %1484 = vrot.lane.b32.xlu0 %v1395, 32
        %v1485 = vpop.permute.xlu0 %1484
        %1486 = vrot.lane.b32.xlu0 %v1396, 32
        %v1487 = vpop.permute.xlu0 %1486
        %1488 = vrot.lane.b32.xlu0 %v1397, 32
        %v1489 = vpop.permute.xlu0 %1488
        %1490 = vrot.lane.b32.xlu0 %v1398, 32
        %v1491 = vpop.permute.xlu0 %1490
        %1492 = vrot.lane.b32.xlu0 %v1399, 32
        %v1493 = vpop.permute.xlu0 %1492
        %1494 = vrot.lane.b32.xlu0 %v1400, 32
        %v1495 = vpop.permute.xlu0 %1494
        %1496 = vrot.lane.b32.xlu0 %v1401, 32
        %v1497 = vpop.permute.xlu0 %1496
        %vm1530 = vcmask 392448
        %1531 = vst.msk [vmem:[#allocation3] sm:$0xff] %vm1530, %v1435
        %1532 = vst.msk [vmem:[#allocation3 + $0x10] sm:$0xff] %vm1530, %v1437
        %1533 = vst.msk [vmem:[#allocation3 + $0x20] sm:$0xff] %vm1530, %v1439
        %1534 = vst.msk [vmem:[#allocation3 + $0x30] sm:$0xff] %vm1530, %v1441
        %1535 = vst.msk [vmem:[#allocation3 + $0x40] sm:$0xff] %vm1530, %v1443
        %1536 = vst.msk [vmem:[#allocation3 + $0x50] sm:$0xff] %vm1530, %v1445
        %1537 = vst.msk [vmem:[#allocation3 + $0x60] sm:$0xff] %vm1530, %v1447
        %1538 = vst.msk [vmem:[#allocation3 + $0x70] sm:$0xff] %vm1530, %v1449
        %1539 = vst.msk [vmem:[#allocation3 + $0x80] sm:$0xff] %vm1530, %v1451
        %1540 = vst.msk [vmem:[#allocation3 + $0x90] sm:$0xff] %vm1530, %v1453
        %1541 = vst.msk [vmem:[#allocation3 + $0xa0] sm:$0xff] %vm1530, %v1455
        %1542 = vst.msk [vmem:[#allocation3 + $0xb0] sm:$0xff] %vm1530, %v1457
        %1543 = vst.msk [vmem:[#allocation3 + $0xc0] sm:$0xff] %vm1530, %v1459
        %1544 = vst.msk [vmem:[#allocation3 + $0xd0] sm:$0xff] %vm1530, %v1461
        %1545 = vst.msk [vmem:[#allocation3 + $0xe0] sm:$0xff] %vm1530, %v1463
        %1546 = vst.msk [vmem:[#allocation3 + $0xf0] sm:$0xff] %vm1530, %v1465
        %1547 = vst.msk [vmem:[#allocation3 + $0x100] sm:$0xff] %vm1530, %v1467
        %1548 = vst.msk [vmem:[#allocation3 + $0x110] sm:$0xff] %vm1530, %v1469
        %1549 = vst.msk [vmem:[#allocation3 + $0x120] sm:$0xff] %vm1530, %v1471
        %1550 = vst.msk [vmem:[#allocation3 + $0x130] sm:$0xff] %vm1530, %v1473
        %1551 = vst.msk [vmem:[#allocation3 + $0x140] sm:$0xff] %vm1530, %v1475
        %1552 = vst.msk [vmem:[#allocation3 + $0x150] sm:$0xff] %vm1530, %v1477
        %1553 = vst.msk [vmem:[#allocation3 + $0x160] sm:$0xff] %vm1530, %v1479
        %1554 = vst.msk [vmem:[#allocation3 + $0x170] sm:$0xff] %vm1530, %v1481
        %1555 = vst.msk [vmem:[#allocation3 + $0x180] sm:$0xff] %vm1530, %v1483
        %1556 = vst.msk [vmem:[#allocation3 + $0x190] sm:$0xff] %vm1530, %v1485
        %1557 = vst.msk [vmem:[#allocation3 + $0x1a0] sm:$0xff] %vm1530, %v1487
        %1558 = vst.msk [vmem:[#allocation3 + $0x1b0] sm:$0xff] %vm1530, %v1489
        %1559 = vst.msk [vmem:[#allocation3 + $0x1c0] sm:$0xff] %vm1530, %v1491
        %1560 = vst.msk [vmem:[#allocation3 + $0x1d0] sm:$0xff] %vm1530, %v1493
        %1561 = vst.msk [vmem:[#allocation3 + $0x1e0] sm:$0xff] %vm1530, %v1495
        %1562 = vst.msk [vmem:[#allocation3 + $0x1f0] sm:$0xff] %vm1530, %v1497
        %v1563 = vld [vmem:[#allocation2 + $0x10] sm:$0xff]
        %v1564 = vld [vmem:[#allocation2 + $0x18] sm:$0xff]
        %v1565 = vld [vmem:[#allocation2 + $0x20] sm:$0xff]
        %v1566 = vld [vmem:[#allocation2 + $0x28] sm:$0xff]
        %v1567 = vld [vmem:[#allocation2 + $0x30] sm:$0xff]
        %v1568 = vld [vmem:[#allocation2 + $0x38] sm:$0xff]
        %v1569 = vld [vmem:[#allocation2 + $0x40] sm:$0xff]
        %v1570 = vld [vmem:[#allocation2 + $0x48] sm:$0xff]
        %v1571 = vld [vmem:[#allocation2 + $0x50] sm:$0xff]
        %v1572 = vld [vmem:[#allocation2 + $0x58] sm:$0xff]
        %v1573 = vld [vmem:[#allocation2 + $0x60] sm:$0xff]
        %v1574 = vld [vmem:[#allocation2 + $0x68] sm:$0xff]
        %v1575 = vld [vmem:[#allocation2 + $0x70] sm:$0xff]
        %v1576 = vld [vmem:[#allocation2 + $0x78] sm:$0xff]
        %v1577 = vld [vmem:[#allocation2 + $0x80] sm:$0xff]
        %v1578 = vld [vmem:[#allocation2 + $0x88] sm:$0xff]
        %v1579 = vld [vmem:[#allocation2 + $0x90] sm:$0xff]
        %v1580 = vld [vmem:[#allocation2 + $0x98] sm:$0xff]
        %v1581 = vld [vmem:[#allocation2 + $0xa0] sm:$0xff]
        %v1582 = vld [vmem:[#allocation2 + $0xa8] sm:$0xff]
        %v1583 = vld [vmem:[#allocation2 + $0xb0] sm:$0xff]
        %v1584 = vld [vmem:[#allocation2 + $0xb8] sm:$0xff]
        %v1585 = vld [vmem:[#allocation2 + $0xc0] sm:$0xff]
        %v1586 = vld [vmem:[#allocation2 + $0xc8] sm:$0xff]
        %v1587 = vld [vmem:[#allocation2 + $0xd0] sm:$0xff]
        %v1588 = vld [vmem:[#allocation2 + $0xd8] sm:$0xff]
        %v1589 = vld [vmem:[#allocation2 + $0xe0] sm:$0xff]
        %v1590 = vld [vmem:[#allocation2 + $0xe8] sm:$0xff]
        %v1591 = vld [vmem:[#allocation2 + $0xf0] sm:$0xff]
        %v1592 = vld [vmem:[#allocation2 + $0xf8] sm:$0xff]
        %v1593 = vld [vmem:[#allocation2 + $0x100] sm:$0xff]
        %v1594 = vld [vmem:[#allocation2 + $0x108] sm:$0xff]
        %v1595 = vsel %vm801, %v1563, 0.0
        %v1596 = vsel %vm802, %v1564, 0.0
        %v1597 = vsel %vm803, %v1565, 0.0
        %v1598 = vsel %vm804, %v1566, 0.0
        %v1599 = vsel %vm805, %v1567, 0.0
        %v1600 = vsel %vm806, %v1568, 0.0
        %v1601 = vsel %vm807, %v1569, 0.0
        %v1602 = vsel %vm808, %v1570, 0.0
        %v1603 = vsel %vm809, %v1571, 0.0
        %v1604 = vsel %vm810, %v1572, 0.0
        %v1605 = vsel %vm811, %v1573, 0.0
        %v1606 = vsel %vm812, %v1574, 0.0
        %v1607 = vsel %vm813, %v1575, 0.0
        %v1608 = vsel %vm814, %v1576, 0.0
        %v1609 = vsel %vm815, %v1577, 0.0
        %v1610 = vsel %vm816, %v1578, 0.0
        %v1611 = vsel %vm817, %v1579, 0.0
        %v1612 = vsel %vm818, %v1580, 0.0
        %v1613 = vsel %vm819, %v1581, 0.0
        %v1614 = vsel %vm820, %v1582, 0.0
        %v1615 = vsel %vm821, %v1583, 0.0
        %v1616 = vsel %vm822, %v1584, 0.0
        %v1617 = vsel %vm823, %v1585, 0.0
        %v1618 = vsel %vm824, %v1586, 0.0
        %v1619 = vsel %vm825, %v1587, 0.0
        %v1620 = vsel %vm826, %v1588, 0.0
        %v1621 = vsel %vm827, %v1589, 0.0
        %v1622 = vsel %vm828, %v1590, 0.0
        %v1623 = vsel %vm829, %v1591, 0.0
        %v1624 = vsel %vm830, %v1592, 0.0
        %v1625 = vsel %vm831, %v1593, 0.0
        %v1626 = vsel %vm832, %v1594, 0.0
        %1659 = vrot.lane.b32.xlu0 %v1595, 48
        %v1660 = vpop.permute.xlu0 %1659
        %1661 = vrot.lane.b32.xlu0 %v1596, 48
        %v1662 = vpop.permute.xlu0 %1661
        %1663 = vrot.lane.b32.xlu0 %v1597, 48
        %v1664 = vpop.permute.xlu0 %1663
        %1665 = vrot.lane.b32.xlu0 %v1598, 48
        %v1666 = vpop.permute.xlu0 %1665
        %1667 = vrot.lane.b32.xlu0 %v1599, 48
        %v1668 = vpop.permute.xlu0 %1667
        %1669 = vrot.lane.b32.xlu0 %v1600, 48
        %v1670 = vpop.permute.xlu0 %1669
        %1671 = vrot.lane.b32.xlu0 %v1601, 48
        %v1672 = vpop.permute.xlu0 %1671
        %1673 = vrot.lane.b32.xlu0 %v1602, 48
        %v1674 = vpop.permute.xlu0 %1673
        %1675 = vrot.lane.b32.xlu0 %v1603, 48
        %v1676 = vpop.permute.xlu0 %1675
        %1677 = vrot.lane.b32.xlu0 %v1604, 48
        %v1678 = vpop.permute.xlu0 %1677
        %1679 = vrot.lane.b32.xlu0 %v1605, 48
        %v1680 = vpop.permute.xlu0 %1679
        %1681 = vrot.lane.b32.xlu0 %v1606, 48
        %v1682 = vpop.permute.xlu0 %1681
        %1683 = vrot.lane.b32.xlu0 %v1607, 48
        %v1684 = vpop.permute.xlu0 %1683
        %1685 = vrot.lane.b32.xlu0 %v1608, 48
        %v1686 = vpop.permute.xlu0 %1685
        %1687 = vrot.lane.b32.xlu0 %v1609, 48
        %v1688 = vpop.permute.xlu0 %1687
        %1689 = vrot.lane.b32.xlu0 %v1610, 48
        %v1690 = vpop.permute.xlu0 %1689
        %1691 = vrot.lane.b32.xlu0 %v1611, 48
        %v1692 = vpop.permute.xlu0 %1691
        %1693 = vrot.lane.b32.xlu0 %v1612, 48
        %v1694 = vpop.permute.xlu0 %1693
        %1695 = vrot.lane.b32.xlu0 %v1613, 48
        %v1696 = vpop.permute.xlu0 %1695
        %1697 = vrot.lane.b32.xlu0 %v1614, 48
        %v1698 = vpop.permute.xlu0 %1697
        %1699 = vrot.lane.b32.xlu0 %v1615, 48
        %v1700 = vpop.permute.xlu0 %1699
        %1701 = vrot.lane.b32.xlu0 %v1616, 48
        %v1702 = vpop.permute.xlu0 %1701
        %1703 = vrot.lane.b32.xlu0 %v1617, 48
        %v1704 = vpop.permute.xlu0 %1703
        %1705 = vrot.lane.b32.xlu0 %v1618, 48
        %v1706 = vpop.permute.xlu0 %1705
        %1707 = vrot.lane.b32.xlu0 %v1619, 48
        %v1708 = vpop.permute.xlu0 %1707
        %1709 = vrot.lane.b32.xlu0 %v1620, 48
        %v1710 = vpop.permute.xlu0 %1709
        %1711 = vrot.lane.b32.xlu0 %v1621, 48
        %v1712 = vpop.permute.xlu0 %1711
        %1713 = vrot.lane.b32.xlu0 %v1622, 48
        %v1714 = vpop.permute.xlu0 %1713
        %1715 = vrot.lane.b32.xlu0 %v1623, 48
        %v1716 = vpop.permute.xlu0 %1715
        %1717 = vrot.lane.b32.xlu0 %v1624, 48
        %v1718 = vpop.permute.xlu0 %1717
        %1719 = vrot.lane.b32.xlu0 %v1625, 48
        %v1720 = vpop.permute.xlu0 %1719
        %1721 = vrot.lane.b32.xlu0 %v1626, 48
        %v1722 = vpop.permute.xlu0 %1721
        %vm1755 = vcmask 523648
        %1756 = vst.msk [vmem:[#allocation3] sm:$0xff] %vm1755, %v1660
        %1757 = vst.msk [vmem:[#allocation3 + $0x10] sm:$0xff] %vm1755, %v1662
        %1758 = vst.msk [vmem:[#allocation3 + $0x20] sm:$0xff] %vm1755, %v1664
        %1759 = vst.msk [vmem:[#allocation3 + $0x30] sm:$0xff] %vm1755, %v1666
        %1760 = vst.msk [vmem:[#allocation3 + $0x40] sm:$0xff] %vm1755, %v1668
        %1761 = vst.msk [vmem:[#allocation3 + $0x50] sm:$0xff] %vm1755, %v1670
        %1762 = vst.msk [vmem:[#allocation3 + $0x60] sm:$0xff] %vm1755, %v1672
        %1763 = vst.msk [vmem:[#allocation3 + $0x70] sm:$0xff] %vm1755, %v1674
        %1764 = vst.msk [vmem:[#allocation3 + $0x80] sm:$0xff] %vm1755, %v1676
        %1765 = vst.msk [vmem:[#allocation3 + $0x90] sm:$0xff] %vm1755, %v1678
        %1766 = vst.msk [vmem:[#allocation3 + $0xa0] sm:$0xff] %vm1755, %v1680
        %1767 = vst.msk [vmem:[#allocation3 + $0xb0] sm:$0xff] %vm1755, %v1682
        %1768 = vst.msk [vmem:[#allocation3 + $0xc0] sm:$0xff] %vm1755, %v1684
        %1769 = vst.msk [vmem:[#allocation3 + $0xd0] sm:$0xff] %vm1755, %v1686
        %1770 = vst.msk [vmem:[#allocation3 + $0xe0] sm:$0xff] %vm1755, %v1688
        %1771 = vst.msk [vmem:[#allocation3 + $0xf0] sm:$0xff] %vm1755, %v1690
        %1772 = vst.msk [vmem:[#allocation3 + $0x100] sm:$0xff] %vm1755, %v1692
        %1773 = vst.msk [vmem:[#allocation3 + $0x110] sm:$0xff] %vm1755, %v1694
        %1774 = vst.msk [vmem:[#allocation3 + $0x120] sm:$0xff] %vm1755, %v1696
        %1775 = vst.msk [vmem:[#allocation3 + $0x130] sm:$0xff] %vm1755, %v1698
        %1776 = vst.msk [vmem:[#allocation3 + $0x140] sm:$0xff] %vm1755, %v1700
        %1777 = vst.msk [vmem:[#allocation3 + $0x150] sm:$0xff] %vm1755, %v1702
        %1778 = vst.msk [vmem:[#allocation3 + $0x160] sm:$0xff] %vm1755, %v1704
        %1779 = vst.msk [vmem:[#allocation3 + $0x170] sm:$0xff] %vm1755, %v1706
        %1780 = vst.msk [vmem:[#allocation3 + $0x180] sm:$0xff] %vm1755, %v1708
        %1781 = vst.msk [vmem:[#allocation3 + $0x190] sm:$0xff] %vm1755, %v1710
        %1782 = vst.msk [vmem:[#allocation3 + $0x1a0] sm:$0xff] %vm1755, %v1712
        %1783 = vst.msk [vmem:[#allocation3 + $0x1b0] sm:$0xff] %vm1755, %v1714
        %1784 = vst.msk [vmem:[#allocation3 + $0x1c0] sm:$0xff] %vm1755, %v1716
        %1785 = vst.msk [vmem:[#allocation3 + $0x1d0] sm:$0xff] %vm1755, %v1718
        %1786 = vst.msk [vmem:[#allocation3 + $0x1e0] sm:$0xff] %vm1755, %v1720
        %1787 = vst.msk [vmem:[#allocation3 + $0x1f0] sm:$0xff] %vm1755, %v1722
        %v1788 = vld [vmem:[#allocation2 + $0x11] sm:$0xff]
        %v1789 = vld [vmem:[#allocation2 + $0x19] sm:$0xff]
        %v1790 = vld [vmem:[#allocation2 + $0x21] sm:$0xff]
        %v1791 = vld [vmem:[#allocation2 + $0x29] sm:$0xff]
        %v1792 = vld [vmem:[#allocation2 + $0x31] sm:$0xff]
        %v1793 = vld [vmem:[#allocation2 + $0x39] sm:$0xff]
        %v1794 = vld [vmem:[#allocation2 + $0x41] sm:$0xff]
        %v1795 = vld [vmem:[#allocation2 + $0x49] sm:$0xff]
        %v1796 = vld [vmem:[#allocation2 + $0x51] sm:$0xff]
        %v1797 = vld [vmem:[#allocation2 + $0x59] sm:$0xff]
        %v1798 = vld [vmem:[#allocation2 + $0x61] sm:$0xff]
        %v1799 = vld [vmem:[#allocation2 + $0x69] sm:$0xff]
        %v1800 = vld [vmem:[#allocation2 + $0x71] sm:$0xff]
        %v1801 = vld [vmem:[#allocation2 + $0x79] sm:$0xff]
        %v1802 = vld [vmem:[#allocation2 + $0x81] sm:$0xff]
        %v1803 = vld [vmem:[#allocation2 + $0x89] sm:$0xff]
        %v1804 = vld [vmem:[#allocation2 + $0x91] sm:$0xff]
        %v1805 = vld [vmem:[#allocation2 + $0x99] sm:$0xff]
        %v1806 = vld [vmem:[#allocation2 + $0xa1] sm:$0xff]
        %v1807 = vld [vmem:[#allocation2 + $0xa9] sm:$0xff]
        %v1808 = vld [vmem:[#allocation2 + $0xb1] sm:$0xff]
        %v1809 = vld [vmem:[#allocation2 + $0xb9] sm:$0xff]
        %v1810 = vld [vmem:[#allocation2 + $0xc1] sm:$0xff]
        %v1811 = vld [vmem:[#allocation2 + $0xc9] sm:$0xff]
        %v1812 = vld [vmem:[#allocation2 + $0xd1] sm:$0xff]
        %v1813 = vld [vmem:[#allocation2 + $0xd9] sm:$0xff]
        %v1814 = vld [vmem:[#allocation2 + $0xe1] sm:$0xff]
        %v1815 = vld [vmem:[#allocation2 + $0xe9] sm:$0xff]
        %v1816 = vld [vmem:[#allocation2 + $0xf1] sm:$0xff]
        %v1817 = vld [vmem:[#allocation2 + $0xf9] sm:$0xff]
        %v1818 = vld [vmem:[#allocation2 + $0x101] sm:$0xff]
        %v1819 = vld [vmem:[#allocation2 + $0x109] sm:$0xff]
        %1852 = vrot.lane.b32.xlu0 %v1788, 64
        %v1853 = vpop.permute.xlu0 %1852
        %1854 = vrot.lane.b32.xlu0 %v1789, 64
        %v1855 = vpop.permute.xlu0 %1854
        %1856 = vrot.lane.b32.xlu0 %v1790, 64
        %v1857 = vpop.permute.xlu0 %1856
        %1858 = vrot.lane.b32.xlu0 %v1791, 64
        %v1859 = vpop.permute.xlu0 %1858
        %1860 = vrot.lane.b32.xlu0 %v1792, 64
        %v1861 = vpop.permute.xlu0 %1860
        %1862 = vrot.lane.b32.xlu0 %v1793, 64
        %v1863 = vpop.permute.xlu0 %1862
        %1864 = vrot.lane.b32.xlu0 %v1794, 64
        %v1865 = vpop.permute.xlu0 %1864
        %1866 = vrot.lane.b32.xlu0 %v1795, 64
        %v1867 = vpop.permute.xlu0 %1866
        %1868 = vrot.lane.b32.xlu0 %v1796, 64
        %v1869 = vpop.permute.xlu0 %1868
        %1870 = vrot.lane.b32.xlu0 %v1797, 64
        %v1871 = vpop.permute.xlu0 %1870
        %1872 = vrot.lane.b32.xlu0 %v1798, 64
        %v1873 = vpop.permute.xlu0 %1872
        %1874 = vrot.lane.b32.xlu0 %v1799, 64
        %v1875 = vpop.permute.xlu0 %1874
        %1876 = vrot.lane.b32.xlu0 %v1800, 64
        %v1877 = vpop.permute.xlu0 %1876
        %1878 = vrot.lane.b32.xlu0 %v1801, 64
        %v1879 = vpop.permute.xlu0 %1878
        %1880 = vrot.lane.b32.xlu0 %v1802, 64
        %v1881 = vpop.permute.xlu0 %1880
        %1882 = vrot.lane.b32.xlu0 %v1803, 64
        %v1883 = vpop.permute.xlu0 %1882
        %1884 = vrot.lane.b32.xlu0 %v1804, 64
        %v1885 = vpop.permute.xlu0 %1884
        %1886 = vrot.lane.b32.xlu0 %v1805, 64
        %v1887 = vpop.permute.xlu0 %1886
        %1888 = vrot.lane.b32.xlu0 %v1806, 64
        %v1889 = vpop.permute.xlu0 %1888
        %1890 = vrot.lane.b32.xlu0 %v1807, 64
        %v1891 = vpop.permute.xlu0 %1890
        %1892 = vrot.lane.b32.xlu0 %v1808, 64
        %v1893 = vpop.permute.xlu0 %1892
        %1894 = vrot.lane.b32.xlu0 %v1809, 64
        %v1895 = vpop.permute.xlu0 %1894
        %1896 = vrot.lane.b32.xlu0 %v1810, 64
        %v1897 = vpop.permute.xlu0 %1896
        %1898 = vrot.lane.b32.xlu0 %v1811, 64
        %v1899 = vpop.permute.xlu0 %1898
        %1900 = vrot.lane.b32.xlu0 %v1812, 64
        %v1901 = vpop.permute.xlu0 %1900
        %1902 = vrot.lane.b32.xlu0 %v1813, 64
        %v1903 = vpop.permute.xlu0 %1902
        %1904 = vrot.lane.b32.xlu0 %v1814, 64
        %v1905 = vpop.permute.xlu0 %1904
        %1906 = vrot.lane.b32.xlu0 %v1815, 64
        %v1907 = vpop.permute.xlu0 %1906
        %1908 = vrot.lane.b32.xlu0 %v1816, 64
        %v1909 = vpop.permute.xlu0 %1908
        %1910 = vrot.lane.b32.xlu0 %v1817, 64
        %v1911 = vpop.permute.xlu0 %1910
        %1912 = vrot.lane.b32.xlu0 %v1818, 64
        %v1913 = vpop.permute.xlu0 %1912
        %1914 = vrot.lane.b32.xlu0 %v1819, 64
        %v1915 = vpop.permute.xlu0 %1914
        %vm1948 = vcmask 654848
        %1949 = vst.msk [vmem:[#allocation3] sm:$0xff] %vm1948, %v1853
        %1950 = vst.msk [vmem:[#allocation3 + $0x10] sm:$0xff] %vm1948, %v1855
        %1951 = vst.msk [vmem:[#allocation3 + $0x20] sm:$0xff] %vm1948, %v1857
        %1952 = vst.msk [vmem:[#allocation3 + $0x30] sm:$0xff] %vm1948, %v1859
        %1953 = vst.msk [vmem:[#allocation3 + $0x40] sm:$0xff] %vm1948, %v1861
        %1954 = vst.msk [vmem:[#allocation3 + $0x50] sm:$0xff] %vm1948, %v1863
        %1955 = vst.msk [vmem:[#allocation3 + $0x60] sm:$0xff] %vm1948, %v1865
        %1956 = vst.msk [vmem:[#allocation3 + $0x70] sm:$0xff] %vm1948, %v1867
        %1957 = vst.msk [vmem:[#allocation3 + $0x80] sm:$0xff] %vm1948, %v1869
        %1958 = vst.msk [vmem:[#allocation3 + $0x90] sm:$0xff] %vm1948, %v1871
        %1959 = vst.msk [vmem:[#allocation3 + $0xa0] sm:$0xff] %vm1948, %v1873
        %1960 = vst.msk [vmem:[#allocation3 + $0xb0] sm:$0xff] %vm1948, %v1875
        %1961 = vst.msk [vmem:[#allocation3 + $0xc0] sm:$0xff] %vm1948, %v1877
        %1962 = vst.msk [vmem:[#allocation3 + $0xd0] sm:$0xff] %vm1948, %v1879
        %1963 = vst.msk [vmem:[#allocation3 + $0xe0] sm:$0xff] %vm1948, %v1881
        %1964 = vst.msk [vmem:[#allocation3 + $0xf0] sm:$0xff] %vm1948, %v1883
        %1965 = vst.msk [vmem:[#allocation3 + $0x100] sm:$0xff] %vm1948, %v1885
        %1966 = vst.msk [vmem:[#allocation3 + $0x110] sm:$0xff] %vm1948, %v1887
        %1967 = vst.msk [vmem:[#allocation3 + $0x120] sm:$0xff] %vm1948, %v1889
        %1968 = vst.msk [vmem:[#allocation3 + $0x130] sm:$0xff] %vm1948, %v1891
        %1969 = vst.msk [vmem:[#allocation3 + $0x140] sm:$0xff] %vm1948, %v1893
        %1970 = vst.msk [vmem:[#allocation3 + $0x150] sm:$0xff] %vm1948, %v1895
        %1971 = vst.msk [vmem:[#allocation3 + $0x160] sm:$0xff] %vm1948, %v1897
        %1972 = vst.msk [vmem:[#allocation3 + $0x170] sm:$0xff] %vm1948, %v1899
        %1973 = vst.msk [vmem:[#allocation3 + $0x180] sm:$0xff] %vm1948, %v1901
        %1974 = vst.msk [vmem:[#allocation3 + $0x190] sm:$0xff] %vm1948, %v1903
        %1975 = vst.msk [vmem:[#allocation3 + $0x1a0] sm:$0xff] %vm1948, %v1905
        %1976 = vst.msk [vmem:[#allocation3 + $0x1b0] sm:$0xff] %vm1948, %v1907
        %1977 = vst.msk [vmem:[#allocation3 + $0x1c0] sm:$0xff] %vm1948, %v1909
        %1978 = vst.msk [vmem:[#allocation3 + $0x1d0] sm:$0xff] %vm1948, %v1911
        %1979 = vst.msk [vmem:[#allocation3 + $0x1e0] sm:$0xff] %vm1948, %v1913
        %1980 = vst.msk [vmem:[#allocation3 + $0x1f0] sm:$0xff] %vm1948, %v1915
        %v1981 = vld [vmem:[#allocation2 + $0x12] sm:$0xff]
        %v1982 = vld [vmem:[#allocation2 + $0x1a] sm:$0xff]
        %v1983 = vld [vmem:[#allocation2 + $0x22] sm:$0xff]
        %v1984 = vld [vmem:[#allocation2 + $0x2a] sm:$0xff]
        %v1985 = vld [vmem:[#allocation2 + $0x32] sm:$0xff]
        %v1986 = vld [vmem:[#allocation2 + $0x3a] sm:$0xff]
        %v1987 = vld [vmem:[#allocation2 + $0x42] sm:$0xff]
        %v1988 = vld [vmem:[#allocation2 + $0x4a] sm:$0xff]
        %v1989 = vld [vmem:[#allocation2 + $0x52] sm:$0xff]
        %v1990 = vld [vmem:[#allocation2 + $0x5a] sm:$0xff]
        %v1991 = vld [vmem:[#allocation2 + $0x62] sm:$0xff]
        %v1992 = vld [vmem:[#allocation2 + $0x6a] sm:$0xff]
        %v1993 = vld [vmem:[#allocation2 + $0x72] sm:$0xff]
        %v1994 = vld [vmem:[#allocation2 + $0x7a] sm:$0xff]
        %v1995 = vld [vmem:[#allocation2 + $0x82] sm:$0xff]
        %v1996 = vld [vmem:[#allocation2 + $0x8a] sm:$0xff]
        %v1997 = vld [vmem:[#allocation2 + $0x92] sm:$0xff]
        %v1998 = vld [vmem:[#allocation2 + $0x9a] sm:$0xff]
        %v1999 = vld [vmem:[#allocation2 + $0xa2] sm:$0xff]
        %v2000 = vld [vmem:[#allocation2 + $0xaa] sm:$0xff]
        %v2001 = vld [vmem:[#allocation2 + $0xb2] sm:$0xff]
        %v2002 = vld [vmem:[#allocation2 + $0xba] sm:$0xff]
        %v2003 = vld [vmem:[#allocation2 + $0xc2] sm:$0xff]
        %v2004 = vld [vmem:[#allocation2 + $0xca] sm:$0xff]
        %v2005 = vld [vmem:[#allocation2 + $0xd2] sm:$0xff]
        %v2006 = vld [vmem:[#allocation2 + $0xda] sm:$0xff]
        %v2007 = vld [vmem:[#allocation2 + $0xe2] sm:$0xff]
        %v2008 = vld [vmem:[#allocation2 + $0xea] sm:$0xff]
        %v2009 = vld [vmem:[#allocation2 + $0xf2] sm:$0xff]
        %v2010 = vld [vmem:[#allocation2 + $0xfa] sm:$0xff]
        %v2011 = vld [vmem:[#allocation2 + $0x102] sm:$0xff]
        %v2012 = vld [vmem:[#allocation2 + $0x10a] sm:$0xff]
        %v2013 = vsel %vm833, %v1981, 0.0
        %v2014 = vsel %vm834, %v1982, 0.0
        %v2015 = vsel %vm835, %v1983, 0.0
        %v2016 = vsel %vm836, %v1984, 0.0
        %v2017 = vsel %vm837, %v1985, 0.0
        %v2018 = vsel %vm838, %v1986, 0.0
        %v2019 = vsel %vm839, %v1987, 0.0
        %v2020 = vsel %vm840, %v1988, 0.0
        %v2021 = vsel %vm841, %v1989, 0.0
        %v2022 = vsel %vm842, %v1990, 0.0
        %v2023 = vsel %vm843, %v1991, 0.0
        %v2024 = vsel %vm844, %v1992, 0.0
        %v2025 = vsel %vm845, %v1993, 0.0
        %v2026 = vsel %vm846, %v1994, 0.0
        %v2027 = vsel %vm847, %v1995, 0.0
        %v2028 = vsel %vm848, %v1996, 0.0
        %v2029 = vsel %vm849, %v1997, 0.0
        %v2030 = vsel %vm850, %v1998, 0.0
        %v2031 = vsel %vm851, %v1999, 0.0
        %v2032 = vsel %vm852, %v2000, 0.0
        %v2033 = vsel %vm853, %v2001, 0.0
        %v2034 = vsel %vm854, %v2002, 0.0
        %v2035 = vsel %vm855, %v2003, 0.0
        %v2036 = vsel %vm856, %v2004, 0.0
        %v2037 = vsel %vm857, %v2005, 0.0
        %v2038 = vsel %vm858, %v2006, 0.0
        %v2039 = vsel %vm859, %v2007, 0.0
        %v2040 = vsel %vm860, %v2008, 0.0
        %v2041 = vsel %vm861, %v2009, 0.0
        %v2042 = vsel %vm862, %v2010, 0.0
        %v2043 = vsel %vm863, %v2011, 0.0
        %v2044 = vsel %vm864, %v2012, 0.0
        %2077 = vrot.lane.b32.xlu0 %v2013, 80
        %v2078 = vpop.permute.xlu0 %2077
        %2079 = vrot.lane.b32.xlu0 %v2014, 80
        %v2080 = vpop.permute.xlu0 %2079
        %2081 = vrot.lane.b32.xlu0 %v2015, 80
        %v2082 = vpop.permute.xlu0 %2081
        %2083 = vrot.lane.b32.xlu0 %v2016, 80
        %v2084 = vpop.permute.xlu0 %2083
        %2085 = vrot.lane.b32.xlu0 %v2017, 80
        %v2086 = vpop.permute.xlu0 %2085
        %2087 = vrot.lane.b32.xlu0 %v2018, 80
        %v2088 = vpop.permute.xlu0 %2087
        %2089 = vrot.lane.b32.xlu0 %v2019, 80
        %v2090 = vpop.permute.xlu0 %2089
        %2091 = vrot.lane.b32.xlu0 %v2020, 80
        %v2092 = vpop.permute.xlu0 %2091
        %2093 = vrot.lane.b32.xlu0 %v2021, 80
        %v2094 = vpop.permute.xlu0 %2093
        %2095 = vrot.lane.b32.xlu0 %v2022, 80
        %v2096 = vpop.permute.xlu0 %2095
        %2097 = vrot.lane.b32.xlu0 %v2023, 80
        %v2098 = vpop.permute.xlu0 %2097
        %2099 = vrot.lane.b32.xlu0 %v2024, 80
        %v2100 = vpop.permute.xlu0 %2099
        %2101 = vrot.lane.b32.xlu0 %v2025, 80
        %v2102 = vpop.permute.xlu0 %2101
        %2103 = vrot.lane.b32.xlu0 %v2026, 80
        %v2104 = vpop.permute.xlu0 %2103
        %2105 = vrot.lane.b32.xlu0 %v2027, 80
        %v2106 = vpop.permute.xlu0 %2105
        %2107 = vrot.lane.b32.xlu0 %v2028, 80
        %v2108 = vpop.permute.xlu0 %2107
        %2109 = vrot.lane.b32.xlu0 %v2029, 80
        %v2110 = vpop.permute.xlu0 %2109
        %2111 = vrot.lane.b32.xlu0 %v2030, 80
        %v2112 = vpop.permute.xlu0 %2111
        %2113 = vrot.lane.b32.xlu0 %v2031, 80
        %v2114 = vpop.permute.xlu0 %2113
        %2115 = vrot.lane.b32.xlu0 %v2032, 80
        %v2116 = vpop.permute.xlu0 %2115
        %2117 = vrot.lane.b32.xlu0 %v2033, 80
        %v2118 = vpop.permute.xlu0 %2117
        %2119 = vrot.lane.b32.xlu0 %v2034, 80
        %v2120 = vpop.permute.xlu0 %2119
        %2121 = vrot.lane.b32.xlu0 %v2035, 80
        %v2122 = vpop.permute.xlu0 %2121
        %2123 = vrot.lane.b32.xlu0 %v2036, 80
        %v2124 = vpop.permute.xlu0 %2123
        %2125 = vrot.lane.b32.xlu0 %v2037, 80
        %v2126 = vpop.permute.xlu0 %2125
        %2127 = vrot.lane.b32.xlu0 %v2038, 80
        %v2128 = vpop.permute.xlu0 %2127
        %2129 = vrot.lane.b32.xlu0 %v2039, 80
        %v2130 = vpop.permute.xlu0 %2129
        %2131 = vrot.lane.b32.xlu0 %v2040, 80
        %v2132 = vpop.permute.xlu0 %2131
        %2133 = vrot.lane.b32.xlu0 %v2041, 80
        %v2134 = vpop.permute.xlu0 %2133
        %2135 = vrot.lane.b32.xlu0 %v2042, 80
        %v2136 = vpop.permute.xlu0 %2135
        %2137 = vrot.lane.b32.xlu0 %v2043, 80
        %v2138 = vpop.permute.xlu0 %2137
        %2139 = vrot.lane.b32.xlu0 %v2044, 80
        %v2140 = vpop.permute.xlu0 %2139
        %vm2173 = vcmask 786048
        %2174 = vst.msk [vmem:[#allocation3] sm:$0xff] %vm2173, %v2078
        %2175 = vst.msk [vmem:[#allocation3 + $0x10] sm:$0xff] %vm2173, %v2080
        %2176 = vst.msk [vmem:[#allocation3 + $0x20] sm:$0xff] %vm2173, %v2082
        %2177 = vst.msk [vmem:[#allocation3 + $0x30] sm:$0xff] %vm2173, %v2084
        %2178 = vst.msk [vmem:[#allocation3 + $0x40] sm:$0xff] %vm2173, %v2086
        %2179 = vst.msk [vmem:[#allocation3 + $0x50] sm:$0xff] %vm2173, %v2088
        %2180 = vst.msk [vmem:[#allocation3 + $0x60] sm:$0xff] %vm2173, %v2090
        %2181 = vst.msk [vmem:[#allocation3 + $0x70] sm:$0xff] %vm2173, %v2092
        %2182 = vst.msk [vmem:[#allocation3 + $0x80] sm:$0xff] %vm2173, %v2094
        %2183 = vst.msk [vmem:[#allocation3 + $0x90] sm:$0xff] %vm2173, %v2096
        %2184 = vst.msk [vmem:[#allocation3 + $0xa0] sm:$0xff] %vm2173, %v2098
        %2185 = vst.msk [vmem:[#allocation3 + $0xb0] sm:$0xff] %vm2173, %v2100
        %2186 = vst.msk [vmem:[#allocation3 + $0xc0] sm:$0xff] %vm2173, %v2102
        %2187 = vst.msk [vmem:[#allocation3 + $0xd0] sm:$0xff] %vm2173, %v2104
        %2188 = vst.msk [vmem:[#allocation3 + $0xe0] sm:$0xff] %vm2173, %v2106
        %2189 = vst.msk [vmem:[#allocation3 + $0xf0] sm:$0xff] %vm2173, %v2108
        %2190 = vst.msk [vmem:[#allocation3 + $0x100] sm:$0xff] %vm2173, %v2110
        %2191 = vst.msk [vmem:[#allocation3 + $0x110] sm:$0xff] %vm2173, %v2112
        %2192 = vst.msk [vmem:[#allocation3 + $0x120] sm:$0xff] %vm2173, %v2114
        %2193 = vst.msk [vmem:[#allocation3 + $0x130] sm:$0xff] %vm2173, %v2116
        %2194 = vst.msk [vmem:[#allocation3 + $0x140] sm:$0xff] %vm2173, %v2118
        %2195 = vst.msk [vmem:[#allocation3 + $0x150] sm:$0xff] %vm2173, %v2120
        %2196 = vst.msk [vmem:[#allocation3 + $0x160] sm:$0xff] %vm2173, %v2122
        %2197 = vst.msk [vmem:[#allocation3 + $0x170] sm:$0xff] %vm2173, %v2124
        %2198 = vst.msk [vmem:[#allocation3 + $0x180] sm:$0xff] %vm2173, %v2126
        %2199 = vst.msk [vmem:[#allocation3 + $0x190] sm:$0xff] %vm2173, %v2128
        %2200 = vst.msk [vmem:[#allocation3 + $0x1a0] sm:$0xff] %vm2173, %v2130
        %2201 = vst.msk [vmem:[#allocation3 + $0x1b0] sm:$0xff] %vm2173, %v2132
        %2202 = vst.msk [vmem:[#allocation3 + $0x1c0] sm:$0xff] %vm2173, %v2134
        %2203 = vst.msk [vmem:[#allocation3 + $0x1d0] sm:$0xff] %vm2173, %v2136
        %2204 = vst.msk [vmem:[#allocation3 + $0x1e0] sm:$0xff] %vm2173, %v2138
        %2205 = vst.msk [vmem:[#allocation3 + $0x1f0] sm:$0xff] %vm2173, %v2140
        %v2206 = vld [vmem:[#allocation2 + $0x20] sm:$0xff]
        %v2207 = vld [vmem:[#allocation2 + $0x28] sm:$0xff]
        %v2208 = vld [vmem:[#allocation2 + $0x30] sm:$0xff]
        %v2209 = vld [vmem:[#allocation2 + $0x38] sm:$0xff]
        %v2210 = vld [vmem:[#allocation2 + $0x40] sm:$0xff]
        %v2211 = vld [vmem:[#allocation2 + $0x48] sm:$0xff]
        %v2212 = vld [vmem:[#allocation2 + $0x50] sm:$0xff]
        %v2213 = vld [vmem:[#allocation2 + $0x58] sm:$0xff]
        %v2214 = vld [vmem:[#allocation2 + $0x60] sm:$0xff]
        %v2215 = vld [vmem:[#allocation2 + $0x68] sm:$0xff]
        %v2216 = vld [vmem:[#allocation2 + $0x70] sm:$0xff]
        %v2217 = vld [vmem:[#allocation2 + $0x78] sm:$0xff]
        %v2218 = vld [vmem:[#allocation2 + $0x80] sm:$0xff]
        %v2219 = vld [vmem:[#allocation2 + $0x88] sm:$0xff]
        %v2220 = vld [vmem:[#allocation2 + $0x90] sm:$0xff]
        %v2221 = vld [vmem:[#allocation2 + $0x98] sm:$0xff]
        %v2222 = vld [vmem:[#allocation2 + $0xa0] sm:$0xff]
        %v2223 = vld [vmem:[#allocation2 + $0xa8] sm:$0xff]
        %v2224 = vld [vmem:[#allocation2 + $0xb0] sm:$0xff]
        %v2225 = vld [vmem:[#allocation2 + $0xb8] sm:$0xff]
        %v2226 = vld [vmem:[#allocation2 + $0xc0] sm:$0xff]
        %v2227 = vld [vmem:[#allocation2 + $0xc8] sm:$0xff]
        %v2228 = vld [vmem:[#allocation2 + $0xd0] sm:$0xff]
        %v2229 = vld [vmem:[#allocation2 + $0xd8] sm:$0xff]
        %v2230 = vld [vmem:[#allocation2 + $0xe0] sm:$0xff]
        %v2231 = vld [vmem:[#allocation2 + $0xe8] sm:$0xff]
        %v2232 = vld [vmem:[#allocation2 + $0xf0] sm:$0xff]
        %v2233 = vld [vmem:[#allocation2 + $0xf8] sm:$0xff]
        %v2234 = vld [vmem:[#allocation2 + $0x100] sm:$0xff]
        %v2235 = vld [vmem:[#allocation2 + $0x108] sm:$0xff]
        %v2236 = vld [vmem:[#allocation2 + $0x110] sm:$0xff]
        %v2237 = vld [vmem:[#allocation2 + $0x118] sm:$0xff]
        %v2238 = vsel %vm801, %v2206, 0.0
        %v2239 = vsel %vm802, %v2207, 0.0
        %v2240 = vsel %vm803, %v2208, 0.0
        %v2241 = vsel %vm804, %v2209, 0.0
        %v2242 = vsel %vm805, %v2210, 0.0
        %v2243 = vsel %vm806, %v2211, 0.0
        %v2244 = vsel %vm807, %v2212, 0.0
        %v2245 = vsel %vm808, %v2213, 0.0
        %v2246 = vsel %vm809, %v2214, 0.0
        %v2247 = vsel %vm810, %v2215, 0.0
        %v2248 = vsel %vm811, %v2216, 0.0
        %v2249 = vsel %vm812, %v2217, 0.0
        %v2250 = vsel %vm813, %v2218, 0.0
        %v2251 = vsel %vm814, %v2219, 0.0
        %v2252 = vsel %vm815, %v2220, 0.0
        %v2253 = vsel %vm816, %v2221, 0.0
        %v2254 = vsel %vm817, %v2222, 0.0
        %v2255 = vsel %vm818, %v2223, 0.0
        %v2256 = vsel %vm819, %v2224, 0.0
        %v2257 = vsel %vm820, %v2225, 0.0
        %v2258 = vsel %vm821, %v2226, 0.0
        %v2259 = vsel %vm822, %v2227, 0.0
        %v2260 = vsel %vm823, %v2228, 0.0
        %v2261 = vsel %vm824, %v2229, 0.0
        %v2262 = vsel %vm825, %v2230, 0.0
        %v2263 = vsel %vm826, %v2231, 0.0
        %v2264 = vsel %vm827, %v2232, 0.0
        %v2265 = vsel %vm828, %v2233, 0.0
        %v2266 = vsel %vm829, %v2234, 0.0
        %v2267 = vsel %vm830, %v2235, 0.0
        %v2268 = vsel %vm831, %v2236, 0.0
        %v2269 = vsel %vm832, %v2237, 0.0
        %2302 = vrot.lane.b32.xlu0 %v2238, 96
        %v2303 = vpop.permute.xlu0 %2302
        %2304 = vrot.lane.b32.xlu0 %v2239, 96
        %v2305 = vpop.permute.xlu0 %2304
        %2306 = vrot.lane.b32.xlu0 %v2240, 96
        %v2307 = vpop.permute.xlu0 %2306
        %2308 = vrot.lane.b32.xlu0 %v2241, 96
        %v2309 = vpop.permute.xlu0 %2308
        %2310 = vrot.lane.b32.xlu0 %v2242, 96
        %v2311 = vpop.permute.xlu0 %2310
        %2312 = vrot.lane.b32.xlu0 %v2243, 96
        %v2313 = vpop.permute.xlu0 %2312
        %2314 = vrot.lane.b32.xlu0 %v2244, 96
        %v2315 = vpop.permute.xlu0 %2314
        %2316 = vrot.lane.b32.xlu0 %v2245, 96
        %v2317 = vpop.permute.xlu0 %2316
        %2318 = vrot.lane.b32.xlu0 %v2246, 96
        %v2319 = vpop.permute.xlu0 %2318
        %2320 = vrot.lane.b32.xlu0 %v2247, 96
        %v2321 = vpop.permute.xlu0 %2320
        %2322 = vrot.lane.b32.xlu0 %v2248, 96
        %v2323 = vpop.permute.xlu0 %2322
        %2324 = vrot.lane.b32.xlu0 %v2249, 96
        %v2325 = vpop.permute.xlu0 %2324
        %2326 = vrot.lane.b32.xlu0 %v2250, 96
        %v2327 = vpop.permute.xlu0 %2326
        %2328 = vrot.lane.b32.xlu0 %v2251, 96
        %v2329 = vpop.permute.xlu0 %2328
        %2330 = vrot.lane.b32.xlu0 %v2252, 96
        %v2331 = vpop.permute.xlu0 %2330
        %2332 = vrot.lane.b32.xlu0 %v2253, 96
        %v2333 = vpop.permute.xlu0 %2332
        %2334 = vrot.lane.b32.xlu0 %v2254, 96
        %v2335 = vpop.permute.xlu0 %2334
        %2336 = vrot.lane.b32.xlu0 %v2255, 96
        %v2337 = vpop.permute.xlu0 %2336
        %2338 = vrot.lane.b32.xlu0 %v2256, 96
        %v2339 = vpop.permute.xlu0 %2338
        %2340 = vrot.lane.b32.xlu0 %v2257, 96
        %v2341 = vpop.permute.xlu0 %2340
        %2342 = vrot.lane.b32.xlu0 %v2258, 96
        %v2343 = vpop.permute.xlu0 %2342
        %2344 = vrot.lane.b32.xlu0 %v2259, 96
        %v2345 = vpop.permute.xlu0 %2344
        %2346 = vrot.lane.b32.xlu0 %v2260, 96
        %v2347 = vpop.permute.xlu0 %2346
        %2348 = vrot.lane.b32.xlu0 %v2261, 96
        %v2349 = vpop.permute.xlu0 %2348
        %2350 = vrot.lane.b32.xlu0 %v2262, 96
        %v2351 = vpop.permute.xlu0 %2350
        %2352 = vrot.lane.b32.xlu0 %v2263, 96
        %v2353 = vpop.permute.xlu0 %2352
        %2354 = vrot.lane.b32.xlu0 %v2264, 96
        %v2355 = vpop.permute.xlu0 %2354
        %2356 = vrot.lane.b32.xlu0 %v2265, 96
        %v2357 = vpop.permute.xlu0 %2356
        %2358 = vrot.lane.b32.xlu0 %v2266, 96
        %v2359 = vpop.permute.xlu0 %2358
        %2360 = vrot.lane.b32.xlu0 %v2267, 96
        %v2361 = vpop.permute.xlu0 %2360
        %2362 = vrot.lane.b32.xlu0 %v2268, 96
        %v2363 = vpop.permute.xlu0 %2362
        %2364 = vrot.lane.b32.xlu0 %v2269, 96
        %v2365 = vpop.permute.xlu0 %2364
        %vm2398 = vcmask 917248
        %2399 = vst.msk [vmem:[#allocation3] sm:$0xff] %vm2398, %v2303
        %2400 = vst.msk [vmem:[#allocation3 + $0x10] sm:$0xff] %vm2398, %v2305
        %2401 = vst.msk [vmem:[#allocation3 + $0x20] sm:$0xff] %vm2398, %v2307
        %2402 = vst.msk [vmem:[#allocation3 + $0x30] sm:$0xff] %vm2398, %v2309
        %2403 = vst.msk [vmem:[#allocation3 + $0x40] sm:$0xff] %vm2398, %v2311
        %2404 = vst.msk [vmem:[#allocation3 + $0x50] sm:$0xff] %vm2398, %v2313
        %2405 = vst.msk [vmem:[#allocation3 + $0x60] sm:$0xff] %vm2398, %v2315
        %2406 = vst.msk [vmem:[#allocation3 + $0x70] sm:$0xff] %vm2398, %v2317
        %2407 = vst.msk [vmem:[#allocation3 + $0x80] sm:$0xff] %vm2398, %v2319
        %2408 = vst.msk [vmem:[#allocation3 + $0x90] sm:$0xff] %vm2398, %v2321
        %2409 = vst.msk [vmem:[#allocation3 + $0xa0] sm:$0xff] %vm2398, %v2323
        %2410 = vst.msk [vmem:[#allocation3 + $0xb0] sm:$0xff] %vm2398, %v2325
        %2411 = vst.msk [vmem:[#allocation3 + $0xc0] sm:$0xff] %vm2398, %v2327
        %2412 = vst.msk [vmem:[#allocation3 + $0xd0] sm:$0xff] %vm2398, %v2329
        %2413 = vst.msk [vmem:[#allocation3 + $0xe0] sm:$0xff] %vm2398, %v2331
        %2414 = vst.msk [vmem:[#allocation3 + $0xf0] sm:$0xff] %vm2398, %v2333
        %2415 = vst.msk [vmem:[#allocation3 + $0x100] sm:$0xff] %vm2398, %v2335
        %2416 = vst.msk [vmem:[#allocation3 + $0x110] sm:$0xff] %vm2398, %v2337
        %2417 = vst.msk [vmem:[#allocation3 + $0x120] sm:$0xff] %vm2398, %v2339
        %2418 = vst.msk [vmem:[#allocation3 + $0x130] sm:$0xff] %vm2398, %v2341
        %2419 = vst.msk [vmem:[#allocation3 + $0x140] sm:$0xff] %vm2398, %v2343
        %2420 = vst.msk [vmem:[#allocation3 + $0x150] sm:$0xff] %vm2398, %v2345
        %2421 = vst.msk [vmem:[#allocation3 + $0x160] sm:$0xff] %vm2398, %v2347
        %2422 = vst.msk [vmem:[#allocation3 + $0x170] sm:$0xff] %vm2398, %v2349
        %2423 = vst.msk [vmem:[#allocation3 + $0x180] sm:$0xff] %vm2398, %v2351
        %2424 = vst.msk [vmem:[#allocation3 + $0x190] sm:$0xff] %vm2398, %v2353
        %2425 = vst.msk [vmem:[#allocation3 + $0x1a0] sm:$0xff] %vm2398, %v2355
        %2426 = vst.msk [vmem:[#allocation3 + $0x1b0] sm:$0xff] %vm2398, %v2357
        %2427 = vst.msk [vmem:[#allocation3 + $0x1c0] sm:$0xff] %vm2398, %v2359
        %2428 = vst.msk [vmem:[#allocation3 + $0x1d0] sm:$0xff] %vm2398, %v2361
        %2429 = vst.msk [vmem:[#allocation3 + $0x1e0] sm:$0xff] %vm2398, %v2363
        %2430 = vst.msk [vmem:[#allocation3 + $0x1f0] sm:$0xff] %vm2398, %v2365
        %v2431 = vld [vmem:[#allocation2 + $0x21] sm:$0xff]
        %v2432 = vld [vmem:[#allocation2 + $0x29] sm:$0xff]
        %v2433 = vld [vmem:[#allocation2 + $0x31] sm:$0xff]
        %v2434 = vld [vmem:[#allocation2 + $0x39] sm:$0xff]
        %v2435 = vld [vmem:[#allocation2 + $0x41] sm:$0xff]
        %v2436 = vld [vmem:[#allocation2 + $0x49] sm:$0xff]
        %v2437 = vld [vmem:[#allocation2 + $0x51] sm:$0xff]
        %v2438 = vld [vmem:[#allocation2 + $0x59] sm:$0xff]
        %v2439 = vld [vmem:[#allocation2 + $0x61] sm:$0xff]
        %v2440 = vld [vmem:[#allocation2 + $0x69] sm:$0xff]
        %v2441 = vld [vmem:[#allocation2 + $0x71] sm:$0xff]
        %v2442 = vld [vmem:[#allocation2 + $0x79] sm:$0xff]
        %v2443 = vld [vmem:[#allocation2 + $0x81] sm:$0xff]
        %v2444 = vld [vmem:[#allocation2 + $0x89] sm:$0xff]
        %v2445 = vld [vmem:[#allocation2 + $0x91] sm:$0xff]
        %v2446 = vld [vmem:[#allocation2 + $0x99] sm:$0xff]
        %v2447 = vld [vmem:[#allocation2 + $0xa1] sm:$0xff]
        %v2448 = vld [vmem:[#allocation2 + $0xa9] sm:$0xff]
        %v2449 = vld [vmem:[#allocation2 + $0xb1] sm:$0xff]
        %v2450 = vld [vmem:[#allocation2 + $0xb9] sm:$0xff]
        %v2451 = vld [vmem:[#allocation2 + $0xc1] sm:$0xff]
        %v2452 = vld [vmem:[#allocation2 + $0xc9] sm:$0xff]
        %v2453 = vld [vmem:[#allocation2 + $0xd1] sm:$0xff]
        %v2454 = vld [vmem:[#allocation2 + $0xd9] sm:$0xff]
        %v2455 = vld [vmem:[#allocation2 + $0xe1] sm:$0xff]
        %v2456 = vld [vmem:[#allocation2 + $0xe9] sm:$0xff]
        %v2457 = vld [vmem:[#allocation2 + $0xf1] sm:$0xff]
        %v2458 = vld [vmem:[#allocation2 + $0xf9] sm:$0xff]
        %v2459 = vld [vmem:[#allocation2 + $0x101] sm:$0xff]
        %v2460 = vld [vmem:[#allocation2 + $0x109] sm:$0xff]
        %v2461 = vld [vmem:[#allocation2 + $0x111] sm:$0xff]
        %v2462 = vld [vmem:[#allocation2 + $0x119] sm:$0xff]
        %2495 = vrot.lane.b32.xlu0 %v2431, 112
        %v2496 = vpop.permute.xlu0 %2495
        %2497 = vrot.lane.b32.xlu0 %v2432, 112
        %v2498 = vpop.permute.xlu0 %2497
        %2499 = vrot.lane.b32.xlu0 %v2433, 112
        %v2500 = vpop.permute.xlu0 %2499
        %2501 = vrot.lane.b32.xlu0 %v2434, 112
        %v2502 = vpop.permute.xlu0 %2501
        %2503 = vrot.lane.b32.xlu0 %v2435, 112
        %v2504 = vpop.permute.xlu0 %2503
        %2505 = vrot.lane.b32.xlu0 %v2436, 112
        %v2506 = vpop.permute.xlu0 %2505
        %2507 = vrot.lane.b32.xlu0 %v2437, 112
        %v2508 = vpop.permute.xlu0 %2507
        %2509 = vrot.lane.b32.xlu0 %v2438, 112
        %v2510 = vpop.permute.xlu0 %2509
        %2511 = vrot.lane.b32.xlu0 %v2439, 112
        %v2512 = vpop.permute.xlu0 %2511
        %2513 = vrot.lane.b32.xlu0 %v2440, 112
        %v2514 = vpop.permute.xlu0 %2513
        %2515 = vrot.lane.b32.xlu0 %v2441, 112
        %v2516 = vpop.permute.xlu0 %2515
        %2517 = vrot.lane.b32.xlu0 %v2442, 112
        %v2518 = vpop.permute.xlu0 %2517
        %2519 = vrot.lane.b32.xlu0 %v2443, 112
        %v2520 = vpop.permute.xlu0 %2519
        %2521 = vrot.lane.b32.xlu0 %v2444, 112
        %v2522 = vpop.permute.xlu0 %2521
        %2523 = vrot.lane.b32.xlu0 %v2445, 112
        %v2524 = vpop.permute.xlu0 %2523
        %2525 = vrot.lane.b32.xlu0 %v2446, 112
        %v2526 = vpop.permute.xlu0 %2525
        %2527 = vrot.lane.b32.xlu0 %v2447, 112
        %v2528 = vpop.permute.xlu0 %2527
        %2529 = vrot.lane.b32.xlu0 %v2448, 112
        %v2530 = vpop.permute.xlu0 %2529
        %2531 = vrot.lane.b32.xlu0 %v2449, 112
        %v2532 = vpop.permute.xlu0 %2531
        %2533 = vrot.lane.b32.xlu0 %v2450, 112
        %v2534 = vpop.permute.xlu0 %2533
        %2535 = vrot.lane.b32.xlu0 %v2451, 112
        %v2536 = vpop.permute.xlu0 %2535
        %2537 = vrot.lane.b32.xlu0 %v2452, 112
        %v2538 = vpop.permute.xlu0 %2537
        %2539 = vrot.lane.b32.xlu0 %v2453, 112
        %v2540 = vpop.permute.xlu0 %2539
        %2541 = vrot.lane.b32.xlu0 %v2454, 112
        %v2542 = vpop.permute.xlu0 %2541
        %2543 = vrot.lane.b32.xlu0 %v2455, 112
        %v2544 = vpop.permute.xlu0 %2543
        %2545 = vrot.lane.b32.xlu0 %v2456, 112
        %v2546 = vpop.permute.xlu0 %2545
        %2547 = vrot.lane.b32.xlu0 %v2457, 112
        %v2548 = vpop.permute.xlu0 %2547
        %2549 = vrot.lane.b32.xlu0 %v2458, 112
        %v2550 = vpop.permute.xlu0 %2549
        %2551 = vrot.lane.b32.xlu0 %v2459, 112
        %v2552 = vpop.permute.xlu0 %2551
        %2553 = vrot.lane.b32.xlu0 %v2460, 112
        %v2554 = vpop.permute.xlu0 %2553
        %2555 = vrot.lane.b32.xlu0 %v2461, 112
        %v2556 = vpop.permute.xlu0 %2555
        %2557 = vrot.lane.b32.xlu0 %v2462, 112
        %v2558 = vpop.permute.xlu0 %2557
        %vm2591 = vcmask 1048448
        %2592 = vst.msk [vmem:[#allocation3] sm:$0xff] %vm2591, %v2496
        %2593 = vst.msk [vmem:[#allocation3 + $0x10] sm:$0xff] %vm2591, %v2498
        %2594 = vst.msk [vmem:[#allocation3 + $0x20] sm:$0xff] %vm2591, %v2500
        %2595 = vst.msk [vmem:[#allocation3 + $0x30] sm:$0xff] %vm2591, %v2502
        %2596 = vst.msk [vmem:[#allocation3 + $0x40] sm:$0xff] %vm2591, %v2504
        %2597 = vst.msk [vmem:[#allocation3 + $0x50] sm:$0xff] %vm2591, %v2506
        %2598 = vst.msk [vmem:[#allocation3 + $0x60] sm:$0xff] %vm2591, %v2508
        %2599 = vst.msk [vmem:[#allocation3 + $0x70] sm:$0xff] %vm2591, %v2510
        %2600 = vst.msk [vmem:[#allocation3 + $0x80] sm:$0xff] %vm2591, %v2512
        %2601 = vst.msk [vmem:[#allocation3 + $0x90] sm:$0xff] %vm2591, %v2514
        %2602 = vst.msk [vmem:[#allocation3 + $0xa0] sm:$0xff] %vm2591, %v2516
        %2603 = vst.msk [vmem:[#allocation3 + $0xb0] sm:$0xff] %vm2591, %v2518
        %2604 = vst.msk [vmem:[#allocation3 + $0xc0] sm:$0xff] %vm2591, %v2520
        %2605 = vst.msk [vmem:[#allocation3 + $0xd0] sm:$0xff] %vm2591, %v2522
        %2606 = vst.msk [vmem:[#allocation3 + $0xe0] sm:$0xff] %vm2591, %v2524
        %2607 = vst.msk [vmem:[#allocation3 + $0xf0] sm:$0xff] %vm2591, %v2526
        %2608 = vst.msk [vmem:[#allocation3 + $0x100] sm:$0xff] %vm2591, %v2528
        %2609 = vst.msk [vmem:[#allocation3 + $0x110] sm:$0xff] %vm2591, %v2530
        %2610 = vst.msk [vmem:[#allocation3 + $0x120] sm:$0xff] %vm2591, %v2532
        %2611 = vst.msk [vmem:[#allocation3 + $0x130] sm:$0xff] %vm2591, %v2534
        %2612 = vst.msk [vmem:[#allocation3 + $0x140] sm:$0xff] %vm2591, %v2536
        %2613 = vst.msk [vmem:[#allocation3 + $0x150] sm:$0xff] %vm2591, %v2538
        %2614 = vst.msk [vmem:[#allocation3 + $0x160] sm:$0xff] %vm2591, %v2540
        %2615 = vst.msk [vmem:[#allocation3 + $0x170] sm:$0xff] %vm2591, %v2542
        %2616 = vst.msk [vmem:[#allocation3 + $0x180] sm:$0xff] %vm2591, %v2544
        %2617 = vst.msk [vmem:[#allocation3 + $0x190] sm:$0xff] %vm2591, %v2546
        %2618 = vst.msk [vmem:[#allocation3 + $0x1a0] sm:$0xff] %vm2591, %v2548
        %2619 = vst.msk [vmem:[#allocation3 + $0x1b0] sm:$0xff] %vm2591, %v2550
        %2620 = vst.msk [vmem:[#allocation3 + $0x1c0] sm:$0xff] %vm2591, %v2552
        %2621 = vst.msk [vmem:[#allocation3 + $0x1d0] sm:$0xff] %vm2591, %v2554
        %2622 = vst.msk [vmem:[#allocation3 + $0x1e0] sm:$0xff] %vm2591, %v2556
        %2623 = vst.msk [vmem:[#allocation3 + $0x1f0] sm:$0xff] %vm2591, %v2558
        %v2624 = vld [vmem:[#allocation2 + $0x22] sm:$0xff]
        %v2625 = vld [vmem:[#allocation2 + $0x2a] sm:$0xff]
        %v2626 = vld [vmem:[#allocation2 + $0x32] sm:$0xff]
        %v2627 = vld [vmem:[#allocation2 + $0x3a] sm:$0xff]
        %v2628 = vld [vmem:[#allocation2 + $0x42] sm:$0xff]
        %v2629 = vld [vmem:[#allocation2 + $0x4a] sm:$0xff]
        %v2630 = vld [vmem:[#allocation2 + $0x52] sm:$0xff]
        %v2631 = vld [vmem:[#allocation2 + $0x5a] sm:$0xff]
        %v2632 = vld [vmem:[#allocation2 + $0x62] sm:$0xff]
        %v2633 = vld [vmem:[#allocation2 + $0x6a] sm:$0xff]
        %v2634 = vld [vmem:[#allocation2 + $0x72] sm:$0xff]
        %v2635 = vld [vmem:[#allocation2 + $0x7a] sm:$0xff]
        %v2636 = vld [vmem:[#allocation2 + $0x82] sm:$0xff]
        %v2637 = vld [vmem:[#allocation2 + $0x8a] sm:$0xff]
        %v2638 = vld [vmem:[#allocation2 + $0x92] sm:$0xff]
        %v2639 = vld [vmem:[#allocation2 + $0x9a] sm:$0xff]
        %v2640 = vld [vmem:[#allocation2 + $0xa2] sm:$0xff]
        %v2641 = vld [vmem:[#allocation2 + $0xaa] sm:$0xff]
        %v2642 = vld [vmem:[#allocation2 + $0xb2] sm:$0xff]
        %v2643 = vld [vmem:[#allocation2 + $0xba] sm:$0xff]
        %v2644 = vld [vmem:[#allocation2 + $0xc2] sm:$0xff]
        %v2645 = vld [vmem:[#allocation2 + $0xca] sm:$0xff]
        %v2646 = vld [vmem:[#allocation2 + $0xd2] sm:$0xff]
        %v2647 = vld [vmem:[#allocation2 + $0xda] sm:$0xff]
        %v2648 = vld [vmem:[#allocation2 + $0xe2] sm:$0xff]
        %v2649 = vld [vmem:[#allocation2 + $0xea] sm:$0xff]
        %v2650 = vld [vmem:[#allocation2 + $0xf2] sm:$0xff]
        %v2651 = vld [vmem:[#allocation2 + $0xfa] sm:$0xff]
        %v2652 = vld [vmem:[#allocation2 + $0x102] sm:$0xff]
        %v2653 = vld [vmem:[#allocation2 + $0x10a] sm:$0xff]
        %v2654 = vld [vmem:[#allocation2 + $0x112] sm:$0xff]
        %v2655 = vld [vmem:[#allocation2 + $0x11a] sm:$0xff]
        %v2656 = vsel %vm833, %v2624, 0.0
        %v2657 = vsel %vm834, %v2625, 0.0
        %v2658 = vsel %vm835, %v2626, 0.0
        %v2659 = vsel %vm836, %v2627, 0.0
        %v2660 = vsel %vm837, %v2628, 0.0
        %v2661 = vsel %vm838, %v2629, 0.0
        %v2662 = vsel %vm839, %v2630, 0.0
        %v2663 = vsel %vm840, %v2631, 0.0
        %v2664 = vsel %vm841, %v2632, 0.0
        %v2665 = vsel %vm842, %v2633, 0.0
        %v2666 = vsel %vm843, %v2634, 0.0
        %v2667 = vsel %vm844, %v2635, 0.0
        %v2668 = vsel %vm845, %v2636, 0.0
        %v2669 = vsel %vm846, %v2637, 0.0
        %v2670 = vsel %vm847, %v2638, 0.0
        %v2671 = vsel %vm848, %v2639, 0.0
        %v2672 = vsel %vm849, %v2640, 0.0
        %v2673 = vsel %vm850, %v2641, 0.0
        %v2674 = vsel %vm851, %v2642, 0.0
        %v2675 = vsel %vm852, %v2643, 0.0
        %v2676 = vsel %vm853, %v2644, 0.0
        %v2677 = vsel %vm854, %v2645, 0.0
        %v2678 = vsel %vm855, %v2646, 0.0
        %v2679 = vsel %vm856, %v2647, 0.0
        %v2680 = vsel %vm857, %v2648, 0.0
        %v2681 = vsel %vm858, %v2649, 0.0
        %v2682 = vsel %vm859, %v2650, 0.0
        %v2683 = vsel %vm860, %v2651, 0.0
        %v2684 = vsel %vm861, %v2652, 0.0
        %v2685 = vsel %vm862, %v2653, 0.0
        %v2686 = vsel %vm863, %v2654, 0.0
        %v2687 = vsel %vm864, %v2655, 0.0
        %2688 = vst.msk [vmem:[#allocation3 + $0x8] sm:$0xff] %vm1009, %v2656
        %2689 = vst.msk [vmem:[#allocation3 + $0x18] sm:$0xff] %vm1009, %v2657
        %2690 = vst.msk [vmem:[#allocation3 + $0x28] sm:$0xff] %vm1009, %v2658
        %2691 = vst.msk [vmem:[#allocation3 + $0x38] sm:$0xff] %vm1009, %v2659
        %2692 = vst.msk [vmem:[#allocation3 + $0x48] sm:$0xff] %vm1009, %v2660
        %2693 = vst.msk [vmem:[#allocation3 + $0x58] sm:$0xff] %vm1009, %v2661
        %2694 = vst.msk [vmem:[#allocation3 + $0x68] sm:$0xff] %vm1009, %v2662
        %2695 = vst.msk [vmem:[#allocation3 + $0x78] sm:$0xff] %vm1009, %v2663
        %2696 = vst.msk [vmem:[#allocation3 + $0x88] sm:$0xff] %vm1009, %v2664
        %2697 = vst.msk [vmem:[#allocation3 + $0x98] sm:$0xff] %vm1009, %v2665
        %2698 = vst.msk [vmem:[#allocation3 + $0xa8] sm:$0xff] %vm1009, %v2666
        %2699 = vst.msk [vmem:[#allocation3 + $0xb8] sm:$0xff] %vm1009, %v2667
        %2700 = vst.msk [vmem:[#allocation3 + $0xc8] sm:$0xff] %vm1009, %v2668
        %2701 = vst.msk [vmem:[#allocation3 + $0xd8] sm:$0xff] %vm1009, %v2669
        %2702 = vst.msk [vmem:[#allocation3 + $0xe8] sm:$0xff] %vm1009, %v2670
        %2703 = vst.msk [vmem:[#allocation3 + $0xf8] sm:$0xff] %vm1009, %v2671
        %2704 = vst.msk [vmem:[#allocation3 + $0x108] sm:$0xff] %vm1009, %v2672
        %2705 = vst.msk [vmem:[#allocation3 + $0x118] sm:$0xff] %vm1009, %v2673
        %2706 = vst.msk [vmem:[#allocation3 + $0x128] sm:$0xff] %vm1009, %v2674
        %2707 = vst.msk [vmem:[#allocation3 + $0x138] sm:$0xff] %vm1009, %v2675
        %2708 = vst.msk [vmem:[#allocation3 + $0x148] sm:$0xff] %vm1009, %v2676
        %2709 = vst.msk [vmem:[#allocation3 + $0x158] sm:$0xff] %vm1009, %v2677
        %2710 = vst.msk [vmem:[#allocation3 + $0x168] sm:$0xff] %vm1009, %v2678
        %2711 = vst.msk [vmem:[#allocation3 + $0x178] sm:$0xff] %vm1009, %v2679
        %2712 = vst.msk [vmem:[#allocation3 + $0x188] sm:$0xff] %vm1009, %v2680
        %2713 = vst.msk [vmem:[#allocation3 + $0x198] sm:$0xff] %vm1009, %v2681
        %2714 = vst.msk [vmem:[#allocation3 + $0x1a8] sm:$0xff] %vm1009, %v2682
        %2715 = vst.msk [vmem:[#allocation3 + $0x1b8] sm:$0xff] %vm1009, %v2683
        %2716 = vst.msk [vmem:[#allocation3 + $0x1c8] sm:$0xff] %vm1009, %v2684
        %2717 = vst.msk [vmem:[#allocation3 + $0x1d8] sm:$0xff] %vm1009, %v2685
        %2718 = vst.msk [vmem:[#allocation3 + $0x1e8] sm:$0xff] %vm1009, %v2686
        %2719 = vst.msk [vmem:[#allocation3 + $0x1f8] sm:$0xff] %vm1009, %v2687
        %v2720 = vld [vmem:[#allocation3] sm:$0xff]
        %v2721 = vld [vmem:[#allocation3 + $0x8] sm:$0xff]
        %v2722 = vld [vmem:[#allocation3 + $0x10] sm:$0xff]
        %v2723 = vld [vmem:[#allocation3 + $0x18] sm:$0xff]
        %v2724 = vld [vmem:[#allocation3 + $0x20] sm:$0xff]
        %v2725 = vld [vmem:[#allocation3 + $0x28] sm:$0xff]
        %v2726 = vld [vmem:[#allocation3 + $0x30] sm:$0xff]
        %v2727 = vld [vmem:[#allocation3 + $0x38] sm:$0xff]
        %v2728 = vld [vmem:[#allocation3 + $0x40] sm:$0xff]
        %v2729 = vld [vmem:[#allocation3 + $0x48] sm:$0xff]
        %v2730 = vld [vmem:[#allocation3 + $0x50] sm:$0xff]
        %v2731 = vld [vmem:[#allocation3 + $0x58] sm:$0xff]
        %v2732 = vld [vmem:[#allocation3 + $0x60] sm:$0xff]
        %v2733 = vld [vmem:[#allocation3 + $0x68] sm:$0xff]
        %v2734 = vld [vmem:[#allocation3 + $0x70] sm:$0xff]
        %v2735 = vld [vmem:[#allocation3 + $0x78] sm:$0xff]
        %v2736 = vld [vmem:[#allocation3 + $0x80] sm:$0xff]
        %v2737 = vld [vmem:[#allocation3 + $0x88] sm:$0xff]
        %v2738 = vld [vmem:[#allocation3 + $0x90] sm:$0xff]
        %v2739 = vld [vmem:[#allocation3 + $0x98] sm:$0xff]
        %v2740 = vld [vmem:[#allocation3 + $0xa0] sm:$0xff]
        %v2741 = vld [vmem:[#allocation3 + $0xa8] sm:$0xff]
        %v2742 = vld [vmem:[#allocation3 + $0xb0] sm:$0xff]
        %v2743 = vld [vmem:[#allocation3 + $0xb8] sm:$0xff]
        %v2744 = vld [vmem:[#allocation3 + $0xc0] sm:$0xff]
        %v2745 = vld [vmem:[#allocation3 + $0xc8] sm:$0xff]
        %v2746 = vld [vmem:[#allocation3 + $0xd0] sm:$0xff]
        %v2747 = vld [vmem:[#allocation3 + $0xd8] sm:$0xff]
        %v2748 = vld [vmem:[#allocation3 + $0xe0] sm:$0xff]
        %v2749 = vld [vmem:[#allocation3 + $0xe8] sm:$0xff]
        %v2750 = vld [vmem:[#allocation3 + $0xf0] sm:$0xff]
        %v2751 = vld [vmem:[#allocation3 + $0xf8] sm:$0xff]
        %v2752 = vld [vmem:[#allocation3 + $0x100] sm:$0xff]
        %v2753 = vld [vmem:[#allocation3 + $0x108] sm:$0xff]
        %v2754 = vld [vmem:[#allocation3 + $0x110] sm:$0xff]
        %v2755 = vld [vmem:[#allocation3 + $0x118] sm:$0xff]
        %v2756 = vld [vmem:[#allocation3 + $0x120] sm:$0xff]
        %v2757 = vld [vmem:[#allocation3 + $0x128] sm:$0xff]
        %v2758 = vld [vmem:[#allocation3 + $0x130] sm:$0xff]
        %v2759 = vld [vmem:[#allocation3 + $0x138] sm:$0xff]
        %v2760 = vld [vmem:[#allocation3 + $0x140] sm:$0xff]
        %v2761 = vld [vmem:[#allocation3 + $0x148] sm:$0xff]
        %v2762 = vld [vmem:[#allocation3 + $0x150] sm:$0xff]
        %v2763 = vld [vmem:[#allocation3 + $0x158] sm:$0xff]
        %v2764 = vld [vmem:[#allocation3 + $0x160] sm:$0xff]
        %v2765 = vld [vmem:[#allocation3 + $0x168] sm:$0xff]
        %v2766 = vld [vmem:[#allocation3 + $0x170] sm:$0xff]
        %v2767 = vld [vmem:[#allocation3 + $0x178] sm:$0xff]
        %v2768 = vld [vmem:[#allocation3 + $0x180] sm:$0xff]
        %v2769 = vld [vmem:[#allocation3 + $0x188] sm:$0xff]
        %v2770 = vld [vmem:[#allocation3 + $0x190] sm:$0xff]
        %v2771 = vld [vmem:[#allocation3 + $0x198] sm:$0xff]
        %v2772 = vld [vmem:[#allocation3 + $0x1a0] sm:$0xff]
        %v2773 = vld [vmem:[#allocation3 + $0x1a8] sm:$0xff]
        %v2774 = vld [vmem:[#allocation3 + $0x1b0] sm:$0xff]
        %v2775 = vld [vmem:[#allocation3 + $0x1b8] sm:$0xff]
        %v2776 = vld [vmem:[#allocation3 + $0x1c0] sm:$0xff]
        %v2777 = vld [vmem:[#allocation3 + $0x1c8] sm:$0xff]
        %v2778 = vld [vmem:[#allocation3 + $0x1d0] sm:$0xff]
        %v2779 = vld [vmem:[#allocation3 + $0x1d8] sm:$0xff]
        %v2780 = vld [vmem:[#allocation3 + $0x1e0] sm:$0xff]
        %v2781 = vld [vmem:[#allocation3 + $0x1e8] sm:$0xff]
        %v2782 = vld [vmem:[#allocation3 + $0x1f0] sm:$0xff]
        %v2783 = vld [vmem:[#allocation3 + $0x1f8] sm:$0xff]
        %v2784 = vld [vmem:[%s1] sm:$0xff]
        %v2785 = vld [vmem:[%s1 + $0x8] sm:$0xff]
        %v2786 = vld [vmem:[%s1 + $0x10] sm:$0xff]
        %v2787 = vld [vmem:[%s1 + $0x18] sm:$0xff]
        %v2788 = vld [vmem:[%s1 + $0x20] sm:$0xff]
        %v2789 = vld [vmem:[%s1 + $0x28] sm:$0xff]
        %v2790 = vld [vmem:[%s1 + $0x30] sm:$0xff]
        %v2791 = vld [vmem:[%s1 + $0x38] sm:$0xff]
        %v2792 = vld [vmem:[%s1 + $0x40] sm:$0xff]
        %v2793 = vld [vmem:[%s1 + $0x48] sm:$0xff]
        %v2794 = vld [vmem:[%s1 + $0x50] sm:$0xff]
        %v2795 = vld [vmem:[%s1 + $0x58] sm:$0xff]
        %v2796 = vld [vmem:[%s1 + $0x60] sm:$0xff]
        %v2797 = vld [vmem:[%s1 + $0x68] sm:$0xff]
        %v2798 = vld [vmem:[%s1 + $0x70] sm:$0xff]
        %v2799 = vld [vmem:[%s1 + $0x78] sm:$0xff]
        %v2800 = vld [vmem:[%s1 + $0x80] sm:$0xff]
        %v2801 = vld [vmem:[%s1 + $0x88] sm:$0xff]
        %v2802 = vld [vmem:[%s2] sm:$0x1]
        %v2804 = vlaneseq
        %v2805 = vshrl.u32 %v2804, 7
        %v2806 = vsub.s32 0, %v2805
        %v2807 = vrot.slane %v2802, %v2806
        %v2810 = vsel %vm1009, %v2721, 0
        %v2813 = vsel %vm1009, %v2723, 0
        %v2816 = vsel %vm1009, %v2725, 0
        %v2819 = vsel %vm1009, %v2727, 0
        %v2822 = vsel %vm1009, %v2729, 0
        %v2825 = vsel %vm1009, %v2731, 0
        %v2828 = vsel %vm1009, %v2733, 0
        %v2831 = vsel %vm1009, %v2735, 0
        %v2834 = vsel %vm1009, %v2737, 0
        %v2837 = vsel %vm1009, %v2739, 0
        %v2840 = vsel %vm1009, %v2741, 0
        %v2843 = vsel %vm1009, %v2743, 0
        %v2846 = vsel %vm1009, %v2745, 0
        %v2849 = vsel %vm1009, %v2747, 0
        %v2852 = vsel %vm1009, %v2749, 0
        %v2855 = vsel %vm1009, %v2751, 0
        %v2858 = vsel %vm1009, %v2753, 0
        %v2861 = vsel %vm1009, %v2755, 0
        %v2864 = vsel %vm1009, %v2757, 0
        %v2867 = vsel %vm1009, %v2759, 0
        %v2870 = vsel %vm1009, %v2761, 0
        %v2873 = vsel %vm1009, %v2763, 0
        %v2876 = vsel %vm1009, %v2765, 0
        %v2879 = vsel %vm1009, %v2767, 0
        %v2882 = vsel %vm1009, %v2769, 0
        %v2885 = vsel %vm1009, %v2771, 0
        %v2888 = vsel %vm1009, %v2773, 0
        %v2891 = vsel %vm1009, %v2775, 0
        %v2894 = vsel %vm1009, %v2777, 0
        %v2897 = vsel %vm1009, %v2779, 0
        %v2900 = vsel %vm1009, %v2781, 0
        %v2903 = vsel %vm1009, %v2783, 0
        %2905 = vmatprep.subr.mxu0 0.0
        %2906 = vmatpush1.msra.mxu0 %v2784
        %2907 = vmatprep.subr.mxu0 0.0
        %2908 = vmatpush1.msra.mxu0 %v2785
        %2909 = vmatprep.subr.mxu0 0.0
        %2910 = vmatpush1.msra.mxu0 %v2786
        %2911 = vmatprep.subr.mxu0 0.0
        %2912 = vmatpush1.msra.mxu0 %v2787
        %2913 = vmatprep.subr.mxu0 0.0
        %2914 = vmatpush1.msra.mxu0 %v2788
        %2915 = vmatprep.subr.mxu0 0.0
        %2916 = vmatpush1.msra.mxu0 %v2789
        %2917 = vmatprep.subr.mxu0 0.0
        %2918 = vmatpush1.msra.mxu0 %v2790
        %2919 = vmatprep.subr.mxu0 0.0
        %2920 = vmatpush1.msra.mxu0 %v2791
        %2921 = vmatprep.subr.mxu0 0.0
        %2922 = vmatpush1.msra.mxu0 %v2792
        %2923 = vmatprep.subr.mxu0 0.0
        %2924 = vmatpush1.msra.mxu0 %v2793
        %2925 = vmatprep.subr.mxu0 0.0
        %2926 = vmatpush1.msra.mxu0 %v2794
        %2927 = vmatprep.subr.mxu0 0.0
        %2928 = vmatpush1.msra.mxu0 %v2795
        %2929 = vmatprep.subr.mxu0 0.0
        %2930 = vmatpush1.msra.mxu0 %v2796
        %2931 = vmatprep.subr.mxu0 0.0
        %2932 = vmatpush1.msra.mxu0 %v2797
        %2933 = vmatprep.subr.mxu0 0.0
        %2934 = vmatpush1.msra.mxu0 %v2798
        %2935 = vmatprep.subr.mxu0 0.0
        %2936 = vmatpush1.msra.mxu0 %v2799
        %2937 = vmatprep.subr.mxu0 0.0
        %2938 = vmatpush1.msra.mxu0 %v2800
        %2939 = vmatprep.subr.mxu0 0.0
        %2940 = vmatpush1.msra.mxu0 %v2801
        %2941 = vmatprep.subr.mxu0 0.0
        %2942 = vmatpush1.msra.mxu0 0.0
        %2943 = vmatprep.subr.mxu0 0.0
        %2944 = vmatpush1.msra.mxu0 0.0
        %2945 = vmatprep.subr.mxu0 0.0
        %2946 = vmatpush1.msra.mxu0 0.0
        %2947 = vmatprep.subr.mxu0 0.0
        %2948 = vmatpush1.msra.mxu0 0.0
        %2949 = vmatprep.subr.mxu0 0.0
        %2950 = vmatpush1.msra.mxu0 0.0
        %2951 = vmatprep.subr.mxu0 0.0
        %2952 = vmatpush1.msra.mxu0 0.0
        %2953 = vmatprep.subr.mxu0 0.0
        %2954 = vmatpush1.msra.mxu0 0.0
        %2955 = vmatprep.subr.mxu0 0.0
        %2956 = vmatpush1.msra.mxu0 0.0
        %2957 = vmatprep.subr.mxu0 0.0
        %2958 = vmatpush1.msra.mxu0 0.0
        %2959 = vmatprep.subr.mxu0 0.0
        %2960 = vmatpush1.msra.mxu0 0.0
        %2961 = vmatprep.subr.mxu0 0.0
        %2962 = vmatpush1.msra.mxu0 0.0
        %2963 = vmatprep.subr.mxu0 0.0
        %2964 = vmatpush1.msra.mxu0 0.0
        %2965 = vmatprep.subr.mxu0 0.0
        %2966 = vmatpush1.msra.mxu0 0.0
        %2967 = vmatprep.subr.mxu0 0.0
        %2968 = vmatpush1.msra.mxu0 0.0
        %2969 = vmatprep.mubr.f32.mxu0 %v2810
        %2970 = vmatmul.mubr.f32.gmra.mrb[0].mxu0 %v2720
        %v2971 = vpop.f32.mrb[0].mxu0
        %v2972 = vadd.f32 %v2807, %v2971
        %v2973 = vpop.f32.mrb[0].mxu0
        %2974 = vmatprep.mubr.f32.mxu0 %v2813
        %2975 = vmatmul.mubr.f32.gmra.mrb[0].mxu0 %v2722
        %v2976 = vpop.f32.mrb[0].mxu0
        %v2977 = vadd.f32 %v2807, %v2976
        %v2978 = vpop.f32.mrb[0].mxu0
        %2979 = vmatprep.mubr.f32.mxu0 %v2816
        %2980 = vmatmul.mubr.f32.gmra.mrb[0].mxu0 %v2724
        %v2981 = vpop.f32.mrb[0].mxu0
        %v2982 = vadd.f32 %v2807, %v2981
        %v2983 = vpop.f32.mrb[0].mxu0
        %2984 = vmatprep.mubr.f32.mxu0 %v2819
        %2985 = vmatmul.mubr.f32.gmra.mrb[0].mxu0 %v2726
        %v2986 = vpop.f32.mrb[0].mxu0
        %v2987 = vadd.f32 %v2807, %v2986
        %v2988 = vpop.f32.mrb[0].mxu0
        %2989 = vmatprep.mubr.f32.mxu0 %v2822
        %2990 = vmatmul.mubr.f32.gmra.mrb[0].mxu0 %v2728
        %v2991 = vpop.f32.mrb[0].mxu0
        %v2992 = vadd.f32 %v2807, %v2991
        %v2993 = vpop.f32.mrb[0].mxu0
        %2994 = vmatprep.mubr.f32.mxu0 %v2825
        %2995 = vmatmul.mubr.f32.gmra.mrb[0].mxu0 %v2730
        %v2996 = vpop.f32.mrb[0].mxu0
        %v2997 = vadd.f32 %v2807, %v2996
        %v2998 = vpop.f32.mrb[0].mxu0
        %2999 = vmatprep.mubr.f32.mxu0 %v2828
        %3000 = vmatmul.mubr.f32.gmra.mrb[0].mxu0 %v2732
        %v3001 = vpop.f32.mrb[0].mxu0
        %v3002 = vadd.f32 %v2807, %v3001
        %v3003 = vpop.f32.mrb[0].mxu0
        %3004 = vmatprep.mubr.f32.mxu0 %v2831
        %3005 = vmatmul.mubr.f32.gmra.mrb[0].mxu0 %v2734
        %v3006 = vpop.f32.mrb[0].mxu0
        %v3007 = vadd.f32 %v2807, %v3006
        %v3008 = vpop.f32.mrb[0].mxu0
        %3009 = vmatprep.mubr.f32.mxu0 %v2834
        %3010 = vmatmul.mubr.f32.gmra.mrb[0].mxu0 %v2736
        %v3011 = vpop.f32.mrb[0].mxu0
        %v3012 = vadd.f32 %v2807, %v3011
        %v3013 = vpop.f32.mrb[0].mxu0
        %3014 = vmatprep.mubr.f32.mxu0 %v2837
        %3015 = vmatmul.mubr.f32.gmra.mrb[0].mxu0 %v2738
        %v3016 = vpop.f32.mrb[0].mxu0
        %v3017 = vadd.f32 %v2807, %v3016
        %v3018 = vpop.f32.mrb[0].mxu0
        %3019 = vmatprep.mubr.f32.mxu0 %v2840
        %3020 = vmatmul.mubr.f32.gmra.mrb[0].mxu0 %v2740
        %v3021 = vpop.f32.mrb[0].mxu0
        %v3022 = vadd.f32 %v2807, %v3021
        %v3023 = vpop.f32.mrb[0].mxu0
        %3024 = vmatprep.mubr.f32.mxu0 %v2843
        %3025 = vmatmul.mubr.f32.gmra.mrb[0].mxu0 %v2742
        %v3026 = vpop.f32.mrb[0].mxu0
        %v3027 = vadd.f32 %v2807, %v3026
        %v3028 = vpop.f32.mrb[0].mxu0
        %3029 = vmatprep.mubr.f32.mxu0 %v2846
        %3030 = vmatmul.mubr.f32.gmra.mrb[0].mxu0 %v2744
        %v3031 = vpop.f32.mrb[0].mxu0
        %v3032 = vadd.f32 %v2807, %v3031
        %v3033 = vpop.f32.mrb[0].mxu0
        %3034 = vmatprep.mubr.f32.mxu0 %v2849
        %3035 = vmatmul.mubr.f32.gmra.mrb[0].mxu0 %v2746
        %v3036 = vpop.f32.mrb[0].mxu0
        %v3037 = vadd.f32 %v2807, %v3036
        %v3038 = vpop.f32.mrb[0].mxu0
        %3039 = vmatprep.mubr.f32.mxu0 %v2852
        %3040 = vmatmul.mubr.f32.gmra.mrb[0].mxu0 %v2748
        %v3041 = vpop.f32.mrb[0].mxu0
        %v3042 = vadd.f32 %v2807, %v3041
        %v3043 = vpop.f32.mrb[0].mxu0
        %3044 = vmatprep.mubr.f32.mxu0 %v2855
        %3045 = vmatmul.mubr.f32.gmra.mrb[0].mxu0 %v2750
        %v3046 = vpop.f32.mrb[0].mxu0
        %v3047 = vadd.f32 %v2807, %v3046
        %v3048 = vpop.f32.mrb[0].mxu0
        %3049 = vmatprep.mubr.f32.mxu0 %v2858
        %3050 = vmatmul.mubr.f32.gmra.mrb[0].mxu0 %v2752
        %v3051 = vpop.f32.mrb[0].mxu0
        %v3052 = vadd.f32 %v2807, %v3051
        %v3053 = vpop.f32.mrb[0].mxu0
        %3054 = vmatprep.mubr.f32.mxu0 %v2861
        %3055 = vmatmul.mubr.f32.gmra.mrb[0].mxu0 %v2754
        %v3056 = vpop.f32.mrb[0].mxu0
        %v3057 = vadd.f32 %v2807, %v3056
        %v3058 = vpop.f32.mrb[0].mxu0
        %3059 = vmatprep.mubr.f32.mxu0 %v2864
        %3060 = vmatmul.mubr.f32.gmra.mrb[0].mxu0 %v2756
        %v3061 = vpop.f32.mrb[0].mxu0
        %v3062 = vadd.f32 %v2807, %v3061
        %v3063 = vpop.f32.mrb[0].mxu0
        %3064 = vmatprep.mubr.f32.mxu0 %v2867
        %3065 = vmatmul.mubr.f32.gmra.mrb[0].mxu0 %v2758
        %v3066 = vpop.f32.mrb[0].mxu0
        %v3067 = vadd.f32 %v2807, %v3066
        %v3068 = vpop.f32.mrb[0].mxu0
        %3069 = vmatprep.mubr.f32.mxu0 %v2870
        %3070 = vmatmul.mubr.f32.gmra.mrb[0].mxu0 %v2760
        %v3071 = vpop.f32.mrb[0].mxu0
        %v3072 = vadd.f32 %v2807, %v3071
        %v3073 = vpop.f32.mrb[0].mxu0
        %3074 = vmatprep.mubr.f32.mxu0 %v2873
        %3075 = vmatmul.mubr.f32.gmra.mrb[0].mxu0 %v2762
        %v3076 = vpop.f32.mrb[0].mxu0
        %v3077 = vadd.f32 %v2807, %v3076
        %v3078 = vpop.f32.mrb[0].mxu0
        %3079 = vmatprep.mubr.f32.mxu0 %v2876
        %3080 = vmatmul.mubr.f32.gmra.mrb[0].mxu0 %v2764
        %v3081 = vpop.f32.mrb[0].mxu0
        %v3082 = vadd.f32 %v2807, %v3081
        %v3083 = vpop.f32.mrb[0].mxu0
        %3084 = vmatprep.mubr.f32.mxu0 %v2879
        %3085 = vmatmul.mubr.f32.gmra.mrb[0].mxu0 %v2766
        %v3086 = vpop.f32.mrb[0].mxu0
        %v3087 = vadd.f32 %v2807, %v3086
        %v3088 = vpop.f32.mrb[0].mxu0
        %3089 = vmatprep.mubr.f32.mxu0 %v2882
        %3090 = vmatmul.mubr.f32.gmra.mrb[0].mxu0 %v2768
        %v3091 = vpop.f32.mrb[0].mxu0
        %v3092 = vadd.f32 %v2807, %v3091
        %v3093 = vpop.f32.mrb[0].mxu0
        %3094 = vmatprep.mubr.f32.mxu0 %v2885
        %3095 = vmatmul.mubr.f32.gmra.mrb[0].mxu0 %v2770
        %v3096 = vpop.f32.mrb[0].mxu0
        %v3097 = vadd.f32 %v2807, %v3096
        %v3098 = vpop.f32.mrb[0].mxu0
        %3099 = vmatprep.mubr.f32.mxu0 %v2888
        %3100 = vmatmul.mubr.f32.gmra.mrb[0].mxu0 %v2772
        %v3101 = vpop.f32.mrb[0].mxu0
        %v3102 = vadd.f32 %v2807, %v3101
        %v3103 = vpop.f32.mrb[0].mxu0
        %3104 = vmatprep.mubr.f32.mxu0 %v2891
        %3105 = vmatmul.mubr.f32.gmra.mrb[0].mxu0 %v2774
        %v3106 = vpop.f32.mrb[0].mxu0
        %v3107 = vadd.f32 %v2807, %v3106
        %v3108 = vpop.f32.mrb[0].mxu0
        %3109 = vmatprep.mubr.f32.mxu0 %v2894
        %3110 = vmatmul.mubr.f32.gmra.mrb[0].mxu0 %v2776
        %v3111 = vpop.f32.mrb[0].mxu0
        %v3112 = vadd.f32 %v2807, %v3111
        %v3113 = vpop.f32.mrb[0].mxu0
        %3114 = vmatprep.mubr.f32.mxu0 %v2897
        %3115 = vmatmul.mubr.f32.gmra.mrb[0].mxu0 %v2778
        %v3116 = vpop.f32.mrb[0].mxu0
        %v3117 = vadd.f32 %v2807, %v3116
        %v3118 = vpop.f32.mrb[0].mxu0
        %3119 = vmatprep.mubr.f32.mxu0 %v2900
        %3120 = vmatmul.mubr.f32.gmra.mrb[0].mxu0 %v2780
        %v3121 = vpop.f32.mrb[0].mxu0
        %v3122 = vadd.f32 %v2807, %v3121
        %v3123 = vpop.f32.mrb[0].mxu0
        %3124 = vmatprep.mubr.f32.mxu0 %v2903
        %3125 = vmatmul.mubr.f32.gmra.mrb[0].mxu0 %v2782
        %v3126 = vpop.f32.mrb[0].mxu0
        %v3127 = vadd.f32 %v2807, %v3126
        %v3128 = vpop.f32.mrb[0].mxu0
        %3129 = vdwg.mxu0
        %v3130 = vmax.f32 %v2972, 0.0
        %v3131 = vmax.f32 %v2977, 0.0
        %v3132 = vmax.f32 %v2982, 0.0
        %v3133 = vmax.f32 %v2987, 0.0
        %v3134 = vmax.f32 %v2992, 0.0
        %v3135 = vmax.f32 %v2997, 0.0
        %v3136 = vmax.f32 %v3002, 0.0
        %v3137 = vmax.f32 %v3007, 0.0
        %v3138 = vmax.f32 %v3012, 0.0
        %v3139 = vmax.f32 %v3017, 0.0
        %v3140 = vmax.f32 %v3022, 0.0
        %v3141 = vmax.f32 %v3027, 0.0
        %v3142 = vmax.f32 %v3032, 0.0
        %v3143 = vmax.f32 %v3037, 0.0
        %v3144 = vmax.f32 %v3042, 0.0
        %v3145 = vmax.f32 %v3047, 0.0
        %v3146 = vmax.f32 %v3052, 0.0
        %v3147 = vmax.f32 %v3057, 0.0
        %v3148 = vmax.f32 %v3062, 0.0
        %v3149 = vmax.f32 %v3067, 0.0
        %v3150 = vmax.f32 %v3072, 0.0
        %v3151 = vmax.f32 %v3077, 0.0
        %v3152 = vmax.f32 %v3082, 0.0
        %v3153 = vmax.f32 %v3087, 0.0
        %v3154 = vmax.f32 %v3092, 0.0
        %v3155 = vmax.f32 %v3097, 0.0
        %v3156 = vmax.f32 %v3102, 0.0
        %v3157 = vmax.f32 %v3107, 0.0
        %v3158 = vmax.f32 %v3112, 0.0
        %v3159 = vmax.f32 %v3117, 0.0
        %v3160 = vmax.f32 %v3122, 0.0
        %v3161 = vmax.f32 %v3127, 0.0
        %3162 = vst.msk [vmem:[#allocation2 + $0x11] sm:$0xff] %vm1009, %v3130
        %3163 = vst.msk [vmem:[#allocation2 + $0x19] sm:$0xff] %vm1009, %v3131
        %3164 = vst.msk [vmem:[#allocation2 + $0x21] sm:$0xff] %vm1009, %v3132
        %3165 = vst.msk [vmem:[#allocation2 + $0x29] sm:$0xff] %vm1009, %v3133
        %3166 = vst.msk [vmem:[#allocation2 + $0x31] sm:$0xff] %vm1009, %v3134
        %3167 = vst.msk [vmem:[#allocation2 + $0x39] sm:$0xff] %vm1009, %v3135
        %3168 = vst.msk [vmem:[#allocation2 + $0x41] sm:$0xff] %vm1009, %v3136
        %3169 = vst.msk [vmem:[#allocation2 + $0x49] sm:$0xff] %vm1009, %v3137
        %3170 = vst.msk [vmem:[#allocation2 + $0x51] sm:$0xff] %vm1009, %v3138
        %3171 = vst.msk [vmem:[#allocation2 + $0x59] sm:$0xff] %vm1009, %v3139
        %3172 = vst.msk [vmem:[#allocation2 + $0x61] sm:$0xff] %vm1009, %v3140
        %3173 = vst.msk [vmem:[#allocation2 + $0x69] sm:$0xff] %vm1009, %v3141
        %3174 = vst.msk [vmem:[#allocation2 + $0x71] sm:$0xff] %vm1009, %v3142
        %3175 = vst.msk [vmem:[#allocation2 + $0x79] sm:$0xff] %vm1009, %v3143
        %3176 = vst.msk [vmem:[#allocation2 + $0x81] sm:$0xff] %vm1009, %v3144
        %3177 = vst.msk [vmem:[#allocation2 + $0x89] sm:$0xff] %vm1009, %v3145
        %3178 = vst.msk [vmem:[#allocation2 + $0x91] sm:$0xff] %vm1009, %v3146
        %3179 = vst.msk [vmem:[#allocation2 + $0x99] sm:$0xff] %vm1009, %v3147
        %3180 = vst.msk [vmem:[#allocation2 + $0xa1] sm:$0xff] %vm1009, %v3148
        %3181 = vst.msk [vmem:[#allocation2 + $0xa9] sm:$0xff] %vm1009, %v3149
        %3182 = vst.msk [vmem:[#allocation2 + $0xb1] sm:$0xff] %vm1009, %v3150
        %3183 = vst.msk [vmem:[#allocation2 + $0xb9] sm:$0xff] %vm1009, %v3151
        %3184 = vst.msk [vmem:[#allocation2 + $0xc1] sm:$0xff] %vm1009, %v3152
        %3185 = vst.msk [vmem:[#allocation2 + $0xc9] sm:$0xff] %vm1009, %v3153
        %3186 = vst.msk [vmem:[#allocation2 + $0xd1] sm:$0xff] %vm1009, %v3154
        %3187 = vst.msk [vmem:[#allocation2 + $0xd9] sm:$0xff] %vm1009, %v3155
        %3188 = vst.msk [vmem:[#allocation2 + $0xe1] sm:$0xff] %vm1009, %v3156
        %3189 = vst.msk [vmem:[#allocation2 + $0xe9] sm:$0xff] %vm1009, %v3157
        %3190 = vst.msk [vmem:[#allocation2 + $0xf1] sm:$0xff] %vm1009, %v3158
        %3191 = vst.msk [vmem:[#allocation2 + $0xf9] sm:$0xff] %vm1009, %v3159
        %3192 = vst.msk [vmem:[#allocation2 + $0x101] sm:$0xff] %vm1009, %v3160
        %3193 = vst.msk [vmem:[#allocation2 + $0x109] sm:$0xff] %vm1009, %v3161
        %v3194 = vld [vmem:[#allocation2] sm:$0xff]
        %v3195 = vld [vmem:[#allocation2 + $0x8] sm:$0xff]
        %v3196 = vld [vmem:[#allocation2 + $0x10] sm:$0xff]
        %v3197 = vld [vmem:[#allocation2 + $0x18] sm:$0xff]
        %v3198 = vld [vmem:[#allocation2 + $0x20] sm:$0xff]
        %v3199 = vld [vmem:[#allocation2 + $0x28] sm:$0xff]
        %v3200 = vld [vmem:[#allocation2 + $0x30] sm:$0xff]
        %v3201 = vld [vmem:[#allocation2 + $0x38] sm:$0xff]
        %v3202 = vld [vmem:[#allocation2 + $0x40] sm:$0xff]
        %v3203 = vld [vmem:[#allocation2 + $0x48] sm:$0xff]
        %v3204 = vld [vmem:[#allocation2 + $0x50] sm:$0xff]
        %v3205 = vld [vmem:[#allocation2 + $0x58] sm:$0xff]
        %v3206 = vld [vmem:[#allocation2 + $0x60] sm:$0xff]
        %v3207 = vld [vmem:[#allocation2 + $0x68] sm:$0xff]
        %v3208 = vld [vmem:[#allocation2 + $0x70] sm:$0xff]
        %v3209 = vld [vmem:[#allocation2 + $0x78] sm:$0xff]
        %v3210 = vld [vmem:[#allocation2 + $0x80] sm:$0xff]
        %v3211 = vld [vmem:[#allocation2 + $0x88] sm:$0xff]
        %v3212 = vld [vmem:[#allocation2 + $0x90] sm:$0xff]
        %v3213 = vld [vmem:[#allocation2 + $0x98] sm:$0xff]
        %v3214 = vld [vmem:[#allocation2 + $0xa0] sm:$0xff]
        %v3215 = vld [vmem:[#allocation2 + $0xa8] sm:$0xff]
        %v3216 = vld [vmem:[#allocation2 + $0xb0] sm:$0xff]
        %v3217 = vld [vmem:[#allocation2 + $0xb8] sm:$0xff]
        %v3218 = vld [vmem:[#allocation2 + $0xc0] sm:$0xff]
        %v3219 = vld [vmem:[#allocation2 + $0xc8] sm:$0xff]
        %v3220 = vld [vmem:[#allocation2 + $0xd0] sm:$0xff]
        %v3221 = vld [vmem:[#allocation2 + $0xd8] sm:$0xff]
        %v3222 = vld [vmem:[#allocation2 + $0xe0] sm:$0xff]
        %v3223 = vld [vmem:[#allocation2 + $0xe8] sm:$0xff]
        %v3224 = vld [vmem:[#allocation2 + $0xf0] sm:$0xff]
        %v3225 = vld [vmem:[#allocation2 + $0xf8] sm:$0xff]
        %v3226 = vsel %vm801, %v3194, 0.0
        %v3227 = vsel %vm802, %v3195, 0.0
        %v3228 = vsel %vm803, %v3196, 0.0
        %v3229 = vsel %vm804, %v3197, 0.0
        %v3230 = vsel %vm805, %v3198, 0.0
        %v3231 = vsel %vm806, %v3199, 0.0
        %v3232 = vsel %vm807, %v3200, 0.0
        %v3233 = vsel %vm808, %v3201, 0.0
        %v3234 = vsel %vm809, %v3202, 0.0
        %v3235 = vsel %vm810, %v3203, 0.0
        %v3236 = vsel %vm811, %v3204, 0.0
        %v3237 = vsel %vm812, %v3205, 0.0
        %v3238 = vsel %vm813, %v3206, 0.0
        %v3239 = vsel %vm814, %v3207, 0.0
        %v3240 = vsel %vm815, %v3208, 0.0
        %v3241 = vsel %vm816, %v3209, 0.0
        %v3242 = vsel %vm817, %v3210, 0.0
        %v3243 = vsel %vm818, %v3211, 0.0
        %v3244 = vsel %vm819, %v3212, 0.0
        %v3245 = vsel %vm820, %v3213, 0.0
        %v3246 = vsel %vm821, %v3214, 0.0
        %v3247 = vsel %vm822, %v3215, 0.0
        %v3248 = vsel %vm823, %v3216, 0.0
        %v3249 = vsel %vm824, %v3217, 0.0
        %v3250 = vsel %vm825, %v3218, 0.0
        %v3251 = vsel %vm826, %v3219, 0.0
        %v3252 = vsel %vm827, %v3220, 0.0
        %v3253 = vsel %vm828, %v3221, 0.0
        %v3254 = vsel %vm829, %v3222, 0.0
        %v3255 = vsel %vm830, %v3223, 0.0
        %v3256 = vsel %vm831, %v3224, 0.0
        %v3257 = vsel %vm832, %v3225, 0.0
        %3258 = vst.msk [vmem:[#allocation3] sm:$0xff] %vm1009, %v3226
        %3259 = vst.msk [vmem:[#allocation3 + $0x10] sm:$0xff] %vm1009, %v3227
        %3260 = vst.msk [vmem:[#allocation3 + $0x20] sm:$0xff] %vm1009, %v3228
        %3261 = vst.msk [vmem:[#allocation3 + $0x30] sm:$0xff] %vm1009, %v3229
        %3262 = vst.msk [vmem:[#allocation3 + $0x40] sm:$0xff] %vm1009, %v3230
        %3263 = vst.msk [vmem:[#allocation3 + $0x50] sm:$0xff] %vm1009, %v3231
        %3264 = vst.msk [vmem:[#allocation3 + $0x60] sm:$0xff] %vm1009, %v3232
        %3265 = vst.msk [vmem:[#allocation3 + $0x70] sm:$0xff] %vm1009, %v3233
        %3266 = vst.msk [vmem:[#allocation3 + $0x80] sm:$0xff] %vm1009, %v3234
        %3267 = vst.msk [vmem:[#allocation3 + $0x90] sm:$0xff] %vm1009, %v3235
        %3268 = vst.msk [vmem:[#allocation3 + $0xa0] sm:$0xff] %vm1009, %v3236
        %3269 = vst.msk [vmem:[#allocation3 + $0xb0] sm:$0xff] %vm1009, %v3237
        %3270 = vst.msk [vmem:[#allocation3 + $0xc0] sm:$0xff] %vm1009, %v3238
        %3271 = vst.msk [vmem:[#allocation3 + $0xd0] sm:$0xff] %vm1009, %v3239
        %3272 = vst.msk [vmem:[#allocation3 + $0xe0] sm:$0xff] %vm1009, %v3240
        %3273 = vst.msk [vmem:[#allocation3 + $0xf0] sm:$0xff] %vm1009, %v3241
        %3274 = vst.msk [vmem:[#allocation3 + $0x100] sm:$0xff] %vm1009, %v3242
        %3275 = vst.msk [vmem:[#allocation3 + $0x110] sm:$0xff] %vm1009, %v3243
        %3276 = vst.msk [vmem:[#allocation3 + $0x120] sm:$0xff] %vm1009, %v3244
        %3277 = vst.msk [vmem:[#allocation3 + $0x130] sm:$0xff] %vm1009, %v3245
        %3278 = vst.msk [vmem:[#allocation3 + $0x140] sm:$0xff] %vm1009, %v3246
        %3279 = vst.msk [vmem:[#allocation3 + $0x150] sm:$0xff] %vm1009, %v3247
        %3280 = vst.msk [vmem:[#allocation3 + $0x160] sm:$0xff] %vm1009, %v3248
        %3281 = vst.msk [vmem:[#allocation3 + $0x170] sm:$0xff] %vm1009, %v3249
        %3282 = vst.msk [vmem:[#allocation3 + $0x180] sm:$0xff] %vm1009, %v3250
        %3283 = vst.msk [vmem:[#allocation3 + $0x190] sm:$0xff] %vm1009, %v3251
        %3284 = vst.msk [vmem:[#allocation3 + $0x1a0] sm:$0xff] %vm1009, %v3252
        %3285 = vst.msk [vmem:[#allocation3 + $0x1b0] sm:$0xff] %vm1009, %v3253
        %3286 = vst.msk [vmem:[#allocation3 + $0x1c0] sm:$0xff] %vm1009, %v3254
        %3287 = vst.msk [vmem:[#allocation3 + $0x1d0] sm:$0xff] %vm1009, %v3255
        %3288 = vst.msk [vmem:[#allocation3 + $0x1e0] sm:$0xff] %vm1009, %v3256
        %3289 = vst.msk [vmem:[#allocation3 + $0x1f0] sm:$0xff] %vm1009, %v3257
        %v3290 = vld [vmem:[#allocation2 + $0x1] sm:$0xff]
        %v3291 = vld [vmem:[#allocation2 + $0x9] sm:$0xff]
        %v3292 = vld [vmem:[#allocation2 + $0x11] sm:$0xff]
        %v3293 = vld [vmem:[#allocation2 + $0x19] sm:$0xff]
        %v3294 = vld [vmem:[#allocation2 + $0x21] sm:$0xff]
        %v3295 = vld [vmem:[#allocation2 + $0x29] sm:$0xff]
        %v3296 = vld [vmem:[#allocation2 + $0x31] sm:$0xff]
        %v3297 = vld [vmem:[#allocation2 + $0x39] sm:$0xff]
        %v3298 = vld [vmem:[#allocation2 + $0x41] sm:$0xff]
        %v3299 = vld [vmem:[#allocation2 + $0x49] sm:$0xff]
        %v3300 = vld [vmem:[#allocation2 + $0x51] sm:$0xff]
        %v3301 = vld [vmem:[#allocation2 + $0x59] sm:$0xff]
        %v3302 = vld [vmem:[#allocation2 + $0x61] sm:$0xff]
        %v3303 = vld [vmem:[#allocation2 + $0x69] sm:$0xff]
        %v3304 = vld [vmem:[#allocation2 + $0x71] sm:$0xff]
        %v3305 = vld [vmem:[#allocation2 + $0x79] sm:$0xff]
        %v3306 = vld [vmem:[#allocation2 + $0x81] sm:$0xff]
        %v3307 = vld [vmem:[#allocation2 + $0x89] sm:$0xff]
        %v3308 = vld [vmem:[#allocation2 + $0x91] sm:$0xff]
        %v3309 = vld [vmem:[#allocation2 + $0x99] sm:$0xff]
        %v3310 = vld [vmem:[#allocation2 + $0xa1] sm:$0xff]
        %v3311 = vld [vmem:[#allocation2 + $0xa9] sm:$0xff]
        %v3312 = vld [vmem:[#allocation2 + $0xb1] sm:$0xff]
        %v3313 = vld [vmem:[#allocation2 + $0xb9] sm:$0xff]
        %v3314 = vld [vmem:[#allocation2 + $0xc1] sm:$0xff]
        %v3315 = vld [vmem:[#allocation2 + $0xc9] sm:$0xff]
        %v3316 = vld [vmem:[#allocation2 + $0xd1] sm:$0xff]
        %v3317 = vld [vmem:[#allocation2 + $0xd9] sm:$0xff]
        %v3318 = vld [vmem:[#allocation2 + $0xe1] sm:$0xff]
        %v3319 = vld [vmem:[#allocation2 + $0xe9] sm:$0xff]
        %v3320 = vld [vmem:[#allocation2 + $0xf1] sm:$0xff]
        %v3321 = vld [vmem:[#allocation2 + $0xf9] sm:$0xff]
        %3354 = vrot.lane.b32.xlu0 %v3290, 16
        %v3355 = vpop.permute.xlu0 %3354
        %3356 = vrot.lane.b32.xlu0 %v3291, 16
        %v3357 = vpop.permute.xlu0 %3356
        %3358 = vrot.lane.b32.xlu0 %v3292, 16
        %v3359 = vpop.permute.xlu0 %3358
        %3360 = vrot.lane.b32.xlu0 %v3293, 16
        %v3361 = vpop.permute.xlu0 %3360
        %3362 = vrot.lane.b32.xlu0 %v3294, 16
        %v3363 = vpop.permute.xlu0 %3362
        %3364 = vrot.lane.b32.xlu0 %v3295, 16
        %v3365 = vpop.permute.xlu0 %3364
        %3366 = vrot.lane.b32.xlu0 %v3296, 16
        %v3367 = vpop.permute.xlu0 %3366
        %3368 = vrot.lane.b32.xlu0 %v3297, 16
        %v3369 = vpop.permute.xlu0 %3368
        %3370 = vrot.lane.b32.xlu0 %v3298, 16
        %v3371 = vpop.permute.xlu0 %3370
        %3372 = vrot.lane.b32.xlu0 %v3299, 16
        %v3373 = vpop.permute.xlu0 %3372
        %3374 = vrot.lane.b32.xlu0 %v3300, 16
        %v3375 = vpop.permute.xlu0 %3374
        %3376 = vrot.lane.b32.xlu0 %v3301, 16
        %v3377 = vpop.permute.xlu0 %3376
        %3378 = vrot.lane.b32.xlu0 %v3302, 16
        %v3379 = vpop.permute.xlu0 %3378
        %3380 = vrot.lane.b32.xlu0 %v3303, 16
        %v3381 = vpop.permute.xlu0 %3380
        %3382 = vrot.lane.b32.xlu0 %v3304, 16
        %v3383 = vpop.permute.xlu0 %3382
        %3384 = vrot.lane.b32.xlu0 %v3305, 16
        %v3385 = vpop.permute.xlu0 %3384
        %3386 = vrot.lane.b32.xlu0 %v3306, 16
        %v3387 = vpop.permute.xlu0 %3386
        %3388 = vrot.lane.b32.xlu0 %v3307, 16
        %v3389 = vpop.permute.xlu0 %3388
        %3390 = vrot.lane.b32.xlu0 %v3308, 16
        %v3391 = vpop.permute.xlu0 %3390
        %3392 = vrot.lane.b32.xlu0 %v3309, 16
        %v3393 = vpop.permute.xlu0 %3392
        %3394 = vrot.lane.b32.xlu0 %v3310, 16
        %v3395 = vpop.permute.xlu0 %3394
        %3396 = vrot.lane.b32.xlu0 %v3311, 16
        %v3397 = vpop.permute.xlu0 %3396
        %3398 = vrot.lane.b32.xlu0 %v3312, 16
        %v3399 = vpop.permute.xlu0 %3398
        %3400 = vrot.lane.b32.xlu0 %v3313, 16
        %v3401 = vpop.permute.xlu0 %3400
        %3402 = vrot.lane.b32.xlu0 %v3314, 16
        %v3403 = vpop.permute.xlu0 %3402
        %3404 = vrot.lane.b32.xlu0 %v3315, 16
        %v3405 = vpop.permute.xlu0 %3404
        %3406 = vrot.lane.b32.xlu0 %v3316, 16
        %v3407 = vpop.permute.xlu0 %3406
        %3408 = vrot.lane.b32.xlu0 %v3317, 16
        %v3409 = vpop.permute.xlu0 %3408
        %3410 = vrot.lane.b32.xlu0 %v3318, 16
        %v3411 = vpop.permute.xlu0 %3410
        %3412 = vrot.lane.b32.xlu0 %v3319, 16
        %v3413 = vpop.permute.xlu0 %3412
        %3414 = vrot.lane.b32.xlu0 %v3320, 16
        %v3415 = vpop.permute.xlu0 %3414
        %3416 = vrot.lane.b32.xlu0 %v3321, 16
        %v3417 = vpop.permute.xlu0 %3416
        %3450 = vst.msk [vmem:[#allocation3] sm:$0xff] %vm1305, %v3355
        %3451 = vst.msk [vmem:[#allocation3 + $0x10] sm:$0xff] %vm1305, %v3357
        %3452 = vst.msk [vmem:[#allocation3 + $0x20] sm:$0xff] %vm1305, %v3359
        %3453 = vst.msk [vmem:[#allocation3 + $0x30] sm:$0xff] %vm1305, %v3361
        %3454 = vst.msk [vmem:[#allocation3 + $0x40] sm:$0xff] %vm1305, %v3363
        %3455 = vst.msk [vmem:[#allocation3 + $0x50] sm:$0xff] %vm1305, %v3365
        %3456 = vst.msk [vmem:[#allocation3 + $0x60] sm:$0xff] %vm1305, %v3367
        %3457 = vst.msk [vmem:[#allocation3 + $0x70] sm:$0xff] %vm1305, %v3369
        %3458 = vst.msk [vmem:[#allocation3 + $0x80] sm:$0xff] %vm1305, %v3371
        %3459 = vst.msk [vmem:[#allocation3 + $0x90] sm:$0xff] %vm1305, %v3373
        %3460 = vst.msk [vmem:[#allocation3 + $0xa0] sm:$0xff] %vm1305, %v3375
        %3461 = vst.msk [vmem:[#allocation3 + $0xb0] sm:$0xff] %vm1305, %v3377
        %3462 = vst.msk [vmem:[#allocation3 + $0xc0] sm:$0xff] %vm1305, %v3379
        %3463 = vst.msk [vmem:[#allocation3 + $0xd0] sm:$0xff] %vm1305, %v3381
        %3464 = vst.msk [vmem:[#allocation3 + $0xe0] sm:$0xff] %vm1305, %v3383
        %3465 = vst.msk [vmem:[#allocation3 + $0xf0] sm:$0xff] %vm1305, %v3385
        %3466 = vst.msk [vmem:[#allocation3 + $0x100] sm:$0xff] %vm1305, %v3387
        %3467 = vst.msk [vmem:[#allocation3 + $0x110] sm:$0xff] %vm1305, %v3389
        %3468 = vst.msk [vmem:[#allocation3 + $0x120] sm:$0xff] %vm1305, %v3391
        %3469 = vst.msk [vmem:[#allocation3 + $0x130] sm:$0xff] %vm1305, %v3393
        %3470 = vst.msk [vmem:[#allocation3 + $0x140] sm:$0xff] %vm1305, %v3395
        %3471 = vst.msk [vmem:[#allocation3 + $0x150] sm:$0xff] %vm1305, %v3397
        %3472 = vst.msk [vmem:[#allocation3 + $0x160] sm:$0xff] %vm1305, %v3399
        %3473 = vst.msk [vmem:[#allocation3 + $0x170] sm:$0xff] %vm1305, %v3401
        %3474 = vst.msk [vmem:[#allocation3 + $0x180] sm:$0xff] %vm1305, %v3403
        %3475 = vst.msk [vmem:[#allocation3 + $0x190] sm:$0xff] %vm1305, %v3405
        %3476 = vst.msk [vmem:[#allocation3 + $0x1a0] sm:$0xff] %vm1305, %v3407
        %3477 = vst.msk [vmem:[#allocation3 + $0x1b0] sm:$0xff] %vm1305, %v3409
        %3478 = vst.msk [vmem:[#allocation3 + $0x1c0] sm:$0xff] %vm1305, %v3411
        %3479 = vst.msk [vmem:[#allocation3 + $0x1d0] sm:$0xff] %vm1305, %v3413
        %3480 = vst.msk [vmem:[#allocation3 + $0x1e0] sm:$0xff] %vm1305, %v3415
        %3481 = vst.msk [vmem:[#allocation3 + $0x1f0] sm:$0xff] %vm1305, %v3417
        %v3482 = vld [vmem:[#allocation2 + $0x2] sm:$0xff]
        %v3483 = vld [vmem:[#allocation2 + $0xa] sm:$0xff]
        %v3484 = vld [vmem:[#allocation2 + $0x12] sm:$0xff]
        %v3485 = vld [vmem:[#allocation2 + $0x1a] sm:$0xff]
        %v3486 = vld [vmem:[#allocation2 + $0x22] sm:$0xff]
        %v3487 = vld [vmem:[#allocation2 + $0x2a] sm:$0xff]
        %v3488 = vld [vmem:[#allocation2 + $0x32] sm:$0xff]
        %v3489 = vld [vmem:[#allocation2 + $0x3a] sm:$0xff]
        %v3490 = vld [vmem:[#allocation2 + $0x42] sm:$0xff]
        %v3491 = vld [vmem:[#allocation2 + $0x4a] sm:$0xff]
        %v3492 = vld [vmem:[#allocation2 + $0x52] sm:$0xff]
        %v3493 = vld [vmem:[#allocation2 + $0x5a] sm:$0xff]
        %v3494 = vld [vmem:[#allocation2 + $0x62] sm:$0xff]
        %v3495 = vld [vmem:[#allocation2 + $0x6a] sm:$0xff]
        %v3496 = vld [vmem:[#allocation2 + $0x72] sm:$0xff]
        %v3497 = vld [vmem:[#allocation2 + $0x7a] sm:$0xff]
        %v3498 = vld [vmem:[#allocation2 + $0x82] sm:$0xff]
        %v3499 = vld [vmem:[#allocation2 + $0x8a] sm:$0xff]
        %v3500 = vld [vmem:[#allocation2 + $0x92] sm:$0xff]
        %v3501 = vld [vmem:[#allocation2 + $0x9a] sm:$0xff]
        %v3502 = vld [vmem:[#allocation2 + $0xa2] sm:$0xff]
        %v3503 = vld [vmem:[#allocation2 + $0xaa] sm:$0xff]
        %v3504 = vld [vmem:[#allocation2 + $0xb2] sm:$0xff]
        %v3505 = vld [vmem:[#allocation2 + $0xba] sm:$0xff]
        %v3506 = vld [vmem:[#allocation2 + $0xc2] sm:$0xff]
        %v3507 = vld [vmem:[#allocation2 + $0xca] sm:$0xff]
        %v3508 = vld [vmem:[#allocation2 + $0xd2] sm:$0xff]
        %v3509 = vld [vmem:[#allocation2 + $0xda] sm:$0xff]
        %v3510 = vld [vmem:[#allocation2 + $0xe2] sm:$0xff]
        %v3511 = vld [vmem:[#allocation2 + $0xea] sm:$0xff]
        %v3512 = vld [vmem:[#allocation2 + $0xf2] sm:$0xff]
        %v3513 = vld [vmem:[#allocation2 + $0xfa] sm:$0xff]
        %v3514 = vsel %vm833, %v3482, 0.0
        %v3515 = vsel %vm834, %v3483, 0.0
        %v3516 = vsel %vm835, %v3484, 0.0
        %v3517 = vsel %vm836, %v3485, 0.0
        %v3518 = vsel %vm837, %v3486, 0.0
        %v3519 = vsel %vm838, %v3487, 0.0
        %v3520 = vsel %vm839, %v3488, 0.0
        %v3521 = vsel %vm840, %v3489, 0.0
        %v3522 = vsel %vm841, %v3490, 0.0
        %v3523 = vsel %vm842, %v3491, 0.0
        %v3524 = vsel %vm843, %v3492, 0.0
        %v3525 = vsel %vm844, %v3493, 0.0
        %v3526 = vsel %vm845, %v3494, 0.0
        %v3527 = vsel %vm846, %v3495, 0.0
        %v3528 = vsel %vm847, %v3496, 0.0
        %v3529 = vsel %vm848, %v3497, 0.0
        %v3530 = vsel %vm849, %v3498, 0.0
        %v3531 = vsel %vm850, %v3499, 0.0
        %v3532 = vsel %vm851, %v3500, 0.0
        %v3533 = vsel %vm852, %v3501, 0.0
        %v3534 = vsel %vm853, %v3502, 0.0
        %v3535 = vsel %vm854, %v3503, 0.0
        %v3536 = vsel %vm855, %v3504, 0.0
        %v3537 = vsel %vm856, %v3505, 0.0
        %v3538 = vsel %vm857, %v3506, 0.0
        %v3539 = vsel %vm858, %v3507, 0.0
        %v3540 = vsel %vm859, %v3508, 0.0
        %v3541 = vsel %vm860, %v3509, 0.0
        %v3542 = vsel %vm861, %v3510, 0.0
        %v3543 = vsel %vm862, %v3511, 0.0
        %v3544 = vsel %vm863, %v3512, 0.0
        %v3545 = vsel %vm864, %v3513, 0.0
        %3578 = vrot.lane.b32.xlu0 %v3514, 32
        %v3579 = vpop.permute.xlu0 %3578
        %3580 = vrot.lane.b32.xlu0 %v3515, 32
        %v3581 = vpop.permute.xlu0 %3580
        %3582 = vrot.lane.b32.xlu0 %v3516, 32
        %v3583 = vpop.permute.xlu0 %3582
        %3584 = vrot.lane.b32.xlu0 %v3517, 32
        %v3585 = vpop.permute.xlu0 %3584
        %3586 = vrot.lane.b32.xlu0 %v3518, 32
        %v3587 = vpop.permute.xlu0 %3586
        %3588 = vrot.lane.b32.xlu0 %v3519, 32
        %v3589 = vpop.permute.xlu0 %3588
        %3590 = vrot.lane.b32.xlu0 %v3520, 32
        %v3591 = vpop.permute.xlu0 %3590
        %3592 = vrot.lane.b32.xlu0 %v3521, 32
        %v3593 = vpop.permute.xlu0 %3592
        %3594 = vrot.lane.b32.xlu0 %v3522, 32
        %v3595 = vpop.permute.xlu0 %3594
        %3596 = vrot.lane.b32.xlu0 %v3523, 32
        %v3597 = vpop.permute.xlu0 %3596
        %3598 = vrot.lane.b32.xlu0 %v3524, 32
        %v3599 = vpop.permute.xlu0 %3598
        %3600 = vrot.lane.b32.xlu0 %v3525, 32
        %v3601 = vpop.permute.xlu0 %3600
        %3602 = vrot.lane.b32.xlu0 %v3526, 32
        %v3603 = vpop.permute.xlu0 %3602
        %3604 = vrot.lane.b32.xlu0 %v3527, 32
        %v3605 = vpop.permute.xlu0 %3604
        %3606 = vrot.lane.b32.xlu0 %v3528, 32
        %v3607 = vpop.permute.xlu0 %3606
        %3608 = vrot.lane.b32.xlu0 %v3529, 32
        %v3609 = vpop.permute.xlu0 %3608
        %3610 = vrot.lane.b32.xlu0 %v3530, 32
        %v3611 = vpop.permute.xlu0 %3610
        %3612 = vrot.lane.b32.xlu0 %v3531, 32
        %v3613 = vpop.permute.xlu0 %3612
        %3614 = vrot.lane.b32.xlu0 %v3532, 32
        %v3615 = vpop.permute.xlu0 %3614
        %3616 = vrot.lane.b32.xlu0 %v3533, 32
        %v3617 = vpop.permute.xlu0 %3616
        %3618 = vrot.lane.b32.xlu0 %v3534, 32
        %v3619 = vpop.permute.xlu0 %3618
        %3620 = vrot.lane.b32.xlu0 %v3535, 32
        %v3621 = vpop.permute.xlu0 %3620
        %3622 = vrot.lane.b32.xlu0 %v3536, 32
        %v3623 = vpop.permute.xlu0 %3622
        %3624 = vrot.lane.b32.xlu0 %v3537, 32
        %v3625 = vpop.permute.xlu0 %3624
        %3626 = vrot.lane.b32.xlu0 %v3538, 32
        %v3627 = vpop.permute.xlu0 %3626
        %3628 = vrot.lane.b32.xlu0 %v3539, 32
        %v3629 = vpop.permute.xlu0 %3628
        %3630 = vrot.lane.b32.xlu0 %v3540, 32
        %v3631 = vpop.permute.xlu0 %3630
        %3632 = vrot.lane.b32.xlu0 %v3541, 32
        %v3633 = vpop.permute.xlu0 %3632
        %3634 = vrot.lane.b32.xlu0 %v3542, 32
        %v3635 = vpop.permute.xlu0 %3634
        %3636 = vrot.lane.b32.xlu0 %v3543, 32
        %v3637 = vpop.permute.xlu0 %3636
        %3638 = vrot.lane.b32.xlu0 %v3544, 32
        %v3639 = vpop.permute.xlu0 %3638
        %3640 = vrot.lane.b32.xlu0 %v3545, 32
        %v3641 = vpop.permute.xlu0 %3640
        %3674 = vst.msk [vmem:[#allocation3] sm:$0xff] %vm1530, %v3579
        %3675 = vst.msk [vmem:[#allocation3 + $0x10] sm:$0xff] %vm1530, %v3581
        %3676 = vst.msk [vmem:[#allocation3 + $0x20] sm:$0xff] %vm1530, %v3583
        %3677 = vst.msk [vmem:[#allocation3 + $0x30] sm:$0xff] %vm1530, %v3585
        %3678 = vst.msk [vmem:[#allocation3 + $0x40] sm:$0xff] %vm1530, %v3587
        %3679 = vst.msk [vmem:[#allocation3 + $0x50] sm:$0xff] %vm1530, %v3589
        %3680 = vst.msk [vmem:[#allocation3 + $0x60] sm:$0xff] %vm1530, %v3591
        %3681 = vst.msk [vmem:[#allocation3 + $0x70] sm:$0xff] %vm1530, %v3593
        %3682 = vst.msk [vmem:[#allocation3 + $0x80] sm:$0xff] %vm1530, %v3595
        %3683 = vst.msk [vmem:[#allocation3 + $0x90] sm:$0xff] %vm1530, %v3597
        %3684 = vst.msk [vmem:[#allocation3 + $0xa0] sm:$0xff] %vm1530, %v3599
        %3685 = vst.msk [vmem:[#allocation3 + $0xb0] sm:$0xff] %vm1530, %v3601
        %3686 = vst.msk [vmem:[#allocation3 + $0xc0] sm:$0xff] %vm1530, %v3603
        %3687 = vst.msk [vmem:[#allocation3 + $0xd0] sm:$0xff] %vm1530, %v3605
        %3688 = vst.msk [vmem:[#allocation3 + $0xe0] sm:$0xff] %vm1530, %v3607
        %3689 = vst.msk [vmem:[#allocation3 + $0xf0] sm:$0xff] %vm1530, %v3609
        %3690 = vst.msk [vmem:[#allocation3 + $0x100] sm:$0xff] %vm1530, %v3611
        %3691 = vst.msk [vmem:[#allocation3 + $0x110] sm:$0xff] %vm1530, %v3613
        %3692 = vst.msk [vmem:[#allocation3 + $0x120] sm:$0xff] %vm1530, %v3615
        %3693 = vst.msk [vmem:[#allocation3 + $0x130] sm:$0xff] %vm1530, %v3617
        %3694 = vst.msk [vmem:[#allocation3 + $0x140] sm:$0xff] %vm1530, %v3619
        %3695 = vst.msk [vmem:[#allocation3 + $0x150] sm:$0xff] %vm1530, %v3621
        %3696 = vst.msk [vmem:[#allocation3 + $0x160] sm:$0xff] %vm1530, %v3623
        %3697 = vst.msk [vmem:[#allocation3 + $0x170] sm:$0xff] %vm1530, %v3625
        %3698 = vst.msk [vmem:[#allocation3 + $0x180] sm:$0xff] %vm1530, %v3627
        %3699 = vst.msk [vmem:[#allocation3 + $0x190] sm:$0xff] %vm1530, %v3629
        %3700 = vst.msk [vmem:[#allocation3 + $0x1a0] sm:$0xff] %vm1530, %v3631
        %3701 = vst.msk [vmem:[#allocation3 + $0x1b0] sm:$0xff] %vm1530, %v3633
        %3702 = vst.msk [vmem:[#allocation3 + $0x1c0] sm:$0xff] %vm1530, %v3635
        %3703 = vst.msk [vmem:[#allocation3 + $0x1d0] sm:$0xff] %vm1530, %v3637
        %3704 = vst.msk [vmem:[#allocation3 + $0x1e0] sm:$0xff] %vm1530, %v3639
        %3705 = vst.msk [vmem:[#allocation3 + $0x1f0] sm:$0xff] %vm1530, %v3641
        %v3706 = vld [vmem:[#allocation2 + $0x10] sm:$0xff]
        %v3707 = vld [vmem:[#allocation2 + $0x18] sm:$0xff]
        %v3708 = vld [vmem:[#allocation2 + $0x20] sm:$0xff]
        %v3709 = vld [vmem:[#allocation2 + $0x28] sm:$0xff]
        %v3710 = vld [vmem:[#allocation2 + $0x30] sm:$0xff]
        %v3711 = vld [vmem:[#allocation2 + $0x38] sm:$0xff]
        %v3712 = vld [vmem:[#allocation2 + $0x40] sm:$0xff]
        %v3713 = vld [vmem:[#allocation2 + $0x48] sm:$0xff]
        %v3714 = vld [vmem:[#allocation2 + $0x50] sm:$0xff]
        %v3715 = vld [vmem:[#allocation2 + $0x58] sm:$0xff]
        %v3716 = vld [vmem:[#allocation2 + $0x60] sm:$0xff]
        %v3717 = vld [vmem:[#allocation2 + $0x68] sm:$0xff]
        %v3718 = vld [vmem:[#allocation2 + $0x70] sm:$0xff]
        %v3719 = vld [vmem:[#allocation2 + $0x78] sm:$0xff]
        %v3720 = vld [vmem:[#allocation2 + $0x80] sm:$0xff]
        %v3721 = vld [vmem:[#allocation2 + $0x88] sm:$0xff]
        %v3722 = vld [vmem:[#allocation2 + $0x90] sm:$0xff]
        %v3723 = vld [vmem:[#allocation2 + $0x98] sm:$0xff]
        %v3724 = vld [vmem:[#allocation2 + $0xa0] sm:$0xff]
        %v3725 = vld [vmem:[#allocation2 + $0xa8] sm:$0xff]
        %v3726 = vld [vmem:[#allocation2 + $0xb0] sm:$0xff]
        %v3727 = vld [vmem:[#allocation2 + $0xb8] sm:$0xff]
        %v3728 = vld [vmem:[#allocation2 + $0xc0] sm:$0xff]
        %v3729 = vld [vmem:[#allocation2 + $0xc8] sm:$0xff]
        %v3730 = vld [vmem:[#allocation2 + $0xd0] sm:$0xff]
        %v3731 = vld [vmem:[#allocation2 + $0xd8] sm:$0xff]
        %v3732 = vld [vmem:[#allocation2 + $0xe0] sm:$0xff]
        %v3733 = vld [vmem:[#allocation2 + $0xe8] sm:$0xff]
        %v3734 = vld [vmem:[#allocation2 + $0xf0] sm:$0xff]
        %v3735 = vld [vmem:[#allocation2 + $0xf8] sm:$0xff]
        %v3736 = vld [vmem:[#allocation2 + $0x100] sm:$0xff]
        %v3737 = vld [vmem:[#allocation2 + $0x108] sm:$0xff]
        %v3738 = vsel %vm801, %v3706, 0.0
        %v3739 = vsel %vm802, %v3707, 0.0
        %v3740 = vsel %vm803, %v3708, 0.0
        %v3741 = vsel %vm804, %v3709, 0.0
        %v3742 = vsel %vm805, %v3710, 0.0
        %v3743 = vsel %vm806, %v3711, 0.0
        %v3744 = vsel %vm807, %v3712, 0.0
        %v3745 = vsel %vm808, %v3713, 0.0
        %v3746 = vsel %vm809, %v3714, 0.0
        %v3747 = vsel %vm810, %v3715, 0.0
        %v3748 = vsel %vm811, %v3716, 0.0
        %v3749 = vsel %vm812, %v3717, 0.0
        %v3750 = vsel %vm813, %v3718, 0.0
        %v3751 = vsel %vm814, %v3719, 0.0
        %v3752 = vsel %vm815, %v3720, 0.0
        %v3753 = vsel %vm816, %v3721, 0.0
        %v3754 = vsel %vm817, %v3722, 0.0
        %v3755 = vsel %vm818, %v3723, 0.0
        %v3756 = vsel %vm819, %v3724, 0.0
        %v3757 = vsel %vm820, %v3725, 0.0
        %v3758 = vsel %vm821, %v3726, 0.0
        %v3759 = vsel %vm822, %v3727, 0.0
        %v3760 = vsel %vm823, %v3728, 0.0
        %v3761 = vsel %vm824, %v3729, 0.0
        %v3762 = vsel %vm825, %v3730, 0.0
        %v3763 = vsel %vm826, %v3731, 0.0
        %v3764 = vsel %vm827, %v3732, 0.0
        %v3765 = vsel %vm828, %v3733, 0.0
        %v3766 = vsel %vm829, %v3734, 0.0
        %v3767 = vsel %vm830, %v3735, 0.0
        %v3768 = vsel %vm831, %v3736, 0.0
        %v3769 = vsel %vm832, %v3737, 0.0
        %3802 = vrot.lane.b32.xlu0 %v3738, 48
        %v3803 = vpop.permute.xlu0 %3802
        %3804 = vrot.lane.b32.xlu0 %v3739, 48
        %v3805 = vpop.permute.xlu0 %3804
        %3806 = vrot.lane.b32.xlu0 %v3740, 48
        %v3807 = vpop.permute.xlu0 %3806
        %3808 = vrot.lane.b32.xlu0 %v3741, 48
        %v3809 = vpop.permute.xlu0 %3808
        %3810 = vrot.lane.b32.xlu0 %v3742, 48
        %v3811 = vpop.permute.xlu0 %3810
        %3812 = vrot.lane.b32.xlu0 %v3743, 48
        %v3813 = vpop.permute.xlu0 %3812
        %3814 = vrot.lane.b32.xlu0 %v3744, 48
        %v3815 = vpop.permute.xlu0 %3814
        %3816 = vrot.lane.b32.xlu0 %v3745, 48
        %v3817 = vpop.permute.xlu0 %3816
        %3818 = vrot.lane.b32.xlu0 %v3746, 48
        %v3819 = vpop.permute.xlu0 %3818
        %3820 = vrot.lane.b32.xlu0 %v3747, 48
        %v3821 = vpop.permute.xlu0 %3820
        %3822 = vrot.lane.b32.xlu0 %v3748, 48
        %v3823 = vpop.permute.xlu0 %3822
        %3824 = vrot.lane.b32.xlu0 %v3749, 48
        %v3825 = vpop.permute.xlu0 %3824
        %3826 = vrot.lane.b32.xlu0 %v3750, 48
        %v3827 = vpop.permute.xlu0 %3826
        %3828 = vrot.lane.b32.xlu0 %v3751, 48
        %v3829 = vpop.permute.xlu0 %3828
        %3830 = vrot.lane.b32.xlu0 %v3752, 48
        %v3831 = vpop.permute.xlu0 %3830
        %3832 = vrot.lane.b32.xlu0 %v3753, 48
        %v3833 = vpop.permute.xlu0 %3832
        %3834 = vrot.lane.b32.xlu0 %v3754, 48
        %v3835 = vpop.permute.xlu0 %3834
        %3836 = vrot.lane.b32.xlu0 %v3755, 48
        %v3837 = vpop.permute.xlu0 %3836
        %3838 = vrot.lane.b32.xlu0 %v3756, 48
        %v3839 = vpop.permute.xlu0 %3838
        %3840 = vrot.lane.b32.xlu0 %v3757, 48
        %v3841 = vpop.permute.xlu0 %3840
        %3842 = vrot.lane.b32.xlu0 %v3758, 48
        %v3843 = vpop.permute.xlu0 %3842
        %3844 = vrot.lane.b32.xlu0 %v3759, 48
        %v3845 = vpop.permute.xlu0 %3844
        %3846 = vrot.lane.b32.xlu0 %v3760, 48
        %v3847 = vpop.permute.xlu0 %3846
        %3848 = vrot.lane.b32.xlu0 %v3761, 48
        %v3849 = vpop.permute.xlu0 %3848
        %3850 = vrot.lane.b32.xlu0 %v3762, 48
        %v3851 = vpop.permute.xlu0 %3850
        %3852 = vrot.lane.b32.xlu0 %v3763, 48
        %v3853 = vpop.permute.xlu0 %3852
        %3854 = vrot.lane.b32.xlu0 %v3764, 48
        %v3855 = vpop.permute.xlu0 %3854
        %3856 = vrot.lane.b32.xlu0 %v3765, 48
        %v3857 = vpop.permute.xlu0 %3856
        %3858 = vrot.lane.b32.xlu0 %v3766, 48
        %v3859 = vpop.permute.xlu0 %3858
        %3860 = vrot.lane.b32.xlu0 %v3767, 48
        %v3861 = vpop.permute.xlu0 %3860
        %3862 = vrot.lane.b32.xlu0 %v3768, 48
        %v3863 = vpop.permute.xlu0 %3862
        %3864 = vrot.lane.b32.xlu0 %v3769, 48
        %v3865 = vpop.permute.xlu0 %3864
        %3898 = vst.msk [vmem:[#allocation3] sm:$0xff] %vm1755, %v3803
        %3899 = vst.msk [vmem:[#allocation3 + $0x10] sm:$0xff] %vm1755, %v3805
        %3900 = vst.msk [vmem:[#allocation3 + $0x20] sm:$0xff] %vm1755, %v3807
        %3901 = vst.msk [vmem:[#allocation3 + $0x30] sm:$0xff] %vm1755, %v3809
        %3902 = vst.msk [vmem:[#allocation3 + $0x40] sm:$0xff] %vm1755, %v3811
        %3903 = vst.msk [vmem:[#allocation3 + $0x50] sm:$0xff] %vm1755, %v3813
        %3904 = vst.msk [vmem:[#allocation3 + $0x60] sm:$0xff] %vm1755, %v3815
        %3905 = vst.msk [vmem:[#allocation3 + $0x70] sm:$0xff] %vm1755, %v3817
        %3906 = vst.msk [vmem:[#allocation3 + $0x80] sm:$0xff] %vm1755, %v3819
        %3907 = vst.msk [vmem:[#allocation3 + $0x90] sm:$0xff] %vm1755, %v3821
        %3908 = vst.msk [vmem:[#allocation3 + $0xa0] sm:$0xff] %vm1755, %v3823
        %3909 = vst.msk [vmem:[#allocation3 + $0xb0] sm:$0xff] %vm1755, %v3825
        %3910 = vst.msk [vmem:[#allocation3 + $0xc0] sm:$0xff] %vm1755, %v3827
        %3911 = vst.msk [vmem:[#allocation3 + $0xd0] sm:$0xff] %vm1755, %v3829
        %3912 = vst.msk [vmem:[#allocation3 + $0xe0] sm:$0xff] %vm1755, %v3831
        %3913 = vst.msk [vmem:[#allocation3 + $0xf0] sm:$0xff] %vm1755, %v3833
        %3914 = vst.msk [vmem:[#allocation3 + $0x100] sm:$0xff] %vm1755, %v3835
        %3915 = vst.msk [vmem:[#allocation3 + $0x110] sm:$0xff] %vm1755, %v3837
        %3916 = vst.msk [vmem:[#allocation3 + $0x120] sm:$0xff] %vm1755, %v3839
        %3917 = vst.msk [vmem:[#allocation3 + $0x130] sm:$0xff] %vm1755, %v3841
        %3918 = vst.msk [vmem:[#allocation3 + $0x140] sm:$0xff] %vm1755, %v3843
        %3919 = vst.msk [vmem:[#allocation3 + $0x150] sm:$0xff] %vm1755, %v3845
        %3920 = vst.msk [vmem:[#allocation3 + $0x160] sm:$0xff] %vm1755, %v3847
        %3921 = vst.msk [vmem:[#allocation3 + $0x170] sm:$0xff] %vm1755, %v3849
        %3922 = vst.msk [vmem:[#allocation3 + $0x180] sm:$0xff] %vm1755, %v3851
        %3923 = vst.msk [vmem:[#allocation3 + $0x190] sm:$0xff] %vm1755, %v3853
        %3924 = vst.msk [vmem:[#allocation3 + $0x1a0] sm:$0xff] %vm1755, %v3855
        %3925 = vst.msk [vmem:[#allocation3 + $0x1b0] sm:$0xff] %vm1755, %v3857
        %3926 = vst.msk [vmem:[#allocation3 + $0x1c0] sm:$0xff] %vm1755, %v3859
        %3927 = vst.msk [vmem:[#allocation3 + $0x1d0] sm:$0xff] %vm1755, %v3861
        %3928 = vst.msk [vmem:[#allocation3 + $0x1e0] sm:$0xff] %vm1755, %v3863
        %3929 = vst.msk [vmem:[#allocation3 + $0x1f0] sm:$0xff] %vm1755, %v3865
        %v3930 = vld [vmem:[#allocation2 + $0x11] sm:$0xff]
        %v3931 = vld [vmem:[#allocation2 + $0x19] sm:$0xff]
        %v3932 = vld [vmem:[#allocation2 + $0x21] sm:$0xff]
        %v3933 = vld [vmem:[#allocation2 + $0x29] sm:$0xff]
        %v3934 = vld [vmem:[#allocation2 + $0x31] sm:$0xff]
        %v3935 = vld [vmem:[#allocation2 + $0x39] sm:$0xff]
        %v3936 = vld [vmem:[#allocation2 + $0x41] sm:$0xff]
        %v3937 = vld [vmem:[#allocation2 + $0x49] sm:$0xff]
        %v3938 = vld [vmem:[#allocation2 + $0x51] sm:$0xff]
        %v3939 = vld [vmem:[#allocation2 + $0x59] sm:$0xff]
        %v3940 = vld [vmem:[#allocation2 + $0x61] sm:$0xff]
        %v3941 = vld [vmem:[#allocation2 + $0x69] sm:$0xff]
        %v3942 = vld [vmem:[#allocation2 + $0x71] sm:$0xff]
        %v3943 = vld [vmem:[#allocation2 + $0x79] sm:$0xff]
        %v3944 = vld [vmem:[#allocation2 + $0x81] sm:$0xff]
        %v3945 = vld [vmem:[#allocation2 + $0x89] sm:$0xff]
        %v3946 = vld [vmem:[#allocation2 + $0x91] sm:$0xff]
        %v3947 = vld [vmem:[#allocation2 + $0x99] sm:$0xff]
        %v3948 = vld [vmem:[#allocation2 + $0xa1] sm:$0xff]
        %v3949 = vld [vmem:[#allocation2 + $0xa9] sm:$0xff]
        %v3950 = vld [vmem:[#allocation2 + $0xb1] sm:$0xff]
        %v3951 = vld [vmem:[#allocation2 + $0xb9] sm:$0xff]
        %v3952 = vld [vmem:[#allocation2 + $0xc1] sm:$0xff]
        %v3953 = vld [vmem:[#allocation2 + $0xc9] sm:$0xff]
        %v3954 = vld [vmem:[#allocation2 + $0xd1] sm:$0xff]
        %v3955 = vld [vmem:[#allocation2 + $0xd9] sm:$0xff]
        %v3956 = vld [vmem:[#allocation2 + $0xe1] sm:$0xff]
        %v3957 = vld [vmem:[#allocation2 + $0xe9] sm:$0xff]
        %v3958 = vld [vmem:[#allocation2 + $0xf1] sm:$0xff]
        %v3959 = vld [vmem:[#allocation2 + $0xf9] sm:$0xff]
        %v3960 = vld [vmem:[#allocation2 + $0x101] sm:$0xff]
        %v3961 = vld [vmem:[#allocation2 + $0x109] sm:$0xff]
        %3994 = vrot.lane.b32.xlu0 %v3930, 64
        %v3995 = vpop.permute.xlu0 %3994
        %3996 = vrot.lane.b32.xlu0 %v3931, 64
        %v3997 = vpop.permute.xlu0 %3996
        %3998 = vrot.lane.b32.xlu0 %v3932, 64
        %v3999 = vpop.permute.xlu0 %3998
        %4000 = vrot.lane.b32.xlu0 %v3933, 64
        %v4001 = vpop.permute.xlu0 %4000
        %4002 = vrot.lane.b32.xlu0 %v3934, 64
        %v4003 = vpop.permute.xlu0 %4002
        %4004 = vrot.lane.b32.xlu0 %v3935, 64
        %v4005 = vpop.permute.xlu0 %4004
        %4006 = vrot.lane.b32.xlu0 %v3936, 64
        %v4007 = vpop.permute.xlu0 %4006
        %4008 = vrot.lane.b32.xlu0 %v3937, 64
        %v4009 = vpop.permute.xlu0 %4008
        %4010 = vrot.lane.b32.xlu0 %v3938, 64
        %v4011 = vpop.permute.xlu0 %4010
        %4012 = vrot.lane.b32.xlu0 %v3939, 64
        %v4013 = vpop.permute.xlu0 %4012
        %4014 = vrot.lane.b32.xlu0 %v3940, 64
        %v4015 = vpop.permute.xlu0 %4014
        %4016 = vrot.lane.b32.xlu0 %v3941, 64
        %v4017 = vpop.permute.xlu0 %4016
        %4018 = vrot.lane.b32.xlu0 %v3942, 64
        %v4019 = vpop.permute.xlu0 %4018
        %4020 = vrot.lane.b32.xlu0 %v3943, 64
        %v4021 = vpop.permute.xlu0 %4020
        %4022 = vrot.lane.b32.xlu0 %v3944, 64
        %v4023 = vpop.permute.xlu0 %4022
        %4024 = vrot.lane.b32.xlu0 %v3945, 64
        %v4025 = vpop.permute.xlu0 %4024
        %4026 = vrot.lane.b32.xlu0 %v3946, 64
        %v4027 = vpop.permute.xlu0 %4026
        %4028 = vrot.lane.b32.xlu0 %v3947, 64
        %v4029 = vpop.permute.xlu0 %4028
        %4030 = vrot.lane.b32.xlu0 %v3948, 64
        %v4031 = vpop.permute.xlu0 %4030
        %4032 = vrot.lane.b32.xlu0 %v3949, 64
        %v4033 = vpop.permute.xlu0 %4032
        %4034 = vrot.lane.b32.xlu0 %v3950, 64
        %v4035 = vpop.permute.xlu0 %4034
        %4036 = vrot.lane.b32.xlu0 %v3951, 64
        %v4037 = vpop.permute.xlu0 %4036
        %4038 = vrot.lane.b32.xlu0 %v3952, 64
        %v4039 = vpop.permute.xlu0 %4038
        %4040 = vrot.lane.b32.xlu0 %v3953, 64
        %v4041 = vpop.permute.xlu0 %4040
        %4042 = vrot.lane.b32.xlu0 %v3954, 64
        %v4043 = vpop.permute.xlu0 %4042
        %4044 = vrot.lane.b32.xlu0 %v3955, 64
        %v4045 = vpop.permute.xlu0 %4044
        %4046 = vrot.lane.b32.xlu0 %v3956, 64
        %v4047 = vpop.permute.xlu0 %4046
        %4048 = vrot.lane.b32.xlu0 %v3957, 64
        %v4049 = vpop.permute.xlu0 %4048
        %4050 = vrot.lane.b32.xlu0 %v3958, 64
        %v4051 = vpop.permute.xlu0 %4050
        %4052 = vrot.lane.b32.xlu0 %v3959, 64
        %v4053 = vpop.permute.xlu0 %4052
        %4054 = vrot.lane.b32.xlu0 %v3960, 64
        %v4055 = vpop.permute.xlu0 %4054
        %4056 = vrot.lane.b32.xlu0 %v3961, 64
        %v4057 = vpop.permute.xlu0 %4056
        %4090 = vst.msk [vmem:[#allocation3] sm:$0xff] %vm1948, %v3995
        %4091 = vst.msk [vmem:[#allocation3 + $0x10] sm:$0xff] %vm1948, %v3997
        %4092 = vst.msk [vmem:[#allocation3 + $0x20] sm:$0xff] %vm1948, %v3999
        %4093 = vst.msk [vmem:[#allocation3 + $0x30] sm:$0xff] %vm1948, %v4001
        %4094 = vst.msk [vmem:[#allocation3 + $0x40] sm:$0xff] %vm1948, %v4003
        %4095 = vst.msk [vmem:[#allocation3 + $0x50] sm:$0xff] %vm1948, %v4005
        %4096 = vst.msk [vmem:[#allocation3 + $0x60] sm:$0xff] %vm1948, %v4007
        %4097 = vst.msk [vmem:[#allocation3 + $0x70] sm:$0xff] %vm1948, %v4009
        %4098 = vst.msk [vmem:[#allocation3 + $0x80] sm:$0xff] %vm1948, %v4011
        %4099 = vst.msk [vmem:[#allocation3 + $0x90] sm:$0xff] %vm1948, %v4013
        %4100 = vst.msk [vmem:[#allocation3 + $0xa0] sm:$0xff] %vm1948, %v4015
        %4101 = vst.msk [vmem:[#allocation3 + $0xb0] sm:$0xff] %vm1948, %v4017
        %4102 = vst.msk [vmem:[#allocation3 + $0xc0] sm:$0xff] %vm1948, %v4019
        %4103 = vst.msk [vmem:[#allocation3 + $0xd0] sm:$0xff] %vm1948, %v4021
        %4104 = vst.msk [vmem:[#allocation3 + $0xe0] sm:$0xff] %vm1948, %v4023
        %4105 = vst.msk [vmem:[#allocation3 + $0xf0] sm:$0xff] %vm1948, %v4025
        %4106 = vst.msk [vmem:[#allocation3 + $0x100] sm:$0xff] %vm1948, %v4027
        %4107 = vst.msk [vmem:[#allocation3 + $0x110] sm:$0xff] %vm1948, %v4029
        %4108 = vst.msk [vmem:[#allocation3 + $0x120] sm:$0xff] %vm1948, %v4031
        %4109 = vst.msk [vmem:[#allocation3 + $0x130] sm:$0xff] %vm1948, %v4033
        %4110 = vst.msk [vmem:[#allocation3 + $0x140] sm:$0xff] %vm1948, %v4035
        %4111 = vst.msk [vmem:[#allocation3 + $0x150] sm:$0xff] %vm1948, %v4037
        %4112 = vst.msk [vmem:[#allocation3 + $0x160] sm:$0xff] %vm1948, %v4039
        %4113 = vst.msk [vmem:[#allocation3 + $0x170] sm:$0xff] %vm1948, %v4041
        %4114 = vst.msk [vmem:[#allocation3 + $0x180] sm:$0xff] %vm1948, %v4043
        %4115 = vst.msk [vmem:[#allocation3 + $0x190] sm:$0xff] %vm1948, %v4045
        %4116 = vst.msk [vmem:[#allocation3 + $0x1a0] sm:$0xff] %vm1948, %v4047
        %4117 = vst.msk [vmem:[#allocation3 + $0x1b0] sm:$0xff] %vm1948, %v4049
        %4118 = vst.msk [vmem:[#allocation3 + $0x1c0] sm:$0xff] %vm1948, %v4051
        %4119 = vst.msk [vmem:[#allocation3 + $0x1d0] sm:$0xff] %vm1948, %v4053
        %4120 = vst.msk [vmem:[#allocation3 + $0x1e0] sm:$0xff] %vm1948, %v4055
        %4121 = vst.msk [vmem:[#allocation3 + $0x1f0] sm:$0xff] %vm1948, %v4057
        %v4122 = vld [vmem:[#allocation2 + $0x12] sm:$0xff]
        %v4123 = vld [vmem:[#allocation2 + $0x1a] sm:$0xff]
        %v4124 = vld [vmem:[#allocation2 + $0x22] sm:$0xff]
        %v4125 = vld [vmem:[#allocation2 + $0x2a] sm:$0xff]
        %v4126 = vld [vmem:[#allocation2 + $0x32] sm:$0xff]
        %v4127 = vld [vmem:[#allocation2 + $0x3a] sm:$0xff]
        %v4128 = vld [vmem:[#allocation2 + $0x42] sm:$0xff]
        %v4129 = vld [vmem:[#allocation2 + $0x4a] sm:$0xff]
        %v4130 = vld [vmem:[#allocation2 + $0x52] sm:$0xff]
        %v4131 = vld [vmem:[#allocation2 + $0x5a] sm:$0xff]
        %v4132 = vld [vmem:[#allocation2 + $0x62] sm:$0xff]
        %v4133 = vld [vmem:[#allocation2 + $0x6a] sm:$0xff]
        %v4134 = vld [vmem:[#allocation2 + $0x72] sm:$0xff]
        %v4135 = vld [vmem:[#allocation2 + $0x7a] sm:$0xff]
        %v4136 = vld [vmem:[#allocation2 + $0x82] sm:$0xff]
        %v4137 = vld [vmem:[#allocation2 + $0x8a] sm:$0xff]
        %v4138 = vld [vmem:[#allocation2 + $0x92] sm:$0xff]
        %v4139 = vld [vmem:[#allocation2 + $0x9a] sm:$0xff]
        %v4140 = vld [vmem:[#allocation2 + $0xa2] sm:$0xff]
        %v4141 = vld [vmem:[#allocation2 + $0xaa] sm:$0xff]
        %v4142 = vld [vmem:[#allocation2 + $0xb2] sm:$0xff]
        %v4143 = vld [vmem:[#allocation2 + $0xba] sm:$0xff]
        %v4144 = vld [vmem:[#allocation2 + $0xc2] sm:$0xff]
        %v4145 = vld [vmem:[#allocation2 + $0xca] sm:$0xff]
        %v4146 = vld [vmem:[#allocation2 + $0xd2] sm:$0xff]
        %v4147 = vld [vmem:[#allocation2 + $0xda] sm:$0xff]
        %v4148 = vld [vmem:[#allocation2 + $0xe2] sm:$0xff]
        %v4149 = vld [vmem:[#allocation2 + $0xea] sm:$0xff]
        %v4150 = vld [vmem:[#allocation2 + $0xf2] sm:$0xff]
        %v4151 = vld [vmem:[#allocation2 + $0xfa] sm:$0xff]
        %v4152 = vld [vmem:[#allocation2 + $0x102] sm:$0xff]
        %v4153 = vld [vmem:[#allocation2 + $0x10a] sm:$0xff]
        %v4154 = vsel %vm833, %v4122, 0.0
        %v4155 = vsel %vm834, %v4123, 0.0
        %v4156 = vsel %vm835, %v4124, 0.0
        %v4157 = vsel %vm836, %v4125, 0.0
        %v4158 = vsel %vm837, %v4126, 0.0
        %v4159 = vsel %vm838, %v4127, 0.0
        %v4160 = vsel %vm839, %v4128, 0.0
        %v4161 = vsel %vm840, %v4129, 0.0
        %v4162 = vsel %vm841, %v4130, 0.0
        %v4163 = vsel %vm842, %v4131, 0.0
        %v4164 = vsel %vm843, %v4132, 0.0
        %v4165 = vsel %vm844, %v4133, 0.0
        %v4166 = vsel %vm845, %v4134, 0.0
        %v4167 = vsel %vm846, %v4135, 0.0
        %v4168 = vsel %vm847, %v4136, 0.0
        %v4169 = vsel %vm848, %v4137, 0.0
        %v4170 = vsel %vm849, %v4138, 0.0
        %v4171 = vsel %vm850, %v4139, 0.0
        %v4172 = vsel %vm851, %v4140, 0.0
        %v4173 = vsel %vm852, %v4141, 0.0
        %v4174 = vsel %vm853, %v4142, 0.0
        %v4175 = vsel %vm854, %v4143, 0.0
        %v4176 = vsel %vm855, %v4144, 0.0
        %v4177 = vsel %vm856, %v4145, 0.0
        %v4178 = vsel %vm857, %v4146, 0.0
        %v4179 = vsel %vm858, %v4147, 0.0
        %v4180 = vsel %vm859, %v4148, 0.0
        %v4181 = vsel %vm860, %v4149, 0.0
        %v4182 = vsel %vm861, %v4150, 0.0
        %v4183 = vsel %vm862, %v4151, 0.0
        %v4184 = vsel %vm863, %v4152, 0.0
        %v4185 = vsel %vm864, %v4153, 0.0
        %4218 = vrot.lane.b32.xlu0 %v4154, 80
        %v4219 = vpop.permute.xlu0 %4218
        %4220 = vrot.lane.b32.xlu0 %v4155, 80
        %v4221 = vpop.permute.xlu0 %4220
        %4222 = vrot.lane.b32.xlu0 %v4156, 80
        %v4223 = vpop.permute.xlu0 %4222
        %4224 = vrot.lane.b32.xlu0 %v4157, 80
        %v4225 = vpop.permute.xlu0 %4224
        %4226 = vrot.lane.b32.xlu0 %v4158, 80
        %v4227 = vpop.permute.xlu0 %4226
        %4228 = vrot.lane.b32.xlu0 %v4159, 80
        %v4229 = vpop.permute.xlu0 %4228
        %4230 = vrot.lane.b32.xlu0 %v4160, 80
        %v4231 = vpop.permute.xlu0 %4230
        %4232 = vrot.lane.b32.xlu0 %v4161, 80
        %v4233 = vpop.permute.xlu0 %4232
        %4234 = vrot.lane.b32.xlu0 %v4162, 80
        %v4235 = vpop.permute.xlu0 %4234
        %4236 = vrot.lane.b32.xlu0 %v4163, 80
        %v4237 = vpop.permute.xlu0 %4236
        %4238 = vrot.lane.b32.xlu0 %v4164, 80
        %v4239 = vpop.permute.xlu0 %4238
        %4240 = vrot.lane.b32.xlu0 %v4165, 80
        %v4241 = vpop.permute.xlu0 %4240
        %4242 = vrot.lane.b32.xlu0 %v4166, 80
        %v4243 = vpop.permute.xlu0 %4242
        %4244 = vrot.lane.b32.xlu0 %v4167, 80
        %v4245 = vpop.permute.xlu0 %4244
        %4246 = vrot.lane.b32.xlu0 %v4168, 80
        %v4247 = vpop.permute.xlu0 %4246
        %4248 = vrot.lane.b32.xlu0 %v4169, 80
        %v4249 = vpop.permute.xlu0 %4248
        %4250 = vrot.lane.b32.xlu0 %v4170, 80
        %v4251 = vpop.permute.xlu0 %4250
        %4252 = vrot.lane.b32.xlu0 %v4171, 80
        %v4253 = vpop.permute.xlu0 %4252
        %4254 = vrot.lane.b32.xlu0 %v4172, 80
        %v4255 = vpop.permute.xlu0 %4254
        %4256 = vrot.lane.b32.xlu0 %v4173, 80
        %v4257 = vpop.permute.xlu0 %4256
        %4258 = vrot.lane.b32.xlu0 %v4174, 80
        %v4259 = vpop.permute.xlu0 %4258
        %4260 = vrot.lane.b32.xlu0 %v4175, 80
        %v4261 = vpop.permute.xlu0 %4260
        %4262 = vrot.lane.b32.xlu0 %v4176, 80
        %v4263 = vpop.permute.xlu0 %4262
        %4264 = vrot.lane.b32.xlu0 %v4177, 80
        %v4265 = vpop.permute.xlu0 %4264
        %4266 = vrot.lane.b32.xlu0 %v4178, 80
        %v4267 = vpop.permute.xlu0 %4266
        %4268 = vrot.lane.b32.xlu0 %v4179, 80
        %v4269 = vpop.permute.xlu0 %4268
        %4270 = vrot.lane.b32.xlu0 %v4180, 80
        %v4271 = vpop.permute.xlu0 %4270
        %4272 = vrot.lane.b32.xlu0 %v4181, 80
        %v4273 = vpop.permute.xlu0 %4272
        %4274 = vrot.lane.b32.xlu0 %v4182, 80
        %v4275 = vpop.permute.xlu0 %4274
        %4276 = vrot.lane.b32.xlu0 %v4183, 80
        %v4277 = vpop.permute.xlu0 %4276
        %4278 = vrot.lane.b32.xlu0 %v4184, 80
        %v4279 = vpop.permute.xlu0 %4278
        %4280 = vrot.lane.b32.xlu0 %v4185, 80
        %v4281 = vpop.permute.xlu0 %4280
        %4314 = vst.msk [vmem:[#allocation3] sm:$0xff] %vm2173, %v4219
        %4315 = vst.msk [vmem:[#allocation3 + $0x10] sm:$0xff] %vm2173, %v4221
        %4316 = vst.msk [vmem:[#allocation3 + $0x20] sm:$0xff] %vm2173, %v4223
        %4317 = vst.msk [vmem:[#allocation3 + $0x30] sm:$0xff] %vm2173, %v4225
        %4318 = vst.msk [vmem:[#allocation3 + $0x40] sm:$0xff] %vm2173, %v4227
        %4319 = vst.msk [vmem:[#allocation3 + $0x50] sm:$0xff] %vm2173, %v4229
        %4320 = vst.msk [vmem:[#allocation3 + $0x60] sm:$0xff] %vm2173, %v4231
        %4321 = vst.msk [vmem:[#allocation3 + $0x70] sm:$0xff] %vm2173, %v4233
        %4322 = vst.msk [vmem:[#allocation3 + $0x80] sm:$0xff] %vm2173, %v4235
        %4323 = vst.msk [vmem:[#allocation3 + $0x90] sm:$0xff] %vm2173, %v4237
        %4324 = vst.msk [vmem:[#allocation3 + $0xa0] sm:$0xff] %vm2173, %v4239
        %4325 = vst.msk [vmem:[#allocation3 + $0xb0] sm:$0xff] %vm2173, %v4241
        %4326 = vst.msk [vmem:[#allocation3 + $0xc0] sm:$0xff] %vm2173, %v4243
        %4327 = vst.msk [vmem:[#allocation3 + $0xd0] sm:$0xff] %vm2173, %v4245
        %4328 = vst.msk [vmem:[#allocation3 + $0xe0] sm:$0xff] %vm2173, %v4247
        %4329 = vst.msk [vmem:[#allocation3 + $0xf0] sm:$0xff] %vm2173, %v4249
        %4330 = vst.msk [vmem:[#allocation3 + $0x100] sm:$0xff] %vm2173, %v4251
        %4331 = vst.msk [vmem:[#allocation3 + $0x110] sm:$0xff] %vm2173, %v4253
        %4332 = vst.msk [vmem:[#allocation3 + $0x120] sm:$0xff] %vm2173, %v4255
        %4333 = vst.msk [vmem:[#allocation3 + $0x130] sm:$0xff] %vm2173, %v4257
        %4334 = vst.msk [vmem:[#allocation3 + $0x140] sm:$0xff] %vm2173, %v4259
        %4335 = vst.msk [vmem:[#allocation3 + $0x150] sm:$0xff] %vm2173, %v4261
        %4336 = vst.msk [vmem:[#allocation3 + $0x160] sm:$0xff] %vm2173, %v4263
        %4337 = vst.msk [vmem:[#allocation3 + $0x170] sm:$0xff] %vm2173, %v4265
        %4338 = vst.msk [vmem:[#allocation3 + $0x180] sm:$0xff] %vm2173, %v4267
        %4339 = vst.msk [vmem:[#allocation3 + $0x190] sm:$0xff] %vm2173, %v4269
        %4340 = vst.msk [vmem:[#allocation3 + $0x1a0] sm:$0xff] %vm2173, %v4271
        %4341 = vst.msk [vmem:[#allocation3 + $0x1b0] sm:$0xff] %vm2173, %v4273
        %4342 = vst.msk [vmem:[#allocation3 + $0x1c0] sm:$0xff] %vm2173, %v4275
        %4343 = vst.msk [vmem:[#allocation3 + $0x1d0] sm:$0xff] %vm2173, %v4277
        %4344 = vst.msk [vmem:[#allocation3 + $0x1e0] sm:$0xff] %vm2173, %v4279
        %4345 = vst.msk [vmem:[#allocation3 + $0x1f0] sm:$0xff] %vm2173, %v4281
        %v4346 = vld [vmem:[#allocation2 + $0x20] sm:$0xff]
        %v4347 = vld [vmem:[#allocation2 + $0x28] sm:$0xff]
        %v4348 = vld [vmem:[#allocation2 + $0x30] sm:$0xff]
        %v4349 = vld [vmem:[#allocation2 + $0x38] sm:$0xff]
        %v4350 = vld [vmem:[#allocation2 + $0x40] sm:$0xff]
        %v4351 = vld [vmem:[#allocation2 + $0x48] sm:$0xff]
        %v4352 = vld [vmem:[#allocation2 + $0x50] sm:$0xff]
        %v4353 = vld [vmem:[#allocation2 + $0x58] sm:$0xff]
        %v4354 = vld [vmem:[#allocation2 + $0x60] sm:$0xff]
        %v4355 = vld [vmem:[#allocation2 + $0x68] sm:$0xff]
        %v4356 = vld [vmem:[#allocation2 + $0x70] sm:$0xff]
        %v4357 = vld [vmem:[#allocation2 + $0x78] sm:$0xff]
        %v4358 = vld [vmem:[#allocation2 + $0x80] sm:$0xff]
        %v4359 = vld [vmem:[#allocation2 + $0x88] sm:$0xff]
        %v4360 = vld [vmem:[#allocation2 + $0x90] sm:$0xff]
        %v4361 = vld [vmem:[#allocation2 + $0x98] sm:$0xff]
        %v4362 = vld [vmem:[#allocation2 + $0xa0] sm:$0xff]
        %v4363 = vld [vmem:[#allocation2 + $0xa8] sm:$0xff]
        %v4364 = vld [vmem:[#allocation2 + $0xb0] sm:$0xff]
        %v4365 = vld [vmem:[#allocation2 + $0xb8] sm:$0xff]
        %v4366 = vld [vmem:[#allocation2 + $0xc0] sm:$0xff]
        %v4367 = vld [vmem:[#allocation2 + $0xc8] sm:$0xff]
        %v4368 = vld [vmem:[#allocation2 + $0xd0] sm:$0xff]
        %v4369 = vld [vmem:[#allocation2 + $0xd8] sm:$0xff]
        %v4370 = vld [vmem:[#allocation2 + $0xe0] sm:$0xff]
        %v4371 = vld [vmem:[#allocation2 + $0xe8] sm:$0xff]
        %v4372 = vld [vmem:[#allocation2 + $0xf0] sm:$0xff]
        %v4373 = vld [vmem:[#allocation2 + $0xf8] sm:$0xff]
        %v4374 = vld [vmem:[#allocation2 + $0x100] sm:$0xff]
        %v4375 = vld [vmem:[#allocation2 + $0x108] sm:$0xff]
        %v4376 = vld [vmem:[#allocation2 + $0x110] sm:$0xff]
        %v4377 = vld [vmem:[#allocation2 + $0x118] sm:$0xff]
        %v4378 = vsel %vm801, %v4346, 0.0
        %v4379 = vsel %vm802, %v4347, 0.0
        %v4380 = vsel %vm803, %v4348, 0.0
        %v4381 = vsel %vm804, %v4349, 0.0
        %v4382 = vsel %vm805, %v4350, 0.0
        %v4383 = vsel %vm806, %v4351, 0.0
        %v4384 = vsel %vm807, %v4352, 0.0
        %v4385 = vsel %vm808, %v4353, 0.0
        %v4386 = vsel %vm809, %v4354, 0.0
        %v4387 = vsel %vm810, %v4355, 0.0
        %v4388 = vsel %vm811, %v4356, 0.0
        %v4389 = vsel %vm812, %v4357, 0.0
        %v4390 = vsel %vm813, %v4358, 0.0
        %v4391 = vsel %vm814, %v4359, 0.0
        %v4392 = vsel %vm815, %v4360, 0.0
        %v4393 = vsel %vm816, %v4361, 0.0
        %v4394 = vsel %vm817, %v4362, 0.0
        %v4395 = vsel %vm818, %v4363, 0.0
        %v4396 = vsel %vm819, %v4364, 0.0
        %v4397 = vsel %vm820, %v4365, 0.0
        %v4398 = vsel %vm821, %v4366, 0.0
        %v4399 = vsel %vm822, %v4367, 0.0
        %v4400 = vsel %vm823, %v4368, 0.0
        %v4401 = vsel %vm824, %v4369, 0.0
        %v4402 = vsel %vm825, %v4370, 0.0
        %v4403 = vsel %vm826, %v4371, 0.0
        %v4404 = vsel %vm827, %v4372, 0.0
        %v4405 = vsel %vm828, %v4373, 0.0
        %v4406 = vsel %vm829, %v4374, 0.0
        %v4407 = vsel %vm830, %v4375, 0.0
        %v4408 = vsel %vm831, %v4376, 0.0
        %v4409 = vsel %vm832, %v4377, 0.0
        %4442 = vrot.lane.b32.xlu0 %v4378, 96
        %v4443 = vpop.permute.xlu0 %4442
        %4444 = vrot.lane.b32.xlu0 %v4379, 96
        %v4445 = vpop.permute.xlu0 %4444
        %4446 = vrot.lane.b32.xlu0 %v4380, 96
        %v4447 = vpop.permute.xlu0 %4446
        %4448 = vrot.lane.b32.xlu0 %v4381, 96
        %v4449 = vpop.permute.xlu0 %4448
        %4450 = vrot.lane.b32.xlu0 %v4382, 96
        %v4451 = vpop.permute.xlu0 %4450
        %4452 = vrot.lane.b32.xlu0 %v4383, 96
        %v4453 = vpop.permute.xlu0 %4452
        %4454 = vrot.lane.b32.xlu0 %v4384, 96
        %v4455 = vpop.permute.xlu0 %4454
        %4456 = vrot.lane.b32.xlu0 %v4385, 96
        %v4457 = vpop.permute.xlu0 %4456
        %4458 = vrot.lane.b32.xlu0 %v4386, 96
        %v4459 = vpop.permute.xlu0 %4458
        %4460 = vrot.lane.b32.xlu0 %v4387, 96
        %v4461 = vpop.permute.xlu0 %4460
        %4462 = vrot.lane.b32.xlu0 %v4388, 96
        %v4463 = vpop.permute.xlu0 %4462
        %4464 = vrot.lane.b32.xlu0 %v4389, 96
        %v4465 = vpop.permute.xlu0 %4464
        %4466 = vrot.lane.b32.xlu0 %v4390, 96
        %v4467 = vpop.permute.xlu0 %4466
        %4468 = vrot.lane.b32.xlu0 %v4391, 96
        %v4469 = vpop.permute.xlu0 %4468
        %4470 = vrot.lane.b32.xlu0 %v4392, 96
        %v4471 = vpop.permute.xlu0 %4470
        %4472 = vrot.lane.b32.xlu0 %v4393, 96
        %v4473 = vpop.permute.xlu0 %4472
        %4474 = vrot.lane.b32.xlu0 %v4394, 96
        %v4475 = vpop.permute.xlu0 %4474
        %4476 = vrot.lane.b32.xlu0 %v4395, 96
        %v4477 = vpop.permute.xlu0 %4476
        %4478 = vrot.lane.b32.xlu0 %v4396, 96
        %v4479 = vpop.permute.xlu0 %4478
        %4480 = vrot.lane.b32.xlu0 %v4397, 96
        %v4481 = vpop.permute.xlu0 %4480
        %4482 = vrot.lane.b32.xlu0 %v4398, 96
        %v4483 = vpop.permute.xlu0 %4482
        %4484 = vrot.lane.b32.xlu0 %v4399, 96
        %v4485 = vpop.permute.xlu0 %4484
        %4486 = vrot.lane.b32.xlu0 %v4400, 96
        %v4487 = vpop.permute.xlu0 %4486
        %4488 = vrot.lane.b32.xlu0 %v4401, 96
        %v4489 = vpop.permute.xlu0 %4488
        %4490 = vrot.lane.b32.xlu0 %v4402, 96
        %v4491 = vpop.permute.xlu0 %4490
        %4492 = vrot.lane.b32.xlu0 %v4403, 96
        %v4493 = vpop.permute.xlu0 %4492
        %4494 = vrot.lane.b32.xlu0 %v4404, 96
        %v4495 = vpop.permute.xlu0 %4494
        %4496 = vrot.lane.b32.xlu0 %v4405, 96
        %v4497 = vpop.permute.xlu0 %4496
        %4498 = vrot.lane.b32.xlu0 %v4406, 96
        %v4499 = vpop.permute.xlu0 %4498
        %4500 = vrot.lane.b32.xlu0 %v4407, 96
        %v4501 = vpop.permute.xlu0 %4500
        %4502 = vrot.lane.b32.xlu0 %v4408, 96
        %v4503 = vpop.permute.xlu0 %4502
        %4504 = vrot.lane.b32.xlu0 %v4409, 96
        %v4505 = vpop.permute.xlu0 %4504
        %4538 = vst.msk [vmem:[#allocation3] sm:$0xff] %vm2398, %v4443
        %4539 = vst.msk [vmem:[#allocation3 + $0x10] sm:$0xff] %vm2398, %v4445
        %4540 = vst.msk [vmem:[#allocation3 + $0x20] sm:$0xff] %vm2398, %v4447
        %4541 = vst.msk [vmem:[#allocation3 + $0x30] sm:$0xff] %vm2398, %v4449
        %4542 = vst.msk [vmem:[#allocation3 + $0x40] sm:$0xff] %vm2398, %v4451
        %4543 = vst.msk [vmem:[#allocation3 + $0x50] sm:$0xff] %vm2398, %v4453
        %4544 = vst.msk [vmem:[#allocation3 + $0x60] sm:$0xff] %vm2398, %v4455
        %4545 = vst.msk [vmem:[#allocation3 + $0x70] sm:$0xff] %vm2398, %v4457
        %4546 = vst.msk [vmem:[#allocation3 + $0x80] sm:$0xff] %vm2398, %v4459
        %4547 = vst.msk [vmem:[#allocation3 + $0x90] sm:$0xff] %vm2398, %v4461
        %4548 = vst.msk [vmem:[#allocation3 + $0xa0] sm:$0xff] %vm2398, %v4463
        %4549 = vst.msk [vmem:[#allocation3 + $0xb0] sm:$0xff] %vm2398, %v4465
        %4550 = vst.msk [vmem:[#allocation3 + $0xc0] sm:$0xff] %vm2398, %v4467
        %4551 = vst.msk [vmem:[#allocation3 + $0xd0] sm:$0xff] %vm2398, %v4469
        %4552 = vst.msk [vmem:[#allocation3 + $0xe0] sm:$0xff] %vm2398, %v4471
        %4553 = vst.msk [vmem:[#allocation3 + $0xf0] sm:$0xff] %vm2398, %v4473
        %4554 = vst.msk [vmem:[#allocation3 + $0x100] sm:$0xff] %vm2398, %v4475
        %4555 = vst.msk [vmem:[#allocation3 + $0x110] sm:$0xff] %vm2398, %v4477
        %4556 = vst.msk [vmem:[#allocation3 + $0x120] sm:$0xff] %vm2398, %v4479
        %4557 = vst.msk [vmem:[#allocation3 + $0x130] sm:$0xff] %vm2398, %v4481
        %4558 = vst.msk [vmem:[#allocation3 + $0x140] sm:$0xff] %vm2398, %v4483
        %4559 = vst.msk [vmem:[#allocation3 + $0x150] sm:$0xff] %vm2398, %v4485
        %4560 = vst.msk [vmem:[#allocation3 + $0x160] sm:$0xff] %vm2398, %v4487
        %4561 = vst.msk [vmem:[#allocation3 + $0x170] sm:$0xff] %vm2398, %v4489
        %4562 = vst.msk [vmem:[#allocation3 + $0x180] sm:$0xff] %vm2398, %v4491
        %4563 = vst.msk [vmem:[#allocation3 + $0x190] sm:$0xff] %vm2398, %v4493
        %4564 = vst.msk [vmem:[#allocation3 + $0x1a0] sm:$0xff] %vm2398, %v4495
        %4565 = vst.msk [vmem:[#allocation3 + $0x1b0] sm:$0xff] %vm2398, %v4497
        %4566 = vst.msk [vmem:[#allocation3 + $0x1c0] sm:$0xff] %vm2398, %v4499
        %4567 = vst.msk [vmem:[#allocation3 + $0x1d0] sm:$0xff] %vm2398, %v4501
        %4568 = vst.msk [vmem:[#allocation3 + $0x1e0] sm:$0xff] %vm2398, %v4503
        %4569 = vst.msk [vmem:[#allocation3 + $0x1f0] sm:$0xff] %vm2398, %v4505
        %v4570 = vld [vmem:[#allocation2 + $0x21] sm:$0xff]
        %v4571 = vld [vmem:[#allocation2 + $0x29] sm:$0xff]
        %v4572 = vld [vmem:[#allocation2 + $0x31] sm:$0xff]
        %v4573 = vld [vmem:[#allocation2 + $0x39] sm:$0xff]
        %v4574 = vld [vmem:[#allocation2 + $0x41] sm:$0xff]
        %v4575 = vld [vmem:[#allocation2 + $0x49] sm:$0xff]
        %v4576 = vld [vmem:[#allocation2 + $0x51] sm:$0xff]
        %v4577 = vld [vmem:[#allocation2 + $0x59] sm:$0xff]
        %v4578 = vld [vmem:[#allocation2 + $0x61] sm:$0xff]
        %v4579 = vld [vmem:[#allocation2 + $0x69] sm:$0xff]
        %v4580 = vld [vmem:[#allocation2 + $0x71] sm:$0xff]
        %v4581 = vld [vmem:[#allocation2 + $0x79] sm:$0xff]
        %v4582 = vld [vmem:[#allocation2 + $0x81] sm:$0xff]
        %v4583 = vld [vmem:[#allocation2 + $0x89] sm:$0xff]
        %v4584 = vld [vmem:[#allocation2 + $0x91] sm:$0xff]
        %v4585 = vld [vmem:[#allocation2 + $0x99] sm:$0xff]
        %v4586 = vld [vmem:[#allocation2 + $0xa1] sm:$0xff]
        %v4587 = vld [vmem:[#allocation2 + $0xa9] sm:$0xff]
        %v4588 = vld [vmem:[#allocation2 + $0xb1] sm:$0xff]
        %v4589 = vld [vmem:[#allocation2 + $0xb9] sm:$0xff]
        %v4590 = vld [vmem:[#allocation2 + $0xc1] sm:$0xff]
        %v4591 = vld [vmem:[#allocation2 + $0xc9] sm:$0xff]
        %v4592 = vld [vmem:[#allocation2 + $0xd1] sm:$0xff]
        %v4593 = vld [vmem:[#allocation2 + $0xd9] sm:$0xff]
        %v4594 = vld [vmem:[#allocation2 + $0xe1] sm:$0xff]
        %v4595 = vld [vmem:[#allocation2 + $0xe9] sm:$0xff]
        %v4596 = vld [vmem:[#allocation2 + $0xf1] sm:$0xff]
        %v4597 = vld [vmem:[#allocation2 + $0xf9] sm:$0xff]
        %v4598 = vld [vmem:[#allocation2 + $0x101] sm:$0xff]
        %v4599 = vld [vmem:[#allocation2 + $0x109] sm:$0xff]
        %v4600 = vld [vmem:[#allocation2 + $0x111] sm:$0xff]
        %v4601 = vld [vmem:[#allocation2 + $0x119] sm:$0xff]
        %4634 = vrot.lane.b32.xlu0 %v4570, 112
        %v4635 = vpop.permute.xlu0 %4634
        %4636 = vrot.lane.b32.xlu0 %v4571, 112
        %v4637 = vpop.permute.xlu0 %4636
        %4638 = vrot.lane.b32.xlu0 %v4572, 112
        %v4639 = vpop.permute.xlu0 %4638
        %4640 = vrot.lane.b32.xlu0 %v4573, 112
        %v4641 = vpop.permute.xlu0 %4640
        %4642 = vrot.lane.b32.xlu0 %v4574, 112
        %v4643 = vpop.permute.xlu0 %4642
        %4644 = vrot.lane.b32.xlu0 %v4575, 112
        %v4645 = vpop.permute.xlu0 %4644
        %4646 = vrot.lane.b32.xlu0 %v4576, 112
        %v4647 = vpop.permute.xlu0 %4646
        %4648 = vrot.lane.b32.xlu0 %v4577, 112
        %v4649 = vpop.permute.xlu0 %4648
        %4650 = vrot.lane.b32.xlu0 %v4578, 112
        %v4651 = vpop.permute.xlu0 %4650
        %4652 = vrot.lane.b32.xlu0 %v4579, 112
        %v4653 = vpop.permute.xlu0 %4652
        %4654 = vrot.lane.b32.xlu0 %v4580, 112
        %v4655 = vpop.permute.xlu0 %4654
        %4656 = vrot.lane.b32.xlu0 %v4581, 112
        %v4657 = vpop.permute.xlu0 %4656
        %4658 = vrot.lane.b32.xlu0 %v4582, 112
        %v4659 = vpop.permute.xlu0 %4658
        %4660 = vrot.lane.b32.xlu0 %v4583, 112
        %v4661 = vpop.permute.xlu0 %4660
        %4662 = vrot.lane.b32.xlu0 %v4584, 112
        %v4663 = vpop.permute.xlu0 %4662
        %4664 = vrot.lane.b32.xlu0 %v4585, 112
        %v4665 = vpop.permute.xlu0 %4664
        %4666 = vrot.lane.b32.xlu0 %v4586, 112
        %v4667 = vpop.permute.xlu0 %4666
        %4668 = vrot.lane.b32.xlu0 %v4587, 112
        %v4669 = vpop.permute.xlu0 %4668
        %4670 = vrot.lane.b32.xlu0 %v4588, 112
        %v4671 = vpop.permute.xlu0 %4670
        %4672 = vrot.lane.b32.xlu0 %v4589, 112
        %v4673 = vpop.permute.xlu0 %4672
        %4674 = vrot.lane.b32.xlu0 %v4590, 112
        %v4675 = vpop.permute.xlu0 %4674
        %4676 = vrot.lane.b32.xlu0 %v4591, 112
        %v4677 = vpop.permute.xlu0 %4676
        %4678 = vrot.lane.b32.xlu0 %v4592, 112
        %v4679 = vpop.permute.xlu0 %4678
        %4680 = vrot.lane.b32.xlu0 %v4593, 112
        %v4681 = vpop.permute.xlu0 %4680
        %4682 = vrot.lane.b32.xlu0 %v4594, 112
        %v4683 = vpop.permute.xlu0 %4682
        %4684 = vrot.lane.b32.xlu0 %v4595, 112
        %v4685 = vpop.permute.xlu0 %4684
        %4686 = vrot.lane.b32.xlu0 %v4596, 112
        %v4687 = vpop.permute.xlu0 %4686
        %4688 = vrot.lane.b32.xlu0 %v4597, 112
        %v4689 = vpop.permute.xlu0 %4688
        %4690 = vrot.lane.b32.xlu0 %v4598, 112
        %v4691 = vpop.permute.xlu0 %4690
        %4692 = vrot.lane.b32.xlu0 %v4599, 112
        %v4693 = vpop.permute.xlu0 %4692
        %4694 = vrot.lane.b32.xlu0 %v4600, 112
        %v4695 = vpop.permute.xlu0 %4694
        %4696 = vrot.lane.b32.xlu0 %v4601, 112
        %v4697 = vpop.permute.xlu0 %4696
        %4730 = vst.msk [vmem:[#allocation3] sm:$0xff] %vm2591, %v4635
        %4731 = vst.msk [vmem:[#allocation3 + $0x10] sm:$0xff] %vm2591, %v4637
        %4732 = vst.msk [vmem:[#allocation3 + $0x20] sm:$0xff] %vm2591, %v4639
        %4733 = vst.msk [vmem:[#allocation3 + $0x30] sm:$0xff] %vm2591, %v4641
        %4734 = vst.msk [vmem:[#allocation3 + $0x40] sm:$0xff] %vm2591, %v4643
        %4735 = vst.msk [vmem:[#allocation3 + $0x50] sm:$0xff] %vm2591, %v4645
        %4736 = vst.msk [vmem:[#allocation3 + $0x60] sm:$0xff] %vm2591, %v4647
        %4737 = vst.msk [vmem:[#allocation3 + $0x70] sm:$0xff] %vm2591, %v4649
        %4738 = vst.msk [vmem:[#allocation3 + $0x80] sm:$0xff] %vm2591, %v4651
        %4739 = vst.msk [vmem:[#allocation3 + $0x90] sm:$0xff] %vm2591, %v4653
        %4740 = vst.msk [vmem:[#allocation3 + $0xa0] sm:$0xff] %vm2591, %v4655
        %4741 = vst.msk [vmem:[#allocation3 + $0xb0] sm:$0xff] %vm2591, %v4657
        %4742 = vst.msk [vmem:[#allocation3 + $0xc0] sm:$0xff] %vm2591, %v4659
        %4743 = vst.msk [vmem:[#allocation3 + $0xd0] sm:$0xff] %vm2591, %v4661
        %4744 = vst.msk [vmem:[#allocation3 + $0xe0] sm:$0xff] %vm2591, %v4663
        %4745 = vst.msk [vmem:[#allocation3 + $0xf0] sm:$0xff] %vm2591, %v4665
        %4746 = vst.msk [vmem:[#allocation3 + $0x100] sm:$0xff] %vm2591, %v4667
        %4747 = vst.msk [vmem:[#allocation3 + $0x110] sm:$0xff] %vm2591, %v4669
        %4748 = vst.msk [vmem:[#allocation3 + $0x120] sm:$0xff] %vm2591, %v4671
        %4749 = vst.msk [vmem:[#allocation3 + $0x130] sm:$0xff] %vm2591, %v4673
        %4750 = vst.msk [vmem:[#allocation3 + $0x140] sm:$0xff] %vm2591, %v4675
        %4751 = vst.msk [vmem:[#allocation3 + $0x150] sm:$0xff] %vm2591, %v4677
        %4752 = vst.msk [vmem:[#allocation3 + $0x160] sm:$0xff] %vm2591, %v4679
        %4753 = vst.msk [vmem:[#allocation3 + $0x170] sm:$0xff] %vm2591, %v4681
        %4754 = vst.msk [vmem:[#allocation3 + $0x180] sm:$0xff] %vm2591, %v4683
        %4755 = vst.msk [vmem:[#allocation3 + $0x190] sm:$0xff] %vm2591, %v4685
        %4756 = vst.msk [vmem:[#allocation3 + $0x1a0] sm:$0xff] %vm2591, %v4687
        %4757 = vst.msk [vmem:[#allocation3 + $0x1b0] sm:$0xff] %vm2591, %v4689
        %4758 = vst.msk [vmem:[#allocation3 + $0x1c0] sm:$0xff] %vm2591, %v4691
        %4759 = vst.msk [vmem:[#allocation3 + $0x1d0] sm:$0xff] %vm2591, %v4693
        %4760 = vst.msk [vmem:[#allocation3 + $0x1e0] sm:$0xff] %vm2591, %v4695
        %4761 = vst.msk [vmem:[#allocation3 + $0x1f0] sm:$0xff] %vm2591, %v4697
        %v4762 = vld [vmem:[#allocation2 + $0x22] sm:$0xff]
        %v4763 = vld [vmem:[#allocation2 + $0x2a] sm:$0xff]
        %v4764 = vld [vmem:[#allocation2 + $0x32] sm:$0xff]
        %v4765 = vld [vmem:[#allocation2 + $0x3a] sm:$0xff]
        %v4766 = vld [vmem:[#allocation2 + $0x42] sm:$0xff]
        %v4767 = vld [vmem:[#allocation2 + $0x4a] sm:$0xff]
        %v4768 = vld [vmem:[#allocation2 + $0x52] sm:$0xff]
        %v4769 = vld [vmem:[#allocation2 + $0x5a] sm:$0xff]
        %v4770 = vld [vmem:[#allocation2 + $0x62] sm:$0xff]
        %v4771 = vld [vmem:[#allocation2 + $0x6a] sm:$0xff]
        %v4772 = vld [vmem:[#allocation2 + $0x72] sm:$0xff]
        %v4773 = vld [vmem:[#allocation2 + $0x7a] sm:$0xff]
        %v4774 = vld [vmem:[#allocation2 + $0x82] sm:$0xff]
        %v4775 = vld [vmem:[#allocation2 + $0x8a] sm:$0xff]
        %v4776 = vld [vmem:[#allocation2 + $0x92] sm:$0xff]
        %v4777 = vld [vmem:[#allocation2 + $0x9a] sm:$0xff]
        %v4778 = vld [vmem:[#allocation2 + $0xa2] sm:$0xff]
        %v4779 = vld [vmem:[#allocation2 + $0xaa] sm:$0xff]
        %v4780 = vld [vmem:[#allocation2 + $0xb2] sm:$0xff]
        %v4781 = vld [vmem:[#allocation2 + $0xba] sm:$0xff]
        %v4782 = vld [vmem:[#allocation2 + $0xc2] sm:$0xff]
        %v4783 = vld [vmem:[#allocation2 + $0xca] sm:$0xff]
        %v4784 = vld [vmem:[#allocation2 + $0xd2] sm:$0xff]
        %v4785 = vld [vmem:[#allocation2 + $0xda] sm:$0xff]
        %v4786 = vld [vmem:[#allocation2 + $0xe2] sm:$0xff]
        %v4787 = vld [vmem:[#allocation2 + $0xea] sm:$0xff]
        %v4788 = vld [vmem:[#allocation2 + $0xf2] sm:$0xff]
        %v4789 = vld [vmem:[#allocation2 + $0xfa] sm:$0xff]
        %v4790 = vld [vmem:[#allocation2 + $0x102] sm:$0xff]
        %v4791 = vld [vmem:[#allocation2 + $0x10a] sm:$0xff]
        %v4792 = vld [vmem:[#allocation2 + $0x112] sm:$0xff]
        %v4793 = vld [vmem:[#allocation2 + $0x11a] sm:$0xff]
        %v4794 = vsel %vm833, %v4762, 0.0
        %v4795 = vsel %vm834, %v4763, 0.0
        %v4796 = vsel %vm835, %v4764, 0.0
        %v4797 = vsel %vm836, %v4765, 0.0
        %v4798 = vsel %vm837, %v4766, 0.0
        %v4799 = vsel %vm838, %v4767, 0.0
        %v4800 = vsel %vm839, %v4768, 0.0
        %v4801 = vsel %vm840, %v4769, 0.0
        %v4802 = vsel %vm841, %v4770, 0.0
        %v4803 = vsel %vm842, %v4771, 0.0
        %v4804 = vsel %vm843, %v4772, 0.0
        %v4805 = vsel %vm844, %v4773, 0.0
        %v4806 = vsel %vm845, %v4774, 0.0
        %v4807 = vsel %vm846, %v4775, 0.0
        %v4808 = vsel %vm847, %v4776, 0.0
        %v4809 = vsel %vm848, %v4777, 0.0
        %v4810 = vsel %vm849, %v4778, 0.0
        %v4811 = vsel %vm850, %v4779, 0.0
        %v4812 = vsel %vm851, %v4780, 0.0
        %v4813 = vsel %vm852, %v4781, 0.0
        %v4814 = vsel %vm853, %v4782, 0.0
        %v4815 = vsel %vm854, %v4783, 0.0
        %v4816 = vsel %vm855, %v4784, 0.0
        %v4817 = vsel %vm856, %v4785, 0.0
        %v4818 = vsel %vm857, %v4786, 0.0
        %v4819 = vsel %vm858, %v4787, 0.0
        %v4820 = vsel %vm859, %v4788, 0.0
        %v4821 = vsel %vm860, %v4789, 0.0
        %v4822 = vsel %vm861, %v4790, 0.0
        %v4823 = vsel %vm862, %v4791, 0.0
        %v4824 = vsel %vm863, %v4792, 0.0
        %v4825 = vsel %vm864, %v4793, 0.0
        %4826 = vst.msk [vmem:[#allocation3 + $0x8] sm:$0xff] %vm1009, %v4794
        %4827 = vst.msk [vmem:[#allocation3 + $0x18] sm:$0xff] %vm1009, %v4795
        %4828 = vst.msk [vmem:[#allocation3 + $0x28] sm:$0xff] %vm1009, %v4796
        %4829 = vst.msk [vmem:[#allocation3 + $0x38] sm:$0xff] %vm1009, %v4797
        %4830 = vst.msk [vmem:[#allocation3 + $0x48] sm:$0xff] %vm1009, %v4798
        %4831 = vst.msk [vmem:[#allocation3 + $0x58] sm:$0xff] %vm1009, %v4799
        %4832 = vst.msk [vmem:[#allocation3 + $0x68] sm:$0xff] %vm1009, %v4800
        %4833 = vst.msk [vmem:[#allocation3 + $0x78] sm:$0xff] %vm1009, %v4801
        %4834 = vst.msk [vmem:[#allocation3 + $0x88] sm:$0xff] %vm1009, %v4802
        %4835 = vst.msk [vmem:[#allocation3 + $0x98] sm:$0xff] %vm1009, %v4803
        %4836 = vst.msk [vmem:[#allocation3 + $0xa8] sm:$0xff] %vm1009, %v4804
        %4837 = vst.msk [vmem:[#allocation3 + $0xb8] sm:$0xff] %vm1009, %v4805
        %4838 = vst.msk [vmem:[#allocation3 + $0xc8] sm:$0xff] %vm1009, %v4806
        %4839 = vst.msk [vmem:[#allocation3 + $0xd8] sm:$0xff] %vm1009, %v4807
        %4840 = vst.msk [vmem:[#allocation3 + $0xe8] sm:$0xff] %vm1009, %v4808
        %4841 = vst.msk [vmem:[#allocation3 + $0xf8] sm:$0xff] %vm1009, %v4809
        %4842 = vst.msk [vmem:[#allocation3 + $0x108] sm:$0xff] %vm1009, %v4810
        %4843 = vst.msk [vmem:[#allocation3 + $0x118] sm:$0xff] %vm1009, %v4811
        %4844 = vst.msk [vmem:[#allocation3 + $0x128] sm:$0xff] %vm1009, %v4812
        %4845 = vst.msk [vmem:[#allocation3 + $0x138] sm:$0xff] %vm1009, %v4813
        %4846 = vst.msk [vmem:[#allocation3 + $0x148] sm:$0xff] %vm1009, %v4814
        %4847 = vst.msk [vmem:[#allocation3 + $0x158] sm:$0xff] %vm1009, %v4815
        %4848 = vst.msk [vmem:[#allocation3 + $0x168] sm:$0xff] %vm1009, %v4816
        %4849 = vst.msk [vmem:[#allocation3 + $0x178] sm:$0xff] %vm1009, %v4817
        %4850 = vst.msk [vmem:[#allocation3 + $0x188] sm:$0xff] %vm1009, %v4818
        %4851 = vst.msk [vmem:[#allocation3 + $0x198] sm:$0xff] %vm1009, %v4819
        %4852 = vst.msk [vmem:[#allocation3 + $0x1a8] sm:$0xff] %vm1009, %v4820
        %4853 = vst.msk [vmem:[#allocation3 + $0x1b8] sm:$0xff] %vm1009, %v4821
        %4854 = vst.msk [vmem:[#allocation3 + $0x1c8] sm:$0xff] %vm1009, %v4822
        %4855 = vst.msk [vmem:[#allocation3 + $0x1d8] sm:$0xff] %vm1009, %v4823
        %4856 = vst.msk [vmem:[#allocation3 + $0x1e8] sm:$0xff] %vm1009, %v4824
        %4857 = vst.msk [vmem:[#allocation3 + $0x1f8] sm:$0xff] %vm1009, %v4825
        %v4858 = vld [vmem:[#allocation3] sm:$0xff]
        %v4859 = vld [vmem:[#allocation3 + $0x8] sm:$0xff]
        %v4860 = vld [vmem:[#allocation3 + $0x10] sm:$0xff]
        %v4861 = vld [vmem:[#allocation3 + $0x18] sm:$0xff]
        %v4862 = vld [vmem:[#allocation3 + $0x20] sm:$0xff]
        %v4863 = vld [vmem:[#allocation3 + $0x28] sm:$0xff]
        %v4864 = vld [vmem:[#allocation3 + $0x30] sm:$0xff]
        %v4865 = vld [vmem:[#allocation3 + $0x38] sm:$0xff]
        %v4866 = vld [vmem:[#allocation3 + $0x40] sm:$0xff]
        %v4867 = vld [vmem:[#allocation3 + $0x48] sm:$0xff]
        %v4868 = vld [vmem:[#allocation3 + $0x50] sm:$0xff]
        %v4869 = vld [vmem:[#allocation3 + $0x58] sm:$0xff]
        %v4870 = vld [vmem:[#allocation3 + $0x60] sm:$0xff]
        %v4871 = vld [vmem:[#allocation3 + $0x68] sm:$0xff]
        %v4872 = vld [vmem:[#allocation3 + $0x70] sm:$0xff]
        %v4873 = vld [vmem:[#allocation3 + $0x78] sm:$0xff]
        %v4874 = vld [vmem:[#allocation3 + $0x80] sm:$0xff]
        %v4875 = vld [vmem:[#allocation3 + $0x88] sm:$0xff]
        %v4876 = vld [vmem:[#allocation3 + $0x90] sm:$0xff]
        %v4877 = vld [vmem:[#allocation3 + $0x98] sm:$0xff]
        %v4878 = vld [vmem:[#allocation3 + $0xa0] sm:$0xff]
        %v4879 = vld [vmem:[#allocation3 + $0xa8] sm:$0xff]
        %v4880 = vld [vmem:[#allocation3 + $0xb0] sm:$0xff]
        %v4881 = vld [vmem:[#allocation3 + $0xb8] sm:$0xff]
        %v4882 = vld [vmem:[#allocation3 + $0xc0] sm:$0xff]
        %v4883 = vld [vmem:[#allocation3 + $0xc8] sm:$0xff]
        %v4884 = vld [vmem:[#allocation3 + $0xd0] sm:$0xff]
        %v4885 = vld [vmem:[#allocation3 + $0xd8] sm:$0xff]
        %v4886 = vld [vmem:[#allocation3 + $0xe0] sm:$0xff]
        %v4887 = vld [vmem:[#allocation3 + $0xe8] sm:$0xff]
        %v4888 = vld [vmem:[#allocation3 + $0xf0] sm:$0xff]
        %v4889 = vld [vmem:[#allocation3 + $0xf8] sm:$0xff]
        %v4890 = vld [vmem:[#allocation3 + $0x100] sm:$0xff]
        %v4891 = vld [vmem:[#allocation3 + $0x108] sm:$0xff]
        %v4892 = vld [vmem:[#allocation3 + $0x110] sm:$0xff]
        %v4893 = vld [vmem:[#allocation3 + $0x118] sm:$0xff]
        %v4894 = vld [vmem:[#allocation3 + $0x120] sm:$0xff]
        %v4895 = vld [vmem:[#allocation3 + $0x128] sm:$0xff]
        %v4896 = vld [vmem:[#allocation3 + $0x130] sm:$0xff]
        %v4897 = vld [vmem:[#allocation3 + $0x138] sm:$0xff]
        %v4898 = vld [vmem:[#allocation3 + $0x140] sm:$0xff]
        %v4899 = vld [vmem:[#allocation3 + $0x148] sm:$0xff]
        %v4900 = vld [vmem:[#allocation3 + $0x150] sm:$0xff]
        %v4901 = vld [vmem:[#allocation3 + $0x158] sm:$0xff]
        %v4902 = vld [vmem:[#allocation3 + $0x160] sm:$0xff]
        %v4903 = vld [vmem:[#allocation3 + $0x168] sm:$0xff]
        %v4904 = vld [vmem:[#allocation3 + $0x170] sm:$0xff]
        %v4905 = vld [vmem:[#allocation3 + $0x178] sm:$0xff]
        %v4906 = vld [vmem:[#allocation3 + $0x180] sm:$0xff]
        %v4907 = vld [vmem:[#allocation3 + $0x188] sm:$0xff]
        %v4908 = vld [vmem:[#allocation3 + $0x190] sm:$0xff]
        %v4909 = vld [vmem:[#allocation3 + $0x198] sm:$0xff]
        %v4910 = vld [vmem:[#allocation3 + $0x1a0] sm:$0xff]
        %v4911 = vld [vmem:[#allocation3 + $0x1a8] sm:$0xff]
        %v4912 = vld [vmem:[#allocation3 + $0x1b0] sm:$0xff]
        %v4913 = vld [vmem:[#allocation3 + $0x1b8] sm:$0xff]
        %v4914 = vld [vmem:[#allocation3 + $0x1c0] sm:$0xff]
        %v4915 = vld [vmem:[#allocation3 + $0x1c8] sm:$0xff]
        %v4916 = vld [vmem:[#allocation3 + $0x1d0] sm:$0xff]
        %v4917 = vld [vmem:[#allocation3 + $0x1d8] sm:$0xff]
        %v4918 = vld [vmem:[#allocation3 + $0x1e0] sm:$0xff]
        %v4919 = vld [vmem:[#allocation3 + $0x1e8] sm:$0xff]
        %v4920 = vld [vmem:[#allocation3 + $0x1f0] sm:$0xff]
        %v4921 = vld [vmem:[#allocation3 + $0x1f8] sm:$0xff]
        %v4922 = vld [vmem:[%s3] sm:$0xff]
        %v4923 = vld [vmem:[%s3 + $0x8] sm:$0xff]
        %v4924 = vld [vmem:[%s3 + $0x10] sm:$0xff]
        %v4925 = vld [vmem:[%s3 + $0x18] sm:$0xff]
        %v4926 = vld [vmem:[%s3 + $0x20] sm:$0xff]
        %v4927 = vld [vmem:[%s3 + $0x28] sm:$0xff]
        %v4928 = vld [vmem:[%s3 + $0x30] sm:$0xff]
        %v4929 = vld [vmem:[%s3 + $0x38] sm:$0xff]
        %v4930 = vld [vmem:[%s3 + $0x40] sm:$0xff]
        %v4931 = vld [vmem:[%s3 + $0x48] sm:$0xff]
        %v4932 = vld [vmem:[%s3 + $0x50] sm:$0xff]
        %v4933 = vld [vmem:[%s3 + $0x58] sm:$0xff]
        %v4934 = vld [vmem:[%s3 + $0x60] sm:$0xff]
        %v4935 = vld [vmem:[%s3 + $0x68] sm:$0xff]
        %v4936 = vld [vmem:[%s3 + $0x70] sm:$0xff]
        %v4937 = vld [vmem:[%s3 + $0x78] sm:$0xff]
        %v4938 = vld [vmem:[%s3 + $0x80] sm:$0xff]
        %v4939 = vld [vmem:[%s3 + $0x88] sm:$0xff]
        %v4940 = vld [vmem:[%s4] sm:$0x1]
        %v4942 = vlaneseq
        %v4943 = vshrl.u32 %v4942, 7
        %v4944 = vsub.s32 0, %v4943
        %v4945 = vrot.slane %v4940, %v4944
        %v4948 = vsel %vm1009, %v4859, 0
        %v4951 = vsel %vm1009, %v4861, 0
        %v4954 = vsel %vm1009, %v4863, 0
        %v4957 = vsel %vm1009, %v4865, 0
        %v4960 = vsel %vm1009, %v4867, 0
        %v4963 = vsel %vm1009, %v4869, 0
        %v4966 = vsel %vm1009, %v4871, 0
        %v4969 = vsel %vm1009, %v4873, 0
        %v4972 = vsel %vm1009, %v4875, 0
        %v4975 = vsel %vm1009, %v4877, 0
        %v4978 = vsel %vm1009, %v4879, 0
        %v4981 = vsel %vm1009, %v4881, 0
        %v4984 = vsel %vm1009, %v4883, 0
        %v4987 = vsel %vm1009, %v4885, 0
        %v4990 = vsel %vm1009, %v4887, 0
        %v4993 = vsel %vm1009, %v4889, 0
        %v4996 = vsel %vm1009, %v4891, 0
        %v4999 = vsel %vm1009, %v4893, 0
        %v5002 = vsel %vm1009, %v4895, 0
        %v5005 = vsel %vm1009, %v4897, 0
        %v5008 = vsel %vm1009, %v4899, 0
        %v5011 = vsel %vm1009, %v4901, 0
        %v5014 = vsel %vm1009, %v4903, 0
        %v5017 = vsel %vm1009, %v4905, 0
        %v5020 = vsel %vm1009, %v4907, 0
        %v5023 = vsel %vm1009, %v4909, 0
        %v5026 = vsel %vm1009, %v4911, 0
        %v5029 = vsel %vm1009, %v4913, 0
        %v5032 = vsel %vm1009, %v4915, 0
        %v5035 = vsel %vm1009, %v4917, 0
        %v5038 = vsel %vm1009, %v4919, 0
        %v5041 = vsel %vm1009, %v4921, 0
        %5043 = vmatprep.subr.mxu0 0.0
        %5044 = vmatpush1.msra.mxu0 %v4922
        %5045 = vmatprep.subr.mxu0 0.0
        %5046 = vmatpush1.msra.mxu0 %v4923
        %5047 = vmatprep.subr.mxu0 0.0
        %5048 = vmatpush1.msra.mxu0 %v4924
        %5049 = vmatprep.subr.mxu0 0.0
        %5050 = vmatpush1.msra.mxu0 %v4925
        %5051 = vmatprep.subr.mxu0 0.0
        %5052 = vmatpush1.msra.mxu0 %v4926
        %5053 = vmatprep.subr.mxu0 0.0
        %5054 = vmatpush1.msra.mxu0 %v4927
        %5055 = vmatprep.subr.mxu0 0.0
        %5056 = vmatpush1.msra.mxu0 %v4928
        %5057 = vmatprep.subr.mxu0 0.0
        %5058 = vmatpush1.msra.mxu0 %v4929
        %5059 = vmatprep.subr.mxu0 0.0
        %5060 = vmatpush1.msra.mxu0 %v4930
        %5061 = vmatprep.subr.mxu0 0.0
        %5062 = vmatpush1.msra.mxu0 %v4931
        %5063 = vmatprep.subr.mxu0 0.0
        %5064 = vmatpush1.msra.mxu0 %v4932
        %5065 = vmatprep.subr.mxu0 0.0
        %5066 = vmatpush1.msra.mxu0 %v4933
        %5067 = vmatprep.subr.mxu0 0.0
        %5068 = vmatpush1.msra.mxu0 %v4934
        %5069 = vmatprep.subr.mxu0 0.0
        %5070 = vmatpush1.msra.mxu0 %v4935
        %5071 = vmatprep.subr.mxu0 0.0
        %5072 = vmatpush1.msra.mxu0 %v4936
        %5073 = vmatprep.subr.mxu0 0.0
        %5074 = vmatpush1.msra.mxu0 %v4937
        %5075 = vmatprep.subr.mxu0 0.0
        %5076 = vmatpush1.msra.mxu0 %v4938
        %5077 = vmatprep.subr.mxu0 0.0
        %5078 = vmatpush1.msra.mxu0 %v4939
        %5079 = vmatprep.subr.mxu0 0.0
        %5080 = vmatpush1.msra.mxu0 0.0
        %5081 = vmatprep.subr.mxu0 0.0
        %5082 = vmatpush1.msra.mxu0 0.0
        %5083 = vmatprep.subr.mxu0 0.0
        %5084 = vmatpush1.msra.mxu0 0.0
        %5085 = vmatprep.subr.mxu0 0.0
        %5086 = vmatpush1.msra.mxu0 0.0
        %5087 = vmatprep.subr.mxu0 0.0
        %5088 = vmatpush1.msra.mxu0 0.0
        %5089 = vmatprep.subr.mxu0 0.0
        %5090 = vmatpush1.msra.mxu0 0.0
        %5091 = vmatprep.subr.mxu0 0.0
        %5092 = vmatpush1.msra.mxu0 0.0
        %5093 = vmatprep.subr.mxu0 0.0
        %5094 = vmatpush1.msra.mxu0 0.0
        %5095 = vmatprep.subr.mxu0 0.0
        %5096 = vmatpush1.msra.mxu0 0.0
        %5097 = vmatprep.subr.mxu0 0.0
        %5098 = vmatpush1.msra.mxu0 0.0
        %5099 = vmatprep.subr.mxu0 0.0
        %5100 = vmatpush1.msra.mxu0 0.0
        %5101 = vmatprep.subr.mxu0 0.0
        %5102 = vmatpush1.msra.mxu0 0.0
        %5103 = vmatprep.subr.mxu0 0.0
        %5104 = vmatpush1.msra.mxu0 0.0
        %5105 = vmatprep.subr.mxu0 0.0
        %5106 = vmatpush1.msra.mxu0 0.0
        %5107 = vmatprep.mubr.f32.mxu0 %v4948
        %5108 = vmatmul.mubr.f32.gmra.mrb[0].mxu0 %v4858
        %v5109 = vpop.f32.mrb[0].mxu0
        %v5110 = vadd.f32 %v4945, %v5109
        %v5111 = vpop.f32.mrb[0].mxu0
        %5112 = vmatprep.mubr.f32.mxu0 %v4951
        %5113 = vmatmul.mubr.f32.gmra.mrb[0].mxu0 %v4860
        %v5114 = vpop.f32.mrb[0].mxu0
        %v5115 = vadd.f32 %v4945, %v5114
        %v5116 = vpop.f32.mrb[0].mxu0
        %5117 = vmatprep.mubr.f32.mxu0 %v4954
        %5118 = vmatmul.mubr.f32.gmra.mrb[0].mxu0 %v4862
        %v5119 = vpop.f32.mrb[0].mxu0
        %v5120 = vadd.f32 %v4945, %v5119
        %v5121 = vpop.f32.mrb[0].mxu0
        %5122 = vmatprep.mubr.f32.mxu0 %v4957
        %5123 = vmatmul.mubr.f32.gmra.mrb[0].mxu0 %v4864
        %v5124 = vpop.f32.mrb[0].mxu0
        %v5125 = vadd.f32 %v4945, %v5124
        %v5126 = vpop.f32.mrb[0].mxu0
        %5127 = vmatprep.mubr.f32.mxu0 %v4960
        %5128 = vmatmul.mubr.f32.gmra.mrb[0].mxu0 %v4866
        %v5129 = vpop.f32.mrb[0].mxu0
        %v5130 = vadd.f32 %v4945, %v5129
        %v5131 = vpop.f32.mrb[0].mxu0
        %5132 = vmatprep.mubr.f32.mxu0 %v4963
        %5133 = vmatmul.mubr.f32.gmra.mrb[0].mxu0 %v4868
        %v5134 = vpop.f32.mrb[0].mxu0
        %v5135 = vadd.f32 %v4945, %v5134
        %v5136 = vpop.f32.mrb[0].mxu0
        %5137 = vmatprep.mubr.f32.mxu0 %v4966
        %5138 = vmatmul.mubr.f32.gmra.mrb[0].mxu0 %v4870
        %v5139 = vpop.f32.mrb[0].mxu0
        %v5140 = vadd.f32 %v4945, %v5139
        %v5141 = vpop.f32.mrb[0].mxu0
        %5142 = vmatprep.mubr.f32.mxu0 %v4969
        %5143 = vmatmul.mubr.f32.gmra.mrb[0].mxu0 %v4872
        %v5144 = vpop.f32.mrb[0].mxu0
        %v5145 = vadd.f32 %v4945, %v5144
        %v5146 = vpop.f32.mrb[0].mxu0
        %5147 = vmatprep.mubr.f32.mxu0 %v4972
        %5148 = vmatmul.mubr.f32.gmra.mrb[0].mxu0 %v4874
        %v5149 = vpop.f32.mrb[0].mxu0
        %v5150 = vadd.f32 %v4945, %v5149
        %v5151 = vpop.f32.mrb[0].mxu0
        %5152 = vmatprep.mubr.f32.mxu0 %v4975
        %5153 = vmatmul.mubr.f32.gmra.mrb[0].mxu0 %v4876
        %v5154 = vpop.f32.mrb[0].mxu0
        %v5155 = vadd.f32 %v4945, %v5154
        %v5156 = vpop.f32.mrb[0].mxu0
        %5157 = vmatprep.mubr.f32.mxu0 %v4978
        %5158 = vmatmul.mubr.f32.gmra.mrb[0].mxu0 %v4878
        %v5159 = vpop.f32.mrb[0].mxu0
        %v5160 = vadd.f32 %v4945, %v5159
        %v5161 = vpop.f32.mrb[0].mxu0
        %5162 = vmatprep.mubr.f32.mxu0 %v4981
        %5163 = vmatmul.mubr.f32.gmra.mrb[0].mxu0 %v4880
        %v5164 = vpop.f32.mrb[0].mxu0
        %v5165 = vadd.f32 %v4945, %v5164
        %v5166 = vpop.f32.mrb[0].mxu0
        %5167 = vmatprep.mubr.f32.mxu0 %v4984
        %5168 = vmatmul.mubr.f32.gmra.mrb[0].mxu0 %v4882
        %v5169 = vpop.f32.mrb[0].mxu0
        %v5170 = vadd.f32 %v4945, %v5169
        %v5171 = vpop.f32.mrb[0].mxu0
        %5172 = vmatprep.mubr.f32.mxu0 %v4987
        %5173 = vmatmul.mubr.f32.gmra.mrb[0].mxu0 %v4884
        %v5174 = vpop.f32.mrb[0].mxu0
        %v5175 = vadd.f32 %v4945, %v5174
        %v5176 = vpop.f32.mrb[0].mxu0
        %5177 = vmatprep.mubr.f32.mxu0 %v4990
        %5178 = vmatmul.mubr.f32.gmra.mrb[0].mxu0 %v4886
        %v5179 = vpop.f32.mrb[0].mxu0
        %v5180 = vadd.f32 %v4945, %v5179
        %v5181 = vpop.f32.mrb[0].mxu0
        %5182 = vmatprep.mubr.f32.mxu0 %v4993
        %5183 = vmatmul.mubr.f32.gmra.mrb[0].mxu0 %v4888
        %v5184 = vpop.f32.mrb[0].mxu0
        %v5185 = vadd.f32 %v4945, %v5184
        %v5186 = vpop.f32.mrb[0].mxu0
        %5187 = vmatprep.mubr.f32.mxu0 %v4996
        %5188 = vmatmul.mubr.f32.gmra.mrb[0].mxu0 %v4890
        %v5189 = vpop.f32.mrb[0].mxu0
        %v5190 = vadd.f32 %v4945, %v5189
        %v5191 = vpop.f32.mrb[0].mxu0
        %5192 = vmatprep.mubr.f32.mxu0 %v4999
        %5193 = vmatmul.mubr.f32.gmra.mrb[0].mxu0 %v4892
        %v5194 = vpop.f32.mrb[0].mxu0
        %v5195 = vadd.f32 %v4945, %v5194
        %v5196 = vpop.f32.mrb[0].mxu0
        %5197 = vmatprep.mubr.f32.mxu0 %v5002
        %5198 = vmatmul.mubr.f32.gmra.mrb[0].mxu0 %v4894
        %v5199 = vpop.f32.mrb[0].mxu0
        %v5200 = vadd.f32 %v4945, %v5199
        %v5201 = vpop.f32.mrb[0].mxu0
        %5202 = vmatprep.mubr.f32.mxu0 %v5005
        %5203 = vmatmul.mubr.f32.gmra.mrb[0].mxu0 %v4896
        %v5204 = vpop.f32.mrb[0].mxu0
        %v5205 = vadd.f32 %v4945, %v5204
        %v5206 = vpop.f32.mrb[0].mxu0
        %5207 = vmatprep.mubr.f32.mxu0 %v5008
        %5208 = vmatmul.mubr.f32.gmra.mrb[0].mxu0 %v4898
        %v5209 = vpop.f32.mrb[0].mxu0
        %v5210 = vadd.f32 %v4945, %v5209
        %v5211 = vpop.f32.mrb[0].mxu0
        %5212 = vmatprep.mubr.f32.mxu0 %v5011
        %5213 = vmatmul.mubr.f32.gmra.mrb[0].mxu0 %v4900
        %v5214 = vpop.f32.mrb[0].mxu0
        %v5215 = vadd.f32 %v4945, %v5214
        %v5216 = vpop.f32.mrb[0].mxu0
        %5217 = vmatprep.mubr.f32.mxu0 %v5014
        %5218 = vmatmul.mubr.f32.gmra.mrb[0].mxu0 %v4902
        %v5219 = vpop.f32.mrb[0].mxu0
        %v5220 = vadd.f32 %v4945, %v5219
        %v5221 = vpop.f32.mrb[0].mxu0
        %5222 = vmatprep.mubr.f32.mxu0 %v5017
        %5223 = vmatmul.mubr.f32.gmra.mrb[0].mxu0 %v4904
        %v5224 = vpop.f32.mrb[0].mxu0
        %v5225 = vadd.f32 %v4945, %v5224
        %v5226 = vpop.f32.mrb[0].mxu0
        %5227 = vmatprep.mubr.f32.mxu0 %v5020
        %5228 = vmatmul.mubr.f32.gmra.mrb[0].mxu0 %v4906
        %v5229 = vpop.f32.mrb[0].mxu0
        %v5230 = vadd.f32 %v4945, %v5229
        %v5231 = vpop.f32.mrb[0].mxu0
        %5232 = vmatprep.mubr.f32.mxu0 %v5023
        %5233 = vmatmul.mubr.f32.gmra.mrb[0].mxu0 %v4908
        %v5234 = vpop.f32.mrb[0].mxu0
        %v5235 = vadd.f32 %v4945, %v5234
        %v5236 = vpop.f32.mrb[0].mxu0
        %5237 = vmatprep.mubr.f32.mxu0 %v5026
        %5238 = vmatmul.mubr.f32.gmra.mrb[0].mxu0 %v4910
        %v5239 = vpop.f32.mrb[0].mxu0
        %v5240 = vadd.f32 %v4945, %v5239
        %v5241 = vpop.f32.mrb[0].mxu0
        %5242 = vmatprep.mubr.f32.mxu0 %v5029
        %5243 = vmatmul.mubr.f32.gmra.mrb[0].mxu0 %v4912
        %v5244 = vpop.f32.mrb[0].mxu0
        %v5245 = vadd.f32 %v4945, %v5244
        %v5246 = vpop.f32.mrb[0].mxu0
        %5247 = vmatprep.mubr.f32.mxu0 %v5032
        %5248 = vmatmul.mubr.f32.gmra.mrb[0].mxu0 %v4914
        %v5249 = vpop.f32.mrb[0].mxu0
        %v5250 = vadd.f32 %v4945, %v5249
        %v5251 = vpop.f32.mrb[0].mxu0
        %5252 = vmatprep.mubr.f32.mxu0 %v5035
        %5253 = vmatmul.mubr.f32.gmra.mrb[0].mxu0 %v4916
        %v5254 = vpop.f32.mrb[0].mxu0
        %v5255 = vadd.f32 %v4945, %v5254
        %v5256 = vpop.f32.mrb[0].mxu0
        %5257 = vmatprep.mubr.f32.mxu0 %v5038
        %5258 = vmatmul.mubr.f32.gmra.mrb[0].mxu0 %v4918
        %v5259 = vpop.f32.mrb[0].mxu0
        %v5260 = vadd.f32 %v4945, %v5259
        %v5261 = vpop.f32.mrb[0].mxu0
        %5262 = vmatprep.mubr.f32.mxu0 %v5041
        %5263 = vmatmul.mubr.f32.gmra.mrb[0].mxu0 %v4920
        %v5264 = vpop.f32.mrb[0].mxu0
        %v5265 = vadd.f32 %v4945, %v5264
        %v5266 = vpop.f32.mrb[0].mxu0
        %5267 = vdwg.mxu0
        %v5268 = vmax.f32 %v5110, %v5120
        %v5269 = vmax.f32 %v5115, %v5125
        %v5270 = vmax.f32 %v5130, %v5140
        %v5271 = vmax.f32 %v5135, %v5145
        %v5272 = vmax.f32 %v5150, %v5160
        %v5273 = vmax.f32 %v5155, %v5165
        %v5274 = vmax.f32 %v5170, %v5180
        %v5275 = vmax.f32 %v5175, %v5185
        %v5276 = vmax.f32 %v5190, %v5200
        %v5277 = vmax.f32 %v5195, %v5205
        %v5278 = vmax.f32 %v5210, %v5220
        %v5279 = vmax.f32 %v5215, %v5225
        %v5280 = vmax.f32 %v5230, %v5240
        %v5281 = vmax.f32 %v5235, %v5245
        %v5282 = vmax.f32 %v5250, %v5260
        %v5283 = vmax.f32 %v5255, %v5265
        %5284 = vst.msk [vmem:[#allocation4] sm:$0xff] %vm1009, %v5268
        %5285 = vst.msk [vmem:[#allocation4 + $0x8] sm:$0xff] %vm1009, %v5269
        %5286 = vst.msk [vmem:[#allocation4 + $0x10] sm:$0xff] %vm1009, %v5270
        %5287 = vst.msk [vmem:[#allocation4 + $0x18] sm:$0xff] %vm1009, %v5271
        %5288 = vst.msk [vmem:[#allocation4 + $0x20] sm:$0xff] %vm1009, %v5272
        %5289 = vst.msk [vmem:[#allocation4 + $0x28] sm:$0xff] %vm1009, %v5273
        %5290 = vst.msk [vmem:[#allocation4 + $0x30] sm:$0xff] %vm1009, %v5274
        %5291 = vst.msk [vmem:[#allocation4 + $0x38] sm:$0xff] %vm1009, %v5275
        %5292 = vst.msk [vmem:[#allocation4 + $0x40] sm:$0xff] %vm1009, %v5276
        %5293 = vst.msk [vmem:[#allocation4 + $0x48] sm:$0xff] %vm1009, %v5277
        %5294 = vst.msk [vmem:[#allocation4 + $0x50] sm:$0xff] %vm1009, %v5278
        %5295 = vst.msk [vmem:[#allocation4 + $0x58] sm:$0xff] %vm1009, %v5279
        %5296 = vst.msk [vmem:[#allocation4 + $0x60] sm:$0xff] %vm1009, %v5280
        %5297 = vst.msk [vmem:[#allocation4 + $0x68] sm:$0xff] %vm1009, %v5281
        %5298 = vst.msk [vmem:[#allocation4 + $0x70] sm:$0xff] %vm1009, %v5282
        %5299 = vst.msk [vmem:[#allocation4 + $0x78] sm:$0xff] %vm1009, %v5283
        %v5300 = vld [vmem:[#allocation4] ss:$2 sm:$0xff]
        %s5301 = scalar_lea.vmem [#allocation4], 16
        %v5302 = vld [vmem:[%s5301] ss:$2 sm:$0xff]
        %s5303 = scalar_lea.vmem [#allocation4], 32
        %v5304 = vld [vmem:[%s5303] ss:$2 sm:$0xff]
        %s5305 = scalar_lea.vmem [#allocation4], 48
        %v5306 = vld [vmem:[%s5305] ss:$2 sm:$0xff]
        %s5307 = scalar_lea.vmem [#allocation4], 64
        %v5308 = vld [vmem:[%s5307] ss:$2 sm:$0xff]
        %s5309 = scalar_lea.vmem [#allocation4], 80
        %v5310 = vld [vmem:[%s5309] ss:$2 sm:$0xff]
        %s5311 = scalar_lea.vmem [#allocation4], 96
        %v5312 = vld [vmem:[%s5311] ss:$2 sm:$0xff]
        %s5313 = scalar_lea.vmem [#allocation4], 112
        %v5314 = vld [vmem:[%s5313] ss:$2 sm:$0xff]
        %s5315 = scalar_lea.vmem [#allocation4], 1
        %v5316 = vld [vmem:[%s5315] ss:$2 sm:$0xff]
        %s5317 = scalar_lea.vmem [#allocation4], 17
        %v5318 = vld [vmem:[%s5317] ss:$2 sm:$0xff]
        %s5319 = scalar_lea.vmem [#allocation4], 33
        %v5320 = vld [vmem:[%s5319] ss:$2 sm:$0xff]
        %s5321 = scalar_lea.vmem [#allocation4], 49
        %v5322 = vld [vmem:[%s5321] ss:$2 sm:$0xff]
        %s5323 = scalar_lea.vmem [#allocation4], 65
        %v5324 = vld [vmem:[%s5323] ss:$2 sm:$0xff]
        %s5325 = scalar_lea.vmem [#allocation4], 81
        %v5326 = vld [vmem:[%s5325] ss:$2 sm:$0xff]
        %s5327 = scalar_lea.vmem [#allocation4], 97
        %v5328 = vld [vmem:[%s5327] ss:$2 sm:$0xff]
        %s5329 = scalar_lea.vmem [#allocation4], 113
        %v5330 = vld [vmem:[%s5329] ss:$2 sm:$0xff]
        %v5331 = vmax.f32 %v5300, %v5316
        %v5332 = vmax.f32 %v5302, %v5318
        %v5333 = vmax.f32 %v5304, %v5320
        %v5334 = vmax.f32 %v5306, %v5322
        %v5335 = vmax.f32 %v5308, %v5324
        %v5336 = vmax.f32 %v5310, %v5326
        %v5337 = vmax.f32 %v5312, %v5328
        %v5338 = vmax.f32 %v5314, %v5330
        %5339 = vst.msk [vmem:[#allocation2] sm:$0xff] %vm1009, 0.0
        %5340 = vst.msk [vmem:[#allocation2 + $0x8] sm:$0x1] %vm1012, 0.0
        %5341 = vst.msk [vmem:[#allocation2 + $0x49] sm:$0xff] %vm1009, 0.0
        %5342 = vst.msk [vmem:[#allocation2 + $0x51] sm:$0x1] %vm1012, 0.0
        %5343 = vst.msk [vmem:[#allocation2 + $0x9] sm:$0xff] %vm1009, %v5331
        %5344 = vst.msk [vmem:[#allocation2 + $0x11] sm:$0xff] %vm1009, %v5332
        %5345 = vst.msk [vmem:[#allocation2 + $0x19] sm:$0xff] %vm1009, %v5333
        %5346 = vst.msk [vmem:[#allocation2 + $0x21] sm:$0xff] %vm1009, %v5334
        %5347 = vst.msk [vmem:[#allocation2 + $0x29] sm:$0xff] %vm1009, %v5335
        %5348 = vst.msk [vmem:[#allocation2 + $0x31] sm:$0xff] %vm1009, %v5336
        %5349 = vst.msk [vmem:[#allocation2 + $0x39] sm:$0xff] %vm1009, %v5337
        %5350 = vst.msk [vmem:[#allocation2 + $0x41] sm:$0xff] %vm1009, %v5338
        %v5351 = vld [vmem:[#allocation2] sm:$0xff]
        %v5352 = vld [vmem:[#allocation2 + $0x8] sm:$0xff]
        %v5353 = vld [vmem:[#allocation2 + $0x10] sm:$0xff]
        %v5354 = vld [vmem:[#allocation2 + $0x18] sm:$0xff]
        %v5355 = vld [vmem:[#allocation2 + $0x20] sm:$0xff]
        %v5356 = vld [vmem:[#allocation2 + $0x28] sm:$0xff]
        %v5357 = vld [vmem:[#allocation2 + $0x30] sm:$0xff]
        %v5358 = vld [vmem:[#allocation2 + $0x38] sm:$0xff]
        %v5359 = vsel %vm961, %v5351, 0.0
        %v5360 = vsel %vm962, %v5352, 0.0
        %v5361 = vsel %vm963, %v5353, 0.0
        %v5362 = vsel %vm964, %v5354, 0.0
        %v5363 = vsel %vm965, %v5355, 0.0
        %v5364 = vsel %vm966, %v5356, 0.0
        %v5365 = vsel %vm967, %v5357, 0.0
        %v5366 = vsel %vm968, %v5358, 0.0
        %5367 = vst.msk [vmem:[#allocation3] sm:$0xff] %vm1009, %v5359
        %5368 = vst.msk [vmem:[#allocation3 + $0x10] sm:$0xff] %vm1009, %v5360
        %5369 = vst.msk [vmem:[#allocation3 + $0x20] sm:$0xff] %vm1009, %v5361
        %5370 = vst.msk [vmem:[#allocation3 + $0x30] sm:$0xff] %vm1009, %v5362
        %5371 = vst.msk [vmem:[#allocation3 + $0x40] sm:$0xff] %vm1009, %v5363
        %5372 = vst.msk [vmem:[#allocation3 + $0x50] sm:$0xff] %vm1009, %v5364
        %5373 = vst.msk [vmem:[#allocation3 + $0x60] sm:$0xff] %vm1009, %v5365
        %5374 = vst.msk [vmem:[#allocation3 + $0x70] sm:$0xff] %vm1009, %v5366
        %v5375 = vld [vmem:[#allocation2 + $0x1] sm:$0xff]
        %v5376 = vld [vmem:[#allocation2 + $0x9] sm:$0xff]
        %v5377 = vld [vmem:[#allocation2 + $0x11] sm:$0xff]
        %v5378 = vld [vmem:[#allocation2 + $0x19] sm:$0xff]
        %v5379 = vld [vmem:[#allocation2 + $0x21] sm:$0xff]
        %v5380 = vld [vmem:[#allocation2 + $0x29] sm:$0xff]
        %v5381 = vld [vmem:[#allocation2 + $0x31] sm:$0xff]
        %v5382 = vld [vmem:[#allocation2 + $0x39] sm:$0xff]
        %5391 = vrot.lane.b32.xlu0 %v5375, 16
        %v5392 = vpop.permute.xlu0 %5391
        %5393 = vrot.lane.b32.xlu0 %v5376, 16
        %v5394 = vpop.permute.xlu0 %5393
        %5395 = vrot.lane.b32.xlu0 %v5377, 16
        %v5396 = vpop.permute.xlu0 %5395
        %5397 = vrot.lane.b32.xlu0 %v5378, 16
        %v5398 = vpop.permute.xlu0 %5397
        %5399 = vrot.lane.b32.xlu0 %v5379, 16
        %v5400 = vpop.permute.xlu0 %5399
        %5401 = vrot.lane.b32.xlu0 %v5380, 16
        %v5402 = vpop.permute.xlu0 %5401
        %5403 = vrot.lane.b32.xlu0 %v5381, 16
        %v5404 = vpop.permute.xlu0 %5403
        %5405 = vrot.lane.b32.xlu0 %v5382, 16
        %v5406 = vpop.permute.xlu0 %5405
        %5415 = vst.msk [vmem:[#allocation3] sm:$0xff] %vm1305, %v5392
        %5416 = vst.msk [vmem:[#allocation3 + $0x10] sm:$0xff] %vm1305, %v5394
        %5417 = vst.msk [vmem:[#allocation3 + $0x20] sm:$0xff] %vm1305, %v5396
        %5418 = vst.msk [vmem:[#allocation3 + $0x30] sm:$0xff] %vm1305, %v5398
        %5419 = vst.msk [vmem:[#allocation3 + $0x40] sm:$0xff] %vm1305, %v5400
        %5420 = vst.msk [vmem:[#allocation3 + $0x50] sm:$0xff] %vm1305, %v5402
        %5421 = vst.msk [vmem:[#allocation3 + $0x60] sm:$0xff] %vm1305, %v5404
        %5422 = vst.msk [vmem:[#allocation3 + $0x70] sm:$0xff] %vm1305, %v5406
        %v5423 = vld [vmem:[#allocation2 + $0x2] sm:$0xff]
        %v5424 = vld [vmem:[#allocation2 + $0xa] sm:$0xff]
        %v5425 = vld [vmem:[#allocation2 + $0x12] sm:$0xff]
        %v5426 = vld [vmem:[#allocation2 + $0x1a] sm:$0xff]
        %v5427 = vld [vmem:[#allocation2 + $0x22] sm:$0xff]
        %v5428 = vld [vmem:[#allocation2 + $0x2a] sm:$0xff]
        %v5429 = vld [vmem:[#allocation2 + $0x32] sm:$0xff]
        %v5430 = vld [vmem:[#allocation2 + $0x3a] sm:$0xff]
        %v5431 = vsel %vm969, %v5423, 0.0
        %v5432 = vsel %vm970, %v5424, 0.0
        %v5433 = vsel %vm971, %v5425, 0.0
        %v5434 = vsel %vm972, %v5426, 0.0
        %v5435 = vsel %vm973, %v5427, 0.0
        %v5436 = vsel %vm974, %v5428, 0.0
        %v5437 = vsel %vm975, %v5429, 0.0
        %v5438 = vsel %vm976, %v5430, 0.0
        %5447 = vrot.lane.b32.xlu0 %v5431, 32
        %v5448 = vpop.permute.xlu0 %5447
        %5449 = vrot.lane.b32.xlu0 %v5432, 32
        %v5450 = vpop.permute.xlu0 %5449
        %5451 = vrot.lane.b32.xlu0 %v5433, 32
        %v5452 = vpop.permute.xlu0 %5451
        %5453 = vrot.lane.b32.xlu0 %v5434, 32
        %v5454 = vpop.permute.xlu0 %5453
        %5455 = vrot.lane.b32.xlu0 %v5435, 32
        %v5456 = vpop.permute.xlu0 %5455
        %5457 = vrot.lane.b32.xlu0 %v5436, 32
        %v5458 = vpop.permute.xlu0 %5457
        %5459 = vrot.lane.b32.xlu0 %v5437, 32
        %v5460 = vpop.permute.xlu0 %5459
        %5461 = vrot.lane.b32.xlu0 %v5438, 32
        %v5462 = vpop.permute.xlu0 %5461
        %5471 = vst.msk [vmem:[#allocation3] sm:$0xff] %vm1530, %v5448
        %5472 = vst.msk [vmem:[#allocation3 + $0x10] sm:$0xff] %vm1530, %v5450
        %5473 = vst.msk [vmem:[#allocation3 + $0x20] sm:$0xff] %vm1530, %v5452
        %5474 = vst.msk [vmem:[#allocation3 + $0x30] sm:$0xff] %vm1530, %v5454
        %5475 = vst.msk [vmem:[#allocation3 + $0x40] sm:$0xff] %vm1530, %v5456
        %5476 = vst.msk [vmem:[#allocation3 + $0x50] sm:$0xff] %vm1530, %v5458
        %5477 = vst.msk [vmem:[#allocation3 + $0x60] sm:$0xff] %vm1530, %v5460
        %5478 = vst.msk [vmem:[#allocation3 + $0x70] sm:$0xff] %vm1530, %v5462
        %v5479 = vld [vmem:[#allocation2 + $0x8] sm:$0xff]
        %v5480 = vld [vmem:[#allocation2 + $0x10] sm:$0xff]
        %v5481 = vld [vmem:[#allocation2 + $0x18] sm:$0xff]
        %v5482 = vld [vmem:[#allocation2 + $0x20] sm:$0xff]
        %v5483 = vld [vmem:[#allocation2 + $0x28] sm:$0xff]
        %v5484 = vld [vmem:[#allocation2 + $0x30] sm:$0xff]
        %v5485 = vld [vmem:[#allocation2 + $0x38] sm:$0xff]
        %v5486 = vld [vmem:[#allocation2 + $0x40] sm:$0xff]
        %v5487 = vsel %vm961, %v5479, 0.0
        %v5488 = vsel %vm962, %v5480, 0.0
        %v5489 = vsel %vm963, %v5481, 0.0
        %v5490 = vsel %vm964, %v5482, 0.0
        %v5491 = vsel %vm965, %v5483, 0.0
        %v5492 = vsel %vm966, %v5484, 0.0
        %v5493 = vsel %vm967, %v5485, 0.0
        %v5494 = vsel %vm968, %v5486, 0.0
        %5503 = vrot.lane.b32.xlu0 %v5487, 48
        %v5504 = vpop.permute.xlu0 %5503
        %5505 = vrot.lane.b32.xlu0 %v5488, 48
        %v5506 = vpop.permute.xlu0 %5505
        %5507 = vrot.lane.b32.xlu0 %v5489, 48
        %v5508 = vpop.permute.xlu0 %5507
        %5509 = vrot.lane.b32.xlu0 %v5490, 48
        %v5510 = vpop.permute.xlu0 %5509
        %5511 = vrot.lane.b32.xlu0 %v5491, 48
        %v5512 = vpop.permute.xlu0 %5511
        %5513 = vrot.lane.b32.xlu0 %v5492, 48
        %v5514 = vpop.permute.xlu0 %5513
        %5515 = vrot.lane.b32.xlu0 %v5493, 48
        %v5516 = vpop.permute.xlu0 %5515
        %5517 = vrot.lane.b32.xlu0 %v5494, 48
        %v5518 = vpop.permute.xlu0 %5517
        %5527 = vst.msk [vmem:[#allocation3] sm:$0xff] %vm1755, %v5504
        %5528 = vst.msk [vmem:[#allocation3 + $0x10] sm:$0xff] %vm1755, %v5506
        %5529 = vst.msk [vmem:[#allocation3 + $0x20] sm:$0xff] %vm1755, %v5508
        %5530 = vst.msk [vmem:[#allocation3 + $0x30] sm:$0xff] %vm1755, %v5510
        %5531 = vst.msk [vmem:[#allocation3 + $0x40] sm:$0xff] %vm1755, %v5512
        %5532 = vst.msk [vmem:[#allocation3 + $0x50] sm:$0xff] %vm1755, %v5514
        %5533 = vst.msk [vmem:[#allocation3 + $0x60] sm:$0xff] %vm1755, %v5516
        %5534 = vst.msk [vmem:[#allocation3 + $0x70] sm:$0xff] %vm1755, %v5518
        %v5535 = vld [vmem:[#allocation2 + $0x9] sm:$0xff]
        %v5536 = vld [vmem:[#allocation2 + $0x11] sm:$0xff]
        %v5537 = vld [vmem:[#allocation2 + $0x19] sm:$0xff]
        %v5538 = vld [vmem:[#allocation2 + $0x21] sm:$0xff]
        %v5539 = vld [vmem:[#allocation2 + $0x29] sm:$0xff]
        %v5540 = vld [vmem:[#allocation2 + $0x31] sm:$0xff]
        %v5541 = vld [vmem:[#allocation2 + $0x39] sm:$0xff]
        %v5542 = vld [vmem:[#allocation2 + $0x41] sm:$0xff]
        %5551 = vrot.lane.b32.xlu0 %v5535, 64
        %v5552 = vpop.permute.xlu0 %5551
        %5553 = vrot.lane.b32.xlu0 %v5536, 64
        %v5554 = vpop.permute.xlu0 %5553
        %5555 = vrot.lane.b32.xlu0 %v5537, 64
        %v5556 = vpop.permute.xlu0 %5555
        %5557 = vrot.lane.b32.xlu0 %v5538, 64
        %v5558 = vpop.permute.xlu0 %5557
        %5559 = vrot.lane.b32.xlu0 %v5539, 64
        %v5560 = vpop.permute.xlu0 %5559
        %5561 = vrot.lane.b32.xlu0 %v5540, 64
        %v5562 = vpop.permute.xlu0 %5561
        %5563 = vrot.lane.b32.xlu0 %v5541, 64
        %v5564 = vpop.permute.xlu0 %5563
        %5565 = vrot.lane.b32.xlu0 %v5542, 64
        %v5566 = vpop.permute.xlu0 %5565
        %5575 = vst.msk [vmem:[#allocation3] sm:$0xff] %vm1948, %v5552
        %5576 = vst.msk [vmem:[#allocation3 + $0x10] sm:$0xff] %vm1948, %v5554
        %5577 = vst.msk [vmem:[#allocation3 + $0x20] sm:$0xff] %vm1948, %v5556
        %5578 = vst.msk [vmem:[#allocation3 + $0x30] sm:$0xff] %vm1948, %v5558
        %5579 = vst.msk [vmem:[#allocation3 + $0x40] sm:$0xff] %vm1948, %v5560
        %5580 = vst.msk [vmem:[#allocation3 + $0x50] sm:$0xff] %vm1948, %v5562
        %5581 = vst.msk [vmem:[#allocation3 + $0x60] sm:$0xff] %vm1948, %v5564
        %5582 = vst.msk [vmem:[#allocation3 + $0x70] sm:$0xff] %vm1948, %v5566
        %v5583 = vld [vmem:[#allocation2 + $0xa] sm:$0xff]
        %v5584 = vld [vmem:[#allocation2 + $0x12] sm:$0xff]
        %v5585 = vld [vmem:[#allocation2 + $0x1a] sm:$0xff]
        %v5586 = vld [vmem:[#allocation2 + $0x22] sm:$0xff]
        %v5587 = vld [vmem:[#allocation2 + $0x2a] sm:$0xff]
        %v5588 = vld [vmem:[#allocation2 + $0x32] sm:$0xff]
        %v5589 = vld [vmem:[#allocation2 + $0x3a] sm:$0xff]
        %v5590 = vld [vmem:[#allocation2 + $0x42] sm:$0xff]
        %v5591 = vsel %vm969, %v5583, 0.0
        %v5592 = vsel %vm970, %v5584, 0.0
        %v5593 = vsel %vm971, %v5585, 0.0
        %v5594 = vsel %vm972, %v5586, 0.0
        %v5595 = vsel %vm973, %v5587, 0.0
        %v5596 = vsel %vm974, %v5588, 0.0
        %v5597 = vsel %vm975, %v5589, 0.0
        %v5598 = vsel %vm976, %v5590, 0.0
        %5607 = vrot.lane.b32.xlu0 %v5591, 80
        %v5608 = vpop.permute.xlu0 %5607
        %5609 = vrot.lane.b32.xlu0 %v5592, 80
        %v5610 = vpop.permute.xlu0 %5609
        %5611 = vrot.lane.b32.xlu0 %v5593, 80
        %v5612 = vpop.permute.xlu0 %5611
        %5613 = vrot.lane.b32.xlu0 %v5594, 80
        %v5614 = vpop.permute.xlu0 %5613
        %5615 = vrot.lane.b32.xlu0 %v5595, 80
        %v5616 = vpop.permute.xlu0 %5615
        %5617 = vrot.lane.b32.xlu0 %v5596, 80
        %v5618 = vpop.permute.xlu0 %5617
        %5619 = vrot.lane.b32.xlu0 %v5597, 80
        %v5620 = vpop.permute.xlu0 %5619
        %5621 = vrot.lane.b32.xlu0 %v5598, 80
        %v5622 = vpop.permute.xlu0 %5621
        %5631 = vst.msk [vmem:[#allocation3] sm:$0xff] %vm2173, %v5608
        %5632 = vst.msk [vmem:[#allocation3 + $0x10] sm:$0xff] %vm2173, %v5610
        %5633 = vst.msk [vmem:[#allocation3 + $0x20] sm:$0xff] %vm2173, %v5612
        %5634 = vst.msk [vmem:[#allocation3 + $0x30] sm:$0xff] %vm2173, %v5614
        %5635 = vst.msk [vmem:[#allocation3 + $0x40] sm:$0xff] %vm2173, %v5616
        %5636 = vst.msk [vmem:[#allocation3 + $0x50] sm:$0xff] %vm2173, %v5618
        %5637 = vst.msk [vmem:[#allocation3 + $0x60] sm:$0xff] %vm2173, %v5620
        %5638 = vst.msk [vmem:[#allocation3 + $0x70] sm:$0xff] %vm2173, %v5622
        %v5639 = vld [vmem:[#allocation2 + $0x10] sm:$0xff]
        %v5640 = vld [vmem:[#allocation2 + $0x18] sm:$0xff]
        %v5641 = vld [vmem:[#allocation2 + $0x20] sm:$0xff]
        %v5642 = vld [vmem:[#allocation2 + $0x28] sm:$0xff]
        %v5643 = vld [vmem:[#allocation2 + $0x30] sm:$0xff]
        %v5644 = vld [vmem:[#allocation2 + $0x38] sm:$0xff]
        %v5645 = vld [vmem:[#allocation2 + $0x40] sm:$0xff]
        %v5646 = vld [vmem:[#allocation2 + $0x48] sm:$0xff]
        %v5647 = vsel %vm961, %v5639, 0.0
        %v5648 = vsel %vm962, %v5640, 0.0
        %v5649 = vsel %vm963, %v5641, 0.0
        %v5650 = vsel %vm964, %v5642, 0.0
        %v5651 = vsel %vm965, %v5643, 0.0
        %v5652 = vsel %vm966, %v5644, 0.0
        %v5653 = vsel %vm967, %v5645, 0.0
        %v5654 = vsel %vm968, %v5646, 0.0
        %5663 = vrot.lane.b32.xlu0 %v5647, 96
        %v5664 = vpop.permute.xlu0 %5663
        %5665 = vrot.lane.b32.xlu0 %v5648, 96
        %v5666 = vpop.permute.xlu0 %5665
        %5667 = vrot.lane.b32.xlu0 %v5649, 96
        %v5668 = vpop.permute.xlu0 %5667
        %5669 = vrot.lane.b32.xlu0 %v5650, 96
        %v5670 = vpop.permute.xlu0 %5669
        %5671 = vrot.lane.b32.xlu0 %v5651, 96
        %v5672 = vpop.permute.xlu0 %5671
        %5673 = vrot.lane.b32.xlu0 %v5652, 96
        %v5674 = vpop.permute.xlu0 %5673
        %5675 = vrot.lane.b32.xlu0 %v5653, 96
        %v5676 = vpop.permute.xlu0 %5675
        %5677 = vrot.lane.b32.xlu0 %v5654, 96
        %v5678 = vpop.permute.xlu0 %5677
        %5687 = vst.msk [vmem:[#allocation3] sm:$0xff] %vm2398, %v5664
        %5688 = vst.msk [vmem:[#allocation3 + $0x10] sm:$0xff] %vm2398, %v5666
        %5689 = vst.msk [vmem:[#allocation3 + $0x20] sm:$0xff] %vm2398, %v5668
        %5690 = vst.msk [vmem:[#allocation3 + $0x30] sm:$0xff] %vm2398, %v5670
        %5691 = vst.msk [vmem:[#allocation3 + $0x40] sm:$0xff] %vm2398, %v5672
        %5692 = vst.msk [vmem:[#allocation3 + $0x50] sm:$0xff] %vm2398, %v5674
        %5693 = vst.msk [vmem:[#allocation3 + $0x60] sm:$0xff] %vm2398, %v5676
        %5694 = vst.msk [vmem:[#allocation3 + $0x70] sm:$0xff] %vm2398, %v5678
        %v5695 = vld [vmem:[#allocation2 + $0x11] sm:$0xff]
        %v5696 = vld [vmem:[#allocation2 + $0x19] sm:$0xff]
        %v5697 = vld [vmem:[#allocation2 + $0x21] sm:$0xff]
        %v5698 = vld [vmem:[#allocation2 + $0x29] sm:$0xff]
        %v5699 = vld [vmem:[#allocation2 + $0x31] sm:$0xff]
        %v5700 = vld [vmem:[#allocation2 + $0x39] sm:$0xff]
        %v5701 = vld [vmem:[#allocation2 + $0x41] sm:$0xff]
        %v5702 = vld [vmem:[#allocation2 + $0x49] sm:$0xff]
        %5711 = vrot.lane.b32.xlu0 %v5695, 112
        %v5712 = vpop.permute.xlu0 %5711
        %5713 = vrot.lane.b32.xlu0 %v5696, 112
        %v5714 = vpop.permute.xlu0 %5713
        %5715 = vrot.lane.b32.xlu0 %v5697, 112
        %v5716 = vpop.permute.xlu0 %5715
        %5717 = vrot.lane.b32.xlu0 %v5698, 112
        %v5718 = vpop.permute.xlu0 %5717
        %5719 = vrot.lane.b32.xlu0 %v5699, 112
        %v5720 = vpop.permute.xlu0 %5719
        %5721 = vrot.lane.b32.xlu0 %v5700, 112
        %v5722 = vpop.permute.xlu0 %5721
        %5723 = vrot.lane.b32.xlu0 %v5701, 112
        %v5724 = vpop.permute.xlu0 %5723
        %5725 = vrot.lane.b32.xlu0 %v5702, 112
        %v5726 = vpop.permute.xlu0 %5725
        %5735 = vst.msk [vmem:[#allocation3] sm:$0xff] %vm2591, %v5712
        %5736 = vst.msk [vmem:[#allocation3 + $0x10] sm:$0xff] %vm2591, %v5714
        %5737 = vst.msk [vmem:[#allocation3 + $0x20] sm:$0xff] %vm2591, %v5716
        %5738 = vst.msk [vmem:[#allocation3 + $0x30] sm:$0xff] %vm2591, %v5718
        %5739 = vst.msk [vmem:[#allocation3 + $0x40] sm:$0xff] %vm2591, %v5720
        %5740 = vst.msk [vmem:[#allocation3 + $0x50] sm:$0xff] %vm2591, %v5722
        %5741 = vst.msk [vmem:[#allocation3 + $0x60] sm:$0xff] %vm2591, %v5724
        %5742 = vst.msk [vmem:[#allocation3 + $0x70] sm:$0xff] %vm2591, %v5726
        %v5743 = vld [vmem:[#allocation2 + $0x12] sm:$0xff]
        %v5744 = vld [vmem:[#allocation2 + $0x1a] sm:$0xff]
        %v5745 = vld [vmem:[#allocation2 + $0x22] sm:$0xff]
        %v5746 = vld [vmem:[#allocation2 + $0x2a] sm:$0xff]
        %v5747 = vld [vmem:[#allocation2 + $0x32] sm:$0xff]
        %v5748 = vld [vmem:[#allocation2 + $0x3a] sm:$0xff]
        %v5749 = vld [vmem:[#allocation2 + $0x42] sm:$0xff]
        %v5750 = vld [vmem:[#allocation2 + $0x4a] sm:$0xff]
        %v5751 = vsel %vm969, %v5743, 0.0
        %v5752 = vsel %vm970, %v5744, 0.0
        %v5753 = vsel %vm971, %v5745, 0.0
        %v5754 = vsel %vm972, %v5746, 0.0
        %v5755 = vsel %vm973, %v5747, 0.0
        %v5756 = vsel %vm974, %v5748, 0.0
        %v5757 = vsel %vm975, %v5749, 0.0
        %v5758 = vsel %vm976, %v5750, 0.0
        %5759 = vst.msk [vmem:[#allocation3 + $0x8] sm:$0xff] %vm1009, %v5751
        %5760 = vst.msk [vmem:[#allocation3 + $0x18] sm:$0xff] %vm1009, %v5752
        %5761 = vst.msk [vmem:[#allocation3 + $0x28] sm:$0xff] %vm1009, %v5753
        %5762 = vst.msk [vmem:[#allocation3 + $0x38] sm:$0xff] %vm1009, %v5754
        %5763 = vst.msk [vmem:[#allocation3 + $0x48] sm:$0xff] %vm1009, %v5755
        %5764 = vst.msk [vmem:[#allocation3 + $0x58] sm:$0xff] %vm1009, %v5756
        %5765 = vst.msk [vmem:[#allocation3 + $0x68] sm:$0xff] %vm1009, %v5757
        %5766 = vst.msk [vmem:[#allocation3 + $0x78] sm:$0xff] %vm1009, %v5758
        %v5767 = vld [vmem:[#allocation3] sm:$0xff]
        %v5768 = vld [vmem:[#allocation3 + $0x8] sm:$0xff]
        %v5769 = vld [vmem:[#allocation3 + $0x10] sm:$0xff]
        %v5770 = vld [vmem:[#allocation3 + $0x18] sm:$0xff]
        %v5771 = vld [vmem:[#allocation3 + $0x20] sm:$0xff]
        %v5772 = vld [vmem:[#allocation3 + $0x28] sm:$0xff]
        %v5773 = vld [vmem:[#allocation3 + $0x30] sm:$0xff]
        %v5774 = vld [vmem:[#allocation3 + $0x38] sm:$0xff]
        %v5775 = vld [vmem:[#allocation3 + $0x40] sm:$0xff]
        %v5776 = vld [vmem:[#allocation3 + $0x48] sm:$0xff]
        %v5777 = vld [vmem:[#allocation3 + $0x50] sm:$0xff]
        %v5778 = vld [vmem:[#allocation3 + $0x58] sm:$0xff]
        %v5779 = vld [vmem:[#allocation3 + $0x60] sm:$0xff]
        %v5780 = vld [vmem:[#allocation3 + $0x68] sm:$0xff]
        %v5781 = vld [vmem:[#allocation3 + $0x70] sm:$0xff]
        %v5782 = vld [vmem:[#allocation3 + $0x78] sm:$0xff]
        %v5783 = vld [vmem:[%s5] sm:$0xff]
        %v5784 = vld [vmem:[%s5 + $0x8] sm:$0xff]
        %v5785 = vld [vmem:[%s5 + $0x10] sm:$0xff]
        %v5786 = vld [vmem:[%s5 + $0x18] sm:$0xff]
        %v5787 = vld [vmem:[%s5 + $0x20] sm:$0xff]
        %v5788 = vld [vmem:[%s5 + $0x28] sm:$0xff]
        %v5789 = vld [vmem:[%s5 + $0x30] sm:$0xff]
        %v5790 = vld [vmem:[%s5 + $0x38] sm:$0xff]
        %v5791 = vld [vmem:[%s5 + $0x40] sm:$0xff]
        %v5792 = vld [vmem:[%s5 + $0x48] sm:$0xff]
        %v5793 = vld [vmem:[%s5 + $0x50] sm:$0xff]
        %v5794 = vld [vmem:[%s5 + $0x58] sm:$0xff]
        %v5795 = vld [vmem:[%s5 + $0x60] sm:$0xff]
        %v5796 = vld [vmem:[%s5 + $0x68] sm:$0xff]
        %v5797 = vld [vmem:[%s5 + $0x70] sm:$0xff]
        %v5798 = vld [vmem:[%s5 + $0x78] sm:$0xff]
        %v5799 = vld [vmem:[%s5 + $0x80] sm:$0xff]
        %v5800 = vld [vmem:[%s5 + $0x88] sm:$0xff]
        %v5801 = vld [vmem:[%s6] sm:$0x1]
        %v5803 = vlaneseq
        %v5804 = vshrl.u32 %v5803, 7
        %v5805 = vsub.s32 0, %v5804
        %v5806 = vrot.slane %v5801, %v5805
        %v5809 = vsel %vm1009, %v5768, 0
        %v5812 = vsel %vm1009, %v5770, 0
        %v5815 = vsel %vm1009, %v5772, 0
        %v5818 = vsel %vm1009, %v5774, 0
        %v5821 = vsel %vm1009, %v5776, 0
        %v5824 = vsel %vm1009, %v5778, 0
        %v5827 = vsel %vm1009, %v5780, 0
        %v5830 = vsel %vm1009, %v5782, 0
        %5832 = vmatprep.subr.mxu0 0.0
        %5833 = vmatpush1.msra.mxu0 %v5783
        %5834 = vmatprep.subr.mxu0 0.0
        %5835 = vmatpush1.msra.mxu0 %v5784
        %5836 = vmatprep.subr.mxu0 0.0
        %5837 = vmatpush1.msra.mxu0 %v5785
        %5838 = vmatprep.subr.mxu0 0.0
        %5839 = vmatpush1.msra.mxu0 %v5786
        %5840 = vmatprep.subr.mxu0 0.0
        %5841 = vmatpush1.msra.mxu0 %v5787
        %5842 = vmatprep.subr.mxu0 0.0
        %5843 = vmatpush1.msra.mxu0 %v5788
        %5844 = vmatprep.subr.mxu0 0.0
        %5845 = vmatpush1.msra.mxu0 %v5789
        %5846 = vmatprep.subr.mxu0 0.0
        %5847 = vmatpush1.msra.mxu0 %v5790
        %5848 = vmatprep.subr.mxu0 0.0
        %5849 = vmatpush1.msra.mxu0 %v5791
        %5850 = vmatprep.subr.mxu0 0.0
        %5851 = vmatpush1.msra.mxu0 %v5792
        %5852 = vmatprep.subr.mxu0 0.0
        %5853 = vmatpush1.msra.mxu0 %v5793
        %5854 = vmatprep.subr.mxu0 0.0
        %5855 = vmatpush1.msra.mxu0 %v5794
        %5856 = vmatprep.subr.mxu0 0.0
        %5857 = vmatpush1.msra.mxu0 %v5795
        %5858 = vmatprep.subr.mxu0 0.0
        %5859 = vmatpush1.msra.mxu0 %v5796
        %5860 = vmatprep.subr.mxu0 0.0
        %5861 = vmatpush1.msra.mxu0 %v5797
        %5862 = vmatprep.subr.mxu0 0.0
        %5863 = vmatpush1.msra.mxu0 %v5798
        %5864 = vmatprep.subr.mxu0 0.0
        %5865 = vmatpush1.msra.mxu0 %v5799
        %5866 = vmatprep.subr.mxu0 0.0
        %5867 = vmatpush1.msra.mxu0 %v5800
        %5868 = vmatprep.subr.mxu0 0.0
        %5869 = vmatpush1.msra.mxu0 0.0
        %5870 = vmatprep.subr.mxu0 0.0
        %5871 = vmatpush1.msra.mxu0 0.0
        %5872 = vmatprep.subr.mxu0 0.0
        %5873 = vmatpush1.msra.mxu0 0.0
        %5874 = vmatprep.subr.mxu0 0.0
        %5875 = vmatpush1.msra.mxu0 0.0
        %5876 = vmatprep.subr.mxu0 0.0
        %5877 = vmatpush1.msra.mxu0 0.0
        %5878 = vmatprep.subr.mxu0 0.0
        %5879 = vmatpush1.msra.mxu0 0.0
        %5880 = vmatprep.subr.mxu0 0.0
        %5881 = vmatpush1.msra.mxu0 0.0
        %5882 = vmatprep.subr.mxu0 0.0
        %5883 = vmatpush1.msra.mxu0 0.0
        %5884 = vmatprep.subr.mxu0 0.0
        %5885 = vmatpush1.msra.mxu0 0.0
        %5886 = vmatprep.subr.mxu0 0.0
        %5887 = vmatpush1.msra.mxu0 0.0
        %5888 = vmatprep.subr.mxu0 0.0
        %5889 = vmatpush1.msra.mxu0 0.0
        %5890 = vmatprep.subr.mxu0 0.0
        %5891 = vmatpush1.msra.mxu0 0.0
        %5892 = vmatprep.subr.mxu0 0.0
        %5893 = vmatpush1.msra.mxu0 0.0
        %5894 = vmatprep.subr.mxu0 0.0
        %5895 = vmatpush1.msra.mxu0 0.0
        %5896 = vmatprep.mubr.f32.mxu0 %v5809
        %5897 = vmatmul.mubr.f32.gmra.mrb[0].mxu0 %v5767
        %v5898 = vpop.f32.mrb[0].mxu0
        %v5899 = vadd.f32 %v5806, %v5898
        %v5900 = vpop.f32.mrb[0].mxu0
        %5901 = vmatprep.mubr.f32.mxu0 %v5812
        %5902 = vmatmul.mubr.f32.gmra.mrb[0].mxu0 %v5769
        %v5903 = vpop.f32.mrb[0].mxu0
        %v5904 = vadd.f32 %v5806, %v5903
        %v5905 = vpop.f32.mrb[0].mxu0
        %5906 = vmatprep.mubr.f32.mxu0 %v5815
        %5907 = vmatmul.mubr.f32.gmra.mrb[0].mxu0 %v5771
        %v5908 = vpop.f32.mrb[0].mxu0
        %v5909 = vadd.f32 %v5806, %v5908
        %v5910 = vpop.f32.mrb[0].mxu0
        %5911 = vmatprep.mubr.f32.mxu0 %v5818
        %5912 = vmatmul.mubr.f32.gmra.mrb[0].mxu0 %v5773
        %v5913 = vpop.f32.mrb[0].mxu0
        %v5914 = vadd.f32 %v5806, %v5913
        %v5915 = vpop.f32.mrb[0].mxu0
        %5916 = vmatprep.mubr.f32.mxu0 %v5821
        %5917 = vmatmul.mubr.f32.gmra.mrb[0].mxu0 %v5775
        %v5918 = vpop.f32.mrb[0].mxu0
        %v5919 = vadd.f32 %v5806, %v5918
        %v5920 = vpop.f32.mrb[0].mxu0
        %5921 = vmatprep.mubr.f32.mxu0 %v5824
        %5922 = vmatmul.mubr.f32.gmra.mrb[0].mxu0 %v5777
        %v5923 = vpop.f32.mrb[0].mxu0
        %v5924 = vadd.f32 %v5806, %v5923
        %v5925 = vpop.f32.mrb[0].mxu0
        %5926 = vmatprep.mubr.f32.mxu0 %v5827
        %5927 = vmatmul.mubr.f32.gmra.mrb[0].mxu0 %v5779
        %v5928 = vpop.f32.mrb[0].mxu0
        %v5929 = vadd.f32 %v5806, %v5928
        %v5930 = vpop.f32.mrb[0].mxu0
        %5931 = vmatprep.mubr.f32.mxu0 %v5830
        %5932 = vmatmul.mubr.f32.gmra.mrb[0].mxu0 %v5781
        %v5933 = vpop.f32.mrb[0].mxu0
        %v5934 = vadd.f32 %v5806, %v5933
        %v5935 = vpop.f32.mrb[0].mxu0
        %5936 = vdwg.mxu0
        %v5937 = vmax.f32 %v5899, 0.0
        %v5938 = vmax.f32 %v5904, 0.0
        %v5939 = vmax.f32 %v5909, 0.0
        %v5940 = vmax.f32 %v5914, 0.0
        %v5941 = vmax.f32 %v5919, 0.0
        %v5942 = vmax.f32 %v5924, 0.0
        %v5943 = vmax.f32 %v5929, 0.0
        %v5944 = vmax.f32 %v5934, 0.0
        %5945 = vst.msk [vmem:[#allocation2 + $0x9] sm:$0xff] %vm1009, %v5937
        %5946 = vst.msk [vmem:[#allocation2 + $0x11] sm:$0xff] %vm1009, %v5938
        %5947 = vst.msk [vmem:[#allocation2 + $0x19] sm:$0xff] %vm1009, %v5939
        %5948 = vst.msk [vmem:[#allocation2 + $0x21] sm:$0xff] %vm1009, %v5940
        %5949 = vst.msk [vmem:[#allocation2 + $0x29] sm:$0xff] %vm1009, %v5941
        %5950 = vst.msk [vmem:[#allocation2 + $0x31] sm:$0xff] %vm1009, %v5942
        %5951 = vst.msk [vmem:[#allocation2 + $0x39] sm:$0xff] %vm1009, %v5943
        %5952 = vst.msk [vmem:[#allocation2 + $0x41] sm:$0xff] %vm1009, %v5944
        %v5953 = vld [vmem:[#allocation2] sm:$0xff]
        %v5954 = vld [vmem:[#allocation2 + $0x8] sm:$0xff]
        %v5955 = vld [vmem:[#allocation2 + $0x10] sm:$0xff]
        %v5956 = vld [vmem:[#allocation2 + $0x18] sm:$0xff]
        %v5957 = vld [vmem:[#allocation2 + $0x20] sm:$0xff]
        %v5958 = vld [vmem:[#allocation2 + $0x28] sm:$0xff]
        %v5959 = vld [vmem:[#allocation2 + $0x30] sm:$0xff]
        %v5960 = vld [vmem:[#allocation2 + $0x38] sm:$0xff]
        %v5961 = vsel %vm961, %v5953, 0.0
        %v5962 = vsel %vm962, %v5954, 0.0
        %v5963 = vsel %vm963, %v5955, 0.0
        %v5964 = vsel %vm964, %v5956, 0.0
        %v5965 = vsel %vm965, %v5957, 0.0
        %v5966 = vsel %vm966, %v5958, 0.0
        %v5967 = vsel %vm967, %v5959, 0.0
        %v5968 = vsel %vm968, %v5960, 0.0
        %5969 = vst.msk [vmem:[#allocation3] sm:$0xff] %vm1009, %v5961
        %5970 = vst.msk [vmem:[#allocation3 + $0x10] sm:$0xff] %vm1009, %v5962
        %5971 = vst.msk [vmem:[#allocation3 + $0x20] sm:$0xff] %vm1009, %v5963
        %5972 = vst.msk [vmem:[#allocation3 + $0x30] sm:$0xff] %vm1009, %v5964
        %5973 = vst.msk [vmem:[#allocation3 + $0x40] sm:$0xff] %vm1009, %v5965
        %5974 = vst.msk [vmem:[#allocation3 + $0x50] sm:$0xff] %vm1009, %v5966
        %5975 = vst.msk [vmem:[#allocation3 + $0x60] sm:$0xff] %vm1009, %v5967
        %5976 = vst.msk [vmem:[#allocation3 + $0x70] sm:$0xff] %vm1009, %v5968
        %v5977 = vld [vmem:[#allocation2 + $0x1] sm:$0xff]
        %v5978 = vld [vmem:[#allocation2 + $0x9] sm:$0xff]
        %v5979 = vld [vmem:[#allocation2 + $0x11] sm:$0xff]
        %v5980 = vld [vmem:[#allocation2 + $0x19] sm:$0xff]
        %v5981 = vld [vmem:[#allocation2 + $0x21] sm:$0xff]
        %v5982 = vld [vmem:[#allocation2 + $0x29] sm:$0xff]
        %v5983 = vld [vmem:[#allocation2 + $0x31] sm:$0xff]
        %v5984 = vld [vmem:[#allocation2 + $0x39] sm:$0xff]
        %5993 = vrot.lane.b32.xlu0 %v5977, 16
        %v5994 = vpop.permute.xlu0 %5993
        %5995 = vrot.lane.b32.xlu0 %v5978, 16
        %v5996 = vpop.permute.xlu0 %5995
        %5997 = vrot.lane.b32.xlu0 %v5979, 16
        %v5998 = vpop.permute.xlu0 %5997
        %5999 = vrot.lane.b32.xlu0 %v5980, 16
        %v6000 = vpop.permute.xlu0 %5999
        %6001 = vrot.lane.b32.xlu0 %v5981, 16
        %v6002 = vpop.permute.xlu0 %6001
        %6003 = vrot.lane.b32.xlu0 %v5982, 16
        %v6004 = vpop.permute.xlu0 %6003
        %6005 = vrot.lane.b32.xlu0 %v5983, 16
        %v6006 = vpop.permute.xlu0 %6005
        %6007 = vrot.lane.b32.xlu0 %v5984, 16
        %v6008 = vpop.permute.xlu0 %6007
        %6017 = vst.msk [vmem:[#allocation3] sm:$0xff] %vm1305, %v5994
        %6018 = vst.msk [vmem:[#allocation3 + $0x10] sm:$0xff] %vm1305, %v5996
        %6019 = vst.msk [vmem:[#allocation3 + $0x20] sm:$0xff] %vm1305, %v5998
        %6020 = vst.msk [vmem:[#allocation3 + $0x30] sm:$0xff] %vm1305, %v6000
        %6021 = vst.msk [vmem:[#allocation3 + $0x40] sm:$0xff] %vm1305, %v6002
        %6022 = vst.msk [vmem:[#allocation3 + $0x50] sm:$0xff] %vm1305, %v6004
        %6023 = vst.msk [vmem:[#allocation3 + $0x60] sm:$0xff] %vm1305, %v6006
        %6024 = vst.msk [vmem:[#allocation3 + $0x70] sm:$0xff] %vm1305, %v6008
        %v6025 = vld [vmem:[#allocation2 + $0x2] sm:$0xff]
        %v6026 = vld [vmem:[#allocation2 + $0xa] sm:$0xff]
        %v6027 = vld [vmem:[#allocation2 + $0x12] sm:$0xff]
        %v6028 = vld [vmem:[#allocation2 + $0x1a] sm:$0xff]
        %v6029 = vld [vmem:[#allocation2 + $0x22] sm:$0xff]
        %v6030 = vld [vmem:[#allocation2 + $0x2a] sm:$0xff]
        %v6031 = vld [vmem:[#allocation2 + $0x32] sm:$0xff]
        %v6032 = vld [vmem:[#allocation2 + $0x3a] sm:$0xff]
        %v6033 = vsel %vm969, %v6025, 0.0
        %v6034 = vsel %vm970, %v6026, 0.0
        %v6035 = vsel %vm971, %v6027, 0.0
        %v6036 = vsel %vm972, %v6028, 0.0
        %v6037 = vsel %vm973, %v6029, 0.0
        %v6038 = vsel %vm974, %v6030, 0.0
        %v6039 = vsel %vm975, %v6031, 0.0
        %v6040 = vsel %vm976, %v6032, 0.0
        %6049 = vrot.lane.b32.xlu0 %v6033, 32
        %v6050 = vpop.permute.xlu0 %6049
        %6051 = vrot.lane.b32.xlu0 %v6034, 32
        %v6052 = vpop.permute.xlu0 %6051
        %6053 = vrot.lane.b32.xlu0 %v6035, 32
        %v6054 = vpop.permute.xlu0 %6053
        %6055 = vrot.lane.b32.xlu0 %v6036, 32
        %v6056 = vpop.permute.xlu0 %6055
        %6057 = vrot.lane.b32.xlu0 %v6037, 32
        %v6058 = vpop.permute.xlu0 %6057
        %6059 = vrot.lane.b32.xlu0 %v6038, 32
        %v6060 = vpop.permute.xlu0 %6059
        %6061 = vrot.lane.b32.xlu0 %v6039, 32
        %v6062 = vpop.permute.xlu0 %6061
        %6063 = vrot.lane.b32.xlu0 %v6040, 32
        %v6064 = vpop.permute.xlu0 %6063
        %6073 = vst.msk [vmem:[#allocation3] sm:$0xff] %vm1530, %v6050
        %6074 = vst.msk [vmem:[#allocation3 + $0x10] sm:$0xff] %vm1530, %v6052
        %6075 = vst.msk [vmem:[#allocation3 + $0x20] sm:$0xff] %vm1530, %v6054
        %6076 = vst.msk [vmem:[#allocation3 + $0x30] sm:$0xff] %vm1530, %v6056
        %6077 = vst.msk [vmem:[#allocation3 + $0x40] sm:$0xff] %vm1530, %v6058
        %6078 = vst.msk [vmem:[#allocation3 + $0x50] sm:$0xff] %vm1530, %v6060
        %6079 = vst.msk [vmem:[#allocation3 + $0x60] sm:$0xff] %vm1530, %v6062
        %6080 = vst.msk [vmem:[#allocation3 + $0x70] sm:$0xff] %vm1530, %v6064
        %v6081 = vld [vmem:[#allocation2 + $0x8] sm:$0xff]
        %v6082 = vld [vmem:[#allocation2 + $0x10] sm:$0xff]
        %v6083 = vld [vmem:[#allocation2 + $0x18] sm:$0xff]
        %v6084 = vld [vmem:[#allocation2 + $0x20] sm:$0xff]
        %v6085 = vld [vmem:[#allocation2 + $0x28] sm:$0xff]
        %v6086 = vld [vmem:[#allocation2 + $0x30] sm:$0xff]
        %v6087 = vld [vmem:[#allocation2 + $0x38] sm:$0xff]
        %v6088 = vld [vmem:[#allocation2 + $0x40] sm:$0xff]
        %v6089 = vsel %vm961, %v6081, 0.0
        %v6090 = vsel %vm962, %v6082, 0.0
        %v6091 = vsel %vm963, %v6083, 0.0
        %v6092 = vsel %vm964, %v6084, 0.0
        %v6093 = vsel %vm965, %v6085, 0.0
        %v6094 = vsel %vm966, %v6086, 0.0
        %v6095 = vsel %vm967, %v6087, 0.0
        %v6096 = vsel %vm968, %v6088, 0.0
        %6105 = vrot.lane.b32.xlu0 %v6089, 48
        %v6106 = vpop.permute.xlu0 %6105
        %6107 = vrot.lane.b32.xlu0 %v6090, 48
        %v6108 = vpop.permute.xlu0 %6107
        %6109 = vrot.lane.b32.xlu0 %v6091, 48
        %v6110 = vpop.permute.xlu0 %6109
        %6111 = vrot.lane.b32.xlu0 %v6092, 48
        %v6112 = vpop.permute.xlu0 %6111
        %6113 = vrot.lane.b32.xlu0 %v6093, 48
        %v6114 = vpop.permute.xlu0 %6113
        %6115 = vrot.lane.b32.xlu0 %v6094, 48
        %v6116 = vpop.permute.xlu0 %6115
        %6117 = vrot.lane.b32.xlu0 %v6095, 48
        %v6118 = vpop.permute.xlu0 %6117
        %6119 = vrot.lane.b32.xlu0 %v6096, 48
        %v6120 = vpop.permute.xlu0 %6119
        %6129 = vst.msk [vmem:[#allocation3] sm:$0xff] %vm1755, %v6106
        %6130 = vst.msk [vmem:[#allocation3 + $0x10] sm:$0xff] %vm1755, %v6108
        %6131 = vst.msk [vmem:[#allocation3 + $0x20] sm:$0xff] %vm1755, %v6110
        %6132 = vst.msk [vmem:[#allocation3 + $0x30] sm:$0xff] %vm1755, %v6112
        %6133 = vst.msk [vmem:[#allocation3 + $0x40] sm:$0xff] %vm1755, %v6114
        %6134 = vst.msk [vmem:[#allocation3 + $0x50] sm:$0xff] %vm1755, %v6116
        %6135 = vst.msk [vmem:[#allocation3 + $0x60] sm:$0xff] %vm1755, %v6118
        %6136 = vst.msk [vmem:[#allocation3 + $0x70] sm:$0xff] %vm1755, %v6120
        %v6137 = vld [vmem:[#allocation2 + $0x9] sm:$0xff]
        %v6138 = vld [vmem:[#allocation2 + $0x11] sm:$0xff]
        %v6139 = vld [vmem:[#allocation2 + $0x19] sm:$0xff]
        %v6140 = vld [vmem:[#allocation2 + $0x21] sm:$0xff]
        %v6141 = vld [vmem:[#allocation2 + $0x29] sm:$0xff]
        %v6142 = vld [vmem:[#allocation2 + $0x31] sm:$0xff]
        %v6143 = vld [vmem:[#allocation2 + $0x39] sm:$0xff]
        %v6144 = vld [vmem:[#allocation2 + $0x41] sm:$0xff]
        %6153 = vrot.lane.b32.xlu0 %v6137, 64
        %v6154 = vpop.permute.xlu0 %6153
        %6155 = vrot.lane.b32.xlu0 %v6138, 64
        %v6156 = vpop.permute.xlu0 %6155
        %6157 = vrot.lane.b32.xlu0 %v6139, 64
        %v6158 = vpop.permute.xlu0 %6157
        %6159 = vrot.lane.b32.xlu0 %v6140, 64
        %v6160 = vpop.permute.xlu0 %6159
        %6161 = vrot.lane.b32.xlu0 %v6141, 64
        %v6162 = vpop.permute.xlu0 %6161
        %6163 = vrot.lane.b32.xlu0 %v6142, 64
        %v6164 = vpop.permute.xlu0 %6163
        %6165 = vrot.lane.b32.xlu0 %v6143, 64
        %v6166 = vpop.permute.xlu0 %6165
        %6167 = vrot.lane.b32.xlu0 %v6144, 64
        %v6168 = vpop.permute.xlu0 %6167
        %6177 = vst.msk [vmem:[#allocation3] sm:$0xff] %vm1948, %v6154
        %6178 = vst.msk [vmem:[#allocation3 + $0x10] sm:$0xff] %vm1948, %v6156
        %6179 = vst.msk [vmem:[#allocation3 + $0x20] sm:$0xff] %vm1948, %v6158
        %6180 = vst.msk [vmem:[#allocation3 + $0x30] sm:$0xff] %vm1948, %v6160
        %6181 = vst.msk [vmem:[#allocation3 + $0x40] sm:$0xff] %vm1948, %v6162
        %6182 = vst.msk [vmem:[#allocation3 + $0x50] sm:$0xff] %vm1948, %v6164
        %6183 = vst.msk [vmem:[#allocation3 + $0x60] sm:$0xff] %vm1948, %v6166
        %6184 = vst.msk [vmem:[#allocation3 + $0x70] sm:$0xff] %vm1948, %v6168
        %v6185 = vld [vmem:[#allocation2 + $0xa] sm:$0xff]
        %v6186 = vld [vmem:[#allocation2 + $0x12] sm:$0xff]
        %v6187 = vld [vmem:[#allocation2 + $0x1a] sm:$0xff]
        %v6188 = vld [vmem:[#allocation2 + $0x22] sm:$0xff]
        %v6189 = vld [vmem:[#allocation2 + $0x2a] sm:$0xff]
        %v6190 = vld [vmem:[#allocation2 + $0x32] sm:$0xff]
        %v6191 = vld [vmem:[#allocation2 + $0x3a] sm:$0xff]
        %v6192 = vld [vmem:[#allocation2 + $0x42] sm:$0xff]
        %v6193 = vsel %vm969, %v6185, 0.0
        %v6194 = vsel %vm970, %v6186, 0.0
        %v6195 = vsel %vm971, %v6187, 0.0
        %v6196 = vsel %vm972, %v6188, 0.0
        %v6197 = vsel %vm973, %v6189, 0.0
        %v6198 = vsel %vm974, %v6190, 0.0
        %v6199 = vsel %vm975, %v6191, 0.0
        %v6200 = vsel %vm976, %v6192, 0.0
        %6209 = vrot.lane.b32.xlu0 %v6193, 80
        %v6210 = vpop.permute.xlu0 %6209
        %6211 = vrot.lane.b32.xlu0 %v6194, 80
        %v6212 = vpop.permute.xlu0 %6211
        %6213 = vrot.lane.b32.xlu0 %v6195, 80
        %v6214 = vpop.permute.xlu0 %6213
        %6215 = vrot.lane.b32.xlu0 %v6196, 80
        %v6216 = vpop.permute.xlu0 %6215
        %6217 = vrot.lane.b32.xlu0 %v6197, 80
        %v6218 = vpop.permute.xlu0 %6217
        %6219 = vrot.lane.b32.xlu0 %v6198, 80
        %v6220 = vpop.permute.xlu0 %6219
        %6221 = vrot.lane.b32.xlu0 %v6199, 80
        %v6222 = vpop.permute.xlu0 %6221
        %6223 = vrot.lane.b32.xlu0 %v6200, 80
        %v6224 = vpop.permute.xlu0 %6223
        %6233 = vst.msk [vmem:[#allocation3] sm:$0xff] %vm2173, %v6210
        %6234 = vst.msk [vmem:[#allocation3 + $0x10] sm:$0xff] %vm2173, %v6212
        %6235 = vst.msk [vmem:[#allocation3 + $0x20] sm:$0xff] %vm2173, %v6214
        %6236 = vst.msk [vmem:[#allocation3 + $0x30] sm:$0xff] %vm2173, %v6216
        %6237 = vst.msk [vmem:[#allocation3 + $0x40] sm:$0xff] %vm2173, %v6218
        %6238 = vst.msk [vmem:[#allocation3 + $0x50] sm:$0xff] %vm2173, %v6220
        %6239 = vst.msk [vmem:[#allocation3 + $0x60] sm:$0xff] %vm2173, %v6222
        %6240 = vst.msk [vmem:[#allocation3 + $0x70] sm:$0xff] %vm2173, %v6224
        %v6241 = vld [vmem:[#allocation2 + $0x10] sm:$0xff]
        %v6242 = vld [vmem:[#allocation2 + $0x18] sm:$0xff]
        %v6243 = vld [vmem:[#allocation2 + $0x20] sm:$0xff]
        %v6244 = vld [vmem:[#allocation2 + $0x28] sm:$0xff]
        %v6245 = vld [vmem:[#allocation2 + $0x30] sm:$0xff]
        %v6246 = vld [vmem:[#allocation2 + $0x38] sm:$0xff]
        %v6247 = vld [vmem:[#allocation2 + $0x40] sm:$0xff]
        %v6248 = vld [vmem:[#allocation2 + $0x48] sm:$0xff]
        %v6249 = vsel %vm961, %v6241, 0.0
        %v6250 = vsel %vm962, %v6242, 0.0
        %v6251 = vsel %vm963, %v6243, 0.0
        %v6252 = vsel %vm964, %v6244, 0.0
        %v6253 = vsel %vm965, %v6245, 0.0
        %v6254 = vsel %vm966, %v6246, 0.0
        %v6255 = vsel %vm967, %v6247, 0.0
        %v6256 = vsel %vm968, %v6248, 0.0
        %6265 = vrot.lane.b32.xlu0 %v6249, 96
        %v6266 = vpop.permute.xlu0 %6265
        %6267 = vrot.lane.b32.xlu0 %v6250, 96
        %v6268 = vpop.permute.xlu0 %6267
        %6269 = vrot.lane.b32.xlu0 %v6251, 96
        %v6270 = vpop.permute.xlu0 %6269
        %6271 = vrot.lane.b32.xlu0 %v6252, 96
        %v6272 = vpop.permute.xlu0 %6271
        %6273 = vrot.lane.b32.xlu0 %v6253, 96
        %v6274 = vpop.permute.xlu0 %6273
        %6275 = vrot.lane.b32.xlu0 %v6254, 96
        %v6276 = vpop.permute.xlu0 %6275
        %6277 = vrot.lane.b32.xlu0 %v6255, 96
        %v6278 = vpop.permute.xlu0 %6277
        %6279 = vrot.lane.b32.xlu0 %v6256, 96
        %v6280 = vpop.permute.xlu0 %6279
        %6289 = vst.msk [vmem:[#allocation3] sm:$0xff] %vm2398, %v6266
        %6290 = vst.msk [vmem:[#allocation3 + $0x10] sm:$0xff] %vm2398, %v6268
        %6291 = vst.msk [vmem:[#allocation3 + $0x20] sm:$0xff] %vm2398, %v6270
        %6292 = vst.msk [vmem:[#allocation3 + $0x30] sm:$0xff] %vm2398, %v6272
        %6293 = vst.msk [vmem:[#allocation3 + $0x40] sm:$0xff] %vm2398, %v6274
        %6294 = vst.msk [vmem:[#allocation3 + $0x50] sm:$0xff] %vm2398, %v6276
        %6295 = vst.msk [vmem:[#allocation3 + $0x60] sm:$0xff] %vm2398, %v6278
        %6296 = vst.msk [vmem:[#allocation3 + $0x70] sm:$0xff] %vm2398, %v6280
        %v6297 = vld [vmem:[#allocation2 + $0x11] sm:$0xff]
        %v6298 = vld [vmem:[#allocation2 + $0x19] sm:$0xff]
        %v6299 = vld [vmem:[#allocation2 + $0x21] sm:$0xff]
        %v6300 = vld [vmem:[#allocation2 + $0x29] sm:$0xff]
        %v6301 = vld [vmem:[#allocation2 + $0x31] sm:$0xff]
        %v6302 = vld [vmem:[#allocation2 + $0x39] sm:$0xff]
        %v6303 = vld [vmem:[#allocation2 + $0x41] sm:$0xff]
        %v6304 = vld [vmem:[#allocation2 + $0x49] sm:$0xff]
        %6313 = vrot.lane.b32.xlu0 %v6297, 112
        %v6314 = vpop.permute.xlu0 %6313
        %6315 = vrot.lane.b32.xlu0 %v6298, 112
        %v6316 = vpop.permute.xlu0 %6315
        %6317 = vrot.lane.b32.xlu0 %v6299, 112
        %v6318 = vpop.permute.xlu0 %6317
        %6319 = vrot.lane.b32.xlu0 %v6300, 112
        %v6320 = vpop.permute.xlu0 %6319
        %6321 = vrot.lane.b32.xlu0 %v6301, 112
        %v6322 = vpop.permute.xlu0 %6321
        %6323 = vrot.lane.b32.xlu0 %v6302, 112
        %v6324 = vpop.permute.xlu0 %6323
        %6325 = vrot.lane.b32.xlu0 %v6303, 112
        %v6326 = vpop.permute.xlu0 %6325
        %6327 = vrot.lane.b32.xlu0 %v6304, 112
        %v6328 = vpop.permute.xlu0 %6327
        %6337 = vst.msk [vmem:[#allocation3] sm:$0xff] %vm2591, %v6314
        %6338 = vst.msk [vmem:[#allocation3 + $0x10] sm:$0xff] %vm2591, %v6316
        %6339 = vst.msk [vmem:[#allocation3 + $0x20] sm:$0xff] %vm2591, %v6318
        %6340 = vst.msk [vmem:[#allocation3 + $0x30] sm:$0xff] %vm2591, %v6320
        %6341 = vst.msk [vmem:[#allocation3 + $0x40] sm:$0xff] %vm2591, %v6322
        %6342 = vst.msk [vmem:[#allocation3 + $0x50] sm:$0xff] %vm2591, %v6324
        %6343 = vst.msk [vmem:[#allocation3 + $0x60] sm:$0xff] %vm2591, %v6326
        %6344 = vst.msk [vmem:[#allocation3 + $0x70] sm:$0xff] %vm2591, %v6328
        %v6345 = vld [vmem:[#allocation2 + $0x12] sm:$0xff]
        %v6346 = vld [vmem:[#allocation2 + $0x1a] sm:$0xff]
        %v6347 = vld [vmem:[#allocation2 + $0x22] sm:$0xff]
        %v6348 = vld [vmem:[#allocation2 + $0x2a] sm:$0xff]
        %v6349 = vld [vmem:[#allocation2 + $0x32] sm:$0xff]
        %v6350 = vld [vmem:[#allocation2 + $0x3a] sm:$0xff]
        %v6351 = vld [vmem:[#allocation2 + $0x42] sm:$0xff]
        %v6352 = vld [vmem:[#allocation2 + $0x4a] sm:$0xff]
        %v6353 = vsel %vm969, %v6345, 0.0
        %v6354 = vsel %vm970, %v6346, 0.0
        %v6355 = vsel %vm971, %v6347, 0.0
        %v6356 = vsel %vm972, %v6348, 0.0
        %v6357 = vsel %vm973, %v6349, 0.0
        %v6358 = vsel %vm974, %v6350, 0.0
        %v6359 = vsel %vm975, %v6351, 0.0
        %v6360 = vsel %vm976, %v6352, 0.0
        %6361 = vst.msk [vmem:[#allocation3 + $0x8] sm:$0xff] %vm1009, %v6353
        %6362 = vst.msk [vmem:[#allocation3 + $0x18] sm:$0xff] %vm1009, %v6354
        %6363 = vst.msk [vmem:[#allocation3 + $0x28] sm:$0xff] %vm1009, %v6355
        %6364 = vst.msk [vmem:[#allocation3 + $0x38] sm:$0xff] %vm1009, %v6356
        %6365 = vst.msk [vmem:[#allocation3 + $0x48] sm:$0xff] %vm1009, %v6357
        %6366 = vst.msk [vmem:[#allocation3 + $0x58] sm:$0xff] %vm1009, %v6358
        %6367 = vst.msk [vmem:[#allocation3 + $0x68] sm:$0xff] %vm1009, %v6359
        %6368 = vst.msk [vmem:[#allocation3 + $0x78] sm:$0xff] %vm1009, %v6360
        %v6369 = vld [vmem:[#allocation3] sm:$0xff]
        %v6370 = vld [vmem:[#allocation3 + $0x8] sm:$0xff]
        %v6371 = vld [vmem:[#allocation3 + $0x10] sm:$0xff]
        %v6372 = vld [vmem:[#allocation3 + $0x18] sm:$0xff]
        %v6373 = vld [vmem:[#allocation3 + $0x20] sm:$0xff]
        %v6374 = vld [vmem:[#allocation3 + $0x28] sm:$0xff]
        %v6375 = vld [vmem:[#allocation3 + $0x30] sm:$0xff]
        %v6376 = vld [vmem:[#allocation3 + $0x38] sm:$0xff]
        %v6377 = vld [vmem:[#allocation3 + $0x40] sm:$0xff]
        %v6378 = vld [vmem:[#allocation3 + $0x48] sm:$0xff]
        %v6379 = vld [vmem:[#allocation3 + $0x50] sm:$0xff]
        %v6380 = vld [vmem:[#allocation3 + $0x58] sm:$0xff]
        %v6381 = vld [vmem:[#allocation3 + $0x60] sm:$0xff]
        %v6382 = vld [vmem:[#allocation3 + $0x68] sm:$0xff]
        %v6383 = vld [vmem:[#allocation3 + $0x70] sm:$0xff]
        %v6384 = vld [vmem:[#allocation3 + $0x78] sm:$0xff]
        %v6385 = vld [vmem:[%s7] sm:$0xff]
        %v6386 = vld [vmem:[%s7 + $0x8] sm:$0xff]
        %v6387 = vld [vmem:[%s7 + $0x10] sm:$0xff]
        %v6388 = vld [vmem:[%s7 + $0x18] sm:$0xff]
        %v6389 = vld [vmem:[%s7 + $0x20] sm:$0xff]
        %v6390 = vld [vmem:[%s7 + $0x28] sm:$0xff]
        %v6391 = vld [vmem:[%s7 + $0x30] sm:$0xff]
        %v6392 = vld [vmem:[%s7 + $0x38] sm:$0xff]
        %v6393 = vld [vmem:[%s7 + $0x40] sm:$0xff]
        %v6394 = vld [vmem:[%s7 + $0x48] sm:$0xff]
        %v6395 = vld [vmem:[%s7 + $0x50] sm:$0xff]
        %v6396 = vld [vmem:[%s7 + $0x58] sm:$0xff]
        %v6397 = vld [vmem:[%s7 + $0x60] sm:$0xff]
        %v6398 = vld [vmem:[%s7 + $0x68] sm:$0xff]
        %v6399 = vld [vmem:[%s7 + $0x70] sm:$0xff]
        %v6400 = vld [vmem:[%s7 + $0x78] sm:$0xff]
        %v6401 = vld [vmem:[%s7 + $0x80] sm:$0xff]
        %v6402 = vld [vmem:[%s7 + $0x88] sm:$0xff]
        %v6403 = vld [vmem:[%s8] sm:$0x1]
        %v6405 = vlaneseq
        %v6406 = vshrl.u32 %v6405, 7
        %v6407 = vsub.s32 0, %v6406
        %v6408 = vrot.slane %v6403, %v6407
        %v6411 = vsel %vm1009, %v6370, 0
        %v6414 = vsel %vm1009, %v6372, 0
        %v6417 = vsel %vm1009, %v6374, 0
        %v6420 = vsel %vm1009, %v6376, 0
        %v6423 = vsel %vm1009, %v6378, 0
        %v6426 = vsel %vm1009, %v6380, 0
        %v6429 = vsel %vm1009, %v6382, 0
        %v6432 = vsel %vm1009, %v6384, 0
        %6434 = vmatprep.subr.mxu0 0.0
        %6435 = vmatpush1.msra.mxu0 %v6385
        %6436 = vmatprep.subr.mxu0 0.0
        %6437 = vmatpush1.msra.mxu0 %v6386
        %6438 = vmatprep.subr.mxu0 0.0
        %6439 = vmatpush1.msra.mxu0 %v6387
        %6440 = vmatprep.subr.mxu0 0.0
        %6441 = vmatpush1.msra.mxu0 %v6388
        %6442 = vmatprep.subr.mxu0 0.0
        %6443 = vmatpush1.msra.mxu0 %v6389
        %6444 = vmatprep.subr.mxu0 0.0
        %6445 = vmatpush1.msra.mxu0 %v6390
        %6446 = vmatprep.subr.mxu0 0.0
        %6447 = vmatpush1.msra.mxu0 %v6391
        %6448 = vmatprep.subr.mxu0 0.0
        %6449 = vmatpush1.msra.mxu0 %v6392
        %6450 = vmatprep.subr.mxu0 0.0
        %6451 = vmatpush1.msra.mxu0 %v6393
        %6452 = vmatprep.subr.mxu0 0.0
        %6453 = vmatpush1.msra.mxu0 %v6394
        %6454 = vmatprep.subr.mxu0 0.0
        %6455 = vmatpush1.msra.mxu0 %v6395
        %6456 = vmatprep.subr.mxu0 0.0
        %6457 = vmatpush1.msra.mxu0 %v6396
        %6458 = vmatprep.subr.mxu0 0.0
        %6459 = vmatpush1.msra.mxu0 %v6397
        %6460 = vmatprep.subr.mxu0 0.0
        %6461 = vmatpush1.msra.mxu0 %v6398
        %6462 = vmatprep.subr.mxu0 0.0
        %6463 = vmatpush1.msra.mxu0 %v6399
        %6464 = vmatprep.subr.mxu0 0.0
        %6465 = vmatpush1.msra.mxu0 %v6400
        %6466 = vmatprep.subr.mxu0 0.0
        %6467 = vmatpush1.msra.mxu0 %v6401
        %6468 = vmatprep.subr.mxu0 0.0
        %6469 = vmatpush1.msra.mxu0 %v6402
        %6470 = vmatprep.subr.mxu0 0.0
        %6471 = vmatpush1.msra.mxu0 0.0
        %6472 = vmatprep.subr.mxu0 0.0
        %6473 = vmatpush1.msra.mxu0 0.0
        %6474 = vmatprep.subr.mxu0 0.0
        %6475 = vmatpush1.msra.mxu0 0.0
        %6476 = vmatprep.subr.mxu0 0.0
        %6477 = vmatpush1.msra.mxu0 0.0
        %6478 = vmatprep.subr.mxu0 0.0
        %6479 = vmatpush1.msra.mxu0 0.0
        %6480 = vmatprep.subr.mxu0 0.0
        %6481 = vmatpush1.msra.mxu0 0.0
        %6482 = vmatprep.subr.mxu0 0.0
        %6483 = vmatpush1.msra.mxu0 0.0
        %6484 = vmatprep.subr.mxu0 0.0
        %6485 = vmatpush1.msra.mxu0 0.0
        %6486 = vmatprep.subr.mxu0 0.0
        %6487 = vmatpush1.msra.mxu0 0.0
        %6488 = vmatprep.subr.mxu0 0.0
        %6489 = vmatpush1.msra.mxu0 0.0
        %6490 = vmatprep.subr.mxu0 0.0
        %6491 = vmatpush1.msra.mxu0 0.0
        %6492 = vmatprep.subr.mxu0 0.0
        %6493 = vmatpush1.msra.mxu0 0.0
        %6494 = vmatprep.subr.mxu0 0.0
        %6495 = vmatpush1.msra.mxu0 0.0
        %6496 = vmatprep.subr.mxu0 0.0
        %6497 = vmatpush1.msra.mxu0 0.0
        %6498 = vmatprep.mubr.f32.mxu0 %v6411
        %6499 = vmatmul.mubr.f32.gmra.mrb[0].mxu0 %v6369
        %v6500 = vpop.f32.mrb[0].mxu0
        %v6501 = vadd.f32 %v6408, %v6500
        %v6502 = vpop.f32.mrb[0].mxu0
        %6503 = vmatprep.mubr.f32.mxu0 %v6414
        %6504 = vmatmul.mubr.f32.gmra.mrb[0].mxu0 %v6371
        %v6505 = vpop.f32.mrb[0].mxu0
        %v6506 = vadd.f32 %v6408, %v6505
        %v6507 = vpop.f32.mrb[0].mxu0
        %6508 = vmatprep.mubr.f32.mxu0 %v6417
        %6509 = vmatmul.mubr.f32.gmra.mrb[0].mxu0 %v6373
        %v6510 = vpop.f32.mrb[0].mxu0
        %v6511 = vadd.f32 %v6408, %v6510
        %v6512 = vpop.f32.mrb[0].mxu0
        %6513 = vmatprep.mubr.f32.mxu0 %v6420
        %6514 = vmatmul.mubr.f32.gmra.mrb[0].mxu0 %v6375
        %v6515 = vpop.f32.mrb[0].mxu0
        %v6516 = vadd.f32 %v6408, %v6515
        %v6517 = vpop.f32.mrb[0].mxu0
        %6518 = vmatprep.mubr.f32.mxu0 %v6423
        %6519 = vmatmul.mubr.f32.gmra.mrb[0].mxu0 %v6377
        %v6520 = vpop.f32.mrb[0].mxu0
        %v6521 = vadd.f32 %v6408, %v6520
        %v6522 = vpop.f32.mrb[0].mxu0
        %6523 = vmatprep.mubr.f32.mxu0 %v6426
        %6524 = vmatmul.mubr.f32.gmra.mrb[0].mxu0 %v6379
        %v6525 = vpop.f32.mrb[0].mxu0
        %v6526 = vadd.f32 %v6408, %v6525
        %v6527 = vpop.f32.mrb[0].mxu0
        %6528 = vmatprep.mubr.f32.mxu0 %v6429
        %6529 = vmatmul.mubr.f32.gmra.mrb[0].mxu0 %v6381
        %v6530 = vpop.f32.mrb[0].mxu0
        %v6531 = vadd.f32 %v6408, %v6530
        %v6532 = vpop.f32.mrb[0].mxu0
        %6533 = vmatprep.mubr.f32.mxu0 %v6432
        %6534 = vmatmul.mubr.f32.gmra.mrb[0].mxu0 %v6383
        %v6535 = vpop.f32.mrb[0].mxu0
        %v6536 = vadd.f32 %v6408, %v6535
        %v6537 = vpop.f32.mrb[0].mxu0
        %6538 = vdwg.mxu0
        %v6539 = vmax.f32 %v6501, %v6506
        %v6540 = vmax.f32 %v6511, %v6516
        %v6541 = vmax.f32 %v6521, %v6526
        %v6542 = vmax.f32 %v6531, %v6536
        %6543 = vst.msk [vmem:[#allocation4] sm:$0xff] %vm1009, %v6539
        %6544 = vst.msk [vmem:[#allocation4 + $0x8] sm:$0xff] %vm1009, %v6540
        %6545 = vst.msk [vmem:[#allocation4 + $0x10] sm:$0xff] %vm1009, %v6541
        %6546 = vst.msk [vmem:[#allocation4 + $0x18] sm:$0xff] %vm1009, %v6542
        %v6547 = vld [vmem:[#allocation4] ss:$2 sm:$0xff]
        %v6548 = vld [vmem:[%s5301] ss:$2 sm:$0xff]
        %v6549 = vld [vmem:[%s5315] ss:$2 sm:$0xff]
        %v6550 = vld [vmem:[%s5317] ss:$2 sm:$0xff]
        %v6551 = vmax.f32 %v6547, %v6549
        %v6552 = vmax.f32 %v6548, %v6550
        %6553 = vst.msk [vmem:[#allocation5] sm:$0x1] %vm1012, %v6551
        %v6555 = vrot.slane %v6551, 1
        %6556 = vrot.lane.b32.xlu0 %v6555, 16
        %v6557 = vpop.permute.xlu0 %6556
        %vm6559 = vcmask 254080
        %6560 = vst.msk [vmem:[#allocation5] sm:$0x1] %vm6559, %v6557
        %v6561 = vrot.slane %v6551, 2
        %6562 = vrot.lane.b32.xlu0 %v6561, 32
        %v6563 = vpop.permute.xlu0 %6562
        %vm6565 = vcmask 385280
        %6566 = vst.msk [vmem:[#allocation5] sm:$0x1] %vm6565, %v6563
        %v6567 = vrot.slane %v6551, 3
        %6568 = vrot.lane.b32.xlu0 %v6567, 48
        %v6569 = vpop.permute.xlu0 %6568
        %vm6571 = vcmask 516480
        %6572 = vst.msk [vmem:[#allocation5] sm:$0x1] %vm6571, %v6569
        %v6573 = vrot.slane %v6551, 4
        %6574 = vrot.lane.b32.xlu0 %v6573, 64
        %v6575 = vpop.permute.xlu0 %6574
        %vm6577 = vcmask 647680
        %6578 = vst.msk [vmem:[#allocation5] sm:$0x1] %vm6577, %v6575
        %v6579 = vrot.slane %v6551, 5
        %6580 = vrot.lane.b32.xlu0 %v6579, 80
        %v6581 = vpop.permute.xlu0 %6580
        %vm6583 = vcmask 778880
        %6584 = vst.msk [vmem:[#allocation5] sm:$0x1] %vm6583, %v6581
        %v6585 = vrot.slane %v6551, 6
        %6586 = vrot.lane.b32.xlu0 %v6585, 96
        %v6587 = vpop.permute.xlu0 %6586
        %vm6589 = vcmask 910080
        %6590 = vst.msk [vmem:[#allocation5] sm:$0x1] %vm6589, %v6587
        %v6591 = vrot.slane %v6551, 7
        %6592 = vrot.lane.b32.xlu0 %v6591, 112
        %v6593 = vpop.permute.xlu0 %6592
        %vm6595 = vcmask 1041280
        %6596 = vst.msk [vmem:[#allocation5] sm:$0x1] %vm6595, %v6593
        %6597 = vst.msk [vmem:[#allocation5 + $0x8] sm:$0x1] %vm1012, %v6552
        %v6599 = vrot.slane %v6552, 1
        %6600 = vrot.lane.b32.xlu0 %v6599, 16
        %v6601 = vpop.permute.xlu0 %6600
        %6603 = vst.msk [vmem:[#allocation5 + $0x8] sm:$0x1] %vm6559, %v6601
        %v6604 = vrot.slane %v6552, 2
        %6605 = vrot.lane.b32.xlu0 %v6604, 32
        %v6606 = vpop.permute.xlu0 %6605
        %6608 = vst.msk [vmem:[#allocation5 + $0x8] sm:$0x1] %vm6565, %v6606
        %v6609 = vrot.slane %v6552, 3
        %6610 = vrot.lane.b32.xlu0 %v6609, 48
        %v6611 = vpop.permute.xlu0 %6610
        %6613 = vst.msk [vmem:[#allocation5 + $0x8] sm:$0x1] %vm6571, %v6611
        %v6614 = vrot.slane %v6552, 4
        %6615 = vrot.lane.b32.xlu0 %v6614, 64
        %v6616 = vpop.permute.xlu0 %6615
        %6618 = vst.msk [vmem:[#allocation5 + $0x8] sm:$0x1] %vm6577, %v6616
        %v6619 = vrot.slane %v6552, 5
        %6620 = vrot.lane.b32.xlu0 %v6619, 80
        %v6621 = vpop.permute.xlu0 %6620
        %6623 = vst.msk [vmem:[#allocation5 + $0x8] sm:$0x1] %vm6583, %v6621
        %v6624 = vrot.slane %v6552, 6
        %6625 = vrot.lane.b32.xlu0 %v6624, 96
        %v6626 = vpop.permute.xlu0 %6625
        %6628 = vst.msk [vmem:[#allocation5 + $0x8] sm:$0x1] %vm6589, %v6626
        %v6629 = vrot.slane %v6552, 7
        %6630 = vrot.lane.b32.xlu0 %v6629, 112
        %v6631 = vpop.permute.xlu0 %6630
        %6633 = vst.msk [vmem:[#allocation5 + $0x8] sm:$0x1] %vm6595, %v6631
        %v6634 = vld [vmem:[#allocation5] ss:$8 sm:$0x3]
        %v6635 = vld [vmem:[%s9] sm:$0xff]
        %v6636 = vld [vmem:[%s9 + $0x8] sm:$0xff]
        %v6637 = vld [vmem:[%s9 + $0x10] sm:$0xff]
        %v6638 = vld [vmem:[%s9 + $0x18] sm:$0xff]
        %v6639 = vld [vmem:[%s9 + $0x20] sm:$0xff]
        %v6640 = vld [vmem:[%s9 + $0x28] sm:$0xff]
        %v6641 = vld [vmem:[%s9 + $0x30] sm:$0xff]
        %v6642 = vld [vmem:[%s9 + $0x38] sm:$0xff]
        %v6643 = vld [vmem:[%s9 + $0x40] sm:$0xff]
        %v6644 = vld [vmem:[%s9 + $0x48] sm:$0xff]
        %v6645 = vld [vmem:[%s9 + $0x50] sm:$0xff]
        %v6646 = vld [vmem:[%s9 + $0x58] sm:$0xff]
        %v6647 = vld [vmem:[%s9 + $0x60] sm:$0xff]
        %v6648 = vld [vmem:[%s9 + $0x68] sm:$0xff]
        %v6649 = vld [vmem:[%s9 + $0x70] sm:$0xff]
        %v6650 = vld [vmem:[%s9 + $0x78] sm:$0xff]
        %v6651 = vld [vmem:[%s9 + $0x80] sm:$0xff]
        %v6652 = vld [vmem:[%s9 + $0x88] sm:$0xff]
        %v6653 = vld [vmem:[%s9 + $0x90] sm:$0xff]
        %v6654 = vld [vmem:[%s9 + $0x98] sm:$0xff]
        %v6655 = vld [vmem:[%s9 + $0xa0] sm:$0xff]
        %v6656 = vld [vmem:[%s9 + $0xa8] sm:$0xff]
        %v6657 = vld [vmem:[%s9 + $0xb0] sm:$0xff]
        %v6658 = vld [vmem:[%s9 + $0xb8] sm:$0xff]
        %v6659 = vld [vmem:[%s9 + $0xc0] sm:$0xff]
        %v6660 = vld [vmem:[%s9 + $0xc8] sm:$0xff]
        %v6661 = vld [vmem:[%s9 + $0xd0] sm:$0xff]
        %v6662 = vld [vmem:[%s9 + $0xd8] sm:$0xff]
        %v6663 = vld [vmem:[%s9 + $0xe0] sm:$0xff]
        %v6664 = vld [vmem:[%s9 + $0xe8] sm:$0xff]
        %v6665 = vld [vmem:[%s9 + $0xf0] sm:$0xff]
        %v6666 = vld [vmem:[%s9 + $0xf8] sm:$0xff]
        %v6667 = vld [vmem:[%s10] sm:$0x1]
        %v6669 = vlaneseq
        %v6670 = vshrl.u32 %v6669, 7
        %v6671 = vsub.s32 0, %v6670
        %v6672 = vrot.slane %v6634, %v6671
        %v6673 = vlaneseq
        %v6674 = vshrl.u32 %v6673, 7
        %v6675 = vsub.s32 1, %v6674
        %v6676 = vrot.slane %v6634, %v6675
        %6679 = vmatprep.subr.mxu0 0.0
        %6680 = vmatpush1.msra.mxu0 %v6635
        %6681 = vmatprep.subr.mxu0 0.0
        %6682 = vmatpush1.msra.mxu0 %v6636
        %6683 = vmatprep.subr.mxu0 0.0
        %6684 = vmatpush1.msra.mxu0 %v6637
        %6685 = vmatprep.subr.mxu0 0.0
        %6686 = vmatpush1.msra.mxu0 %v6638
        %6687 = vmatprep.subr.mxu0 0.0
        %6688 = vmatpush1.msra.mxu0 %v6639
        %6689 = vmatprep.subr.mxu0 0.0
        %6690 = vmatpush1.msra.mxu0 %v6640
        %6691 = vmatprep.subr.mxu0 0.0
        %6692 = vmatpush1.msra.mxu0 %v6641
        %6693 = vmatprep.subr.mxu0 0.0
        %6694 = vmatpush1.msra.mxu0 %v6642
        %6695 = vmatprep.subr.mxu0 0.0
        %6696 = vmatpush1.msra.mxu0 %v6643
        %6697 = vmatprep.subr.mxu0 0.0
        %6698 = vmatpush1.msra.mxu0 %v6644
        %6699 = vmatprep.subr.mxu0 0.0
        %6700 = vmatpush1.msra.mxu0 %v6645
        %6701 = vmatprep.subr.mxu0 0.0
        %6702 = vmatpush1.msra.mxu0 %v6646
        %6703 = vmatprep.subr.mxu0 0.0
        %6704 = vmatpush1.msra.mxu0 %v6647
        %6705 = vmatprep.subr.mxu0 0.0
        %6706 = vmatpush1.msra.mxu0 %v6648
        %6707 = vmatprep.subr.mxu0 0.0
        %6708 = vmatpush1.msra.mxu0 %v6649
        %6709 = vmatprep.subr.mxu0 0.0
        %6710 = vmatpush1.msra.mxu0 %v6650
        %6711 = vmatprep.subr.mxu0 0.0
        %6712 = vmatpush1.msra.mxu0 %v6651
        %6713 = vmatprep.subr.mxu0 0.0
        %6714 = vmatpush1.msra.mxu0 %v6652
        %6715 = vmatprep.subr.mxu0 0.0
        %6716 = vmatpush1.msra.mxu0 %v6653
        %6717 = vmatprep.subr.mxu0 0.0
        %6718 = vmatpush1.msra.mxu0 %v6654
        %6719 = vmatprep.subr.mxu0 0.0
        %6720 = vmatpush1.msra.mxu0 %v6655
        %6721 = vmatprep.subr.mxu0 0.0
        %6722 = vmatpush1.msra.mxu0 %v6656
        %6723 = vmatprep.subr.mxu0 0.0
        %6724 = vmatpush1.msra.mxu0 %v6657
        %6725 = vmatprep.subr.mxu0 0.0
        %6726 = vmatpush1.msra.mxu0 %v6658
        %6727 = vmatprep.subr.mxu0 0.0
        %6728 = vmatpush1.msra.mxu0 %v6659
        %6729 = vmatprep.subr.mxu0 0.0
        %6730 = vmatpush1.msra.mxu0 %v6660
        %6731 = vmatprep.subr.mxu0 0.0
        %6732 = vmatpush1.msra.mxu0 %v6661
        %6733 = vmatprep.subr.mxu0 0.0
        %6734 = vmatpush1.msra.mxu0 %v6662
        %6735 = vmatprep.subr.mxu0 0.0
        %6736 = vmatpush1.msra.mxu0 %v6663
        %6737 = vmatprep.subr.mxu0 0.0
        %6738 = vmatpush1.msra.mxu0 %v6664
        %6739 = vmatprep.subr.mxu0 0.0
        %6740 = vmatpush1.msra.mxu0 %v6665
        %6741 = vmatprep.subr.mxu0 0.0
        %6742 = vmatpush1.msra.mxu0 %v6666
        %6743 = vmatprep.mubr.f32.mxu0 %v6676
        %6744 = vmatmul.mubr.f32.gmra.mrb[0].mxu0 %v6672
        %v6745 = vpop.f32.mrb[0].mxu0
        %v6746 = vadd.f32 %v6667, %v6745
        %v6747 = vpop.f32.mrb[0].mxu0
        %6748 = vdwg.mxu0
        %6749 = vst [vmem:[%s378] sm:$0x1] %v6746
        %s6750 = sand.u32 %s269, 1
        %s6751 = scalar_lea.sflag [#allocation7], %s6750
        %s6752 = sand.u32 %s269, 1
        %s6753 = scalar_lea.vmem [#allocation6], %s6752
        // Predicated region
        $region65: #{forward.1} parent=63 // pred_check
          %p6754 = pneg %p279
        $region66: #{forward.1} parent=63 // pred_check_branch
          %6756 = sbr.rel (%p6754) target = $region68
        $region67: #{forward.1} parent=63 // pred_region
          %s6758 = ssub.s32 16, 16
          %6759 = vsyncadd %s6751, %s6758
          %s6760 = smul.addr %s25, 16
          %s6761 = scalar_lea.hbm %s11, %s6760
          %s6763 = sshll.u32 %s6753, 4
          %s6764 = int_to_ptr.vmem [resolvable:$true] %s6763
          %6766 = dma.vmem_to_hbm [thread:$0]  %s6764, 16, %s6761, %s6751
        $region68: #{forward.1} parent=63 // pred_fallthru
          _
      $region64: #{forward.1} parent=5 // pred_fallthru
        _
      %p6767 = scmp.le.s32.totalorder 2, %s20
      // Predicated region
      $region69: #{forward.1} parent=5 // pred_check
        %p6768 = pneg %p6767
      $region70: #{forward.1} parent=5 // pred_check_branch
        %6770 = sbr.rel (%p6768) target = $region72
      $region71: #{forward.1} parent=5 // pred_region
        %s6771 = ssub.s32 %s20, 2
        // Predicated region
        $region73: #{forward.1} parent=71 // pred_check
          %p6772 = pneg %p285
        $region74: #{forward.1} parent=71 // pred_check_branch
          %6774 = sbr.rel (%p6772) target = $region76
        $region75: #{forward.1} parent=71 // pred_region
          %s6775 = sand.u32 %s270, 1
          %s6776 = scalar_lea.sflag [#allocation7], %s6775
          %s6777 = sand.u32 %s270, 1
          %s6778 = scalar_lea.vmem [#allocation6], %s6777
          %6779 = dma.done %s6776, 16
        $region76: #{forward.1} parent=71 // pred_fallthru
          _
      $region72: #{forward.1} parent=5 // pred_fallthru
        _
    $region6: #{forward.1} parent=1 // loop_footer
      %s24 = sadd.s32 1, %s20
    $region7: #{forward.1} parent=1 // loop_footer_branch
      %19 = sbr.rel target = $region3
    $region8: #{forward.1} parent=1 // loop_exit
      _
    %6780 = vsyncpa [#allocation7], 1
    %s6781 = scalar_lea.sflag [#allocation7], 1
    %6782 = vsyncpa %s6781, 1

</llo_original>
